<compile_context>
chip_gen: v7x
topology: tpu7x:2x2x1
jax: 0.10.0
libtpu: 0.0.40
codegen_flags: <defaults>
</compile_context>

<pallas_src>
import functools

import jax
import jax.numpy as jnp
from jax.experimental import pallas as pl
from jax.experimental.pallas import tpu as pltpu


_TT = 4  # timesteps processed per grid step (raise for long T)


def _round_up(x, m):
    return ((x + m - 1) // m) * m


# ----------------------------------------------------------------------------
# Pallas kernel: one pyramid level (both cells), _TT timesteps per grid step.
# ----------------------------------------------------------------------------
def _seq_encoder_kernel(m_ref,                 # (Tpad*B,) int32 mask in SMEM (scalar prefetch)
                        x_ref,                 # (_TT, C, Rm) padded-flat x with lane margins
                        w_ref,                 # (8C, Kp) fused block weights (bias folded)
                        bsel_ref,              # (B, Rp) per-batch interior indicators
                        out_ref,               # (C, Rp)
                        hf_ref, cf_ref, hb_ref, cb_ref,   # recurrent state scratch
                        col_ref,               # (Kp, Rp) shared im2col column scratch
                        *, B, C, H, W):
    gidx = pl.program_id(0)
    Tt = x_ref.shape[0]
    Hp, Wp = H + 2, W + 2
    Rp = B * Hp * Wp               # conv output positions (padded grid, flattened)
    M = Wp + 1                     # lane margin: every 3x3 window slice stays in bounds
    C3, C4 = 3 * C, 4 * C

    @pl.when(gidx == 0)
    def _init():
        hf_ref[...] = jnp.zeros_like(hf_ref)
        cf_ref[...] = jnp.zeros_like(cf_ref)
        hb_ref[...] = jnp.zeros_like(hb_ref)
        cb_ref[...] = jnp.zeros_like(cb_ref)
        col_ref[...] = jnp.zeros_like(col_ref)                           # K-pad rows stay 0
        col_ref[27 * C:27 * C + 1, :] = jnp.ones((1, Rp), jnp.float32)   # bias row

    w_all = w_ref[...]             # hoisted: (8C, Kp)
    bsel = bsel_ref[...]           # hoisted: (B, Rp)

    def fill_windows(v, row0):
        # v: (C, Rm) padded-flat slab with M-lane margins.  Window k of the 3x3
        # stencil is a static lane-offset slice; each write is a full-lane-width
        # (C, Rp) row slab into the shared column scratch.
        for k in range(9):
            off = (k // 3 - 1) * Wp + (k % 3 - 1)
            col_ref[row0 + k * C:row0 + (k + 1) * C, :] = v[:, M + off:M + off + Rp]

    def step(tt, carry):
        t_abs = gidx * Tt + tt

        hfv = hf_ref[...]          # (C, Rm)
        hbv = hb_ref[...]
        fill_windows(x_ref[tt], 0)
        fill_windows(hfv, 9 * C)
        fill_windows(hbv, 18 * C)

        # One fused MXU dot for BOTH cells, bias folded in: (8C,Kp) x (Kp,Rp).
        gates = jnp.dot(w_all, col_ref[...], preferred_element_type=jnp.float32)

        # (t, b) mask -> (1, Rp) lane vector: exactly 1.0 on interior positions
        # of unmasked batches, 0.0 elsewhere (borders / margins never commit,
        # which also keeps the conv's "same" zero padding intact).
        m_vec = jnp.zeros((1, Rp), jnp.float32)
        for b in range(B):
            m_b = m_ref[t_abs * B + b].astype(jnp.float32)   # SMEM scalar
            m_vec = m_vec + bsel[b:b + 1, :] * m_b

        def cell(h_ref, hv, c_ref, acc):
            sig = jax.nn.sigmoid(acc[:C3, :])                # [i | f | o] in one slab
            g = jnp.tanh(acc[C3:, :])
            i_g, f_g, o_g = sig[:C, :], sig[C:2 * C, :], sig[2 * C:, :]
            c_old = c_ref[...]
            c_new = f_g * c_old + i_g * g
            h_new = o_g * jnp.tanh(c_new)
            h_old = hv[:, M:M + Rp]
            # Vectorized masked commit (m_vec is exactly 0/1, all values finite).
            c_ref[...] = m_vec * c_new + (1.0 - m_vec) * c_old
            h_ref[:, M:M + Rp] = m_vec * h_new + (1.0 - m_vec) * h_old

        cell(hf_ref, hfv, cf_ref, gates[:C4, :])
        cell(hb_ref, hbv, cb_ref, gates[C4:, :])
        return carry

    jax.lax.fori_loop(0, Tt, step, 0, unroll=True)

    @pl.when(gidx == pl.num_programs(0) - 1)
    def _finalize():
        out_ref[...] = 0.5 * (hf_ref[...][:, M:M + Rp] + hb_ref[...][:, M:M + Rp])


# ----------------------------------------------------------------------------
# Wrapper: one pallas_call per pyramid level.
# ----------------------------------------------------------------------------
def _encode_level(m_flat, x_flat, w_block, bsel, *, B, C, H, W, Tpad):
    Hp, Wp = H + 2, W + 2
    Rp = B * Hp * Wp
    M = Wp + 1
    Rm = Rp + 2 * M
    Kp = w_block.shape[1]
    kernel = functools.partial(_seq_encoder_kernel, B=B, C=C, H=H, W=W)

    grid_spec = pltpu.PrefetchScalarGridSpec(
        num_scalar_prefetch=1,                     # 1-D mask -> SMEM
        grid=(Tpad // _TT,),
        in_specs=[
            pl.BlockSpec((_TT, C, Rm), lambda g, m: (g, 0, 0)),   # x (padded-flat)
            pl.BlockSpec((8 * C, Kp), lambda g, m: (0, 0)),       # fused weights
            pl.BlockSpec((B, Rp), lambda g, m: (0, 0)),           # batch-interior sel
        ],
        out_specs=pl.BlockSpec((C, Rp), lambda g, m: (0, 0)),
        scratch_shapes=[
            pltpu.VMEM((C, Rm), jnp.float32),    # fwd h (with lane margins)
            pltpu.VMEM((C, Rp), jnp.float32),    # fwd c
            pltpu.VMEM((C, Rm), jnp.float32),    # bwd h
            pltpu.VMEM((C, Rp), jnp.float32),    # bwd c
            pltpu.VMEM((Kp, Rp), jnp.float32),   # shared im2col column scratch
        ],
    )
    return pl.pallas_call(
        kernel,
        out_shape=jax.ShapeDtypeStruct((C, Rp), jnp.float32),
        grid_spec=grid_spec,
        compiler_params=pltpu.CompilerParams(
            dimension_semantics=("arbitrary",),        # time is sequential
            vmem_limit_bytes=32 * 1024 * 1024),
    )(m_flat, x_flat, w_block, bsel)


def _pack_block_weights(w_f, b_f, w_b, b_b, Kp):
    """PyTorch Conv2d weights (4C, 2C, 3, 3) -> fused block weight (8C, Kp).

    Column layout matches the kernel's column scratch:
      [0, 9C)   x windows     (row = (ky*3 + kx)*C + c_in)
      [9C, 18C) fwd-h windows
      [18C,27C) bwd-h windows
      27C       ones row (bias), rest zero padding.
    Rows: [0, 4C) = fwd gates (i|f|o|g), [4C, 8C) = bwd gates.
    """
    c4 = w_f.shape[0]
    C = c4 // 4

    def to_cols_t(w):
        w_okki = jnp.transpose(w, (0, 2, 3, 1))            # (4C, 3, 3, 2C)
        wx = w_okki[:, :, :, :C].reshape(c4, 9 * C)
        wh = w_okki[:, :, :, C:].reshape(c4, 9 * C)
        return wx, wh

    wxf, whf = to_cols_t(w_f)
    wxb, whb = to_cols_t(w_b)
    Wb = jnp.zeros((2 * c4, Kp), jnp.float32)
    Wb = Wb.at[:c4, 0:9 * C].set(wxf)
    Wb = Wb.at[c4:, 0:9 * C].set(wxb)
    Wb = Wb.at[:c4, 9 * C:18 * C].set(whf)
    Wb = Wb.at[c4:, 18 * C:27 * C].set(whb)
    Wb = Wb.at[:c4, 27 * C].set(b_f)
    Wb = Wb.at[c4:, 27 * C].set(b_b)
    return Wb


def _build_interior_sel(B, H, W):
    """(B, Rp) float32: 1.0 at interior positions of batch b, 0.0 elsewhere."""
    Hp, Wp = H + 2, W + 2
    Rp = B * Hp * Wp
    r = jnp.arange(Rp)
    x_idx = r % Wp
    y_idx = (r // Wp) % Hp
    b_idx = r // (Hp * Wp)
    interior = (y_idx >= 1) & (y_idx <= H) & (x_idx >= 1) & (x_idx <= W)
    rows = [(interior & (b_idx == b)) for b in range(B)]
    return jnp.stack(rows).astype(jnp.float32)


def sequence_encoder_pallas(features, mask, params):
    """features: list of (T, B, C, H, W); mask: (T, B);
    params: list of (w_f, b_f, w_b, b_b) in PyTorch Conv2d (OIHW) layout.
    Returns list of (B, C, H, W) aggregated states."""
    outs = []
    mask_i = (mask > 0).astype(jnp.int32)
    for feats, (w_f, b_f, w_b, b_b) in zip(features, params):
        T, B, C, H, W = feats.shape
        Hp, Wp = H + 2, W + 2
        Rp = B * Hp * Wp
        M = Wp + 1
        Tpad = _round_up(T, _TT)
        Kp = _round_up(27 * C + 1, 128)     # MXU-friendly K (bias row included)

        # x -> channels-major, spatially zero-padded, flattened, with M-lane
        # zero margins so every 3x3 window in the kernel is an in-bounds slice.
        x = jnp.transpose(feats, (0, 2, 1, 3, 4)).astype(jnp.float32)   # (T,C,B,H,W)
        x = jnp.pad(x, ((0, Tpad - T), (0, 0), (0, 0), (1, 1), (1, 1)))
        x = x.reshape(Tpad, C, Rp)
        x = jnp.pad(x, ((0, 0), (0, 0), (M, M)))                        # (Tpad,C,Rm)

        m_flat = jnp.pad(mask_i, ((0, Tpad - T), (0, 0))).reshape(Tpad * B)
        w_block = _pack_block_weights(w_f, b_f, w_b, b_b, Kp)
        bsel = _build_interior_sel(B, H, W)

        out_flat = _encode_level(m_flat, x, w_block, bsel,
                                 B=B, C=C, H=H, W=W, Tpad=Tpad)          # (C, Rp)
        out = out_flat.reshape(C, B, Hp, Wp)[:, :, 1:H + 1, 1:W + 1]
        outs.append(jnp.transpose(out, (1, 0, 2, 3)))                    # (B, C, H, W)
    return outs


# ----------------------------------------------------------------------------
# Pure-JAX reference (mirrors the PyTorch module exactly, NCHW).
# ----------------------------------------------------------------------------
def _ref_cell_step(x, h, c, w, b):
    comb = jnp.concatenate([x, h], axis=1)
    conv = jax.lax.conv_general_dilated(
        comb, w, window_strides=(1, 1), padding=((1, 1), (1, 1)),
        dimension_numbers=("NCHW", "OIHW", "NCHW"),
        precision=jax.lax.Precision.HIGHEST)
    conv = conv + b[None, :, None, None]
    cc_i, cc_f, cc_o, cc_g = jnp.split(conv, 4, axis=1)
    i = jax.nn.sigmoid(cc_i)
    f = jax.nn.sigmoid(cc_f)
    o = jax.nn.sigmoid(cc_o)
    g = jnp.tanh(cc_g)
    c_new = f * c + i * g
    h_new = o * jnp.tanh(c_new)
    return h_new, c_new


def sequence_encoder_reference(features, mask, params):
    outs = []
    for feats, (w_f, b_f, w_b, b_b) in zip(features, params):
        T, B, C, H, W = feats.shape
        z = jnp.zeros((B, C, H, W), jnp.float32)
        hf, cf, hb, cb = z, z, z, z
        for t in range(T):
            x = feats[t]
            m = mask[t].reshape(B, 1, 1, 1)
            nh, nc = _ref_cell_step(x, hf, cf, w_f, b_f)
            hf = jnp.where(m > 0, nh, hf)
            cf = jnp.where(m > 0, nc, cf)
            nh, nc = _ref_cell_step(x, hb, cb, w_b, b_b)
            hb = jnp.where(m > 0, nh, hb)
            cb = jnp.where(m > 0, nc, cb)
        outs.append((hf + hb) / 2.0)
    return outs


if __name__ == "__main__":
    key = jax.random.PRNGKey(0)
    T, B = 8, 2
    level_channels = [4, 8]       # SequenceEncoder(in_channels=[4, 8])
    level_spatial = [16, 8]
    keys = jax.random.split(key, 5 * len(level_channels) + 1)

    features = []
    params = []
    ki = 0
    for C, S in zip(level_channels, level_spatial):
        feats = jax.random.normal(keys[ki], (T, B, C, S, S), jnp.float32); ki += 1
        w_f = jax.random.normal(keys[ki], (4 * C, 2 * C, 3, 3), jnp.float32) * 0.1; ki += 1
        b_f = jax.random.normal(keys[ki], (4 * C,), jnp.float32) * 0.1; ki += 1
        w_b = jax.random.normal(keys[ki], (4 * C, 2 * C, 3, 3), jnp.float32) * 0.1; ki += 1
        b_b = jax.random.normal(keys[ki], (4 * C,), jnp.float32) * 0.1; ki += 1
        features.append(feats)
        params.append((w_f, b_f, w_b, b_b))
    mask = (jax.random.uniform(keys[ki], (T, B)) > 0.3).astype(jnp.float32)

    outs = sequence_encoder_pallas(features, mask, params)
    outs = [jax.block_until_ready(o) for o in outs]

    refs = sequence_encoder_reference(features, mask, params)
    for lvl, (o, r) in enumerate(zip(outs, refs)):
        err = float(jnp.max(jnp.abs(o - r)))
        if not (err < 2e-3):
            raise AssertionError(f"level {lvl}: mismatch vs reference, max abs err = {err}")

    print("KERNEL_OK")
</pallas_src>

<mosaic_0001>
module attributes {stable_mosaic.version = 11 : i64} {
  func.func @_seq_encoder_kernel(%arg0: i32, %arg1: memref<16xi32, #tpu.memory_space<smem>>, %arg2: memref<4x4x686xf32, #tpu.memory_space<vmem>>, %arg3: memref<32x128xf32, #tpu.memory_space<vmem>>, %arg4: memref<2x648xf32, #tpu.memory_space<vmem>>, %arg5: memref<4x648xf32, #tpu.memory_space<vmem>>, %arg6: memref<4x686xf32, #tpu.memory_space<vmem>>, %arg7: memref<4x648xf32, #tpu.memory_space<vmem>>, %arg8: memref<4x686xf32, #tpu.memory_space<vmem>>, %arg9: memref<4x648xf32, #tpu.memory_space<vmem>>, %arg10: memref<128x648xf32, #tpu.memory_space<vmem>>) attributes {dimension_semantics = [#tpu.dimension_semantics<arbitrary>], iteration_bounds = array<i64: 2>, scalar_prefetch = 1 : i64, scratch_operands = 5 : i64, tpu.core_type = #tpu.core_type<tc>, window_params = [{transform_indices = @transform_0, window_bounds = array<i64: 4, 4, 686>}, {pipeline_mode = #tpu.pipeline_mode<synchronous>, transform_indices = @transform_1, window_bounds = array<i64: 32, 128>}, {pipeline_mode = #tpu.pipeline_mode<synchronous>, transform_indices = @transform_2, window_bounds = array<i64: 2, 648>}, {pipeline_mode = #tpu.pipeline_mode<synchronous>, transform_indices = @transform_3, window_bounds = array<i64: 4, 648>}]} {
    %c0_i32 = arith.constant 0 : i32
    %0 = arith.cmpi eq, %arg0, %c0_i32 : i32
    %1 = arith.extui %0 : i1 to i32
    %c0_i32_0 = arith.constant 0 : i32
    %2 = arith.cmpi ne, %1, %c0_i32_0 : i32
    scf.if %2 {
      %cst_327 = arith.constant 0.000000e+00 : f32
      %616 = vector.broadcast %cst_327 : f32 to vector<4x686xf32>
      %c0_328 = arith.constant 0 : index
      %c0_329 = arith.constant 0 : index
      %617 = vector.load %arg6[%c0_328, %c0_329] : memref<4x686xf32, #tpu.memory_space<vmem>>, vector<4x686xf32>
      tpu.vector_store %arg6[%c0_328, %c0_329], %616 {strides = array<i32>} : memref<4x686xf32, #tpu.memory_space<vmem>>, vector<4x686xf32>,
      %cst_330 = arith.constant 0.000000e+00 : f32
      %618 = vector.broadcast %cst_330 : f32 to vector<4x648xf32>
      %c0_331 = arith.constant 0 : index
      %c0_332 = arith.constant 0 : index
      %619 = vector.load %arg7[%c0_331, %c0_332] : memref<4x648xf32, #tpu.memory_space<vmem>>, vector<4x648xf32>
      tpu.vector_store %arg7[%c0_331, %c0_332], %618 {strides = array<i32>} : memref<4x648xf32, #tpu.memory_space<vmem>>, vector<4x648xf32>,
      %cst_333 = arith.constant 0.000000e+00 : f32
      %620 = vector.broadcast %cst_333 : f32 to vector<4x686xf32>
      %c0_334 = arith.constant 0 : index
      %c0_335 = arith.constant 0 : index
      %621 = vector.load %arg8[%c0_334, %c0_335] : memref<4x686xf32, #tpu.memory_space<vmem>>, vector<4x686xf32>
      tpu.vector_store %arg8[%c0_334, %c0_335], %620 {strides = array<i32>} : memref<4x686xf32, #tpu.memory_space<vmem>>, vector<4x686xf32>,
      %cst_336 = arith.constant 0.000000e+00 : f32
      %622 = vector.broadcast %cst_336 : f32 to vector<4x648xf32>
      %c0_337 = arith.constant 0 : index
      %c0_338 = arith.constant 0 : index
      %623 = vector.load %arg9[%c0_337, %c0_338] : memref<4x648xf32, #tpu.memory_space<vmem>>, vector<4x648xf32>
      tpu.vector_store %arg9[%c0_337, %c0_338], %622 {strides = array<i32>} : memref<4x648xf32, #tpu.memory_space<vmem>>, vector<4x648xf32>,
      %cst_339 = arith.constant 0.000000e+00 : f32
      %624 = vector.broadcast %cst_339 : f32 to vector<128x648xf32>
      %c0_340 = arith.constant 0 : index
      %c0_341 = arith.constant 0 : index
      %625 = vector.load %arg10[%c0_340, %c0_341] : memref<128x648xf32, #tpu.memory_space<vmem>>, vector<128x648xf32>
      tpu.vector_store %arg10[%c0_340, %c0_341], %624 {strides = array<i32>} : memref<128x648xf32, #tpu.memory_space<vmem>>, vector<128x648xf32>,
      %cst_342 = arith.constant 1.000000e+00 : f32
      %626 = vector.broadcast %cst_342 : f32 to vector<1x648xf32>
      %c108 = arith.constant 108 : index
      %c0_343 = arith.constant 0 : index
      %627 = vector.load %arg10[%c108, %c0_343] : memref<128x648xf32, #tpu.memory_space<vmem>>, vector<1x648xf32>
      tpu.vector_store %arg10[%c108, %c0_343], %626 {strides = array<i32>} : memref<128x648xf32, #tpu.memory_space<vmem>>, vector<1x648xf32>,
    } else {
    }
    %c0 = arith.constant 0 : index
    %c0_1 = arith.constant 0 : index
    %3 = vector.load %arg3[%c0, %c0_1] : memref<32x128xf32, #tpu.memory_space<vmem>>, vector<32x128xf32>
    %c0_2 = arith.constant 0 : index
    %c0_3 = arith.constant 0 : index
    %4 = vector.load %arg4[%c0_2, %c0_3] : memref<2x648xf32, #tpu.memory_space<vmem>>, vector<2x648xf32>
    %c0_i32_4 = arith.constant 0 : i32
    %c4_i32 = arith.constant 4 : i32
    %5 = arith.muli %arg0, %c4_i32 : i32
    %6 = arith.addi %5, %c0_i32_4 : i32
    %c0_5 = arith.constant 0 : index
    %c0_6 = arith.constant 0 : index
    %7 = vector.load %arg6[%c0_5, %c0_6] : memref<4x686xf32, #tpu.memory_space<vmem>>, vector<4x686xf32>
    %c0_7 = arith.constant 0 : index
    %c0_8 = arith.constant 0 : index
    %8 = vector.load %arg8[%c0_7, %c0_8] : memref<4x686xf32, #tpu.memory_space<vmem>>, vector<4x686xf32>
    %9 = arith.index_cast %c0_i32_4 : i32 to index
    %c0_9 = arith.constant 0 : index
    %c0_10 = arith.constant 0 : index
    %10 = vector.load %arg2[%9, %c0_9, %c0_10] : memref<4x4x686xf32, #tpu.memory_space<vmem>>, vector<1x4x686xf32>
    %11 = vector.shape_cast %10 : vector<1x4x686xf32> to vector<4x686xf32>
    %12 = vector.extract_strided_slice %11 {offsets = [0, 0], sizes = [4, 648], strides = [1, 1]} : vector<4x686xf32> to vector<4x648xf32>
    %c0_11 = arith.constant 0 : index
    %c0_12 = arith.constant 0 : index
    %13 = vector.load %arg10[%c0_11, %c0_12] : memref<128x648xf32, #tpu.memory_space<vmem>>, vector<4x648xf32>
    tpu.vector_store %arg10[%c0_11, %c0_12], %12 {strides = array<i32>} : memref<128x648xf32, #tpu.memory_space<vmem>>, vector<4x648xf32>,
    %14 = vector.extract_strided_slice %11 {offsets = [0, 1], sizes = [4, 648], strides = [1, 1]} : vector<4x686xf32> to vector<4x648xf32>
    %c4 = arith.constant 4 : index
    %c0_13 = arith.constant 0 : index
    %15 = vector.load %arg10[%c4, %c0_13] : memref<128x648xf32, #tpu.memory_space<vmem>>, vector<4x648xf32>
    tpu.vector_store %arg10[%c4, %c0_13], %14 {strides = array<i32>} : memref<128x648xf32, #tpu.memory_space<vmem>>, vector<4x648xf32>,
    %16 = vector.extract_strided_slice %11 {offsets = [0, 2], sizes = [4, 648], strides = [1, 1]} : vector<4x686xf32> to vector<4x648xf32>
    %c8 = arith.constant 8 : index
    %c0_14 = arith.constant 0 : index
    %17 = vector.load %arg10[%c8, %c0_14] : memref<128x648xf32, #tpu.memory_space<vmem>>, vector<4x648xf32>
    tpu.vector_store %arg10[%c8, %c0_14], %16 {strides = array<i32>} : memref<128x648xf32, #tpu.memory_space<vmem>>, vector<4x648xf32>,
    %18 = vector.extract_strided_slice %11 {offsets = [0, 18], sizes = [4, 648], strides = [1, 1]} : vector<4x686xf32> to vector<4x648xf32>
    %c12 = arith.constant 12 : index
    %c0_15 = arith.constant 0 : index
    %19 = vector.load %arg10[%c12, %c0_15] : memref<128x648xf32, #tpu.memory_space<vmem>>, vector<4x648xf32>
    tpu.vector_store %arg10[%c12, %c0_15], %18 {strides = array<i32>} : memref<128x648xf32, #tpu.memory_space<vmem>>, vector<4x648xf32>,
    %20 = vector.extract_strided_slice %11 {offsets = [0, 19], sizes = [4, 648], strides = [1, 1]} : vector<4x686xf32> to vector<4x648xf32>
    %c16 = arith.constant 16 : index
    %c0_16 = arith.constant 0 : index
    %21 = vector.load %arg10[%c16, %c0_16] : memref<128x648xf32, #tpu.memory_space<vmem>>, vector<4x648xf32>
    tpu.vector_store %arg10[%c16, %c0_16], %20 {strides = array<i32>} : memref<128x648xf32, #tpu.memory_space<vmem>>, vector<4x648xf32>,
    %22 = vector.extract_strided_slice %11 {offsets = [0, 20], sizes = [4, 648], strides = [1, 1]} : vector<4x686xf32> to vector<4x648xf32>
    %c20 = arith.constant 20 : index
    %c0_17 = arith.constant 0 : index
    %23 = vector.load %arg10[%c20, %c0_17] : memref<128x648xf32, #tpu.memory_space<vmem>>, vector<4x648xf32>
    tpu.vector_store %arg10[%c20, %c0_17], %22 {strides = array<i32>} : memref<128x648xf32, #tpu.memory_space<vmem>>, vector<4x648xf32>,
    %24 = vector.extract_strided_slice %11 {offsets = [0, 36], sizes = [4, 648], strides = [1, 1]} : vector<4x686xf32> to vector<4x648xf32>
    %c24 = arith.constant 24 : index
    %c0_18 = arith.constant 0 : index
    %25 = vector.load %arg10[%c24, %c0_18] : memref<128x648xf32, #tpu.memory_space<vmem>>, vector<4x648xf32>
    tpu.vector_store %arg10[%c24, %c0_18], %24 {strides = array<i32>} : memref<128x648xf32, #tpu.memory_space<vmem>>, vector<4x648xf32>,
    %26 = vector.extract_strided_slice %11 {offsets = [0, 37], sizes = [4, 648], strides = [1, 1]} : vector<4x686xf32> to vector<4x648xf32>
    %c28 = arith.constant 28 : index
    %c0_19 = arith.constant 0 : index
    %27 = vector.load %arg10[%c28, %c0_19] : memref<128x648xf32, #tpu.memory_space<vmem>>, vector<4x648xf32>
    tpu.vector_store %arg10[%c28, %c0_19], %26 {strides = array<i32>} : memref<128x648xf32, #tpu.memory_space<vmem>>, vector<4x648xf32>,
    %28 = vector.extract_strided_slice %11 {offsets = [0, 38], sizes = [4, 648], strides = [1, 1]} : vector<4x686xf32> to vector<4x648xf32>
    %c32 = arith.constant 32 : index
    %c0_20 = arith.constant 0 : index
    %29 = vector.load %arg10[%c32, %c0_20] : memref<128x648xf32, #tpu.memory_space<vmem>>, vector<4x648xf32>
    tpu.vector_store %arg10[%c32, %c0_20], %28 {strides = array<i32>} : memref<128x648xf32, #tpu.memory_space<vmem>>, vector<4x648xf32>,
    %30 = vector.extract_strided_slice %7 {offsets = [0, 0], sizes = [4, 648], strides = [1, 1]} : vector<4x686xf32> to vector<4x648xf32>
    %c36 = arith.constant 36 : index
    %c0_21 = arith.constant 0 : index
    %31 = vector.load %arg10[%c36, %c0_21] : memref<128x648xf32, #tpu.memory_space<vmem>>, vector<4x648xf32>
    tpu.vector_store %arg10[%c36, %c0_21], %30 {strides = array<i32>} : memref<128x648xf32, #tpu.memory_space<vmem>>, vector<4x648xf32>,
    %32 = vector.extract_strided_slice %7 {offsets = [0, 1], sizes = [4, 648], strides = [1, 1]} : vector<4x686xf32> to vector<4x648xf32>
    %c40 = arith.constant 40 : index
    %c0_22 = arith.constant 0 : index
    %33 = vector.load %arg10[%c40, %c0_22] : memref<128x648xf32, #tpu.memory_space<vmem>>, vector<4x648xf32>
    tpu.vector_store %arg10[%c40, %c0_22], %32 {strides = array<i32>} : memref<128x648xf32, #tpu.memory_space<vmem>>, vector<4x648xf32>,
    %34 = vector.extract_strided_slice %7 {offsets = [0, 2], sizes = [4, 648], strides = [1, 1]} : vector<4x686xf32> to vector<4x648xf32>
    %c44 = arith.constant 44 : index
    %c0_23 = arith.constant 0 : index
    %35 = vector.load %arg10[%c44, %c0_23] : memref<128x648xf32, #tpu.memory_space<vmem>>, vector<4x648xf32>
    tpu.vector_store %arg10[%c44, %c0_23], %34 {strides = array<i32>} : memref<128x648xf32, #tpu.memory_space<vmem>>, vector<4x648xf32>,
    %36 = vector.extract_strided_slice %7 {offsets = [0, 18], sizes = [4, 648], strides = [1, 1]} : vector<4x686xf32> to vector<4x648xf32>
    %c48 = arith.constant 48 : index
    %c0_24 = arith.constant 0 : index
    %37 = vector.load %arg10[%c48, %c0_24] : memref<128x648xf32, #tpu.memory_space<vmem>>, vector<4x648xf32>
    tpu.vector_store %arg10[%c48, %c0_24], %36 {strides = array<i32>} : memref<128x648xf32, #tpu.memory_space<vmem>>, vector<4x648xf32>,
    %38 = vector.extract_strided_slice %7 {offsets = [0, 19], sizes = [4, 648], strides = [1, 1]} : vector<4x686xf32> to vector<4x648xf32>
    %c52 = arith.constant 52 : index
    %c0_25 = arith.constant 0 : index
    %39 = vector.load %arg10[%c52, %c0_25] : memref<128x648xf32, #tpu.memory_space<vmem>>, vector<4x648xf32>
    tpu.vector_store %arg10[%c52, %c0_25], %38 {strides = array<i32>} : memref<128x648xf32, #tpu.memory_space<vmem>>, vector<4x648xf32>,
    %40 = vector.extract_strided_slice %7 {offsets = [0, 20], sizes = [4, 648], strides = [1, 1]} : vector<4x686xf32> to vector<4x648xf32>
    %c56 = arith.constant 56 : index
    %c0_26 = arith.constant 0 : index
    %41 = vector.load %arg10[%c56, %c0_26] : memref<128x648xf32, #tpu.memory_space<vmem>>, vector<4x648xf32>
    tpu.vector_store %arg10[%c56, %c0_26], %40 {strides = array<i32>} : memref<128x648xf32, #tpu.memory_space<vmem>>, vector<4x648xf32>,
    %42 = vector.extract_strided_slice %7 {offsets = [0, 36], sizes = [4, 648], strides = [1, 1]} : vector<4x686xf32> to vector<4x648xf32>
    %c60 = arith.constant 60 : index
    %c0_27 = arith.constant 0 : index
    %43 = vector.load %arg10[%c60, %c0_27] : memref<128x648xf32, #tpu.memory_space<vmem>>, vector<4x648xf32>
    tpu.vector_store %arg10[%c60, %c0_27], %42 {strides = array<i32>} : memref<128x648xf32, #tpu.memory_space<vmem>>, vector<4x648xf32>,
    %44 = vector.extract_strided_slice %7 {offsets = [0, 37], sizes = [4, 648], strides = [1, 1]} : vector<4x686xf32> to vector<4x648xf32>
    %c64 = arith.constant 64 : index
    %c0_28 = arith.constant 0 : index
    %45 = vector.load %arg10[%c64, %c0_28] : memref<128x648xf32, #tpu.memory_space<vmem>>, vector<4x648xf32>
    tpu.vector_store %arg10[%c64, %c0_28], %44 {strides = array<i32>} : memref<128x648xf32, #tpu.memory_space<vmem>>, vector<4x648xf32>,
    %46 = vector.extract_strided_slice %7 {offsets = [0, 38], sizes = [4, 648], strides = [1, 1]} : vector<4x686xf32> to vector<4x648xf32>
    %c68 = arith.constant 68 : index
    %c0_29 = arith.constant 0 : index
    %47 = vector.load %arg10[%c68, %c0_29] : memref<128x648xf32, #tpu.memory_space<vmem>>, vector<4x648xf32>
    tpu.vector_store %arg10[%c68, %c0_29], %46 {strides = array<i32>} : memref<128x648xf32, #tpu.memory_space<vmem>>, vector<4x648xf32>,
    %48 = vector.extract_strided_slice %8 {offsets = [0, 0], sizes = [4, 648], strides = [1, 1]} : vector<4x686xf32> to vector<4x648xf32>
    %c72 = arith.constant 72 : index
    %c0_30 = arith.constant 0 : index
    %49 = vector.load %arg10[%c72, %c0_30] : memref<128x648xf32, #tpu.memory_space<vmem>>, vector<4x648xf32>
    tpu.vector_store %arg10[%c72, %c0_30], %48 {strides = array<i32>} : memref<128x648xf32, #tpu.memory_space<vmem>>, vector<4x648xf32>,
    %50 = vector.extract_strided_slice %8 {offsets = [0, 1], sizes = [4, 648], strides = [1, 1]} : vector<4x686xf32> to vector<4x648xf32>
    %c76 = arith.constant 76 : index
    %c0_31 = arith.constant 0 : index
    %51 = vector.load %arg10[%c76, %c0_31] : memref<128x648xf32, #tpu.memory_space<vmem>>, vector<4x648xf32>
    tpu.vector_store %arg10[%c76, %c0_31], %50 {strides = array<i32>} : memref<128x648xf32, #tpu.memory_space<vmem>>, vector<4x648xf32>,
    %52 = vector.extract_strided_slice %8 {offsets = [0, 2], sizes = [4, 648], strides = [1, 1]} : vector<4x686xf32> to vector<4x648xf32>
    %c80 = arith.constant 80 : index
    %c0_32 = arith.constant 0 : index
    %53 = vector.load %arg10[%c80, %c0_32] : memref<128x648xf32, #tpu.memory_space<vmem>>, vector<4x648xf32>
    tpu.vector_store %arg10[%c80, %c0_32], %52 {strides = array<i32>} : memref<128x648xf32, #tpu.memory_space<vmem>>, vector<4x648xf32>,
    %54 = vector.extract_strided_slice %8 {offsets = [0, 18], sizes = [4, 648], strides = [1, 1]} : vector<4x686xf32> to vector<4x648xf32>
    %c84 = arith.constant 84 : index
    %c0_33 = arith.constant 0 : index
    %55 = vector.load %arg10[%c84, %c0_33] : memref<128x648xf32, #tpu.memory_space<vmem>>, vector<4x648xf32>
    tpu.vector_store %arg10[%c84, %c0_33], %54 {strides = array<i32>} : memref<128x648xf32, #tpu.memory_space<vmem>>, vector<4x648xf32>,
    %56 = vector.extract_strided_slice %8 {offsets = [0, 19], sizes = [4, 648], strides = [1, 1]} : vector<4x686xf32> to vector<4x648xf32>
    %c88 = arith.constant 88 : index
    %c0_34 = arith.constant 0 : index
    %57 = vector.load %arg10[%c88, %c0_34] : memref<128x648xf32, #tpu.memory_space<vmem>>, vector<4x648xf32>
    tpu.vector_store %arg10[%c88, %c0_34], %56 {strides = array<i32>} : memref<128x648xf32, #tpu.memory_space<vmem>>, vector<4x648xf32>,
    %58 = vector.extract_strided_slice %8 {offsets = [0, 20], sizes = [4, 648], strides = [1, 1]} : vector<4x686xf32> to vector<4x648xf32>
    %c92 = arith.constant 92 : index
    %c0_35 = arith.constant 0 : index
    %59 = vector.load %arg10[%c92, %c0_35] : memref<128x648xf32, #tpu.memory_space<vmem>>, vector<4x648xf32>
    tpu.vector_store %arg10[%c92, %c0_35], %58 {strides = array<i32>} : memref<128x648xf32, #tpu.memory_space<vmem>>, vector<4x648xf32>,
    %60 = vector.extract_strided_slice %8 {offsets = [0, 36], sizes = [4, 648], strides = [1, 1]} : vector<4x686xf32> to vector<4x648xf32>
    %c96 = arith.constant 96 : index
    %c0_36 = arith.constant 0 : index
    %61 = vector.load %arg10[%c96, %c0_36] : memref<128x648xf32, #tpu.memory_space<vmem>>, vector<4x648xf32>
    tpu.vector_store %arg10[%c96, %c0_36], %60 {strides = array<i32>} : memref<128x648xf32, #tpu.memory_space<vmem>>, vector<4x648xf32>,
    %62 = vector.extract_strided_slice %8 {offsets = [0, 37], sizes = [4, 648], strides = [1, 1]} : vector<4x686xf32> to vector<4x648xf32>
    %c100 = arith.constant 100 : index
    %c0_37 = arith.constant 0 : index
    %63 = vector.load %arg10[%c100, %c0_37] : memref<128x648xf32, #tpu.memory_space<vmem>>, vector<4x648xf32>
    tpu.vector_store %arg10[%c100, %c0_37], %62 {strides = array<i32>} : memref<128x648xf32, #tpu.memory_space<vmem>>, vector<4x648xf32>,
    %64 = vector.extract_strided_slice %8 {offsets = [0, 38], sizes = [4, 648], strides = [1, 1]} : vector<4x686xf32> to vector<4x648xf32>
    %c104 = arith.constant 104 : index
    %c0_38 = arith.constant 0 : index
    %65 = vector.load %arg10[%c104, %c0_38] : memref<128x648xf32, #tpu.memory_space<vmem>>, vector<4x648xf32>
    tpu.vector_store %arg10[%c104, %c0_38], %64 {strides = array<i32>} : memref<128x648xf32, #tpu.memory_space<vmem>>, vector<4x648xf32>,
    %c0_39 = arith.constant 0 : index
    %c0_40 = arith.constant 0 : index
    %66 = vector.load %arg10[%c0_39, %c0_40] : memref<128x648xf32, #tpu.memory_space<vmem>>, vector<128x648xf32>
    %cst = arith.constant dense<0.000000e+00> : vector<32x648xf32>
    %67 = tpu.matmul %3, %66, %cst {dimension_numbers = #tpu.dot_dimension_numbers<[1], [0], [0], [1], [0, 0, 1, 1], [], []>} : vector<32x128xf32>, vector<128x648xf32>, vector<32x648xf32> -> vector<32x648xf32>
    %cst_41 = arith.constant 0.000000e+00 : f32
    %68 = vector.broadcast %cst_41 : f32 to vector<1x648xf32>
    %c2_i32 = arith.constant 2 : i32
    %69 = arith.muli %6, %c2_i32 : i32
    %c0_i32_42 = arith.constant 0 : i32
    %70 = arith.addi %69, %c0_i32_42 : i32
    %71 = arith.index_cast %70 : i32 to index
    %72 = memref.load %arg1[%71] : memref<16xi32, #tpu.memory_space<smem>>
    %73 = arith.sitofp %72 : i32 to f32
    %74 = vector.extract_strided_slice %4 {offsets = [0, 0], sizes = [1, 648], strides = [1, 1]} : vector<2x648xf32> to vector<1x648xf32>
    %75 = vector.broadcast %73 : f32 to vector<1x648xf32>
    %76 = arith.mulf %74, %75 : vector<1x648xf32>
    %77 = arith.addf %68, %76 : vector<1x648xf32>
    %c2_i32_43 = arith.constant 2 : i32
    %78 = arith.muli %6, %c2_i32_43 : i32
    %c1_i32 = arith.constant 1 : i32
    %79 = arith.addi %78, %c1_i32 : i32
    %80 = arith.index_cast %79 : i32 to index
    %81 = memref.load %arg1[%80] : memref<16xi32, #tpu.memory_space<smem>>
    %82 = arith.sitofp %81 : i32 to f32
    %83 = vector.extract_strided_slice %4 {offsets = [1, 0], sizes = [1, 648], strides = [1, 1]} : vector<2x648xf32> to vector<1x648xf32>
    %84 = vector.broadcast %82 : f32 to vector<1x648xf32>
    %85 = arith.mulf %83, %84 : vector<1x648xf32>
    %86 = arith.addf %77, %85 : vector<1x648xf32>
    %87 = vector.extract_strided_slice %67 {offsets = [0, 0], sizes = [16, 648], strides = [1, 1]} : vector<32x648xf32> to vector<16x648xf32>
    %88 = vector.extract_strided_slice %87 {offsets = [0, 0], sizes = [12, 648], strides = [1, 1]} : vector<16x648xf32> to vector<12x648xf32>
    %89 = arith.negf %88 : vector<12x648xf32>
    %90 = math.exp %89 : vector<12x648xf32>
    %cst_44 = arith.constant 1.000000e+00 : f32
    %91 = vector.broadcast %cst_44 : f32 to vector<12x648xf32>
    %92 = arith.addf %91, %90 : vector<12x648xf32>
    %93 = arith.divf %91, %92 : vector<12x648xf32>
    %94 = vector.extract_strided_slice %87 {offsets = [12, 0], sizes = [4, 648], strides = [1, 1]} : vector<16x648xf32> to vector<4x648xf32>
    %95 = math.tanh %94 : vector<4x648xf32>
    %96 = vector.extract_strided_slice %93 {offsets = [0, 0], sizes = [4, 648], strides = [1, 1]} : vector<12x648xf32> to vector<4x648xf32>
    %97 = vector.extract_strided_slice %93 {offsets = [4, 0], sizes = [4, 648], strides = [1, 1]} : vector<12x648xf32> to vector<4x648xf32>
    %98 = vector.extract_strided_slice %93 {offsets = [8, 0], sizes = [4, 648], strides = [1, 1]} : vector<12x648xf32> to vector<4x648xf32>
    %c0_45 = arith.constant 0 : index
    %c0_46 = arith.constant 0 : index
    %99 = vector.load %arg7[%c0_45, %c0_46] : memref<4x648xf32, #tpu.memory_space<vmem>>, vector<4x648xf32>
    %100 = arith.mulf %97, %99 : vector<4x648xf32>
    %101 = arith.mulf %96, %95 : vector<4x648xf32>
    %102 = arith.addf %100, %101 : vector<4x648xf32>
    %103 = math.tanh %102 : vector<4x648xf32>
    %104 = arith.mulf %98, %103 : vector<4x648xf32>
    %105 = vector.extract_strided_slice %7 {offsets = [0, 19], sizes = [4, 648], strides = [1, 1]} : vector<4x686xf32> to vector<4x648xf32>
    %106 = vector.broadcast %86 : vector<1x648xf32> to vector<4x648xf32>
    %107 = arith.mulf %106, %102 : vector<4x648xf32>
    %cst_47 = arith.constant 1.000000e+00 : f32
    %108 = vector.broadcast %cst_47 : f32 to vector<1x648xf32>
    %109 = arith.subf %108, %86 : vector<1x648xf32>
    %110 = vector.broadcast %109 : vector<1x648xf32> to vector<4x648xf32>
    %111 = arith.mulf %110, %99 : vector<4x648xf32>
    %112 = arith.addf %107, %111 : vector<4x648xf32>
    %c0_48 = arith.constant 0 : index
    %c0_49 = arith.constant 0 : index
    %113 = vector.load %arg7[%c0_48, %c0_49] : memref<4x648xf32, #tpu.memory_space<vmem>>, vector<4x648xf32>
    tpu.vector_store %arg7[%c0_48, %c0_49], %112 {strides = array<i32>} : memref<4x648xf32, #tpu.memory_space<vmem>>, vector<4x648xf32>,
    %114 = vector.broadcast %86 : vector<1x648xf32> to vector<4x648xf32>
    %115 = arith.mulf %114, %104 : vector<4x648xf32>
    %cst_50 = arith.constant 1.000000e+00 : f32
    %116 = vector.broadcast %cst_50 : f32 to vector<1x648xf32>
    %117 = arith.subf %116, %86 : vector<1x648xf32>
    %118 = vector.broadcast %117 : vector<1x648xf32> to vector<4x648xf32>
    %119 = arith.mulf %118, %105 : vector<4x648xf32>
    %120 = arith.addf %115, %119 : vector<4x648xf32>
    %c0_51 = arith.constant 0 : index
    %c19 = arith.constant 19 : index
    %121 = vector.load %arg6[%c0_51, %c19] : memref<4x686xf32, #tpu.memory_space<vmem>>, vector<4x648xf32>
    tpu.vector_store %arg6[%c0_51, %c19], %120 {strides = array<i32>} : memref<4x686xf32, #tpu.memory_space<vmem>>, vector<4x648xf32>,
    %122 = vector.extract_strided_slice %67 {offsets = [16, 0], sizes = [16, 648], strides = [1, 1]} : vector<32x648xf32> to vector<16x648xf32>
    %123 = vector.extract_strided_slice %122 {offsets = [0, 0], sizes = [12, 648], strides = [1, 1]} : vector<16x648xf32> to vector<12x648xf32>
    %124 = arith.negf %123 : vector<12x648xf32>
    %125 = math.exp %124 : vector<12x648xf32>
    %cst_52 = arith.constant 1.000000e+00 : f32
    %126 = vector.broadcast %cst_52 : f32 to vector<12x648xf32>
    %127 = arith.addf %126, %125 : vector<12x648xf32>
    %128 = arith.divf %126, %127 : vector<12x648xf32>
    %129 = vector.extract_strided_slice %122 {offsets = [12, 0], sizes = [4, 648], strides = [1, 1]} : vector<16x648xf32> to vector<4x648xf32>
    %130 = math.tanh %129 : vector<4x648xf32>
    %131 = vector.extract_strided_slice %128 {offsets = [0, 0], sizes = [4, 648], strides = [1, 1]} : vector<12x648xf32> to vector<4x648xf32>
    %132 = vector.extract_strided_slice %128 {offsets = [4, 0], sizes = [4, 648], strides = [1, 1]} : vector<12x648xf32> to vector<4x648xf32>
    %133 = vector.extract_strided_slice %128 {offsets = [8, 0], sizes = [4, 648], strides = [1, 1]} : vector<12x648xf32> to vector<4x648xf32>
    %c0_53 = arith.constant 0 : index
    %c0_54 = arith.constant 0 : index
    %134 = vector.load %arg9[%c0_53, %c0_54] : memref<4x648xf32, #tpu.memory_space<vmem>>, vector<4x648xf32>
    %135 = arith.mulf %132, %134 : vector<4x648xf32>
    %136 = arith.mulf %131, %130 : vector<4x648xf32>
    %137 = arith.addf %135, %136 : vector<4x648xf32>
    %138 = math.tanh %137 : vector<4x648xf32>
    %139 = arith.mulf %133, %138 : vector<4x648xf32>
    %140 = vector.extract_strided_slice %8 {offsets = [0, 19], sizes = [4, 648], strides = [1, 1]} : vector<4x686xf32> to vector<4x648xf32>
    %141 = vector.broadcast %86 : vector<1x648xf32> to vector<4x648xf32>
    %142 = arith.mulf %141, %137 : vector<4x648xf32>
    %cst_55 = arith.constant 1.000000e+00 : f32
    %143 = vector.broadcast %cst_55 : f32 to vector<1x648xf32>
    %144 = arith.subf %143, %86 : vector<1x648xf32>
    %145 = vector.broadcast %144 : vector<1x648xf32> to vector<4x648xf32>
    %146 = arith.mulf %145, %134 : vector<4x648xf32>
    %147 = arith.addf %142, %146 : vector<4x648xf32>
    %c0_56 = arith.constant 0 : index
    %c0_57 = arith.constant 0 : index
    %148 = vector.load %arg9[%c0_56, %c0_57] : memref<4x648xf32, #tpu.memory_space<vmem>>, vector<4x648xf32>
    tpu.vector_store %arg9[%c0_56, %c0_57], %147 {strides = array<i32>} : memref<4x648xf32, #tpu.memory_space<vmem>>, vector<4x648xf32>,
    %149 = vector.broadcast %86 : vector<1x648xf32> to vector<4x648xf32>
    %150 = arith.mulf %149, %139 : vector<4x648xf32>
    %cst_58 = arith.constant 1.000000e+00 : f32
    %151 = vector.broadcast %cst_58 : f32 to vector<1x648xf32>
    %152 = arith.subf %151, %86 : vector<1x648xf32>
    %153 = vector.broadcast %152 : vector<1x648xf32> to vector<4x648xf32>
    %154 = arith.mulf %153, %140 : vector<4x648xf32>
    %155 = arith.addf %150, %154 : vector<4x648xf32>
    %c0_59 = arith.constant 0 : index
    %c19_60 = arith.constant 19 : index
    %156 = vector.load %arg8[%c0_59, %c19_60] : memref<4x686xf32, #tpu.memory_space<vmem>>, vector<4x648xf32>
    tpu.vector_store %arg8[%c0_59, %c19_60], %155 {strides = array<i32>} : memref<4x686xf32, #tpu.memory_space<vmem>>, vector<4x648xf32>,
    %c1_i32_61 = arith.constant 1 : i32
    %c4_i32_62 = arith.constant 4 : i32
    %157 = arith.muli %arg0, %c4_i32_62 : i32
    %158 = arith.addi %157, %c1_i32_61 : i32
    %c0_63 = arith.constant 0 : index
    %c0_64 = arith.constant 0 : index
    %159 = vector.load %arg6[%c0_63, %c0_64] : memref<4x686xf32, #tpu.memory_space<vmem>>, vector<4x686xf32>
    %c0_65 = arith.constant 0 : index
    %c0_66 = arith.constant 0 : index
    %160 = vector.load %arg8[%c0_65, %c0_66] : memref<4x686xf32, #tpu.memory_space<vmem>>, vector<4x686xf32>
    %161 = arith.index_cast %c1_i32_61 : i32 to index
    %c0_67 = arith.constant 0 : index
    %c0_68 = arith.constant 0 : index
    %162 = vector.load %arg2[%161, %c0_67, %c0_68] : memref<4x4x686xf32, #tpu.memory_space<vmem>>, vector<1x4x686xf32>
    %163 = vector.shape_cast %162 : vector<1x4x686xf32> to vector<4x686xf32>
    %164 = vector.extract_strided_slice %163 {offsets = [0, 0], sizes = [4, 648], strides = [1, 1]} : vector<4x686xf32> to vector<4x648xf32>
    %c0_69 = arith.constant 0 : index
    %c0_70 = arith.constant 0 : index
    %165 = vector.load %arg10[%c0_69, %c0_70] : memref<128x648xf32, #tpu.memory_space<vmem>>, vector<4x648xf32>
    tpu.vector_store %arg10[%c0_69, %c0_70], %164 {strides = array<i32>} : memref<128x648xf32, #tpu.memory_space<vmem>>, vector<4x648xf32>,
    %166 = vector.extract_strided_slice %163 {offsets = [0, 1], sizes = [4, 648], strides = [1, 1]} : vector<4x686xf32> to vector<4x648xf32>
    %c4_71 = arith.constant 4 : index
    %c0_72 = arith.constant 0 : index
    %167 = vector.load %arg10[%c4_71, %c0_72] : memref<128x648xf32, #tpu.memory_space<vmem>>, vector<4x648xf32>
    tpu.vector_store %arg10[%c4_71, %c0_72], %166 {strides = array<i32>} : memref<128x648xf32, #tpu.memory_space<vmem>>, vector<4x648xf32>,
    %168 = vector.extract_strided_slice %163 {offsets = [0, 2], sizes = [4, 648], strides = [1, 1]} : vector<4x686xf32> to vector<4x648xf32>
    %c8_73 = arith.constant 8 : index
    %c0_74 = arith.constant 0 : index
    %169 = vector.load %arg10[%c8_73, %c0_74] : memref<128x648xf32, #tpu.memory_space<vmem>>, vector<4x648xf32>
    tpu.vector_store %arg10[%c8_73, %c0_74], %168 {strides = array<i32>} : memref<128x648xf32, #tpu.memory_space<vmem>>, vector<4x648xf32>,
    %170 = vector.extract_strided_slice %163 {offsets = [0, 18], sizes = [4, 648], strides = [1, 1]} : vector<4x686xf32> to vector<4x648xf32>
    %c12_75 = arith.constant 12 : index
    %c0_76 = arith.constant 0 : index
    %171 = vector.load %arg10[%c12_75, %c0_76] : memref<128x648xf32, #tpu.memory_space<vmem>>, vector<4x648xf32>
    tpu.vector_store %arg10[%c12_75, %c0_76], %170 {strides = array<i32>} : memref<128x648xf32, #tpu.memory_space<vmem>>, vector<4x648xf32>,
    %172 = vector.extract_strided_slice %163 {offsets = [0, 19], sizes = [4, 648], strides = [1, 1]} : vector<4x686xf32> to vector<4x648xf32>
    %c16_77 = arith.constant 16 : index
    %c0_78 = arith.constant 0 : index
    %173 = vector.load %arg10[%c16_77, %c0_78] : memref<128x648xf32, #tpu.memory_space<vmem>>, vector<4x648xf32>
    tpu.vector_store %arg10[%c16_77, %c0_78], %172 {strides = array<i32>} : memref<128x648xf32, #tpu.memory_space<vmem>>, vector<4x648xf32>,
    %174 = vector.extract_strided_slice %163 {offsets = [0, 20], sizes = [4, 648], strides = [1, 1]} : vector<4x686xf32> to vector<4x648xf32>
    %c20_79 = arith.constant 20 : index
    %c0_80 = arith.constant 0 : index
    %175 = vector.load %arg10[%c20_79, %c0_80] : memref<128x648xf32, #tpu.memory_space<vmem>>, vector<4x648xf32>
    tpu.vector_store %arg10[%c20_79, %c0_80], %174 {strides = array<i32>} : memref<128x648xf32, #tpu.memory_space<vmem>>, vector<4x648xf32>,
    %176 = vector.extract_strided_slice %163 {offsets = [0, 36], sizes = [4, 648], strides = [1, 1]} : vector<4x686xf32> to vector<4x648xf32>
    %c24_81 = arith.constant 24 : index
    %c0_82 = arith.constant 0 : index
    %177 = vector.load %arg10[%c24_81, %c0_82] : memref<128x648xf32, #tpu.memory_space<vmem>>, vector<4x648xf32>
    tpu.vector_store %arg10[%c24_81, %c0_82], %176 {strides = array<i32>} : memref<128x648xf32, #tpu.memory_space<vmem>>, vector<4x648xf32>,
    %178 = vector.extract_strided_slice %163 {offsets = [0, 37], sizes = [4, 648], strides = [1, 1]} : vector<4x686xf32> to vector<4x648xf32>
    %c28_83 = arith.constant 28 : index
    %c0_84 = arith.constant 0 : index
    %179 = vector.load %arg10[%c28_83, %c0_84] : memref<128x648xf32, #tpu.memory_space<vmem>>, vector<4x648xf32>
    tpu.vector_store %arg10[%c28_83, %c0_84], %178 {strides = array<i32>} : memref<128x648xf32, #tpu.memory_space<vmem>>, vector<4x648xf32>,
    %180 = vector.extract_strided_slice %163 {offsets = [0, 38], sizes = [4, 648], strides = [1, 1]} : vector<4x686xf32> to vector<4x648xf32>
    %c32_85 = arith.constant 32 : index
    %c0_86 = arith.constant 0 : index
    %181 = vector.load %arg10[%c32_85, %c0_86] : memref<128x648xf32, #tpu.memory_space<vmem>>, vector<4x648xf32>
    tpu.vector_store %arg10[%c32_85, %c0_86], %180 {strides = array<i32>} : memref<128x648xf32, #tpu.memory_space<vmem>>, vector<4x648xf32>,
    %182 = vector.extract_strided_slice %159 {offsets = [0, 0], sizes = [4, 648], strides = [1, 1]} : vector<4x686xf32> to vector<4x648xf32>
    %c36_87 = arith.constant 36 : index
    %c0_88 = arith.constant 0 : index
    %183 = vector.load %arg10[%c36_87, %c0_88] : memref<128x648xf32, #tpu.memory_space<vmem>>, vector<4x648xf32>
    tpu.vector_store %arg10[%c36_87, %c0_88], %182 {strides = array<i32>} : memref<128x648xf32, #tpu.memory_space<vmem>>, vector<4x648xf32>,
    %184 = vector.extract_strided_slice %159 {offsets = [0, 1], sizes = [4, 648], strides = [1, 1]} : vector<4x686xf32> to vector<4x648xf32>
    %c40_89 = arith.constant 40 : index
    %c0_90 = arith.constant 0 : index
    %185 = vector.load %arg10[%c40_89, %c0_90] : memref<128x648xf32, #tpu.memory_space<vmem>>, vector<4x648xf32>
    tpu.vector_store %arg10[%c40_89, %c0_90], %184 {strides = array<i32>} : memref<128x648xf32, #tpu.memory_space<vmem>>, vector<4x648xf32>,
    %186 = vector.extract_strided_slice %159 {offsets = [0, 2], sizes = [4, 648], strides = [1, 1]} : vector<4x686xf32> to vector<4x648xf32>
    %c44_91 = arith.constant 44 : index
    %c0_92 = arith.constant 0 : index
    %187 = vector.load %arg10[%c44_91, %c0_92] : memref<128x648xf32, #tpu.memory_space<vmem>>, vector<4x648xf32>
    tpu.vector_store %arg10[%c44_91, %c0_92], %186 {strides = array<i32>} : memref<128x648xf32, #tpu.memory_space<vmem>>, vector<4x648xf32>,
    %188 = vector.extract_strided_slice %159 {offsets = [0, 18], sizes = [4, 648], strides = [1, 1]} : vector<4x686xf32> to vector<4x648xf32>
    %c48_93 = arith.constant 48 : index
    %c0_94 = arith.constant 0 : index
    %189 = vector.load %arg10[%c48_93, %c0_94] : memref<128x648xf32, #tpu.memory_space<vmem>>, vector<4x648xf32>
    tpu.vector_store %arg10[%c48_93, %c0_94], %188 {strides = array<i32>} : memref<128x648xf32, #tpu.memory_space<vmem>>, vector<4x648xf32>,
    %190 = vector.extract_strided_slice %159 {offsets = [0, 19], sizes = [4, 648], strides = [1, 1]} : vector<4x686xf32> to vector<4x648xf32>
    %c52_95 = arith.constant 52 : index
    %c0_96 = arith.constant 0 : index
    %191 = vector.load %arg10[%c52_95, %c0_96] : memref<128x648xf32, #tpu.memory_space<vmem>>, vector<4x648xf32>
    tpu.vector_store %arg10[%c52_95, %c0_96], %190 {strides = array<i32>} : memref<128x648xf32, #tpu.memory_space<vmem>>, vector<4x648xf32>,
    %192 = vector.extract_strided_slice %159 {offsets = [0, 20], sizes = [4, 648], strides = [1, 1]} : vector<4x686xf32> to vector<4x648xf32>
    %c56_97 = arith.constant 56 : index
    %c0_98 = arith.constant 0 : index
    %193 = vector.load %arg10[%c56_97, %c0_98] : memref<128x648xf32, #tpu.memory_space<vmem>>, vector<4x648xf32>
    tpu.vector_store %arg10[%c56_97, %c0_98], %192 {strides = array<i32>} : memref<128x648xf32, #tpu.memory_space<vmem>>, vector<4x648xf32>,
    %194 = vector.extract_strided_slice %159 {offsets = [0, 36], sizes = [4, 648], strides = [1, 1]} : vector<4x686xf32> to vector<4x648xf32>
    %c60_99 = arith.constant 60 : index
    %c0_100 = arith.constant 0 : index
    %195 = vector.load %arg10[%c60_99, %c0_100] : memref<128x648xf32, #tpu.memory_space<vmem>>, vector<4x648xf32>
    tpu.vector_store %arg10[%c60_99, %c0_100], %194 {strides = array<i32>} : memref<128x648xf32, #tpu.memory_space<vmem>>, vector<4x648xf32>,
    %196 = vector.extract_strided_slice %159 {offsets = [0, 37], sizes = [4, 648], strides = [1, 1]} : vector<4x686xf32> to vector<4x648xf32>
    %c64_101 = arith.constant 64 : index
    %c0_102 = arith.constant 0 : index
    %197 = vector.load %arg10[%c64_101, %c0_102] : memref<128x648xf32, #tpu.memory_space<vmem>>, vector<4x648xf32>
    tpu.vector_store %arg10[%c64_101, %c0_102], %196 {strides = array<i32>} : memref<128x648xf32, #tpu.memory_space<vmem>>, vector<4x648xf32>,
    %198 = vector.extract_strided_slice %159 {offsets = [0, 38], sizes = [4, 648], strides = [1, 1]} : vector<4x686xf32> to vector<4x648xf32>
    %c68_103 = arith.constant 68 : index
    %c0_104 = arith.constant 0 : index
    %199 = vector.load %arg10[%c68_103, %c0_104] : memref<128x648xf32, #tpu.memory_space<vmem>>, vector<4x648xf32>
    tpu.vector_store %arg10[%c68_103, %c0_104], %198 {strides = array<i32>} : memref<128x648xf32, #tpu.memory_space<vmem>>, vector<4x648xf32>,
    %200 = vector.extract_strided_slice %160 {offsets = [0, 0], sizes = [4, 648], strides = [1, 1]} : vector<4x686xf32> to vector<4x648xf32>
    %c72_105 = arith.constant 72 : index
    %c0_106 = arith.constant 0 : index
    %201 = vector.load %arg10[%c72_105, %c0_106] : memref<128x648xf32, #tpu.memory_space<vmem>>, vector<4x648xf32>
    tpu.vector_store %arg10[%c72_105, %c0_106], %200 {strides = array<i32>} : memref<128x648xf32, #tpu.memory_space<vmem>>, vector<4x648xf32>,
    %202 = vector.extract_strided_slice %160 {offsets = [0, 1], sizes = [4, 648], strides = [1, 1]} : vector<4x686xf32> to vector<4x648xf32>
    %c76_107 = arith.constant 76 : index
    %c0_108 = arith.constant 0 : index
    %203 = vector.load %arg10[%c76_107, %c0_108] : memref<128x648xf32, #tpu.memory_space<vmem>>, vector<4x648xf32>
    tpu.vector_store %arg10[%c76_107, %c0_108], %202 {strides = array<i32>} : memref<128x648xf32, #tpu.memory_space<vmem>>, vector<4x648xf32>,
    %204 = vector.extract_strided_slice %160 {offsets = [0, 2], sizes = [4, 648], strides = [1, 1]} : vector<4x686xf32> to vector<4x648xf32>
    %c80_109 = arith.constant 80 : index
    %c0_110 = arith.constant 0 : index
    %205 = vector.load %arg10[%c80_109, %c0_110] : memref<128x648xf32, #tpu.memory_space<vmem>>, vector<4x648xf32>
    tpu.vector_store %arg10[%c80_109, %c0_110], %204 {strides = array<i32>} : memref<128x648xf32, #tpu.memory_space<vmem>>, vector<4x648xf32>,
    %206 = vector.extract_strided_slice %160 {offsets = [0, 18], sizes = [4, 648], strides = [1, 1]} : vector<4x686xf32> to vector<4x648xf32>
    %c84_111 = arith.constant 84 : index
    %c0_112 = arith.constant 0 : index
    %207 = vector.load %arg10[%c84_111, %c0_112] : memref<128x648xf32, #tpu.memory_space<vmem>>, vector<4x648xf32>
    tpu.vector_store %arg10[%c84_111, %c0_112], %206 {strides = array<i32>} : memref<128x648xf32, #tpu.memory_space<vmem>>, vector<4x648xf32>,
    %208 = vector.extract_strided_slice %160 {offsets = [0, 19], sizes = [4, 648], strides = [1, 1]} : vector<4x686xf32> to vector<4x648xf32>
    %c88_113 = arith.constant 88 : index
    %c0_114 = arith.constant 0 : index
    %209 = vector.load %arg10[%c88_113, %c0_114] : memref<128x648xf32, #tpu.memory_space<vmem>>, vector<4x648xf32>
    tpu.vector_store %arg10[%c88_113, %c0_114], %208 {strides = array<i32>} : memref<128x648xf32, #tpu.memory_space<vmem>>, vector<4x648xf32>,
    %210 = vector.extract_strided_slice %160 {offsets = [0, 20], sizes = [4, 648], strides = [1, 1]} : vector<4x686xf32> to vector<4x648xf32>
    %c92_115 = arith.constant 92 : index
    %c0_116 = arith.constant 0 : index
    %211 = vector.load %arg10[%c92_115, %c0_116] : memref<128x648xf32, #tpu.memory_space<vmem>>, vector<4x648xf32>
    tpu.vector_store %arg10[%c92_115, %c0_116], %210 {strides = array<i32>} : memref<128x648xf32, #tpu.memory_space<vmem>>, vector<4x648xf32>,
    %212 = vector.extract_strided_slice %160 {offsets = [0, 36], sizes = [4, 648], strides = [1, 1]} : vector<4x686xf32> to vector<4x648xf32>
    %c96_117 = arith.constant 96 : index
    %c0_118 = arith.constant 0 : index
    %213 = vector.load %arg10[%c96_117, %c0_118] : memref<128x648xf32, #tpu.memory_space<vmem>>, vector<4x648xf32>
    tpu.vector_store %arg10[%c96_117, %c0_118], %212 {strides = array<i32>} : memref<128x648xf32, #tpu.memory_space<vmem>>, vector<4x648xf32>,
    %214 = vector.extract_strided_slice %160 {offsets = [0, 37], sizes = [4, 648], strides = [1, 1]} : vector<4x686xf32> to vector<4x648xf32>
    %c100_119 = arith.constant 100 : index
    %c0_120 = arith.constant 0 : index
    %215 = vector.load %arg10[%c100_119, %c0_120] : memref<128x648xf32, #tpu.memory_space<vmem>>, vector<4x648xf32>
    tpu.vector_store %arg10[%c100_119, %c0_120], %214 {strides = array<i32>} : memref<128x648xf32, #tpu.memory_space<vmem>>, vector<4x648xf32>,
    %216 = vector.extract_strided_slice %160 {offsets = [0, 38], sizes = [4, 648], strides = [1, 1]} : vector<4x686xf32> to vector<4x648xf32>
    %c104_121 = arith.constant 104 : index
    %c0_122 = arith.constant 0 : index
    %217 = vector.load %arg10[%c104_121, %c0_122] : memref<128x648xf32, #tpu.memory_space<vmem>>, vector<4x648xf32>
    tpu.vector_store %arg10[%c104_121, %c0_122], %216 {strides = array<i32>} : memref<128x648xf32, #tpu.memory_space<vmem>>, vector<4x648xf32>,
    %c0_123 = arith.constant 0 : index
    %c0_124 = arith.constant 0 : index
    %218 = vector.load %arg10[%c0_123, %c0_124] : memref<128x648xf32, #tpu.memory_space<vmem>>, vector<128x648xf32>
    %cst_125 = arith.constant dense<0.000000e+00> : vector<32x648xf32>
    %219 = tpu.matmul %3, %218, %cst_125 {dimension_numbers = #tpu.dot_dimension_numbers<[1], [0], [0], [1], [0, 0, 1, 1], [], []>} : vector<32x128xf32>, vector<128x648xf32>, vector<32x648xf32> -> vector<32x648xf32>
    %cst_126 = arith.constant 0.000000e+00 : f32
    %220 = vector.broadcast %cst_126 : f32 to vector<1x648xf32>
    %c2_i32_127 = arith.constant 2 : i32
    %221 = arith.muli %158, %c2_i32_127 : i32
    %c0_i32_128 = arith.constant 0 : i32
    %222 = arith.addi %221, %c0_i32_128 : i32
    %223 = arith.index_cast %222 : i32 to index
    %224 = memref.load %arg1[%223] : memref<16xi32, #tpu.memory_space<smem>>
    %225 = arith.sitofp %224 : i32 to f32
    %226 = vector.extract_strided_slice %4 {offsets = [0, 0], sizes = [1, 648], strides = [1, 1]} : vector<2x648xf32> to vector<1x648xf32>
    %227 = vector.broadcast %225 : f32 to vector<1x648xf32>
    %228 = arith.mulf %226, %227 : vector<1x648xf32>
    %229 = arith.addf %220, %228 : vector<1x648xf32>
    %c2_i32_129 = arith.constant 2 : i32
    %230 = arith.muli %158, %c2_i32_129 : i32
    %c1_i32_130 = arith.constant 1 : i32
    %231 = arith.addi %230, %c1_i32_130 : i32
    %232 = arith.index_cast %231 : i32 to index
    %233 = memref.load %arg1[%232] : memref<16xi32, #tpu.memory_space<smem>>
    %234 = arith.sitofp %233 : i32 to f32
    %235 = vector.extract_strided_slice %4 {offsets = [1, 0], sizes = [1, 648], strides = [1, 1]} : vector<2x648xf32> to vector<1x648xf32>
    %236 = vector.broadcast %234 : f32 to vector<1x648xf32>
    %237 = arith.mulf %235, %236 : vector<1x648xf32>
    %238 = arith.addf %229, %237 : vector<1x648xf32>
    %239 = vector.extract_strided_slice %219 {offsets = [0, 0], sizes = [16, 648], strides = [1, 1]} : vector<32x648xf32> to vector<16x648xf32>
    %240 = vector.extract_strided_slice %239 {offsets = [0, 0], sizes = [12, 648], strides = [1, 1]} : vector<16x648xf32> to vector<12x648xf32>
    %241 = arith.negf %240 : vector<12x648xf32>
    %242 = math.exp %241 : vector<12x648xf32>
    %cst_131 = arith.constant 1.000000e+00 : f32
    %243 = vector.broadcast %cst_131 : f32 to vector<12x648xf32>
    %244 = arith.addf %243, %242 : vector<12x648xf32>
    %245 = arith.divf %243, %244 : vector<12x648xf32>
    %246 = vector.extract_strided_slice %239 {offsets = [12, 0], sizes = [4, 648], strides = [1, 1]} : vector<16x648xf32> to vector<4x648xf32>
    %247 = math.tanh %246 : vector<4x648xf32>
    %248 = vector.extract_strided_slice %245 {offsets = [0, 0], sizes = [4, 648], strides = [1, 1]} : vector<12x648xf32> to vector<4x648xf32>
    %249 = vector.extract_strided_slice %245 {offsets = [4, 0], sizes = [4, 648], strides = [1, 1]} : vector<12x648xf32> to vector<4x648xf32>
    %250 = vector.extract_strided_slice %245 {offsets = [8, 0], sizes = [4, 648], strides = [1, 1]} : vector<12x648xf32> to vector<4x648xf32>
    %c0_132 = arith.constant 0 : index
    %c0_133 = arith.constant 0 : index
    %251 = vector.load %arg7[%c0_132, %c0_133] : memref<4x648xf32, #tpu.memory_space<vmem>>, vector<4x648xf32>
    %252 = arith.mulf %249, %251 : vector<4x648xf32>
    %253 = arith.mulf %248, %247 : vector<4x648xf32>
    %254 = arith.addf %252, %253 : vector<4x648xf32>
    %255 = math.tanh %254 : vector<4x648xf32>
    %256 = arith.mulf %250, %255 : vector<4x648xf32>
    %257 = vector.extract_strided_slice %159 {offsets = [0, 19], sizes = [4, 648], strides = [1, 1]} : vector<4x686xf32> to vector<4x648xf32>
    %258 = vector.broadcast %238 : vector<1x648xf32> to vector<4x648xf32>
    %259 = arith.mulf %258, %254 : vector<4x648xf32>
    %cst_134 = arith.constant 1.000000e+00 : f32
    %260 = vector.broadcast %cst_134 : f32 to vector<1x648xf32>
    %261 = arith.subf %260, %238 : vector<1x648xf32>
    %262 = vector.broadcast %261 : vector<1x648xf32> to vector<4x648xf32>
    %263 = arith.mulf %262, %251 : vector<4x648xf32>
    %264 = arith.addf %259, %263 : vector<4x648xf32>
    %c0_135 = arith.constant 0 : index
    %c0_136 = arith.constant 0 : index
    %265 = vector.load %arg7[%c0_135, %c0_136] : memref<4x648xf32, #tpu.memory_space<vmem>>, vector<4x648xf32>
    tpu.vector_store %arg7[%c0_135, %c0_136], %264 {strides = array<i32>} : memref<4x648xf32, #tpu.memory_space<vmem>>, vector<4x648xf32>,
    %266 = vector.broadcast %238 : vector<1x648xf32> to vector<4x648xf32>
    %267 = arith.mulf %266, %256 : vector<4x648xf32>
    %cst_137 = arith.constant 1.000000e+00 : f32
    %268 = vector.broadcast %cst_137 : f32 to vector<1x648xf32>
    %269 = arith.subf %268, %238 : vector<1x648xf32>
    %270 = vector.broadcast %269 : vector<1x648xf32> to vector<4x648xf32>
    %271 = arith.mulf %270, %257 : vector<4x648xf32>
    %272 = arith.addf %267, %271 : vector<4x648xf32>
    %c0_138 = arith.constant 0 : index
    %c19_139 = arith.constant 19 : index
    %273 = vector.load %arg6[%c0_138, %c19_139] : memref<4x686xf32, #tpu.memory_space<vmem>>, vector<4x648xf32>
    tpu.vector_store %arg6[%c0_138, %c19_139], %272 {strides = array<i32>} : memref<4x686xf32, #tpu.memory_space<vmem>>, vector<4x648xf32>,
    %274 = vector.extract_strided_slice %219 {offsets = [16, 0], sizes = [16, 648], strides = [1, 1]} : vector<32x648xf32> to vector<16x648xf32>
    %275 = vector.extract_strided_slice %274 {offsets = [0, 0], sizes = [12, 648], strides = [1, 1]} : vector<16x648xf32> to vector<12x648xf32>
    %276 = arith.negf %275 : vector<12x648xf32>
    %277 = math.exp %276 : vector<12x648xf32>
    %cst_140 = arith.constant 1.000000e+00 : f32
    %278 = vector.broadcast %cst_140 : f32 to vector<12x648xf32>
    %279 = arith.addf %278, %277 : vector<12x648xf32>
    %280 = arith.divf %278, %279 : vector<12x648xf32>
    %281 = vector.extract_strided_slice %274 {offsets = [12, 0], sizes = [4, 648], strides = [1, 1]} : vector<16x648xf32> to vector<4x648xf32>
    %282 = math.tanh %281 : vector<4x648xf32>
    %283 = vector.extract_strided_slice %280 {offsets = [0, 0], sizes = [4, 648], strides = [1, 1]} : vector<12x648xf32> to vector<4x648xf32>
    %284 = vector.extract_strided_slice %280 {offsets = [4, 0], sizes = [4, 648], strides = [1, 1]} : vector<12x648xf32> to vector<4x648xf32>
    %285 = vector.extract_strided_slice %280 {offsets = [8, 0], sizes = [4, 648], strides = [1, 1]} : vector<12x648xf32> to vector<4x648xf32>
    %c0_141 = arith.constant 0 : index
    %c0_142 = arith.constant 0 : index
    %286 = vector.load %arg9[%c0_141, %c0_142] : memref<4x648xf32, #tpu.memory_space<vmem>>, vector<4x648xf32>
    %287 = arith.mulf %284, %286 : vector<4x648xf32>
    %288 = arith.mulf %283, %282 : vector<4x648xf32>
    %289 = arith.addf %287, %288 : vector<4x648xf32>
    %290 = math.tanh %289 : vector<4x648xf32>
    %291 = arith.mulf %285, %290 : vector<4x648xf32>
    %292 = vector.extract_strided_slice %160 {offsets = [0, 19], sizes = [4, 648], strides = [1, 1]} : vector<4x686xf32> to vector<4x648xf32>
    %293 = vector.broadcast %238 : vector<1x648xf32> to vector<4x648xf32>
    %294 = arith.mulf %293, %289 : vector<4x648xf32>
    %cst_143 = arith.constant 1.000000e+00 : f32
    %295 = vector.broadcast %cst_143 : f32 to vector<1x648xf32>
    %296 = arith.subf %295, %238 : vector<1x648xf32>
    %297 = vector.broadcast %296 : vector<1x648xf32> to vector<4x648xf32>
    %298 = arith.mulf %297, %286 : vector<4x648xf32>
    %299 = arith.addf %294, %298 : vector<4x648xf32>
    %c0_144 = arith.constant 0 : index
    %c0_145 = arith.constant 0 : index
    %300 = vector.load %arg9[%c0_144, %c0_145] : memref<4x648xf32, #tpu.memory_space<vmem>>, vector<4x648xf32>
    tpu.vector_store %arg9[%c0_144, %c0_145], %299 {strides = array<i32>} : memref<4x648xf32, #tpu.memory_space<vmem>>, vector<4x648xf32>,
    %301 = vector.broadcast %238 : vector<1x648xf32> to vector<4x648xf32>
    %302 = arith.mulf %301, %291 : vector<4x648xf32>
    %cst_146 = arith.constant 1.000000e+00 : f32
    %303 = vector.broadcast %cst_146 : f32 to vector<1x648xf32>
    %304 = arith.subf %303, %238 : vector<1x648xf32>
    %305 = vector.broadcast %304 : vector<1x648xf32> to vector<4x648xf32>
    %306 = arith.mulf %305, %292 : vector<4x648xf32>
    %307 = arith.addf %302, %306 : vector<4x648xf32>
    %c0_147 = arith.constant 0 : index
    %c19_148 = arith.constant 19 : index
    %308 = vector.load %arg8[%c0_147, %c19_148] : memref<4x686xf32, #tpu.memory_space<vmem>>, vector<4x648xf32>
    tpu.vector_store %arg8[%c0_147, %c19_148], %307 {strides = array<i32>} : memref<4x686xf32, #tpu.memory_space<vmem>>, vector<4x648xf32>,
    %c2_i32_149 = arith.constant 2 : i32
    %c4_i32_150 = arith.constant 4 : i32
    %309 = arith.muli %arg0, %c4_i32_150 : i32
    %310 = arith.addi %309, %c2_i32_149 : i32
    %c0_151 = arith.constant 0 : index
    %c0_152 = arith.constant 0 : index
    %311 = vector.load %arg6[%c0_151, %c0_152] : memref<4x686xf32, #tpu.memory_space<vmem>>, vector<4x686xf32>
    %c0_153 = arith.constant 0 : index
    %c0_154 = arith.constant 0 : index
    %312 = vector.load %arg8[%c0_153, %c0_154] : memref<4x686xf32, #tpu.memory_space<vmem>>, vector<4x686xf32>
    %313 = arith.index_cast %c2_i32_149 : i32 to index
    %c0_155 = arith.constant 0 : index
    %c0_156 = arith.constant 0 : index
    %314 = vector.load %arg2[%313, %c0_155, %c0_156] : memref<4x4x686xf32, #tpu.memory_space<vmem>>, vector<1x4x686xf32>
    %315 = vector.shape_cast %314 : vector<1x4x686xf32> to vector<4x686xf32>
    %316 = vector.extract_strided_slice %315 {offsets = [0, 0], sizes = [4, 648], strides = [1, 1]} : vector<4x686xf32> to vector<4x648xf32>
    %c0_157 = arith.constant 0 : index
    %c0_158 = arith.constant 0 : index
    %317 = vector.load %arg10[%c0_157, %c0_158] : memref<128x648xf32, #tpu.memory_space<vmem>>, vector<4x648xf32>
    tpu.vector_store %arg10[%c0_157, %c0_158], %316 {strides = array<i32>} : memref<128x648xf32, #tpu.memory_space<vmem>>, vector<4x648xf32>,
    %318 = vector.extract_strided_slice %315 {offsets = [0, 1], sizes = [4, 648], strides = [1, 1]} : vector<4x686xf32> to vector<4x648xf32>
    %c4_159 = arith.constant 4 : index
    %c0_160 = arith.constant 0 : index
    %319 = vector.load %arg10[%c4_159, %c0_160] : memref<128x648xf32, #tpu.memory_space<vmem>>, vector<4x648xf32>
    tpu.vector_store %arg10[%c4_159, %c0_160], %318 {strides = array<i32>} : memref<128x648xf32, #tpu.memory_space<vmem>>, vector<4x648xf32>,
    %320 = vector.extract_strided_slice %315 {offsets = [0, 2], sizes = [4, 648], strides = [1, 1]} : vector<4x686xf32> to vector<4x648xf32>
    %c8_161 = arith.constant 8 : index
    %c0_162 = arith.constant 0 : index
    %321 = vector.load %arg10[%c8_161, %c0_162] : memref<128x648xf32, #tpu.memory_space<vmem>>, vector<4x648xf32>
    tpu.vector_store %arg10[%c8_161, %c0_162], %320 {strides = array<i32>} : memref<128x648xf32, #tpu.memory_space<vmem>>, vector<4x648xf32>,
    %322 = vector.extract_strided_slice %315 {offsets = [0, 18], sizes = [4, 648], strides = [1, 1]} : vector<4x686xf32> to vector<4x648xf32>
    %c12_163 = arith.constant 12 : index
    %c0_164 = arith.constant 0 : index
    %323 = vector.load %arg10[%c12_163, %c0_164] : memref<128x648xf32, #tpu.memory_space<vmem>>, vector<4x648xf32>
    tpu.vector_store %arg10[%c12_163, %c0_164], %322 {strides = array<i32>} : memref<128x648xf32, #tpu.memory_space<vmem>>, vector<4x648xf32>,
    %324 = vector.extract_strided_slice %315 {offsets = [0, 19], sizes = [4, 648], strides = [1, 1]} : vector<4x686xf32> to vector<4x648xf32>
    %c16_165 = arith.constant 16 : index
    %c0_166 = arith.constant 0 : index
    %325 = vector.load %arg10[%c16_165, %c0_166] : memref<128x648xf32, #tpu.memory_space<vmem>>, vector<4x648xf32>
    tpu.vector_store %arg10[%c16_165, %c0_166], %324 {strides = array<i32>} : memref<128x648xf32, #tpu.memory_space<vmem>>, vector<4x648xf32>,
    %326 = vector.extract_strided_slice %315 {offsets = [0, 20], sizes = [4, 648], strides = [1, 1]} : vector<4x686xf32> to vector<4x648xf32>
    %c20_167 = arith.constant 20 : index
    %c0_168 = arith.constant 0 : index
    %327 = vector.load %arg10[%c20_167, %c0_168] : memref<128x648xf32, #tpu.memory_space<vmem>>, vector<4x648xf32>
    tpu.vector_store %arg10[%c20_167, %c0_168], %326 {strides = array<i32>} : memref<128x648xf32, #tpu.memory_space<vmem>>, vector<4x648xf32>,
    %328 = vector.extract_strided_slice %315 {offsets = [0, 36], sizes = [4, 648], strides = [1, 1]} : vector<4x686xf32> to vector<4x648xf32>
    %c24_169 = arith.constant 24 : index
    %c0_170 = arith.constant 0 : index
    %329 = vector.load %arg10[%c24_169, %c0_170] : memref<128x648xf32, #tpu.memory_space<vmem>>, vector<4x648xf32>
    tpu.vector_store %arg10[%c24_169, %c0_170], %328 {strides = array<i32>} : memref<128x648xf32, #tpu.memory_space<vmem>>, vector<4x648xf32>,
    %330 = vector.extract_strided_slice %315 {offsets = [0, 37], sizes = [4, 648], strides = [1, 1]} : vector<4x686xf32> to vector<4x648xf32>
    %c28_171 = arith.constant 28 : index
    %c0_172 = arith.constant 0 : index
    %331 = vector.load %arg10[%c28_171, %c0_172] : memref<128x648xf32, #tpu.memory_space<vmem>>, vector<4x648xf32>
    tpu.vector_store %arg10[%c28_171, %c0_172], %330 {strides = array<i32>} : memref<128x648xf32, #tpu.memory_space<vmem>>, vector<4x648xf32>,
    %332 = vector.extract_strided_slice %315 {offsets = [0, 38], sizes = [4, 648], strides = [1, 1]} : vector<4x686xf32> to vector<4x648xf32>
    %c32_173 = arith.constant 32 : index
    %c0_174 = arith.constant 0 : index
    %333 = vector.load %arg10[%c32_173, %c0_174] : memref<128x648xf32, #tpu.memory_space<vmem>>, vector<4x648xf32>
    tpu.vector_store %arg10[%c32_173, %c0_174], %332 {strides = array<i32>} : memref<128x648xf32, #tpu.memory_space<vmem>>, vector<4x648xf32>,
    %334 = vector.extract_strided_slice %311 {offsets = [0, 0], sizes = [4, 648], strides = [1, 1]} : vector<4x686xf32> to vector<4x648xf32>
    %c36_175 = arith.constant 36 : index
    %c0_176 = arith.constant 0 : index
    %335 = vector.load %arg10[%c36_175, %c0_176] : memref<128x648xf32, #tpu.memory_space<vmem>>, vector<4x648xf32>
    tpu.vector_store %arg10[%c36_175, %c0_176], %334 {strides = array<i32>} : memref<128x648xf32, #tpu.memory_space<vmem>>, vector<4x648xf32>,
    %336 = vector.extract_strided_slice %311 {offsets = [0, 1], sizes = [4, 648], strides = [1, 1]} : vector<4x686xf32> to vector<4x648xf32>
    %c40_177 = arith.constant 40 : index
    %c0_178 = arith.constant 0 : index
    %337 = vector.load %arg10[%c40_177, %c0_178] : memref<128x648xf32, #tpu.memory_space<vmem>>, vector<4x648xf32>
    tpu.vector_store %arg10[%c40_177, %c0_178], %336 {strides = array<i32>} : memref<128x648xf32, #tpu.memory_space<vmem>>, vector<4x648xf32>,
    %338 = vector.extract_strided_slice %311 {offsets = [0, 2], sizes = [4, 648], strides = [1, 1]} : vector<4x686xf32> to vector<4x648xf32>
    %c44_179 = arith.constant 44 : index
    %c0_180 = arith.constant 0 : index
    %339 = vector.load %arg10[%c44_179, %c0_180] : memref<128x648xf32, #tpu.memory_space<vmem>>, vector<4x648xf32>
    tpu.vector_store %arg10[%c44_179, %c0_180], %338 {strides = array<i32>} : memref<128x648xf32, #tpu.memory_space<vmem>>, vector<4x648xf32>,
    %340 = vector.extract_strided_slice %311 {offsets = [0, 18], sizes = [4, 648], strides = [1, 1]} : vector<4x686xf32> to vector<4x648xf32>
    %c48_181 = arith.constant 48 : index
    %c0_182 = arith.constant 0 : index
    %341 = vector.load %arg10[%c48_181, %c0_182] : memref<128x648xf32, #tpu.memory_space<vmem>>, vector<4x648xf32>
    tpu.vector_store %arg10[%c48_181, %c0_182], %340 {strides = array<i32>} : memref<128x648xf32, #tpu.memory_space<vmem>>, vector<4x648xf32>,
    %342 = vector.extract_strided_slice %311 {offsets = [0, 19], sizes = [4, 648], strides = [1, 1]} : vector<4x686xf32> to vector<4x648xf32>
    %c52_183 = arith.constant 52 : index
    %c0_184 = arith.constant 0 : index
    %343 = vector.load %arg10[%c52_183, %c0_184] : memref<128x648xf32, #tpu.memory_space<vmem>>, vector<4x648xf32>
    tpu.vector_store %arg10[%c52_183, %c0_184], %342 {strides = array<i32>} : memref<128x648xf32, #tpu.memory_space<vmem>>, vector<4x648xf32>,
    %344 = vector.extract_strided_slice %311 {offsets = [0, 20], sizes = [4, 648], strides = [1, 1]} : vector<4x686xf32> to vector<4x648xf32>
    %c56_185 = arith.constant 56 : index
    %c0_186 = arith.constant 0 : index
    %345 = vector.load %arg10[%c56_185, %c0_186] : memref<128x648xf32, #tpu.memory_space<vmem>>, vector<4x648xf32>
    tpu.vector_store %arg10[%c56_185, %c0_186], %344 {strides = array<i32>} : memref<128x648xf32, #tpu.memory_space<vmem>>, vector<4x648xf32>,
    %346 = vector.extract_strided_slice %311 {offsets = [0, 36], sizes = [4, 648], strides = [1, 1]} : vector<4x686xf32> to vector<4x648xf32>
    %c60_187 = arith.constant 60 : index
    %c0_188 = arith.constant 0 : index
    %347 = vector.load %arg10[%c60_187, %c0_188] : memref<128x648xf32, #tpu.memory_space<vmem>>, vector<4x648xf32>
    tpu.vector_store %arg10[%c60_187, %c0_188], %346 {strides = array<i32>} : memref<128x648xf32, #tpu.memory_space<vmem>>, vector<4x648xf32>,
    %348 = vector.extract_strided_slice %311 {offsets = [0, 37], sizes = [4, 648], strides = [1, 1]} : vector<4x686xf32> to vector<4x648xf32>
    %c64_189 = arith.constant 64 : index
    %c0_190 = arith.constant 0 : index
    %349 = vector.load %arg10[%c64_189, %c0_190] : memref<128x648xf32, #tpu.memory_space<vmem>>, vector<4x648xf32>
    tpu.vector_store %arg10[%c64_189, %c0_190], %348 {strides = array<i32>} : memref<128x648xf32, #tpu.memory_space<vmem>>, vector<4x648xf32>,
    %350 = vector.extract_strided_slice %311 {offsets = [0, 38], sizes = [4, 648], strides = [1, 1]} : vector<4x686xf32> to vector<4x648xf32>
    %c68_191 = arith.constant 68 : index
    %c0_192 = arith.constant 0 : index
    %351 = vector.load %arg10[%c68_191, %c0_192] : memref<128x648xf32, #tpu.memory_space<vmem>>, vector<4x648xf32>
    tpu.vector_store %arg10[%c68_191, %c0_192], %350 {strides = array<i32>} : memref<128x648xf32, #tpu.memory_space<vmem>>, vector<4x648xf32>,
    %352 = vector.extract_strided_slice %312 {offsets = [0, 0], sizes = [4, 648], strides = [1, 1]} : vector<4x686xf32> to vector<4x648xf32>
    %c72_193 = arith.constant 72 : index
    %c0_194 = arith.constant 0 : index
    %353 = vector.load %arg10[%c72_193, %c0_194] : memref<128x648xf32, #tpu.memory_space<vmem>>, vector<4x648xf32>
    tpu.vector_store %arg10[%c72_193, %c0_194], %352 {strides = array<i32>} : memref<128x648xf32, #tpu.memory_space<vmem>>, vector<4x648xf32>,
    %354 = vector.extract_strided_slice %312 {offsets = [0, 1], sizes = [4, 648], strides = [1, 1]} : vector<4x686xf32> to vector<4x648xf32>
    %c76_195 = arith.constant 76 : index
    %c0_196 = arith.constant 0 : index
    %355 = vector.load %arg10[%c76_195, %c0_196] : memref<128x648xf32, #tpu.memory_space<vmem>>, vector<4x648xf32>
    tpu.vector_store %arg10[%c76_195, %c0_196], %354 {strides = array<i32>} : memref<128x648xf32, #tpu.memory_space<vmem>>, vector<4x648xf32>,
    %356 = vector.extract_strided_slice %312 {offsets = [0, 2], sizes = [4, 648], strides = [1, 1]} : vector<4x686xf32> to vector<4x648xf32>
    %c80_197 = arith.constant 80 : index
    %c0_198 = arith.constant 0 : index
    %357 = vector.load %arg10[%c80_197, %c0_198] : memref<128x648xf32, #tpu.memory_space<vmem>>, vector<4x648xf32>
    tpu.vector_store %arg10[%c80_197, %c0_198], %356 {strides = array<i32>} : memref<128x648xf32, #tpu.memory_space<vmem>>, vector<4x648xf32>,
    %358 = vector.extract_strided_slice %312 {offsets = [0, 18], sizes = [4, 648], strides = [1, 1]} : vector<4x686xf32> to vector<4x648xf32>
    %c84_199 = arith.constant 84 : index
    %c0_200 = arith.constant 0 : index
    %359 = vector.load %arg10[%c84_199, %c0_200] : memref<128x648xf32, #tpu.memory_space<vmem>>, vector<4x648xf32>
    tpu.vector_store %arg10[%c84_199, %c0_200], %358 {strides = array<i32>} : memref<128x648xf32, #tpu.memory_space<vmem>>, vector<4x648xf32>,
    %360 = vector.extract_strided_slice %312 {offsets = [0, 19], sizes = [4, 648], strides = [1, 1]} : vector<4x686xf32> to vector<4x648xf32>
    %c88_201 = arith.constant 88 : index
    %c0_202 = arith.constant 0 : index
    %361 = vector.load %arg10[%c88_201, %c0_202] : memref<128x648xf32, #tpu.memory_space<vmem>>, vector<4x648xf32>
    tpu.vector_store %arg10[%c88_201, %c0_202], %360 {strides = array<i32>} : memref<128x648xf32, #tpu.memory_space<vmem>>, vector<4x648xf32>,
    %362 = vector.extract_strided_slice %312 {offsets = [0, 20], sizes = [4, 648], strides = [1, 1]} : vector<4x686xf32> to vector<4x648xf32>
    %c92_203 = arith.constant 92 : index
    %c0_204 = arith.constant 0 : index
    %363 = vector.load %arg10[%c92_203, %c0_204] : memref<128x648xf32, #tpu.memory_space<vmem>>, vector<4x648xf32>
    tpu.vector_store %arg10[%c92_203, %c0_204], %362 {strides = array<i32>} : memref<128x648xf32, #tpu.memory_space<vmem>>, vector<4x648xf32>,
    %364 = vector.extract_strided_slice %312 {offsets = [0, 36], sizes = [4, 648], strides = [1, 1]} : vector<4x686xf32> to vector<4x648xf32>
    %c96_205 = arith.constant 96 : index
    %c0_206 = arith.constant 0 : index
    %365 = vector.load %arg10[%c96_205, %c0_206] : memref<128x648xf32, #tpu.memory_space<vmem>>, vector<4x648xf32>
    tpu.vector_store %arg10[%c96_205, %c0_206], %364 {strides = array<i32>} : memref<128x648xf32, #tpu.memory_space<vmem>>, vector<4x648xf32>,
    %366 = vector.extract_strided_slice %312 {offsets = [0, 37], sizes = [4, 648], strides = [1, 1]} : vector<4x686xf32> to vector<4x648xf32>
    %c100_207 = arith.constant 100 : index
    %c0_208 = arith.constant 0 : index
    %367 = vector.load %arg10[%c100_207, %c0_208] : memref<128x648xf32, #tpu.memory_space<vmem>>, vector<4x648xf32>
    tpu.vector_store %arg10[%c100_207, %c0_208], %366 {strides = array<i32>} : memref<128x648xf32, #tpu.memory_space<vmem>>, vector<4x648xf32>,
    %368 = vector.extract_strided_slice %312 {offsets = [0, 38], sizes = [4, 648], strides = [1, 1]} : vector<4x686xf32> to vector<4x648xf32>
    %c104_209 = arith.constant 104 : index
    %c0_210 = arith.constant 0 : index
    %369 = vector.load %arg10[%c104_209, %c0_210] : memref<128x648xf32, #tpu.memory_space<vmem>>, vector<4x648xf32>
    tpu.vector_store %arg10[%c104_209, %c0_210], %368 {strides = array<i32>} : memref<128x648xf32, #tpu.memory_space<vmem>>, vector<4x648xf32>,
    %c0_211 = arith.constant 0 : index
    %c0_212 = arith.constant 0 : index
    %370 = vector.load %arg10[%c0_211, %c0_212] : memref<128x648xf32, #tpu.memory_space<vmem>>, vector<128x648xf32>
    %cst_213 = arith.constant dense<0.000000e+00> : vector<32x648xf32>
    %371 = tpu.matmul %3, %370, %cst_213 {dimension_numbers = #tpu.dot_dimension_numbers<[1], [0], [0], [1], [0, 0, 1, 1], [], []>} : vector<32x128xf32>, vector<128x648xf32>, vector<32x648xf32> -> vector<32x648xf32>
    %cst_214 = arith.constant 0.000000e+00 : f32
    %372 = vector.broadcast %cst_214 : f32 to vector<1x648xf32>
    %c2_i32_215 = arith.constant 2 : i32
    %373 = arith.muli %310, %c2_i32_215 : i32
    %c0_i32_216 = arith.constant 0 : i32
    %374 = arith.addi %373, %c0_i32_216 : i32
    %375 = arith.index_cast %374 : i32 to index
    %376 = memref.load %arg1[%375] : memref<16xi32, #tpu.memory_space<smem>>
    %377 = arith.sitofp %376 : i32 to f32
    %378 = vector.extract_strided_slice %4 {offsets = [0, 0], sizes = [1, 648], strides = [1, 1]} : vector<2x648xf32> to vector<1x648xf32>
    %379 = vector.broadcast %377 : f32 to vector<1x648xf32>
    %380 = arith.mulf %378, %379 : vector<1x648xf32>
    %381 = arith.addf %372, %380 : vector<1x648xf32>
    %c2_i32_217 = arith.constant 2 : i32
    %382 = arith.muli %310, %c2_i32_217 : i32
    %c1_i32_218 = arith.constant 1 : i32
    %383 = arith.addi %382, %c1_i32_218 : i32
    %384 = arith.index_cast %383 : i32 to index
    %385 = memref.load %arg1[%384] : memref<16xi32, #tpu.memory_space<smem>>
    %386 = arith.sitofp %385 : i32 to f32
    %387 = vector.extract_strided_slice %4 {offsets = [1, 0], sizes = [1, 648], strides = [1, 1]} : vector<2x648xf32> to vector<1x648xf32>
    %388 = vector.broadcast %386 : f32 to vector<1x648xf32>
    %389 = arith.mulf %387, %388 : vector<1x648xf32>
    %390 = arith.addf %381, %389 : vector<1x648xf32>
    %391 = vector.extract_strided_slice %371 {offsets = [0, 0], sizes = [16, 648], strides = [1, 1]} : vector<32x648xf32> to vector<16x648xf32>
    %392 = vector.extract_strided_slice %391 {offsets = [0, 0], sizes = [12, 648], strides = [1, 1]} : vector<16x648xf32> to vector<12x648xf32>
    %393 = arith.negf %392 : vector<12x648xf32>
    %394 = math.exp %393 : vector<12x648xf32>
    %cst_219 = arith.constant 1.000000e+00 : f32
    %395 = vector.broadcast %cst_219 : f32 to vector<12x648xf32>
    %396 = arith.addf %395, %394 : vector<12x648xf32>
    %397 = arith.divf %395, %396 : vector<12x648xf32>
    %398 = vector.extract_strided_slice %391 {offsets = [12, 0], sizes = [4, 648], strides = [1, 1]} : vector<16x648xf32> to vector<4x648xf32>
    %399 = math.tanh %398 : vector<4x648xf32>
    %400 = vector.extract_strided_slice %397 {offsets = [0, 0], sizes = [4, 648], strides = [1, 1]} : vector<12x648xf32> to vector<4x648xf32>
    %401 = vector.extract_strided_slice %397 {offsets = [4, 0], sizes = [4, 648], strides = [1, 1]} : vector<12x648xf32> to vector<4x648xf32>
    %402 = vector.extract_strided_slice %397 {offsets = [8, 0], sizes = [4, 648], strides = [1, 1]} : vector<12x648xf32> to vector<4x648xf32>
    %c0_220 = arith.constant 0 : index
    %c0_221 = arith.constant 0 : index
    %403 = vector.load %arg7[%c0_220, %c0_221] : memref<4x648xf32, #tpu.memory_space<vmem>>, vector<4x648xf32>
    %404 = arith.mulf %401, %403 : vector<4x648xf32>
    %405 = arith.mulf %400, %399 : vector<4x648xf32>
    %406 = arith.addf %404, %405 : vector<4x648xf32>
    %407 = math.tanh %406 : vector<4x648xf32>
    %408 = arith.mulf %402, %407 : vector<4x648xf32>
    %409 = vector.extract_strided_slice %311 {offsets = [0, 19], sizes = [4, 648], strides = [1, 1]} : vector<4x686xf32> to vector<4x648xf32>
    %410 = vector.broadcast %390 : vector<1x648xf32> to vector<4x648xf32>
    %411 = arith.mulf %410, %406 : vector<4x648xf32>
    %cst_222 = arith.constant 1.000000e+00 : f32
    %412 = vector.broadcast %cst_222 : f32 to vector<1x648xf32>
    %413 = arith.subf %412, %390 : vector<1x648xf32>
    %414 = vector.broadcast %413 : vector<1x648xf32> to vector<4x648xf32>
    %415 = arith.mulf %414, %403 : vector<4x648xf32>
    %416 = arith.addf %411, %415 : vector<4x648xf32>
    %c0_223 = arith.constant 0 : index
    %c0_224 = arith.constant 0 : index
    %417 = vector.load %arg7[%c0_223, %c0_224] : memref<4x648xf32, #tpu.memory_space<vmem>>, vector<4x648xf32>
    tpu.vector_store %arg7[%c0_223, %c0_224], %416 {strides = array<i32>} : memref<4x648xf32, #tpu.memory_space<vmem>>, vector<4x648xf32>,
    %418 = vector.broadcast %390 : vector<1x648xf32> to vector<4x648xf32>
    %419 = arith.mulf %418, %408 : vector<4x648xf32>
    %cst_225 = arith.constant 1.000000e+00 : f32
    %420 = vector.broadcast %cst_225 : f32 to vector<1x648xf32>
    %421 = arith.subf %420, %390 : vector<1x648xf32>
    %422 = vector.broadcast %421 : vector<1x648xf32> to vector<4x648xf32>
    %423 = arith.mulf %422, %409 : vector<4x648xf32>
    %424 = arith.addf %419, %423 : vector<4x648xf32>
    %c0_226 = arith.constant 0 : index
    %c19_227 = arith.constant 19 : index
    %425 = vector.load %arg6[%c0_226, %c19_227] : memref<4x686xf32, #tpu.memory_space<vmem>>, vector<4x648xf32>
    tpu.vector_store %arg6[%c0_226, %c19_227], %424 {strides = array<i32>} : memref<4x686xf32, #tpu.memory_space<vmem>>, vector<4x648xf32>,
    %426 = vector.extract_strided_slice %371 {offsets = [16, 0], sizes = [16, 648], strides = [1, 1]} : vector<32x648xf32> to vector<16x648xf32>
    %427 = vector.extract_strided_slice %426 {offsets = [0, 0], sizes = [12, 648], strides = [1, 1]} : vector<16x648xf32> to vector<12x648xf32>
    %428 = arith.negf %427 : vector<12x648xf32>
    %429 = math.exp %428 : vector<12x648xf32>
    %cst_228 = arith.constant 1.000000e+00 : f32
    %430 = vector.broadcast %cst_228 : f32 to vector<12x648xf32>
    %431 = arith.addf %430, %429 : vector<12x648xf32>
    %432 = arith.divf %430, %431 : vector<12x648xf32>
    %433 = vector.extract_strided_slice %426 {offsets = [12, 0], sizes = [4, 648], strides = [1, 1]} : vector<16x648xf32> to vector<4x648xf32>
    %434 = math.tanh %433 : vector<4x648xf32>
    %435 = vector.extract_strided_slice %432 {offsets = [0, 0], sizes = [4, 648], strides = [1, 1]} : vector<12x648xf32> to vector<4x648xf32>
    %436 = vector.extract_strided_slice %432 {offsets = [4, 0], sizes = [4, 648], strides = [1, 1]} : vector<12x648xf32> to vector<4x648xf32>
    %437 = vector.extract_strided_slice %432 {offsets = [8, 0], sizes = [4, 648], strides = [1, 1]} : vector<12x648xf32> to vector<4x648xf32>
    %c0_229 = arith.constant 0 : index
    %c0_230 = arith.constant 0 : index
    %438 = vector.load %arg9[%c0_229, %c0_230] : memref<4x648xf32, #tpu.memory_space<vmem>>, vector<4x648xf32>
    %439 = arith.mulf %436, %438 : vector<4x648xf32>
    %440 = arith.mulf %435, %434 : vector<4x648xf32>
    %441 = arith.addf %439, %440 : vector<4x648xf32>
    %442 = math.tanh %441 : vector<4x648xf32>
    %443 = arith.mulf %437, %442 : vector<4x648xf32>
    %444 = vector.extract_strided_slice %312 {offsets = [0, 19], sizes = [4, 648], strides = [1, 1]} : vector<4x686xf32> to vector<4x648xf32>
    %445 = vector.broadcast %390 : vector<1x648xf32> to vector<4x648xf32>
    %446 = arith.mulf %445, %441 : vector<4x648xf32>
    %cst_231 = arith.constant 1.000000e+00 : f32
    %447 = vector.broadcast %cst_231 : f32 to vector<1x648xf32>
    %448 = arith.subf %447, %390 : vector<1x648xf32>
    %449 = vector.broadcast %448 : vector<1x648xf32> to vector<4x648xf32>
    %450 = arith.mulf %449, %438 : vector<4x648xf32>
    %451 = arith.addf %446, %450 : vector<4x648xf32>
    %c0_232 = arith.constant 0 : index
    %c0_233 = arith.constant 0 : index
    %452 = vector.load %arg9[%c0_232, %c0_233] : memref<4x648xf32, #tpu.memory_space<vmem>>, vector<4x648xf32>
    tpu.vector_store %arg9[%c0_232, %c0_233], %451 {strides = array<i32>} : memref<4x648xf32, #tpu.memory_space<vmem>>, vector<4x648xf32>,
    %453 = vector.broadcast %390 : vector<1x648xf32> to vector<4x648xf32>
    %454 = arith.mulf %453, %443 : vector<4x648xf32>
    %cst_234 = arith.constant 1.000000e+00 : f32
    %455 = vector.broadcast %cst_234 : f32 to vector<1x648xf32>
    %456 = arith.subf %455, %390 : vector<1x648xf32>
    %457 = vector.broadcast %456 : vector<1x648xf32> to vector<4x648xf32>
    %458 = arith.mulf %457, %444 : vector<4x648xf32>
    %459 = arith.addf %454, %458 : vector<4x648xf32>
    %c0_235 = arith.constant 0 : index
    %c19_236 = arith.constant 19 : index
    %460 = vector.load %arg8[%c0_235, %c19_236] : memref<4x686xf32, #tpu.memory_space<vmem>>, vector<4x648xf32>
    tpu.vector_store %arg8[%c0_235, %c19_236], %459 {strides = array<i32>} : memref<4x686xf32, #tpu.memory_space<vmem>>, vector<4x648xf32>,
    %c3_i32 = arith.constant 3 : i32
    %c4_i32_237 = arith.constant 4 : i32
    %461 = arith.muli %arg0, %c4_i32_237 : i32
    %462 = arith.addi %461, %c3_i32 : i32
    %c0_238 = arith.constant 0 : index
    %c0_239 = arith.constant 0 : index
    %463 = vector.load %arg6[%c0_238, %c0_239] : memref<4x686xf32, #tpu.memory_space<vmem>>, vector<4x686xf32>
    %c0_240 = arith.constant 0 : index
    %c0_241 = arith.constant 0 : index
    %464 = vector.load %arg8[%c0_240, %c0_241] : memref<4x686xf32, #tpu.memory_space<vmem>>, vector<4x686xf32>
    %465 = arith.index_cast %c3_i32 : i32 to index
    %c0_242 = arith.constant 0 : index
    %c0_243 = arith.constant 0 : index
    %466 = vector.load %arg2[%465, %c0_242, %c0_243] : memref<4x4x686xf32, #tpu.memory_space<vmem>>, vector<1x4x686xf32>
    %467 = vector.shape_cast %466 : vector<1x4x686xf32> to vector<4x686xf32>
    %468 = vector.extract_strided_slice %467 {offsets = [0, 0], sizes = [4, 648], strides = [1, 1]} : vector<4x686xf32> to vector<4x648xf32>
    %c0_244 = arith.constant 0 : index
    %c0_245 = arith.constant 0 : index
    %469 = vector.load %arg10[%c0_244, %c0_245] : memref<128x648xf32, #tpu.memory_space<vmem>>, vector<4x648xf32>
    tpu.vector_store %arg10[%c0_244, %c0_245], %468 {strides = array<i32>} : memref<128x648xf32, #tpu.memory_space<vmem>>, vector<4x648xf32>,
    %470 = vector.extract_strided_slice %467 {offsets = [0, 1], sizes = [4, 648], strides = [1, 1]} : vector<4x686xf32> to vector<4x648xf32>
    %c4_246 = arith.constant 4 : index
    %c0_247 = arith.constant 0 : index
    %471 = vector.load %arg10[%c4_246, %c0_247] : memref<128x648xf32, #tpu.memory_space<vmem>>, vector<4x648xf32>
    tpu.vector_store %arg10[%c4_246, %c0_247], %470 {strides = array<i32>} : memref<128x648xf32, #tpu.memory_space<vmem>>, vector<4x648xf32>,
    %472 = vector.extract_strided_slice %467 {offsets = [0, 2], sizes = [4, 648], strides = [1, 1]} : vector<4x686xf32> to vector<4x648xf32>
    %c8_248 = arith.constant 8 : index
    %c0_249 = arith.constant 0 : index
    %473 = vector.load %arg10[%c8_248, %c0_249] : memref<128x648xf32, #tpu.memory_space<vmem>>, vector<4x648xf32>
    tpu.vector_store %arg10[%c8_248, %c0_249], %472 {strides = array<i32>} : memref<128x648xf32, #tpu.memory_space<vmem>>, vector<4x648xf32>,
    %474 = vector.extract_strided_slice %467 {offsets = [0, 18], sizes = [4, 648], strides = [1, 1]} : vector<4x686xf32> to vector<4x648xf32>
    %c12_250 = arith.constant 12 : index
    %c0_251 = arith.constant 0 : index
    %475 = vector.load %arg10[%c12_250, %c0_251] : memref<128x648xf32, #tpu.memory_space<vmem>>, vector<4x648xf32>
    tpu.vector_store %arg10[%c12_250, %c0_251], %474 {strides = array<i32>} : memref<128x648xf32, #tpu.memory_space<vmem>>, vector<4x648xf32>,
    %476 = vector.extract_strided_slice %467 {offsets = [0, 19], sizes = [4, 648], strides = [1, 1]} : vector<4x686xf32> to vector<4x648xf32>
    %c16_252 = arith.constant 16 : index
    %c0_253 = arith.constant 0 : index
    %477 = vector.load %arg10[%c16_252, %c0_253] : memref<128x648xf32, #tpu.memory_space<vmem>>, vector<4x648xf32>
    tpu.vector_store %arg10[%c16_252, %c0_253], %476 {strides = array<i32>} : memref<128x648xf32, #tpu.memory_space<vmem>>, vector<4x648xf32>,
    %478 = vector.extract_strided_slice %467 {offsets = [0, 20], sizes = [4, 648], strides = [1, 1]} : vector<4x686xf32> to vector<4x648xf32>
    %c20_254 = arith.constant 20 : index
    %c0_255 = arith.constant 0 : index
    %479 = vector.load %arg10[%c20_254, %c0_255] : memref<128x648xf32, #tpu.memory_space<vmem>>, vector<4x648xf32>
    tpu.vector_store %arg10[%c20_254, %c0_255], %478 {strides = array<i32>} : memref<128x648xf32, #tpu.memory_space<vmem>>, vector<4x648xf32>,
    %480 = vector.extract_strided_slice %467 {offsets = [0, 36], sizes = [4, 648], strides = [1, 1]} : vector<4x686xf32> to vector<4x648xf32>
    %c24_256 = arith.constant 24 : index
    %c0_257 = arith.constant 0 : index
    %481 = vector.load %arg10[%c24_256, %c0_257] : memref<128x648xf32, #tpu.memory_space<vmem>>, vector<4x648xf32>
    tpu.vector_store %arg10[%c24_256, %c0_257], %480 {strides = array<i32>} : memref<128x648xf32, #tpu.memory_space<vmem>>, vector<4x648xf32>,
    %482 = vector.extract_strided_slice %467 {offsets = [0, 37], sizes = [4, 648], strides = [1, 1]} : vector<4x686xf32> to vector<4x648xf32>
    %c28_258 = arith.constant 28 : index
    %c0_259 = arith.constant 0 : index
    %483 = vector.load %arg10[%c28_258, %c0_259] : memref<128x648xf32, #tpu.memory_space<vmem>>, vector<4x648xf32>
    tpu.vector_store %arg10[%c28_258, %c0_259], %482 {strides = array<i32>} : memref<128x648xf32, #tpu.memory_space<vmem>>, vector<4x648xf32>,
    %484 = vector.extract_strided_slice %467 {offsets = [0, 38], sizes = [4, 648], strides = [1, 1]} : vector<4x686xf32> to vector<4x648xf32>
    %c32_260 = arith.constant 32 : index
    %c0_261 = arith.constant 0 : index
    %485 = vector.load %arg10[%c32_260, %c0_261] : memref<128x648xf32, #tpu.memory_space<vmem>>, vector<4x648xf32>
    tpu.vector_store %arg10[%c32_260, %c0_261], %484 {strides = array<i32>} : memref<128x648xf32, #tpu.memory_space<vmem>>, vector<4x648xf32>,
    %486 = vector.extract_strided_slice %463 {offsets = [0, 0], sizes = [4, 648], strides = [1, 1]} : vector<4x686xf32> to vector<4x648xf32>
    %c36_262 = arith.constant 36 : index
    %c0_263 = arith.constant 0 : index
    %487 = vector.load %arg10[%c36_262, %c0_263] : memref<128x648xf32, #tpu.memory_space<vmem>>, vector<4x648xf32>
    tpu.vector_store %arg10[%c36_262, %c0_263], %486 {strides = array<i32>} : memref<128x648xf32, #tpu.memory_space<vmem>>, vector<4x648xf32>,
    %488 = vector.extract_strided_slice %463 {offsets = [0, 1], sizes = [4, 648], strides = [1, 1]} : vector<4x686xf32> to vector<4x648xf32>
    %c40_264 = arith.constant 40 : index
    %c0_265 = arith.constant 0 : index
    %489 = vector.load %arg10[%c40_264, %c0_265] : memref<128x648xf32, #tpu.memory_space<vmem>>, vector<4x648xf32>
    tpu.vector_store %arg10[%c40_264, %c0_265], %488 {strides = array<i32>} : memref<128x648xf32, #tpu.memory_space<vmem>>, vector<4x648xf32>,
    %490 = vector.extract_strided_slice %463 {offsets = [0, 2], sizes = [4, 648], strides = [1, 1]} : vector<4x686xf32> to vector<4x648xf32>
    %c44_266 = arith.constant 44 : index
    %c0_267 = arith.constant 0 : index
    %491 = vector.load %arg10[%c44_266, %c0_267] : memref<128x648xf32, #tpu.memory_space<vmem>>, vector<4x648xf32>
    tpu.vector_store %arg10[%c44_266, %c0_267], %490 {strides = array<i32>} : memref<128x648xf32, #tpu.memory_space<vmem>>, vector<4x648xf32>,
    %492 = vector.extract_strided_slice %463 {offsets = [0, 18], sizes = [4, 648], strides = [1, 1]} : vector<4x686xf32> to vector<4x648xf32>
    %c48_268 = arith.constant 48 : index
    %c0_269 = arith.constant 0 : index
    %493 = vector.load %arg10[%c48_268, %c0_269] : memref<128x648xf32, #tpu.memory_space<vmem>>, vector<4x648xf32>
    tpu.vector_store %arg10[%c48_268, %c0_269], %492 {strides = array<i32>} : memref<128x648xf32, #tpu.memory_space<vmem>>, vector<4x648xf32>,
    %494 = vector.extract_strided_slice %463 {offsets = [0, 19], sizes = [4, 648], strides = [1, 1]} : vector<4x686xf32> to vector<4x648xf32>
    %c52_270 = arith.constant 52 : index
    %c0_271 = arith.constant 0 : index
    %495 = vector.load %arg10[%c52_270, %c0_271] : memref<128x648xf32, #tpu.memory_space<vmem>>, vector<4x648xf32>
    tpu.vector_store %arg10[%c52_270, %c0_271], %494 {strides = array<i32>} : memref<128x648xf32, #tpu.memory_space<vmem>>, vector<4x648xf32>,
    %496 = vector.extract_strided_slice %463 {offsets = [0, 20], sizes = [4, 648], strides = [1, 1]} : vector<4x686xf32> to vector<4x648xf32>
    %c56_272 = arith.constant 56 : index
    %c0_273 = arith.constant 0 : index
    %497 = vector.load %arg10[%c56_272, %c0_273] : memref<128x648xf32, #tpu.memory_space<vmem>>, vector<4x648xf32>
    tpu.vector_store %arg10[%c56_272, %c0_273], %496 {strides = array<i32>} : memref<128x648xf32, #tpu.memory_space<vmem>>, vector<4x648xf32>,
    %498 = vector.extract_strided_slice %463 {offsets = [0, 36], sizes = [4, 648], strides = [1, 1]} : vector<4x686xf32> to vector<4x648xf32>
    %c60_274 = arith.constant 60 : index
    %c0_275 = arith.constant 0 : index
    %499 = vector.load %arg10[%c60_274, %c0_275] : memref<128x648xf32, #tpu.memory_space<vmem>>, vector<4x648xf32>
    tpu.vector_store %arg10[%c60_274, %c0_275], %498 {strides = array<i32>} : memref<128x648xf32, #tpu.memory_space<vmem>>, vector<4x648xf32>,
    %500 = vector.extract_strided_slice %463 {offsets = [0, 37], sizes = [4, 648], strides = [1, 1]} : vector<4x686xf32> to vector<4x648xf32>
    %c64_276 = arith.constant 64 : index
    %c0_277 = arith.constant 0 : index
    %501 = vector.load %arg10[%c64_276, %c0_277] : memref<128x648xf32, #tpu.memory_space<vmem>>, vector<4x648xf32>
    tpu.vector_store %arg10[%c64_276, %c0_277], %500 {strides = array<i32>} : memref<128x648xf32, #tpu.memory_space<vmem>>, vector<4x648xf32>,
    %502 = vector.extract_strided_slice %463 {offsets = [0, 38], sizes = [4, 648], strides = [1, 1]} : vector<4x686xf32> to vector<4x648xf32>
    %c68_278 = arith.constant 68 : index
    %c0_279 = arith.constant 0 : index
    %503 = vector.load %arg10[%c68_278, %c0_279] : memref<128x648xf32, #tpu.memory_space<vmem>>, vector<4x648xf32>
    tpu.vector_store %arg10[%c68_278, %c0_279], %502 {strides = array<i32>} : memref<128x648xf32, #tpu.memory_space<vmem>>, vector<4x648xf32>,
    %504 = vector.extract_strided_slice %464 {offsets = [0, 0], sizes = [4, 648], strides = [1, 1]} : vector<4x686xf32> to vector<4x648xf32>
    %c72_280 = arith.constant 72 : index
    %c0_281 = arith.constant 0 : index
    %505 = vector.load %arg10[%c72_280, %c0_281] : memref<128x648xf32, #tpu.memory_space<vmem>>, vector<4x648xf32>
    tpu.vector_store %arg10[%c72_280, %c0_281], %504 {strides = array<i32>} : memref<128x648xf32, #tpu.memory_space<vmem>>, vector<4x648xf32>,
    %506 = vector.extract_strided_slice %464 {offsets = [0, 1], sizes = [4, 648], strides = [1, 1]} : vector<4x686xf32> to vector<4x648xf32>
    %c76_282 = arith.constant 76 : index
    %c0_283 = arith.constant 0 : index
    %507 = vector.load %arg10[%c76_282, %c0_283] : memref<128x648xf32, #tpu.memory_space<vmem>>, vector<4x648xf32>
    tpu.vector_store %arg10[%c76_282, %c0_283], %506 {strides = array<i32>} : memref<128x648xf32, #tpu.memory_space<vmem>>, vector<4x648xf32>,
    %508 = vector.extract_strided_slice %464 {offsets = [0, 2], sizes = [4, 648], strides = [1, 1]} : vector<4x686xf32> to vector<4x648xf32>
    %c80_284 = arith.constant 80 : index
    %c0_285 = arith.constant 0 : index
    %509 = vector.load %arg10[%c80_284, %c0_285] : memref<128x648xf32, #tpu.memory_space<vmem>>, vector<4x648xf32>
    tpu.vector_store %arg10[%c80_284, %c0_285], %508 {strides = array<i32>} : memref<128x648xf32, #tpu.memory_space<vmem>>, vector<4x648xf32>,
    %510 = vector.extract_strided_slice %464 {offsets = [0, 18], sizes = [4, 648], strides = [1, 1]} : vector<4x686xf32> to vector<4x648xf32>
    %c84_286 = arith.constant 84 : index
    %c0_287 = arith.constant 0 : index
    %511 = vector.load %arg10[%c84_286, %c0_287] : memref<128x648xf32, #tpu.memory_space<vmem>>, vector<4x648xf32>
    tpu.vector_store %arg10[%c84_286, %c0_287], %510 {strides = array<i32>} : memref<128x648xf32, #tpu.memory_space<vmem>>, vector<4x648xf32>,
    %512 = vector.extract_strided_slice %464 {offsets = [0, 19], sizes = [4, 648], strides = [1, 1]} : vector<4x686xf32> to vector<4x648xf32>
    %c88_288 = arith.constant 88 : index
    %c0_289 = arith.constant 0 : index
    %513 = vector.load %arg10[%c88_288, %c0_289] : memref<128x648xf32, #tpu.memory_space<vmem>>, vector<4x648xf32>
    tpu.vector_store %arg10[%c88_288, %c0_289], %512 {strides = array<i32>} : memref<128x648xf32, #tpu.memory_space<vmem>>, vector<4x648xf32>,
    %514 = vector.extract_strided_slice %464 {offsets = [0, 20], sizes = [4, 648], strides = [1, 1]} : vector<4x686xf32> to vector<4x648xf32>
    %c92_290 = arith.constant 92 : index
    %c0_291 = arith.constant 0 : index
    %515 = vector.load %arg10[%c92_290, %c0_291] : memref<128x648xf32, #tpu.memory_space<vmem>>, vector<4x648xf32>
    tpu.vector_store %arg10[%c92_290, %c0_291], %514 {strides = array<i32>} : memref<128x648xf32, #tpu.memory_space<vmem>>, vector<4x648xf32>,
    %516 = vector.extract_strided_slice %464 {offsets = [0, 36], sizes = [4, 648], strides = [1, 1]} : vector<4x686xf32> to vector<4x648xf32>
    %c96_292 = arith.constant 96 : index
    %c0_293 = arith.constant 0 : index
    %517 = vector.load %arg10[%c96_292, %c0_293] : memref<128x648xf32, #tpu.memory_space<vmem>>, vector<4x648xf32>
    tpu.vector_store %arg10[%c96_292, %c0_293], %516 {strides = array<i32>} : memref<128x648xf32, #tpu.memory_space<vmem>>, vector<4x648xf32>,
    %518 = vector.extract_strided_slice %464 {offsets = [0, 37], sizes = [4, 648], strides = [1, 1]} : vector<4x686xf32> to vector<4x648xf32>
    %c100_294 = arith.constant 100 : index
    %c0_295 = arith.constant 0 : index
    %519 = vector.load %arg10[%c100_294, %c0_295] : memref<128x648xf32, #tpu.memory_space<vmem>>, vector<4x648xf32>
    tpu.vector_store %arg10[%c100_294, %c0_295], %518 {strides = array<i32>} : memref<128x648xf32, #tpu.memory_space<vmem>>, vector<4x648xf32>,
    %520 = vector.extract_strided_slice %464 {offsets = [0, 38], sizes = [4, 648], strides = [1, 1]} : vector<4x686xf32> to vector<4x648xf32>
    %c104_296 = arith.constant 104 : index
    %c0_297 = arith.constant 0 : index
    %521 = vector.load %arg10[%c104_296, %c0_297] : memref<128x648xf32, #tpu.memory_space<vmem>>, vector<4x648xf32>
    tpu.vector_store %arg10[%c104_296, %c0_297], %520 {strides = array<i32>} : memref<128x648xf32, #tpu.memory_space<vmem>>, vector<4x648xf32>,
    %c0_298 = arith.constant 0 : index
    %c0_299 = arith.constant 0 : index
    %522 = vector.load %arg10[%c0_298, %c0_299] : memref<128x648xf32, #tpu.memory_space<vmem>>, vector<128x648xf32>
    %cst_300 = arith.constant dense<0.000000e+00> : vector<32x648xf32>
    %523 = tpu.matmul %3, %522, %cst_300 {dimension_numbers = #tpu.dot_dimension_numbers<[1], [0], [0], [1], [0, 0, 1, 1], [], []>} : vector<32x128xf32>, vector<128x648xf32>, vector<32x648xf32> -> vector<32x648xf32>
    %cst_301 = arith.constant 0.000000e+00 : f32
    %524 = vector.broadcast %cst_301 : f32 to vector<1x648xf32>
    %c2_i32_302 = arith.constant 2 : i32
    %525 = arith.muli %462, %c2_i32_302 : i32
    %c0_i32_303 = arith.constant 0 : i32
    %526 = arith.addi %525, %c0_i32_303 : i32
    %527 = arith.index_cast %526 : i32 to index
    %528 = memref.load %arg1[%527] : memref<16xi32, #tpu.memory_space<smem>>
    %529 = arith.sitofp %528 : i32 to f32
    %530 = vector.extract_strided_slice %4 {offsets = [0, 0], sizes = [1, 648], strides = [1, 1]} : vector<2x648xf32> to vector<1x648xf32>
    %531 = vector.broadcast %529 : f32 to vector<1x648xf32>
    %532 = arith.mulf %530, %531 : vector<1x648xf32>
    %533 = arith.addf %524, %532 : vector<1x648xf32>
    %c2_i32_304 = arith.constant 2 : i32
    %534 = arith.muli %462, %c2_i32_304 : i32
    %c1_i32_305 = arith.constant 1 : i32
    %535 = arith.addi %534, %c1_i32_305 : i32
    %536 = arith.index_cast %535 : i32 to index
    %537 = memref.load %arg1[%536] : memref<16xi32, #tpu.memory_space<smem>>
    %538 = arith.sitofp %537 : i32 to f32
    %539 = vector.extract_strided_slice %4 {offsets = [1, 0], sizes = [1, 648], strides = [1, 1]} : vector<2x648xf32> to vector<1x648xf32>
    %540 = vector.broadcast %538 : f32 to vector<1x648xf32>
    %541 = arith.mulf %539, %540 : vector<1x648xf32>
    %542 = arith.addf %533, %541 : vector<1x648xf32>
    %543 = vector.extract_strided_slice %523 {offsets = [0, 0], sizes = [16, 648], strides = [1, 1]} : vector<32x648xf32> to vector<16x648xf32>
    %544 = vector.extract_strided_slice %543 {offsets = [0, 0], sizes = [12, 648], strides = [1, 1]} : vector<16x648xf32> to vector<12x648xf32>
    %545 = arith.negf %544 : vector<12x648xf32>
    %546 = math.exp %545 : vector<12x648xf32>
    %cst_306 = arith.constant 1.000000e+00 : f32
    %547 = vector.broadcast %cst_306 : f32 to vector<12x648xf32>
    %548 = arith.addf %547, %546 : vector<12x648xf32>
    %549 = arith.divf %547, %548 : vector<12x648xf32>
    %550 = vector.extract_strided_slice %543 {offsets = [12, 0], sizes = [4, 648], strides = [1, 1]} : vector<16x648xf32> to vector<4x648xf32>
    %551 = math.tanh %550 : vector<4x648xf32>
    %552 = vector.extract_strided_slice %549 {offsets = [0, 0], sizes = [4, 648], strides = [1, 1]} : vector<12x648xf32> to vector<4x648xf32>
    %553 = vector.extract_strided_slice %549 {offsets = [4, 0], sizes = [4, 648], strides = [1, 1]} : vector<12x648xf32> to vector<4x648xf32>
    %554 = vector.extract_strided_slice %549 {offsets = [8, 0], sizes = [4, 648], strides = [1, 1]} : vector<12x648xf32> to vector<4x648xf32>
    %c0_307 = arith.constant 0 : index
    %c0_308 = arith.constant 0 : index
    %555 = vector.load %arg7[%c0_307, %c0_308] : memref<4x648xf32, #tpu.memory_space<vmem>>, vector<4x648xf32>
    %556 = arith.mulf %553, %555 : vector<4x648xf32>
    %557 = arith.mulf %552, %551 : vector<4x648xf32>
    %558 = arith.addf %556, %557 : vector<4x648xf32>
    %559 = math.tanh %558 : vector<4x648xf32>
    %560 = arith.mulf %554, %559 : vector<4x648xf32>
    %561 = vector.extract_strided_slice %463 {offsets = [0, 19], sizes = [4, 648], strides = [1, 1]} : vector<4x686xf32> to vector<4x648xf32>
    %562 = vector.broadcast %542 : vector<1x648xf32> to vector<4x648xf32>
    %563 = arith.mulf %562, %558 : vector<4x648xf32>
    %cst_309 = arith.constant 1.000000e+00 : f32
    %564 = vector.broadcast %cst_309 : f32 to vector<1x648xf32>
    %565 = arith.subf %564, %542 : vector<1x648xf32>
    %566 = vector.broadcast %565 : vector<1x648xf32> to vector<4x648xf32>
    %567 = arith.mulf %566, %555 : vector<4x648xf32>
    %568 = arith.addf %563, %567 : vector<4x648xf32>
    %c0_310 = arith.constant 0 : index
    %c0_311 = arith.constant 0 : index
    %569 = vector.load %arg7[%c0_310, %c0_311] : memref<4x648xf32, #tpu.memory_space<vmem>>, vector<4x648xf32>
    tpu.vector_store %arg7[%c0_310, %c0_311], %568 {strides = array<i32>} : memref<4x648xf32, #tpu.memory_space<vmem>>, vector<4x648xf32>,
    %570 = vector.broadcast %542 : vector<1x648xf32> to vector<4x648xf32>
    %571 = arith.mulf %570, %560 : vector<4x648xf32>
    %cst_312 = arith.constant 1.000000e+00 : f32
    %572 = vector.broadcast %cst_312 : f32 to vector<1x648xf32>
    %573 = arith.subf %572, %542 : vector<1x648xf32>
    %574 = vector.broadcast %573 : vector<1x648xf32> to vector<4x648xf32>
    %575 = arith.mulf %574, %561 : vector<4x648xf32>
    %576 = arith.addf %571, %575 : vector<4x648xf32>
    %c0_313 = arith.constant 0 : index
    %c19_314 = arith.constant 19 : index
    %577 = vector.load %arg6[%c0_313, %c19_314] : memref<4x686xf32, #tpu.memory_space<vmem>>, vector<4x648xf32>
    tpu.vector_store %arg6[%c0_313, %c19_314], %576 {strides = array<i32>} : memref<4x686xf32, #tpu.memory_space<vmem>>, vector<4x648xf32>,
    %578 = vector.extract_strided_slice %523 {offsets = [16, 0], sizes = [16, 648], strides = [1, 1]} : vector<32x648xf32> to vector<16x648xf32>
    %579 = vector.extract_strided_slice %578 {offsets = [0, 0], sizes = [12, 648], strides = [1, 1]} : vector<16x648xf32> to vector<12x648xf32>
    %580 = arith.negf %579 : vector<12x648xf32>
    %581 = math.exp %580 : vector<12x648xf32>
    %cst_315 = arith.constant 1.000000e+00 : f32
    %582 = vector.broadcast %cst_315 : f32 to vector<12x648xf32>
    %583 = arith.addf %582, %581 : vector<12x648xf32>
    %584 = arith.divf %582, %583 : vector<12x648xf32>
    %585 = vector.extract_strided_slice %578 {offsets = [12, 0], sizes = [4, 648], strides = [1, 1]} : vector<16x648xf32> to vector<4x648xf32>
    %586 = math.tanh %585 : vector<4x648xf32>
    %587 = vector.extract_strided_slice %584 {offsets = [0, 0], sizes = [4, 648], strides = [1, 1]} : vector<12x648xf32> to vector<4x648xf32>
    %588 = vector.extract_strided_slice %584 {offsets = [4, 0], sizes = [4, 648], strides = [1, 1]} : vector<12x648xf32> to vector<4x648xf32>
    %589 = vector.extract_strided_slice %584 {offsets = [8, 0], sizes = [4, 648], strides = [1, 1]} : vector<12x648xf32> to vector<4x648xf32>
    %c0_316 = arith.constant 0 : index
    %c0_317 = arith.constant 0 : index
    %590 = vector.load %arg9[%c0_316, %c0_317] : memref<4x648xf32, #tpu.memory_space<vmem>>, vector<4x648xf32>
    %591 = arith.mulf %588, %590 : vector<4x648xf32>
    %592 = arith.mulf %587, %586 : vector<4x648xf32>
    %593 = arith.addf %591, %592 : vector<4x648xf32>
    %594 = math.tanh %593 : vector<4x648xf32>
    %595 = arith.mulf %589, %594 : vector<4x648xf32>
    %596 = vector.extract_strided_slice %464 {offsets = [0, 19], sizes = [4, 648], strides = [1, 1]} : vector<4x686xf32> to vector<4x648xf32>
    %597 = vector.broadcast %542 : vector<1x648xf32> to vector<4x648xf32>
    %598 = arith.mulf %597, %593 : vector<4x648xf32>
    %cst_318 = arith.constant 1.000000e+00 : f32
    %599 = vector.broadcast %cst_318 : f32 to vector<1x648xf32>
    %600 = arith.subf %599, %542 : vector<1x648xf32>
    %601 = vector.broadcast %600 : vector<1x648xf32> to vector<4x648xf32>
    %602 = arith.mulf %601, %590 : vector<4x648xf32>
    %603 = arith.addf %598, %602 : vector<4x648xf32>
    %c0_319 = arith.constant 0 : index
    %c0_320 = arith.constant 0 : index
    %604 = vector.load %arg9[%c0_319, %c0_320] : memref<4x648xf32, #tpu.memory_space<vmem>>, vector<4x648xf32>
    tpu.vector_store %arg9[%c0_319, %c0_320], %603 {strides = array<i32>} : memref<4x648xf32, #tpu.memory_space<vmem>>, vector<4x648xf32>,
    %605 = vector.broadcast %542 : vector<1x648xf32> to vector<4x648xf32>
    %606 = arith.mulf %605, %595 : vector<4x648xf32>
    %cst_321 = arith.constant 1.000000e+00 : f32
    %607 = vector.broadcast %cst_321 : f32 to vector<1x648xf32>
    %608 = arith.subf %607, %542 : vector<1x648xf32>
    %609 = vector.broadcast %608 : vector<1x648xf32> to vector<4x648xf32>
    %610 = arith.mulf %609, %596 : vector<4x648xf32>
    %611 = arith.addf %606, %610 : vector<4x648xf32>
    %c0_322 = arith.constant 0 : index
    %c19_323 = arith.constant 19 : index
    %612 = vector.load %arg8[%c0_322, %c19_323] : memref<4x686xf32, #tpu.memory_space<vmem>>, vector<4x648xf32>
    tpu.vector_store %arg8[%c0_322, %c19_323], %611 {strides = array<i32>} : memref<4x686xf32, #tpu.memory_space<vmem>>, vector<4x648xf32>,
    %c4_i32_324 = arith.constant 4 : i32
    %c1_i32_325 = arith.constant 1 : i32
    %613 = arith.cmpi eq, %arg0, %c1_i32_325 : i32
    %614 = arith.extui %613 : i1 to i32
    %c0_i32_326 = arith.constant 0 : i32
    %615 = arith.cmpi ne, %614, %c0_i32_326 : i32
    scf.if %615 {
      %c0_327 = arith.constant 0 : index
      %c0_328 = arith.constant 0 : index
      %616 = vector.load %arg6[%c0_327, %c0_328] : memref<4x686xf32, #tpu.memory_space<vmem>>, vector<4x686xf32>
      %617 = vector.extract_strided_slice %616 {offsets = [0, 19], sizes = [4, 648], strides = [1, 1]} : vector<4x686xf32> to vector<4x648xf32>
      %c0_329 = arith.constant 0 : index
      %c0_330 = arith.constant 0 : index
      %618 = vector.load %arg8[%c0_329, %c0_330] : memref<4x686xf32, #tpu.memory_space<vmem>>, vector<4x686xf32>
      %619 = vector.extract_strided_slice %618 {offsets = [0, 19], sizes = [4, 648], strides = [1, 1]} : vector<4x686xf32> to vector<4x648xf32>
      %620 = arith.addf %617, %619 : vector<4x648xf32>
      %cst_331 = arith.constant 5.000000e-01 : f32
      %621 = vector.broadcast %cst_331 : f32 to vector<4x648xf32>
      %622 = arith.mulf %621, %620 : vector<4x648xf32>
      %c0_332 = arith.constant 0 : index
      %c0_333 = arith.constant 0 : index
      %623 = vector.load %arg5[%c0_332, %c0_333] : memref<4x648xf32, #tpu.memory_space<vmem>>, vector<4x648xf32>
      tpu.vector_store %arg5[%c0_332, %c0_333], %622 {strides = array<i32>} : memref<4x648xf32, #tpu.memory_space<vmem>>, vector<4x648xf32>,
    } else {
    }
    return
  }
  func.func @transform_0(%arg0: i32, %arg1: memref<16xi32, #tpu.memory_space<smem>>) -> (i32, i32, i32) {
    %c0_i32 = arith.constant 0 : i32
    %c0_i32_0 = arith.constant 0 : i32
    %c0_i32_1 = arith.constant 0 : i32
    return %arg0, %c0_i32, %c0_i32_0 : i32, i32, i32
  }
  func.func @transform_1(%arg0: i32, %arg1: memref<16xi32, #tpu.memory_space<smem>>) -> (i32, i32) {
    %c0_i32 = arith.constant 0 : i32
    %c0_i32_0 = arith.constant 0 : i32
    %c0_i32_1 = arith.constant 0 : i32
    return %c0_i32, %c0_i32_0 : i32, i32
  }
  func.func @transform_2(%arg0: i32, %arg1: memref<16xi32, #tpu.memory_space<smem>>) -> (i32, i32) {
    %c0_i32 = arith.constant 0 : i32
    %c0_i32_0 = arith.constant 0 : i32
    %c0_i32_1 = arith.constant 0 : i32
    return %c0_i32, %c0_i32_0 : i32, i32
  }
  func.func @transform_3(%arg0: i32, %arg1: memref<16xi32, #tpu.memory_space<smem>>) -> (i32, i32) {
    %c0_i32 = arith.constant 0 : i32
    %c0_i32_0 = arith.constant 0 : i32
    %c0_i32_1 = arith.constant 0 : i32
    return %c0_i32, %c0_i32_0 : i32, i32
  }
}

</mosaic_0001>

<llo_original>
// kernel: tpu_custom_call.1
$region0: #{tpu_custom_call.1}
  #allocation0 [shape = 'u32[]', space=smem, size = 0x4, offset = 0x4, fixed_abs, tag = 'smem constant byte address 0x4 - core index']
  #allocation1 [shape = 'u32[144,128]{1,0:T(1,128)}', space=vmem, size = 0x12000, scoped, tag = 'internal scratch']
  #allocation2 [shape = 'f32[4,686]{1,0:T(4,128)}', space=vmem, size = 0x3000, scoped, tag = 'scratch operand']
  #allocation3 [shape = 'f32[4,648]{1,0:T(4,128)}', space=vmem, size = 0x3000, scoped, tag = 'scratch operand']
  #allocation4 [shape = 'f32[4,686]{1,0:T(4,128)}', space=vmem, size = 0x3000, scoped, tag = 'scratch operand']
  #allocation5 [shape = 'f32[4,648]{1,0:T(4,128)}', space=vmem, size = 0x3000, scoped, tag = 'scratch operand']
  #allocation6 [shape = 'f32[128,648]{1,0:T(8,128)}', space=vmem, size = 0x60000, scoped, tag = 'scratch operand']
  #allocation7 [shape = 's32[1]{0}', space=sflag, size = 0x4, scoped, tag = 'scoped memory for tpu_custom_call.1']
  #allocation8 [shape = 'u8[512]{0}', space=smem, size = 0x200, scoped, tag = 'prefetched SMEM operand 0']
  %s0 = inlined_call_operand.hbm [shape: s32[16], index: 0, kind: input, shape index: {}]
  %s1 = inlined_call_operand.hbm [shape: f32[8,4,686], index: 1, kind: input, shape index: {}]
  %s2 = inlined_call_operand.hbm [shape: f32[32,128], index: 2, kind: input, shape index: {}]
  %s3 = inlined_call_operand.hbm [shape: f32[2,648], index: 3, kind: input, shape index: {}]
  %s4 = inlined_call_operand.hbm [shape: f32[4,648], index: 4, kind: output, shape index: {}]
  %s5 = sld [smem:[#allocation0]]
  $region65: #{tpu_custom_call.1} parent=0
    _
  %s7 = ssub.s32 1, %s5
  %s8 = scalar_select 0, %s7, %s5
  %10 = dma.hbm_to_smem %s0, 16, [#allocation8], [#allocation7]
  %11 = dma.done [#allocation7], 16
  %12 = sfence
  $region1: #{tpu_custom_call.1} parent=0
    #allocation9 [shape = 'u8[98304]{0}', space=vmem, size = 0x18000, scoped, tag = 'input window, operand 1']
    #allocation10 [shape = 's32[2]{0}', space=sflag, size = 0x8, scoped, tag = 'scoped memory for tpu_custom_call.1']
    #allocation11 [shape = 's32[2]{0}', space=sflag, size = 0x8, scoped, tag = 'scoped memory for tpu_custom_call.1']
    #allocation12 [shape = 'u8[16384]{0}', space=vmem, size = 0x4000, scoped, tag = 'input window, operand 2, single buffered']
    #allocation13 [shape = 's32[1]{0}', space=sflag, size = 0x4, scoped, tag = 'scoped memory for tpu_custom_call.1']
    #allocation14 [shape = 'u8[6144]{0}', space=vmem, size = 0x1800, scoped, tag = 'input window, operand 3, single buffered']
    #allocation15 [shape = 'u8[12288]{0}', space=vmem, size = 0x3000, scoped, tag = 'output window, operand 0, single buffered']
    %13 = vsyncpa [#allocation10], 0
    %s14 = scalar_lea.sflag [#allocation10], 1
    %15 = vsyncpa %s14, 0
    %16 = vsyncpa [#allocation13], 0
    %17 = vsyncpa [#allocation11], 0
    loop: start=0, step=1, limit=4
    $region2: #{tpu_custom_call.1} parent=1 // loop_pre_header
      _
    $region3: #{tpu_custom_call.1} parent=1 // loop_header
      %s19 = sphi 0, %s23
      %p20 = scmp.ge.s32.totalorder %s19, 4
      %s29 = sphi 0, %s31
      %s32 = sphi 0, %s29
      %s33 = sphi 0, %s32
      %s49 = sphi 0, %s33
      %s53 = sphi 0, %s53
      %s55 = sphi 0, %s53
      %s56 = sphi 0, %s55
      %s70 = sphi 0, %s56
      %s74 = sphi 0, %s74
      %s76 = sphi 0, %s74
      %s77 = sphi 0, %s76
      %s91 = sphi 0, %s77
      %s95 = sphi 0, %s95
      %s97 = sphi 0, %s95
      %s98 = sphi 0, %s97
      %s112 = sphi 0, %s98
    $region4: #{tpu_custom_call.1} parent=1 // loop_header_branch
      %22 = sbr.rel (%p20) target = $region8
    $region5: #{tpu_custom_call.1} parent=1 // loop_body
      %s24 = ssub.s32 %s19, 1
      %s25 = ssub.s32 %s19, 2
      %s26 = sadd.s32 %s19, 1
      %s27 = ssub.s32 %s19, %s26
      %p28 = scmp.eq.s32.totalorder %s27, 0
      %s30 = sadd.s32 %s29, 1
      %s31 = scalar_select %p28, %s29, %s30
      %p34 = pneg %p28
      %p35 = scmp.eq.s32.totalorder %s19, 1
      %p36 = por %p34, %p35
      %p37 = scmp.ne.s32.totalorder %s29, %s32
      %p38 = scmp.eq.s32.totalorder %s19, 0
      %p39 = por %p37, %p38
      %p40 = scmp.ne.s32.totalorder %s29, %s32
      %p41 = scmp.eq.s32.totalorder %s24, 1
      %p42 = por %p40, %p41
      %p43 = scmp.ne.s32.totalorder %s32, %s33
      %p44 = scmp.eq.s32.totalorder %s24, 0
      %p45 = por %p43, %p44
      %p46 = scmp.ne.s32.totalorder %s32, %s33
      %p47 = scmp.eq.s32.totalorder %s25, 1
      %p48 = por %p46, %p47
      %p50 = scmp.ne.s32.totalorder %s33, %s49
      %p51 = scmp.eq.s32.totalorder %s25, 0
      %p52 = por %p50, %p51
      %s54 = sadd.s32 %s53, 1
      %p57 = scmp.eq.s32.totalorder %s19, 1
      %p58 = scmp.ne.s32.totalorder %s53, %s55
      %p59 = scmp.eq.s32.totalorder %s19, 0
      %p60 = por %p58, %p59
      %p61 = scmp.ne.s32.totalorder %s53, %s55
      %p62 = scmp.eq.s32.totalorder %s24, 1
      %p63 = por %p61, %p62
      %p64 = scmp.ne.s32.totalorder %s55, %s56
      %p65 = scmp.eq.s32.totalorder %s24, 0
      %p66 = por %p64, %p65
      %p67 = scmp.ne.s32.totalorder %s55, %s56
      %p68 = scmp.eq.s32.totalorder %s25, 1
      %p69 = por %p67, %p68
      %p71 = scmp.ne.s32.totalorder %s56, %s70
      %p72 = scmp.eq.s32.totalorder %s25, 0
      %p73 = por %p71, %p72
      %s75 = sadd.s32 %s74, 1
      %p78 = scmp.eq.s32.totalorder %s19, 1
      %p79 = scmp.ne.s32.totalorder %s74, %s76
      %p80 = scmp.eq.s32.totalorder %s19, 0
      %p81 = por %p79, %p80
      %p82 = scmp.ne.s32.totalorder %s74, %s76
      %p83 = scmp.eq.s32.totalorder %s24, 1
      %p84 = por %p82, %p83
      %p85 = scmp.ne.s32.totalorder %s76, %s77
      %p86 = scmp.eq.s32.totalorder %s24, 0
      %p87 = por %p85, %p86
      %p88 = scmp.ne.s32.totalorder %s76, %s77
      %p89 = scmp.eq.s32.totalorder %s25, 1
      %p90 = por %p88, %p89
      %p92 = scmp.ne.s32.totalorder %s77, %s91
      %p93 = scmp.eq.s32.totalorder %s25, 0
      %p94 = por %p92, %p93
      %s96 = sadd.s32 %s95, 1
      %p99 = scmp.eq.s32.totalorder %s19, 1
      %p100 = scmp.ne.s32.totalorder %s95, %s97
      %p101 = scmp.eq.s32.totalorder %s19, 0
      %p102 = por %p100, %p101
      %p103 = scmp.ne.s32.totalorder %s95, %s97
      %p104 = scmp.eq.s32.totalorder %s24, 1
      %p105 = por %p103, %p104
      %p106 = scmp.ne.s32.totalorder %s97, %s98
      %p107 = scmp.eq.s32.totalorder %s24, 0
      %p108 = por %p106, %p107
      %p109 = scmp.ne.s32.totalorder %s97, %s98
      %p110 = scmp.eq.s32.totalorder %s25, 1
      %p111 = por %p109, %p110
      %p113 = scmp.ne.s32.totalorder %s98, %s112
      %p114 = scmp.eq.s32.totalorder %s25, 0
      %p115 = por %p113, %p114
      %p116 = scmp.le.s32.totalorder 1, %s19
      %p117 = scmp.lt.s32.totalorder %s19, 3
      %p118 = pnand %p116, %p117
      %p119 = pneg %p118
      // Predicated region
      $region9: #{tpu_custom_call.1} parent=5 // pred_check
        _
      $region10: #{tpu_custom_call.1} parent=5 // pred_check_branch
        %121 = sbr.rel (%p118) target = $region12
      $region11: #{tpu_custom_call.1} parent=5 // pred_region
        %s122 = ssub.s32 %s19, 1
        // Predicated region
        $region13: #{tpu_custom_call.1} parent=11 // pred_check
          %p123 = pneg %p66
        $region14: #{tpu_custom_call.1} parent=11 // pred_check_branch
          %125 = sbr.rel (%p123) target = $region16
        $region15: #{tpu_custom_call.1} parent=11 // pred_region
          %s127 = ssub.s32 512, 512
          %128 = vsyncadd [#allocation13], %s127
          %s129 = sshll.u32 [#allocation12], 4
          %s130 = int_to_ptr.vmem [resolvable:$true] %s129
          %135 = dma.hbm_to_vmem [thread:$0]  %s2, 512, %s130, [#allocation13], 128, 128, 8
        $region16: #{tpu_custom_call.1} parent=11 // pred_fallthru
          _
        // Predicated region
        $region17: #{tpu_custom_call.1} parent=11 // pred_check
          %p136 = pneg %p87
        $region18: #{tpu_custom_call.1} parent=11 // pred_check_branch
          %138 = sbr.rel (%p136) target = $region20
        $region19: #{tpu_custom_call.1} parent=11 // pred_region
          %s140 = ssub.s32 192, 192
          %141 = vsyncadd [#allocation13], %s140
          %s143 = sshll.u32 [#allocation14], 4
          %s144 = int_to_ptr.vmem [resolvable:$true] %s143
          %146 = dma.hbm_to_vmem [thread:$0]  %s3, 192, %s144, [#allocation13]
        $region20: #{tpu_custom_call.1} parent=11 // pred_fallthru
          _
      $region12: #{tpu_custom_call.1} parent=5 // pred_fallthru
        _
      %p147 = scmp.lt.s32.totalorder %s19, 2
      // Predicated region
      $region21: #{tpu_custom_call.1} parent=5 // pred_check
        %p148 = pneg %p147
      $region22: #{tpu_custom_call.1} parent=5 // pred_check_branch
        %150 = sbr.rel (%p148) target = $region24
      $region23: #{tpu_custom_call.1} parent=5 // pred_region
        // Predicated region
        $region25: #{tpu_custom_call.1} parent=23 // pred_check
          %p151 = pneg %p39
        $region26: #{tpu_custom_call.1} parent=23 // pred_check_branch
          %153 = sbr.rel (%p151) target = $region28
        $region27: #{tpu_custom_call.1} parent=23 // pred_region
          %s154 = sand.u32 %s29, 1
          %s155 = scalar_lea.sflag [#allocation10], %s154
          %s156 = sand.u32 %s29, 1
          %s157 = smul.addr %s156, 96
          %s158 = scalar_lea.vmem [#allocation9], %s157
          %s159 = smul.u32 4, %s19
          %s161 = ssub.s32 1536, 1536
          %162 = vsyncadd %s155, %s161
          %s163 = smul.addr %s159, 6
          %s164 = smul.addr %s163, 64
          %s165 = scalar_lea.hbm %s1, %s164
          %s166 = sshll.u32 %s158, 4
          %s167 = int_to_ptr.vmem [resolvable:$true] %s166
          %172 = dma.hbm_to_vmem [thread:$0]  %s165, 1536, %s167, %s155, 384, 384, 24
        $region28: #{tpu_custom_call.1} parent=23 // pred_fallthru
          _
      $region24: #{tpu_custom_call.1} parent=5 // pred_fallthru
        _
      %p173 = scmp.le.s32.totalorder 1, %s19
      %p174 = scmp.lt.s32.totalorder %s19, 3
      %p175 = pnand %p173, %p174
      %p176 = pneg %p175
      // Predicated region
      $region29: #{tpu_custom_call.1} parent=5 // pred_check
        _
      $region30: #{tpu_custom_call.1} parent=5 // pred_check_branch
        %178 = sbr.rel (%p175) target = $region32
      $region31: #{tpu_custom_call.1} parent=5 // pred_region
        %s179 = ssub.s32 %s19, 1
        %s180 = sand.u32 %s32, 1
        %s181 = scalar_lea.sflag [#allocation10], %s180
        %s182 = sand.u32 %s32, 1
        %s183 = smul.addr %s182, 96
        %s184 = scalar_lea.vmem [#allocation9], %s183
        // Predicated region
        $region33: #{tpu_custom_call.1} parent=31 // pred_check
          %p185 = pneg %p45
        $region34: #{tpu_custom_call.1} parent=31 // pred_check_branch
          %187 = sbr.rel (%p185) target = $region36
        $region35: #{tpu_custom_call.1} parent=31 // pred_region
          %188 = dma.done %s181, 1536
        $region36: #{tpu_custom_call.1} parent=31 // pred_fallthru
          _
        // Predicated region
        $region37: #{tpu_custom_call.1} parent=31 // pred_check
          %p189 = pneg %p66
        $region38: #{tpu_custom_call.1} parent=31 // pred_check_branch
          %191 = sbr.rel (%p189) target = $region40
        $region39: #{tpu_custom_call.1} parent=31 // pred_region
          %192 = dma.done [#allocation13], 512
        $region40: #{tpu_custom_call.1} parent=31 // pred_fallthru
          _
        // Predicated region
        $region41: #{tpu_custom_call.1} parent=31 // pred_check
          %p193 = pneg %p87
        $region42: #{tpu_custom_call.1} parent=31 // pred_check_branch
          %195 = sbr.rel (%p193) target = $region44
        $region43: #{tpu_custom_call.1} parent=31 // pred_region
          %196 = dma.done [#allocation13], 192
        $region44: #{tpu_custom_call.1} parent=31 // pred_fallthru
          _
        %s197 = sand.u32 %s32, 1
        %s198 = scalar_lea.sflag [#allocation10], %s197
        %s199 = sand.u32 %s32, 1
        %s200 = smul.addr %s199, 96
        %s201 = scalar_lea.vmem [#allocation9], %s200
        %p202 = pneg %p45
        %p203 = pneg %p42
        %p204 = pneg %p66
        %p205 = pneg %p63
        %p206 = pneg %p87
        %p207 = pneg %p84
        %p208 = pneg %p108
        %p209 = pneg %p105
        %s210 = smul.u32 4, %s24
        %p211 = scmp.eq.s32.totalorder %s24, 0
        // Predicated region
        $region45: #{tpu_custom_call.1} parent=31 // pred_check
          %p212 = pneg %p211
        $region46: #{tpu_custom_call.1} parent=31 // pred_check_branch
          %214 = sbr.rel (%p212) target = $region48
        $region47: #{tpu_custom_call.1} parent=31 // pred_region
          %215 = vst [vmem:[#allocation2] sm:$0xff] 0.0
          %216 = vst [vmem:[#allocation2 + $0x8] sm:$0xff] 0.0
          %vm217 = vcmask 1043456
          %vm218 = vcmask 375812
          %vm219 = vmor %vm218, %vm217
          %220 = vst.msk [vmem:[#allocation2 + $0x10] sm:$0xff] %vm219, 0.0
          %221 = vst [vmem:[#allocation3] sm:$0xff] 0.0
          %222 = vst [vmem:[#allocation3 + $0x8] sm:$0xff] 0.0
          %vm223 = vcmask 64516
          %vm224 = vmor %vm223, %vm217
          %225 = vst.msk [vmem:[#allocation3 + $0x10] sm:$0xff] %vm224, 0.0
          %226 = vst [vmem:[#allocation4] sm:$0xff] 0.0
          %227 = vst [vmem:[#allocation4 + $0x8] sm:$0xff] 0.0
          %228 = vst.msk [vmem:[#allocation4 + $0x10] sm:$0xff] %vm219, 0.0
          %229 = vst [vmem:[#allocation5] sm:$0xff] 0.0
          %230 = vst [vmem:[#allocation5 + $0x8] sm:$0xff] 0.0
          %231 = vst.msk [vmem:[#allocation5 + $0x10] sm:$0xff] %vm224, 0.0
          %232 = vst [vmem:[#allocation6] sm:$0xff] 0.0
          %233 = vst [vmem:[#allocation6 + $0x8] sm:$0xff] 0.0
          %234 = vst [vmem:[#allocation6 + $0x10] sm:$0xff] 0.0
          %235 = vst [vmem:[#allocation6 + $0x18] sm:$0xff] 0.0
          %236 = vst [vmem:[#allocation6 + $0x20] sm:$0xff] 0.0
          %vm237 = vcmask 64512
          %238 = vst.msk [vmem:[#allocation6 + $0x28] sm:$0xff] %vm237, 0.0
          %239 = vst [vmem:[#allocation6 + $0x30] sm:$0xff] 0.0
          %240 = vst [vmem:[#allocation6 + $0x38] sm:$0xff] 0.0
          %241 = vst [vmem:[#allocation6 + $0x40] sm:$0xff] 0.0
          %242 = vst [vmem:[#allocation6 + $0x48] sm:$0xff] 0.0
          %243 = vst [vmem:[#allocation6 + $0x50] sm:$0xff] 0.0
          %244 = vst.msk [vmem:[#allocation6 + $0x58] sm:$0xff] %vm237, 0.0
          %245 = vst [vmem:[#allocation6 + $0x60] sm:$0xff] 0.0
          %246 = vst [vmem:[#allocation6 + $0x68] sm:$0xff] 0.0
          %247 = vst [vmem:[#allocation6 + $0x70] sm:$0xff] 0.0
          %248 = vst [vmem:[#allocation6 + $0x78] sm:$0xff] 0.0
          %249 = vst [vmem:[#allocation6 + $0x80] sm:$0xff] 0.0
          %250 = vst.msk [vmem:[#allocation6 + $0x88] sm:$0xff] %vm237, 0.0
          %251 = vst [vmem:[#allocation6 + $0x90] sm:$0xff] 0.0
          %252 = vst [vmem:[#allocation6 + $0x98] sm:$0xff] 0.0
          %253 = vst [vmem:[#allocation6 + $0xa0] sm:$0xff] 0.0
          %254 = vst [vmem:[#allocation6 + $0xa8] sm:$0xff] 0.0
          %255 = vst [vmem:[#allocation6 + $0xb0] sm:$0xff] 0.0
          %256 = vst.msk [vmem:[#allocation6 + $0xb8] sm:$0xff] %vm237, 0.0
          %257 = vst [vmem:[#allocation6 + $0xc0] sm:$0xff] 0.0
          %258 = vst [vmem:[#allocation6 + $0xc8] sm:$0xff] 0.0
          %259 = vst [vmem:[#allocation6 + $0xd0] sm:$0xff] 0.0
          %260 = vst [vmem:[#allocation6 + $0xd8] sm:$0xff] 0.0
          %261 = vst [vmem:[#allocation6 + $0xe0] sm:$0xff] 0.0
          %262 = vst.msk [vmem:[#allocation6 + $0xe8] sm:$0xff] %vm237, 0.0
          %263 = vst [vmem:[#allocation6 + $0xf0] sm:$0xff] 0.0
          %264 = vst [vmem:[#allocation6 + $0xf8] sm:$0xff] 0.0
          %265 = vst [vmem:[#allocation6 + $0x100] sm:$0xff] 0.0
          %266 = vst [vmem:[#allocation6 + $0x108] sm:$0xff] 0.0
          %267 = vst [vmem:[#allocation6 + $0x110] sm:$0xff] 0.0
          %268 = vst.msk [vmem:[#allocation6 + $0x118] sm:$0xff] %vm237, 0.0
          %269 = vst [vmem:[#allocation6 + $0x120] sm:$0xff] 0.0
          %270 = vst [vmem:[#allocation6 + $0x128] sm:$0xff] 0.0
          %271 = vst [vmem:[#allocation6 + $0x130] sm:$0xff] 0.0
          %272 = vst [vmem:[#allocation6 + $0x138] sm:$0xff] 0.0
          %273 = vst [vmem:[#allocation6 + $0x140] sm:$0xff] 0.0
          %274 = vst.msk [vmem:[#allocation6 + $0x148] sm:$0xff] %vm237, 0.0
          %275 = vst [vmem:[#allocation6 + $0x150] sm:$0xff] 0.0
          %276 = vst [vmem:[#allocation6 + $0x158] sm:$0xff] 0.0
          %277 = vst [vmem:[#allocation6 + $0x160] sm:$0xff] 0.0
          %278 = vst [vmem:[#allocation6 + $0x168] sm:$0xff] 0.0
          %279 = vst [vmem:[#allocation6 + $0x170] sm:$0xff] 0.0
          %280 = vst.msk [vmem:[#allocation6 + $0x178] sm:$0xff] %vm237, 0.0
          %281 = vst [vmem:[#allocation6 + $0x180] sm:$0xff] 0.0
          %282 = vst [vmem:[#allocation6 + $0x188] sm:$0xff] 0.0
          %283 = vst [vmem:[#allocation6 + $0x190] sm:$0xff] 0.0
          %284 = vst [vmem:[#allocation6 + $0x198] sm:$0xff] 0.0
          %285 = vst [vmem:[#allocation6 + $0x1a0] sm:$0xff] 0.0
          %286 = vst.msk [vmem:[#allocation6 + $0x1a8] sm:$0xff] %vm237, 0.0
          %287 = vst [vmem:[#allocation6 + $0x1b0] sm:$0xff] 0.0
          %288 = vst [vmem:[#allocation6 + $0x1b8] sm:$0xff] 0.0
          %289 = vst [vmem:[#allocation6 + $0x1c0] sm:$0xff] 0.0
          %290 = vst [vmem:[#allocation6 + $0x1c8] sm:$0xff] 0.0
          %291 = vst [vmem:[#allocation6 + $0x1d0] sm:$0xff] 0.0
          %292 = vst.msk [vmem:[#allocation6 + $0x1d8] sm:$0xff] %vm237, 0.0
          %293 = vst [vmem:[#allocation6 + $0x1e0] sm:$0xff] 0.0
          %294 = vst [vmem:[#allocation6 + $0x1e8] sm:$0xff] 0.0
          %295 = vst [vmem:[#allocation6 + $0x1f0] sm:$0xff] 0.0
          %296 = vst [vmem:[#allocation6 + $0x1f8] sm:$0xff] 0.0
          %297 = vst [vmem:[#allocation6 + $0x200] sm:$0xff] 0.0
          %298 = vst.msk [vmem:[#allocation6 + $0x208] sm:$0xff] %vm237, 0.0
          %299 = vst [vmem:[#allocation6 + $0x210] sm:$0xff] 0.0
          %300 = vst [vmem:[#allocation6 + $0x218] sm:$0xff] 0.0
          %301 = vst [vmem:[#allocation6 + $0x220] sm:$0xff] 0.0
          %302 = vst [vmem:[#allocation6 + $0x228] sm:$0xff] 0.0
          %303 = vst [vmem:[#allocation6 + $0x230] sm:$0xff] 0.0
          %304 = vst.msk [vmem:[#allocation6 + $0x238] sm:$0xff] %vm237, 0.0
          %305 = vst [vmem:[#allocation6 + $0x240] sm:$0xff] 0.0
          %306 = vst [vmem:[#allocation6 + $0x248] sm:$0xff] 0.0
          %307 = vst [vmem:[#allocation6 + $0x250] sm:$0xff] 0.0
          %308 = vst [vmem:[#allocation6 + $0x258] sm:$0xff] 0.0
          %309 = vst [vmem:[#allocation6 + $0x260] sm:$0xff] 0.0
          %310 = vst.msk [vmem:[#allocation6 + $0x268] sm:$0xff] %vm237, 0.0
          %311 = vst [vmem:[#allocation6 + $0x270] sm:$0xff] 0.0
          %312 = vst [vmem:[#allocation6 + $0x278] sm:$0xff] 0.0
          %313 = vst [vmem:[#allocation6 + $0x280] sm:$0xff] 0.0
          %314 = vst [vmem:[#allocation6 + $0x288] sm:$0xff] 0.0
          %315 = vst [vmem:[#allocation6 + $0x290] sm:$0xff] 0.0
          %316 = vst.msk [vmem:[#allocation6 + $0x298] sm:$0xff] %vm237, 0.0
          %317 = vst [vmem:[#allocation6 + $0x2a0] sm:$0xff] 0.0
          %318 = vst [vmem:[#allocation6 + $0x2a8] sm:$0xff] 0.0
          %319 = vst [vmem:[#allocation6 + $0x2b0] sm:$0xff] 0.0
          %320 = vst [vmem:[#allocation6 + $0x2b8] sm:$0xff] 0.0
          %321 = vst [vmem:[#allocation6 + $0x2c0] sm:$0xff] 0.0
          %322 = vst.msk [vmem:[#allocation6 + $0x2c8] sm:$0xff] %vm237, 0.0
          %323 = vst [vmem:[#allocation6 + $0x2d0] sm:$0xff] 0.0
          %324 = vst [vmem:[#allocation6 + $0x2d8] sm:$0xff] 0.0
          %325 = vst [vmem:[#allocation6 + $0x2e0] sm:$0xff] 0.0
          %326 = vst [vmem:[#allocation6 + $0x2e8] sm:$0xff] 0.0
          %327 = vst [vmem:[#allocation6 + $0x2f0] sm:$0xff] 0.0
          %328 = vst.msk [vmem:[#allocation6 + $0x2f8] sm:$0xff] %vm237, 0.0
          %v329 = vlaneseq
          %vm330 = vcmp.ge.s32.totalorder %v329, 0
          %vm331 = vcmp.lt.s32.totalorder %v329, 648
          %vm332 = vmand %vm330, %vm331
          %s333 = scalar_lea.vmem [#allocation6], 628
          %334 = vst.msk [vmem:[%s333] ss:$8 sm:$0xf] %vm332, 1.0
          %335 = vst.msk [vmem:[%s333] ss:$8 sm:$0x30] %vm332, 1.0
        $region48: #{tpu_custom_call.1} parent=31 // pred_fallthru
          _
        %v336 = vld [vmem:[#allocation12] sm:$0xff]
        %v337 = vld [vmem:[#allocation12 + $0x8] sm:$0xff]
        %v338 = vld [vmem:[#allocation12 + $0x10] sm:$0xff]
        %v339 = vld [vmem:[#allocation12 + $0x18] sm:$0xff]
        %v340 = vld [vmem:[#allocation14] sm:$0xff]
        %v341 = vld [vmem:[#allocation14 + $0x8] sm:$0xf]
        %v342 = vld [vmem:[#allocation2] sm:$0xff]
        %v343 = vld [vmem:[#allocation2 + $0x8] sm:$0xff]
        %v344 = vld [vmem:[#allocation2 + $0x10] sm:$0xff]
        %v345 = vld [vmem:[#allocation4] sm:$0xff]
        %v346 = vld [vmem:[#allocation4 + $0x8] sm:$0xff]
        %v347 = vld [vmem:[#allocation4 + $0x10] sm:$0xff]
        %v348 = vld [vmem:[%s184] sm:$0xff]
        %v349 = vld [vmem:[%s184 + $0x8] sm:$0xff]
        %v350 = vld [vmem:[%s184 + $0x10] sm:$0xff]
        %v354 = vcombine.high %v348, %v348
        %v355 = vcombine.high %v349, %v349
        %v356 = vcombine.high %v350, %v350
        %360 = vst [vmem:[#allocation6] sm:$0xf] %v348
        %361 = vst [vmem:[#allocation6 + $0x8] sm:$0xf] %v354
        %362 = vst [vmem:[#allocation6 + $0x10] sm:$0xf] %v349
        %363 = vst [vmem:[#allocation6 + $0x18] sm:$0xf] %v355
        %364 = vst [vmem:[#allocation6 + $0x20] sm:$0xf] %v350
        %vm365 = vcmask 60416
        %366 = vst.msk [vmem:[#allocation6 + $0x28] sm:$0xf] %vm365, %v356
        %v367 = vcombine.low %v348, %v348
        %v368 = vcombine.low %v349, %v349
        %v369 = vcombine.low %v350, %v350
        %370 = vrot.lane.b32.xlu0 %v367, 127
        %v371 = vpop.permute.xlu0 %370
        %372 = vrot.lane.b32.xlu0 %v348, 127
        %v373 = vpop.permute.xlu0 %372
        %374 = vrot.lane.b32.xlu0 %v368, 127
        %v375 = vpop.permute.xlu0 %374
        %376 = vrot.lane.b32.xlu0 %v349, 127
        %v377 = vpop.permute.xlu0 %376
        %378 = vrot.lane.b32.xlu0 %v369, 127
        %v379 = vpop.permute.xlu0 %378
        %380 = vrot.lane.b32.xlu0 %v350, 127
        %v381 = vpop.permute.xlu0 %380
        %vm382 = vcmask 1039360
        %v383 = vsel %vm382, %v371, %v373
        %v384 = vsel %vm382, %v373, %v375
        %v385 = vsel %vm382, %v375, %v377
        %v386 = vsel %vm382, %v377, %v379
        %v387 = vsel %vm382, %v379, %v381
        %394 = vst [vmem:[#allocation6] sm:$0xf0] %v383
        %395 = vst [vmem:[#allocation6 + $0x8] sm:$0xf0] %v384
        %396 = vst [vmem:[#allocation6 + $0x10] sm:$0xf0] %v385
        %397 = vst [vmem:[#allocation6 + $0x18] sm:$0xf0] %v386
        %398 = vst [vmem:[#allocation6 + $0x20] sm:$0xf0] %v387
        %vm399 = vcmask 64516
        %400 = vst.msk [vmem:[#allocation6 + $0x28] sm:$0xf0] %vm399, %v381
        %401 = vrot.lane.b32.xlu0 %v348, 126
        %v402 = vpop.permute.xlu0 %401
        %403 = vrot.lane.b32.xlu0 %v354, 126
        %v404 = vpop.permute.xlu0 %403
        %405 = vrot.lane.b32.xlu0 %v349, 126
        %v406 = vpop.permute.xlu0 %405
        %407 = vrot.lane.b32.xlu0 %v355, 126
        %v408 = vpop.permute.xlu0 %407
        %409 = vrot.lane.b32.xlu0 %v350, 126
        %v410 = vpop.permute.xlu0 %409
        %411 = vrot.lane.b32.xlu0 %v356, 126
        %v412 = vpop.permute.xlu0 %411
        %vm413 = vcmask 1031168
        %v414 = vsel %vm413, %v402, %v404
        %v415 = vsel %vm413, %v404, %v406
        %v416 = vsel %vm413, %v406, %v408
        %v417 = vsel %vm413, %v408, %v410
        %v418 = vsel %vm413, %v410, %v412
        %425 = vst [vmem:[#allocation6 + $0x30] sm:$0xf] %v414
        %426 = vst [vmem:[#allocation6 + $0x38] sm:$0xf] %v415
        %427 = vst [vmem:[#allocation6 + $0x40] sm:$0xf] %v416
        %428 = vst [vmem:[#allocation6 + $0x48] sm:$0xf] %v417
        %429 = vst [vmem:[#allocation6 + $0x50] sm:$0xf] %v418
        %430 = vst.msk [vmem:[#allocation6 + $0x58] sm:$0xf] %vm365, %v412
        %431 = vrot.lane.b32.xlu0 %v367, 110
        %v432 = vpop.permute.xlu0 %431
        %433 = vrot.lane.b32.xlu0 %v348, 110
        %v434 = vpop.permute.xlu0 %433
        %435 = vrot.lane.b32.xlu0 %v368, 110
        %v436 = vpop.permute.xlu0 %435
        %437 = vrot.lane.b32.xlu0 %v349, 110
        %v438 = vpop.permute.xlu0 %437
        %439 = vrot.lane.b32.xlu0 %v369, 110
        %v440 = vpop.permute.xlu0 %439
        %441 = vrot.lane.b32.xlu0 %v350, 110
        %v442 = vpop.permute.xlu0 %441
        %vm443 = vcmask 900096
        %v444 = vsel %vm443, %v432, %v434
        %v445 = vsel %vm443, %v434, %v436
        %v446 = vsel %vm443, %v436, %v438
        %v447 = vsel %vm443, %v438, %v440
        %v448 = vsel %vm443, %v440, %v442
        %455 = vst [vmem:[#allocation6 + $0x30] sm:$0xf0] %v444
        %456 = vst [vmem:[#allocation6 + $0x38] sm:$0xf0] %v445
        %457 = vst [vmem:[#allocation6 + $0x40] sm:$0xf0] %v446
        %458 = vst [vmem:[#allocation6 + $0x48] sm:$0xf0] %v447
        %459 = vst [vmem:[#allocation6 + $0x50] sm:$0xf0] %v448
        %460 = vst.msk [vmem:[#allocation6 + $0x58] sm:$0xf0] %vm399, %v442
        %461 = vrot.lane.b32.xlu0 %v348, 109
        %v462 = vpop.permute.xlu0 %461
        %463 = vrot.lane.b32.xlu0 %v354, 109
        %v464 = vpop.permute.xlu0 %463
        %465 = vrot.lane.b32.xlu0 %v349, 109
        %v466 = vpop.permute.xlu0 %465
        %467 = vrot.lane.b32.xlu0 %v355, 109
        %v468 = vpop.permute.xlu0 %467
        %469 = vrot.lane.b32.xlu0 %v350, 109
        %v470 = vpop.permute.xlu0 %469
        %471 = vrot.lane.b32.xlu0 %v356, 109
        %v472 = vpop.permute.xlu0 %471
        %vm473 = vcmask 891904
        %v474 = vsel %vm473, %v462, %v464
        %v475 = vsel %vm473, %v464, %v466
        %v476 = vsel %vm473, %v466, %v468
        %v477 = vsel %vm473, %v468, %v470
        %v478 = vsel %vm473, %v470, %v472
        %485 = vst [vmem:[#allocation6 + $0x60] sm:$0xf] %v474
        %486 = vst [vmem:[#allocation6 + $0x68] sm:$0xf] %v475
        %487 = vst [vmem:[#allocation6 + $0x70] sm:$0xf] %v476
        %488 = vst [vmem:[#allocation6 + $0x78] sm:$0xf] %v477
        %489 = vst [vmem:[#allocation6 + $0x80] sm:$0xf] %v478
        %490 = vst.msk [vmem:[#allocation6 + $0x88] sm:$0xf] %vm365, %v472
        %491 = vrot.lane.b32.xlu0 %v367, 108
        %v492 = vpop.permute.xlu0 %491
        %493 = vrot.lane.b32.xlu0 %v348, 108
        %v494 = vpop.permute.xlu0 %493
        %495 = vrot.lane.b32.xlu0 %v368, 108
        %v496 = vpop.permute.xlu0 %495
        %497 = vrot.lane.b32.xlu0 %v349, 108
        %v498 = vpop.permute.xlu0 %497
        %499 = vrot.lane.b32.xlu0 %v369, 108
        %v500 = vpop.permute.xlu0 %499
        %501 = vrot.lane.b32.xlu0 %v350, 108
        %v502 = vpop.permute.xlu0 %501
        %vm503 = vcmask 883712
        %v504 = vsel %vm503, %v492, %v494
        %v505 = vsel %vm503, %v494, %v496
        %v506 = vsel %vm503, %v496, %v498
        %v507 = vsel %vm503, %v498, %v500
        %v508 = vsel %vm503, %v500, %v502
        %515 = vst [vmem:[#allocation6 + $0x60] sm:$0xf0] %v504
        %516 = vst [vmem:[#allocation6 + $0x68] sm:$0xf0] %v505
        %517 = vst [vmem:[#allocation6 + $0x70] sm:$0xf0] %v506
        %518 = vst [vmem:[#allocation6 + $0x78] sm:$0xf0] %v507
        %519 = vst [vmem:[#allocation6 + $0x80] sm:$0xf0] %v508
        %520 = vst.msk [vmem:[#allocation6 + $0x88] sm:$0xf0] %vm399, %v502
        %521 = vrot.lane.b32.xlu0 %v348, 92
        %v522 = vpop.permute.xlu0 %521
        %523 = vrot.lane.b32.xlu0 %v354, 92
        %v524 = vpop.permute.xlu0 %523
        %525 = vrot.lane.b32.xlu0 %v349, 92
        %v526 = vpop.permute.xlu0 %525
        %527 = vrot.lane.b32.xlu0 %v355, 92
        %v528 = vpop.permute.xlu0 %527
        %529 = vrot.lane.b32.xlu0 %v350, 92
        %v530 = vpop.permute.xlu0 %529
        %531 = vrot.lane.b32.xlu0 %v356, 92
        %v532 = vpop.permute.xlu0 %531
        %vm533 = vcmask 752640
        %v534 = vsel %vm533, %v522, %v524
        %v535 = vsel %vm533, %v524, %v526
        %v536 = vsel %vm533, %v526, %v528
        %v537 = vsel %vm533, %v528, %v530
        %v538 = vsel %vm533, %v530, %v532
        %545 = vst [vmem:[#allocation6 + $0x90] sm:$0xf] %v534
        %546 = vst [vmem:[#allocation6 + $0x98] sm:$0xf] %v535
        %547 = vst [vmem:[#allocation6 + $0xa0] sm:$0xf] %v536
        %548 = vst [vmem:[#allocation6 + $0xa8] sm:$0xf] %v537
        %549 = vst [vmem:[#allocation6 + $0xb0] sm:$0xf] %v538
        %550 = vst.msk [vmem:[#allocation6 + $0xb8] sm:$0xf] %vm365, %v532
        %551 = vrot.lane.b32.xlu0 %v367, 91
        %v552 = vpop.permute.xlu0 %551
        %553 = vrot.lane.b32.xlu0 %v348, 91
        %v554 = vpop.permute.xlu0 %553
        %555 = vrot.lane.b32.xlu0 %v368, 91
        %v556 = vpop.permute.xlu0 %555
        %557 = vrot.lane.b32.xlu0 %v349, 91
        %v558 = vpop.permute.xlu0 %557
        %559 = vrot.lane.b32.xlu0 %v369, 91
        %v560 = vpop.permute.xlu0 %559
        %561 = vrot.lane.b32.xlu0 %v350, 91
        %v562 = vpop.permute.xlu0 %561
        %vm563 = vcmask 744448
        %v564 = vsel %vm563, %v552, %v554
        %v565 = vsel %vm563, %v554, %v556
        %v566 = vsel %vm563, %v556, %v558
        %v567 = vsel %vm563, %v558, %v560
        %v568 = vsel %vm563, %v560, %v562
        %575 = vst [vmem:[#allocation6 + $0x90] sm:$0xf0] %v564
        %576 = vst [vmem:[#allocation6 + $0x98] sm:$0xf0] %v565
        %577 = vst [vmem:[#allocation6 + $0xa0] sm:$0xf0] %v566
        %578 = vst [vmem:[#allocation6 + $0xa8] sm:$0xf0] %v567
        %579 = vst [vmem:[#allocation6 + $0xb0] sm:$0xf0] %v568
        %580 = vst.msk [vmem:[#allocation6 + $0xb8] sm:$0xf0] %vm399, %v562
        %581 = vrot.lane.b32.xlu0 %v348, 90
        %v582 = vpop.permute.xlu0 %581
        %583 = vrot.lane.b32.xlu0 %v354, 90
        %v584 = vpop.permute.xlu0 %583
        %585 = vrot.lane.b32.xlu0 %v349, 90
        %v586 = vpop.permute.xlu0 %585
        %587 = vrot.lane.b32.xlu0 %v355, 90
        %v588 = vpop.permute.xlu0 %587
        %589 = vrot.lane.b32.xlu0 %v350, 90
        %v590 = vpop.permute.xlu0 %589
        %591 = vrot.lane.b32.xlu0 %v356, 90
        %v592 = vpop.permute.xlu0 %591
        %vm593 = vcmask 736256
        %v594 = vsel %vm593, %v582, %v584
        %v595 = vsel %vm593, %v584, %v586
        %v596 = vsel %vm593, %v586, %v588
        %v597 = vsel %vm593, %v588, %v590
        %v598 = vsel %vm593, %v590, %v592
        %605 = vst [vmem:[#allocation6 + $0xc0] sm:$0xf] %v594
        %606 = vst [vmem:[#allocation6 + $0xc8] sm:$0xf] %v595
        %607 = vst [vmem:[#allocation6 + $0xd0] sm:$0xf] %v596
        %608 = vst [vmem:[#allocation6 + $0xd8] sm:$0xf] %v597
        %609 = vst [vmem:[#allocation6 + $0xe0] sm:$0xf] %v598
        %610 = vst.msk [vmem:[#allocation6 + $0xe8] sm:$0xf] %vm365, %v592
        %v614 = vcombine.low %v342, %v342
        %v615 = vcombine.low %v343, %v343
        %v616 = vcombine.low %v344, %v344
        %620 = vst [vmem:[#allocation6 + $0xc0] sm:$0xf0] %v614
        %621 = vst [vmem:[#allocation6 + $0xc8] sm:$0xf0] %v342
        %622 = vst [vmem:[#allocation6 + $0xd0] sm:$0xf0] %v615
        %623 = vst [vmem:[#allocation6 + $0xd8] sm:$0xf0] %v343
        %624 = vst [vmem:[#allocation6 + $0xe0] sm:$0xf0] %v616
        %625 = vst.msk [vmem:[#allocation6 + $0xe8] sm:$0xf0] %vm399, %v344
        %v626 = vcombine.high %v342, %v342
        %v627 = vcombine.high %v343, %v343
        %v628 = vcombine.high %v344, %v344
        %629 = vrot.lane.b32.xlu0 %v342, 127
        %v630 = vpop.permute.xlu0 %629
        %631 = vrot.lane.b32.xlu0 %v626, 127
        %v632 = vpop.permute.xlu0 %631
        %633 = vrot.lane.b32.xlu0 %v343, 127
        %v634 = vpop.permute.xlu0 %633
        %635 = vrot.lane.b32.xlu0 %v627, 127
        %v636 = vpop.permute.xlu0 %635
        %637 = vrot.lane.b32.xlu0 %v344, 127
        %v638 = vpop.permute.xlu0 %637
        %639 = vrot.lane.b32.xlu0 %v628, 127
        %v640 = vpop.permute.xlu0 %639
        %v641 = vsel %vm382, %v630, %v632
        %v642 = vsel %vm382, %v632, %v634
        %v643 = vsel %vm382, %v634, %v636
        %v644 = vsel %vm382, %v636, %v638
        %v645 = vsel %vm382, %v638, %v640
        %652 = vst [vmem:[#allocation6 + $0xf0] sm:$0xf] %v641
        %653 = vst [vmem:[#allocation6 + $0xf8] sm:$0xf] %v642
        %654 = vst [vmem:[#allocation6 + $0x100] sm:$0xf] %v643
        %655 = vst [vmem:[#allocation6 + $0x108] sm:$0xf] %v644
        %656 = vst [vmem:[#allocation6 + $0x110] sm:$0xf] %v645
        %657 = vst.msk [vmem:[#allocation6 + $0x118] sm:$0xf] %vm365, %v640
        %658 = vrot.lane.b32.xlu0 %v614, 126
        %v659 = vpop.permute.xlu0 %658
        %660 = vrot.lane.b32.xlu0 %v342, 126
        %v661 = vpop.permute.xlu0 %660
        %662 = vrot.lane.b32.xlu0 %v615, 126
        %v663 = vpop.permute.xlu0 %662
        %664 = vrot.lane.b32.xlu0 %v343, 126
        %v665 = vpop.permute.xlu0 %664
        %666 = vrot.lane.b32.xlu0 %v616, 126
        %v667 = vpop.permute.xlu0 %666
        %668 = vrot.lane.b32.xlu0 %v344, 126
        %v669 = vpop.permute.xlu0 %668
        %v670 = vsel %vm413, %v659, %v661
        %v671 = vsel %vm413, %v661, %v663
        %v672 = vsel %vm413, %v663, %v665
        %v673 = vsel %vm413, %v665, %v667
        %v674 = vsel %vm413, %v667, %v669
        %681 = vst [vmem:[#allocation6 + $0xf0] sm:$0xf0] %v670
        %682 = vst [vmem:[#allocation6 + $0xf8] sm:$0xf0] %v671
        %683 = vst [vmem:[#allocation6 + $0x100] sm:$0xf0] %v672
        %684 = vst [vmem:[#allocation6 + $0x108] sm:$0xf0] %v673
        %685 = vst [vmem:[#allocation6 + $0x110] sm:$0xf0] %v674
        %686 = vst.msk [vmem:[#allocation6 + $0x118] sm:$0xf0] %vm399, %v669
        %687 = vrot.lane.b32.xlu0 %v342, 110
        %v688 = vpop.permute.xlu0 %687
        %689 = vrot.lane.b32.xlu0 %v626, 110
        %v690 = vpop.permute.xlu0 %689
        %691 = vrot.lane.b32.xlu0 %v343, 110
        %v692 = vpop.permute.xlu0 %691
        %693 = vrot.lane.b32.xlu0 %v627, 110
        %v694 = vpop.permute.xlu0 %693
        %695 = vrot.lane.b32.xlu0 %v344, 110
        %v696 = vpop.permute.xlu0 %695
        %697 = vrot.lane.b32.xlu0 %v628, 110
        %v698 = vpop.permute.xlu0 %697
        %v699 = vsel %vm443, %v688, %v690
        %v700 = vsel %vm443, %v690, %v692
        %v701 = vsel %vm443, %v692, %v694
        %v702 = vsel %vm443, %v694, %v696
        %v703 = vsel %vm443, %v696, %v698
        %710 = vst [vmem:[#allocation6 + $0x120] sm:$0xf] %v699
        %711 = vst [vmem:[#allocation6 + $0x128] sm:$0xf] %v700
        %712 = vst [vmem:[#allocation6 + $0x130] sm:$0xf] %v701
        %713 = vst [vmem:[#allocation6 + $0x138] sm:$0xf] %v702
        %714 = vst [vmem:[#allocation6 + $0x140] sm:$0xf] %v703
        %715 = vst.msk [vmem:[#allocation6 + $0x148] sm:$0xf] %vm365, %v698
        %716 = vrot.lane.b32.xlu0 %v614, 109
        %v717 = vpop.permute.xlu0 %716
        %718 = vrot.lane.b32.xlu0 %v342, 109
        %v719 = vpop.permute.xlu0 %718
        %720 = vrot.lane.b32.xlu0 %v615, 109
        %v721 = vpop.permute.xlu0 %720
        %722 = vrot.lane.b32.xlu0 %v343, 109
        %v723 = vpop.permute.xlu0 %722
        %724 = vrot.lane.b32.xlu0 %v616, 109
        %v725 = vpop.permute.xlu0 %724
        %726 = vrot.lane.b32.xlu0 %v344, 109
        %v727 = vpop.permute.xlu0 %726
        %v728 = vsel %vm473, %v717, %v719
        %v729 = vsel %vm473, %v719, %v721
        %v730 = vsel %vm473, %v721, %v723
        %v731 = vsel %vm473, %v723, %v725
        %v732 = vsel %vm473, %v725, %v727
        %739 = vst [vmem:[#allocation6 + $0x120] sm:$0xf0] %v728
        %740 = vst [vmem:[#allocation6 + $0x128] sm:$0xf0] %v729
        %741 = vst [vmem:[#allocation6 + $0x130] sm:$0xf0] %v730
        %742 = vst [vmem:[#allocation6 + $0x138] sm:$0xf0] %v731
        %743 = vst [vmem:[#allocation6 + $0x140] sm:$0xf0] %v732
        %744 = vst.msk [vmem:[#allocation6 + $0x148] sm:$0xf0] %vm399, %v727
        %745 = vrot.lane.b32.xlu0 %v342, 108
        %v746 = vpop.permute.xlu0 %745
        %747 = vrot.lane.b32.xlu0 %v626, 108
        %v748 = vpop.permute.xlu0 %747
        %749 = vrot.lane.b32.xlu0 %v343, 108
        %v750 = vpop.permute.xlu0 %749
        %751 = vrot.lane.b32.xlu0 %v627, 108
        %v752 = vpop.permute.xlu0 %751
        %753 = vrot.lane.b32.xlu0 %v344, 108
        %v754 = vpop.permute.xlu0 %753
        %755 = vrot.lane.b32.xlu0 %v628, 108
        %v756 = vpop.permute.xlu0 %755
        %v757 = vsel %vm503, %v746, %v748
        %v758 = vsel %vm503, %v748, %v750
        %v759 = vsel %vm503, %v750, %v752
        %v760 = vsel %vm503, %v752, %v754
        %v761 = vsel %vm503, %v754, %v756
        %768 = vst [vmem:[#allocation6 + $0x150] sm:$0xf] %v757
        %769 = vst [vmem:[#allocation6 + $0x158] sm:$0xf] %v758
        %770 = vst [vmem:[#allocation6 + $0x160] sm:$0xf] %v759
        %771 = vst [vmem:[#allocation6 + $0x168] sm:$0xf] %v760
        %772 = vst [vmem:[#allocation6 + $0x170] sm:$0xf] %v761
        %773 = vst.msk [vmem:[#allocation6 + $0x178] sm:$0xf] %vm365, %v756
        %774 = vrot.lane.b32.xlu0 %v614, 92
        %v775 = vpop.permute.xlu0 %774
        %776 = vrot.lane.b32.xlu0 %v342, 92
        %v777 = vpop.permute.xlu0 %776
        %778 = vrot.lane.b32.xlu0 %v615, 92
        %v779 = vpop.permute.xlu0 %778
        %780 = vrot.lane.b32.xlu0 %v343, 92
        %v781 = vpop.permute.xlu0 %780
        %782 = vrot.lane.b32.xlu0 %v616, 92
        %v783 = vpop.permute.xlu0 %782
        %784 = vrot.lane.b32.xlu0 %v344, 92
        %v785 = vpop.permute.xlu0 %784
        %v786 = vsel %vm533, %v775, %v777
        %v787 = vsel %vm533, %v777, %v779
        %v788 = vsel %vm533, %v779, %v781
        %v789 = vsel %vm533, %v781, %v783
        %v790 = vsel %vm533, %v783, %v785
        %797 = vst [vmem:[#allocation6 + $0x150] sm:$0xf0] %v786
        %798 = vst [vmem:[#allocation6 + $0x158] sm:$0xf0] %v787
        %799 = vst [vmem:[#allocation6 + $0x160] sm:$0xf0] %v788
        %800 = vst [vmem:[#allocation6 + $0x168] sm:$0xf0] %v789
        %801 = vst [vmem:[#allocation6 + $0x170] sm:$0xf0] %v790
        %802 = vst.msk [vmem:[#allocation6 + $0x178] sm:$0xf0] %vm399, %v785
        %803 = vrot.lane.b32.xlu0 %v342, 91
        %v804 = vpop.permute.xlu0 %803
        %805 = vrot.lane.b32.xlu0 %v626, 91
        %v806 = vpop.permute.xlu0 %805
        %807 = vrot.lane.b32.xlu0 %v343, 91
        %v808 = vpop.permute.xlu0 %807
        %809 = vrot.lane.b32.xlu0 %v627, 91
        %v810 = vpop.permute.xlu0 %809
        %811 = vrot.lane.b32.xlu0 %v344, 91
        %v812 = vpop.permute.xlu0 %811
        %813 = vrot.lane.b32.xlu0 %v628, 91
        %v814 = vpop.permute.xlu0 %813
        %v815 = vsel %vm563, %v804, %v806
        %v816 = vsel %vm563, %v806, %v808
        %v817 = vsel %vm563, %v808, %v810
        %v818 = vsel %vm563, %v810, %v812
        %v819 = vsel %vm563, %v812, %v814
        %826 = vst [vmem:[#allocation6 + $0x180] sm:$0xf] %v815
        %827 = vst [vmem:[#allocation6 + $0x188] sm:$0xf] %v816
        %828 = vst [vmem:[#allocation6 + $0x190] sm:$0xf] %v817
        %829 = vst [vmem:[#allocation6 + $0x198] sm:$0xf] %v818
        %830 = vst [vmem:[#allocation6 + $0x1a0] sm:$0xf] %v819
        %831 = vst.msk [vmem:[#allocation6 + $0x1a8] sm:$0xf] %vm365, %v814
        %832 = vrot.lane.b32.xlu0 %v614, 90
        %v833 = vpop.permute.xlu0 %832
        %834 = vrot.lane.b32.xlu0 %v342, 90
        %v835 = vpop.permute.xlu0 %834
        %836 = vrot.lane.b32.xlu0 %v615, 90
        %v837 = vpop.permute.xlu0 %836
        %838 = vrot.lane.b32.xlu0 %v343, 90
        %v839 = vpop.permute.xlu0 %838
        %840 = vrot.lane.b32.xlu0 %v616, 90
        %v841 = vpop.permute.xlu0 %840
        %842 = vrot.lane.b32.xlu0 %v344, 90
        %v843 = vpop.permute.xlu0 %842
        %v844 = vsel %vm593, %v833, %v835
        %v845 = vsel %vm593, %v835, %v837
        %v846 = vsel %vm593, %v837, %v839
        %v847 = vsel %vm593, %v839, %v841
        %v848 = vsel %vm593, %v841, %v843
        %855 = vst [vmem:[#allocation6 + $0x180] sm:$0xf0] %v844
        %856 = vst [vmem:[#allocation6 + $0x188] sm:$0xf0] %v845
        %857 = vst [vmem:[#allocation6 + $0x190] sm:$0xf0] %v846
        %858 = vst [vmem:[#allocation6 + $0x198] sm:$0xf0] %v847
        %859 = vst [vmem:[#allocation6 + $0x1a0] sm:$0xf0] %v848
        %860 = vst.msk [vmem:[#allocation6 + $0x1a8] sm:$0xf0] %vm399, %v843
        %v864 = vcombine.high %v345, %v345
        %v865 = vcombine.high %v346, %v346
        %v866 = vcombine.high %v347, %v347
        %870 = vst [vmem:[#allocation6 + $0x1b0] sm:$0xf] %v345
        %871 = vst [vmem:[#allocation6 + $0x1b8] sm:$0xf] %v864
        %872 = vst [vmem:[#allocation6 + $0x1c0] sm:$0xf] %v346
        %873 = vst [vmem:[#allocation6 + $0x1c8] sm:$0xf] %v865
        %874 = vst [vmem:[#allocation6 + $0x1d0] sm:$0xf] %v347
        %875 = vst.msk [vmem:[#allocation6 + $0x1d8] sm:$0xf] %vm365, %v866
        %v876 = vcombine.low %v345, %v345
        %v877 = vcombine.low %v346, %v346
        %v878 = vcombine.low %v347, %v347
        %879 = vrot.lane.b32.xlu0 %v876, 127
        %v880 = vpop.permute.xlu0 %879
        %881 = vrot.lane.b32.xlu0 %v345, 127
        %v882 = vpop.permute.xlu0 %881
        %883 = vrot.lane.b32.xlu0 %v877, 127
        %v884 = vpop.permute.xlu0 %883
        %885 = vrot.lane.b32.xlu0 %v346, 127
        %v886 = vpop.permute.xlu0 %885
        %887 = vrot.lane.b32.xlu0 %v878, 127
        %v888 = vpop.permute.xlu0 %887
        %889 = vrot.lane.b32.xlu0 %v347, 127
        %v890 = vpop.permute.xlu0 %889
        %v891 = vsel %vm382, %v880, %v882
        %v892 = vsel %vm382, %v882, %v884
        %v893 = vsel %vm382, %v884, %v886
        %v894 = vsel %vm382, %v886, %v888
        %v895 = vsel %vm382, %v888, %v890
        %902 = vst [vmem:[#allocation6 + $0x1b0] sm:$0xf0] %v891
        %903 = vst [vmem:[#allocation6 + $0x1b8] sm:$0xf0] %v892
        %904 = vst [vmem:[#allocation6 + $0x1c0] sm:$0xf0] %v893
        %905 = vst [vmem:[#allocation6 + $0x1c8] sm:$0xf0] %v894
        %906 = vst [vmem:[#allocation6 + $0x1d0] sm:$0xf0] %v895
        %907 = vst.msk [vmem:[#allocation6 + $0x1d8] sm:$0xf0] %vm399, %v890
        %908 = vrot.lane.b32.xlu0 %v345, 126
        %v909 = vpop.permute.xlu0 %908
        %910 = vrot.lane.b32.xlu0 %v864, 126
        %v911 = vpop.permute.xlu0 %910
        %912 = vrot.lane.b32.xlu0 %v346, 126
        %v913 = vpop.permute.xlu0 %912
        %914 = vrot.lane.b32.xlu0 %v865, 126
        %v915 = vpop.permute.xlu0 %914
        %916 = vrot.lane.b32.xlu0 %v347, 126
        %v917 = vpop.permute.xlu0 %916
        %918 = vrot.lane.b32.xlu0 %v866, 126
        %v919 = vpop.permute.xlu0 %918
        %v920 = vsel %vm413, %v909, %v911
        %v921 = vsel %vm413, %v911, %v913
        %v922 = vsel %vm413, %v913, %v915
        %v923 = vsel %vm413, %v915, %v917
        %v924 = vsel %vm413, %v917, %v919
        %931 = vst [vmem:[#allocation6 + $0x1e0] sm:$0xf] %v920
        %932 = vst [vmem:[#allocation6 + $0x1e8] sm:$0xf] %v921
        %933 = vst [vmem:[#allocation6 + $0x1f0] sm:$0xf] %v922
        %934 = vst [vmem:[#allocation6 + $0x1f8] sm:$0xf] %v923
        %935 = vst [vmem:[#allocation6 + $0x200] sm:$0xf] %v924
        %936 = vst.msk [vmem:[#allocation6 + $0x208] sm:$0xf] %vm365, %v919
        %937 = vrot.lane.b32.xlu0 %v876, 110
        %v938 = vpop.permute.xlu0 %937
        %939 = vrot.lane.b32.xlu0 %v345, 110
        %v940 = vpop.permute.xlu0 %939
        %941 = vrot.lane.b32.xlu0 %v877, 110
        %v942 = vpop.permute.xlu0 %941
        %943 = vrot.lane.b32.xlu0 %v346, 110
        %v944 = vpop.permute.xlu0 %943
        %945 = vrot.lane.b32.xlu0 %v878, 110
        %v946 = vpop.permute.xlu0 %945
        %947 = vrot.lane.b32.xlu0 %v347, 110
        %v948 = vpop.permute.xlu0 %947
        %v949 = vsel %vm443, %v938, %v940
        %v950 = vsel %vm443, %v940, %v942
        %v951 = vsel %vm443, %v942, %v944
        %v952 = vsel %vm443, %v944, %v946
        %v953 = vsel %vm443, %v946, %v948
        %960 = vst [vmem:[#allocation6 + $0x1e0] sm:$0xf0] %v949
        %961 = vst [vmem:[#allocation6 + $0x1e8] sm:$0xf0] %v950
        %962 = vst [vmem:[#allocation6 + $0x1f0] sm:$0xf0] %v951
        %963 = vst [vmem:[#allocation6 + $0x1f8] sm:$0xf0] %v952
        %964 = vst [vmem:[#allocation6 + $0x200] sm:$0xf0] %v953
        %965 = vst.msk [vmem:[#allocation6 + $0x208] sm:$0xf0] %vm399, %v948
        %966 = vrot.lane.b32.xlu0 %v345, 109
        %v967 = vpop.permute.xlu0 %966
        %968 = vrot.lane.b32.xlu0 %v864, 109
        %v969 = vpop.permute.xlu0 %968
        %970 = vrot.lane.b32.xlu0 %v346, 109
        %v971 = vpop.permute.xlu0 %970
        %972 = vrot.lane.b32.xlu0 %v865, 109
        %v973 = vpop.permute.xlu0 %972
        %974 = vrot.lane.b32.xlu0 %v347, 109
        %v975 = vpop.permute.xlu0 %974
        %976 = vrot.lane.b32.xlu0 %v866, 109
        %v977 = vpop.permute.xlu0 %976
        %v978 = vsel %vm473, %v967, %v969
        %v979 = vsel %vm473, %v969, %v971
        %v980 = vsel %vm473, %v971, %v973
        %v981 = vsel %vm473, %v973, %v975
        %v982 = vsel %vm473, %v975, %v977
        %989 = vst [vmem:[#allocation6 + $0x210] sm:$0xf] %v978
        %990 = vst [vmem:[#allocation6 + $0x218] sm:$0xf] %v979
        %991 = vst [vmem:[#allocation6 + $0x220] sm:$0xf] %v980
        %992 = vst [vmem:[#allocation6 + $0x228] sm:$0xf] %v981
        %993 = vst [vmem:[#allocation6 + $0x230] sm:$0xf] %v982
        %994 = vst.msk [vmem:[#allocation6 + $0x238] sm:$0xf] %vm365, %v977
        %995 = vrot.lane.b32.xlu0 %v876, 108
        %v996 = vpop.permute.xlu0 %995
        %997 = vrot.lane.b32.xlu0 %v345, 108
        %v998 = vpop.permute.xlu0 %997
        %999 = vrot.lane.b32.xlu0 %v877, 108
        %v1000 = vpop.permute.xlu0 %999
        %1001 = vrot.lane.b32.xlu0 %v346, 108
        %v1002 = vpop.permute.xlu0 %1001
        %1003 = vrot.lane.b32.xlu0 %v878, 108
        %v1004 = vpop.permute.xlu0 %1003
        %1005 = vrot.lane.b32.xlu0 %v347, 108
        %v1006 = vpop.permute.xlu0 %1005
        %v1007 = vsel %vm503, %v996, %v998
        %v1008 = vsel %vm503, %v998, %v1000
        %v1009 = vsel %vm503, %v1000, %v1002
        %v1010 = vsel %vm503, %v1002, %v1004
        %v1011 = vsel %vm503, %v1004, %v1006
        %1018 = vst [vmem:[#allocation6 + $0x210] sm:$0xf0] %v1007
        %1019 = vst [vmem:[#allocation6 + $0x218] sm:$0xf0] %v1008
        %1020 = vst [vmem:[#allocation6 + $0x220] sm:$0xf0] %v1009
        %1021 = vst [vmem:[#allocation6 + $0x228] sm:$0xf0] %v1010
        %1022 = vst [vmem:[#allocation6 + $0x230] sm:$0xf0] %v1011
        %1023 = vst.msk [vmem:[#allocation6 + $0x238] sm:$0xf0] %vm399, %v1006
        %1024 = vrot.lane.b32.xlu0 %v345, 92
        %v1025 = vpop.permute.xlu0 %1024
        %1026 = vrot.lane.b32.xlu0 %v864, 92
        %v1027 = vpop.permute.xlu0 %1026
        %1028 = vrot.lane.b32.xlu0 %v346, 92
        %v1029 = vpop.permute.xlu0 %1028
        %1030 = vrot.lane.b32.xlu0 %v865, 92
        %v1031 = vpop.permute.xlu0 %1030
        %1032 = vrot.lane.b32.xlu0 %v347, 92
        %v1033 = vpop.permute.xlu0 %1032
        %1034 = vrot.lane.b32.xlu0 %v866, 92
        %v1035 = vpop.permute.xlu0 %1034
        %v1036 = vsel %vm533, %v1025, %v1027
        %v1037 = vsel %vm533, %v1027, %v1029
        %v1038 = vsel %vm533, %v1029, %v1031
        %v1039 = vsel %vm533, %v1031, %v1033
        %v1040 = vsel %vm533, %v1033, %v1035
        %1047 = vst [vmem:[#allocation6 + $0x240] sm:$0xf] %v1036
        %1048 = vst [vmem:[#allocation6 + $0x248] sm:$0xf] %v1037
        %1049 = vst [vmem:[#allocation6 + $0x250] sm:$0xf] %v1038
        %1050 = vst [vmem:[#allocation6 + $0x258] sm:$0xf] %v1039
        %1051 = vst [vmem:[#allocation6 + $0x260] sm:$0xf] %v1040
        %1052 = vst.msk [vmem:[#allocation6 + $0x268] sm:$0xf] %vm365, %v1035
        %1053 = vrot.lane.b32.xlu0 %v876, 91
        %v1054 = vpop.permute.xlu0 %1053
        %1055 = vrot.lane.b32.xlu0 %v345, 91
        %v1056 = vpop.permute.xlu0 %1055
        %1057 = vrot.lane.b32.xlu0 %v877, 91
        %v1058 = vpop.permute.xlu0 %1057
        %1059 = vrot.lane.b32.xlu0 %v346, 91
        %v1060 = vpop.permute.xlu0 %1059
        %1061 = vrot.lane.b32.xlu0 %v878, 91
        %v1062 = vpop.permute.xlu0 %1061
        %1063 = vrot.lane.b32.xlu0 %v347, 91
        %v1064 = vpop.permute.xlu0 %1063
        %v1065 = vsel %vm563, %v1054, %v1056
        %v1066 = vsel %vm563, %v1056, %v1058
        %v1067 = vsel %vm563, %v1058, %v1060
        %v1068 = vsel %vm563, %v1060, %v1062
        %v1069 = vsel %vm563, %v1062, %v1064
        %1076 = vst [vmem:[#allocation6 + $0x240] sm:$0xf0] %v1065
        %1077 = vst [vmem:[#allocation6 + $0x248] sm:$0xf0] %v1066
        %1078 = vst [vmem:[#allocation6 + $0x250] sm:$0xf0] %v1067
        %1079 = vst [vmem:[#allocation6 + $0x258] sm:$0xf0] %v1068
        %1080 = vst [vmem:[#allocation6 + $0x260] sm:$0xf0] %v1069
        %1081 = vst.msk [vmem:[#allocation6 + $0x268] sm:$0xf0] %vm399, %v1064
        %1082 = vrot.lane.b32.xlu0 %v345, 90
        %v1083 = vpop.permute.xlu0 %1082
        %1084 = vrot.lane.b32.xlu0 %v864, 90
        %v1085 = vpop.permute.xlu0 %1084
        %1086 = vrot.lane.b32.xlu0 %v346, 90
        %v1087 = vpop.permute.xlu0 %1086
        %1088 = vrot.lane.b32.xlu0 %v865, 90
        %v1089 = vpop.permute.xlu0 %1088
        %1090 = vrot.lane.b32.xlu0 %v347, 90
        %v1091 = vpop.permute.xlu0 %1090
        %1092 = vrot.lane.b32.xlu0 %v866, 90
        %v1093 = vpop.permute.xlu0 %1092
        %v1094 = vsel %vm593, %v1083, %v1085
        %v1095 = vsel %vm593, %v1085, %v1087
        %v1096 = vsel %vm593, %v1087, %v1089
        %v1097 = vsel %vm593, %v1089, %v1091
        %v1098 = vsel %vm593, %v1091, %v1093
        %1105 = vst [vmem:[#allocation6 + $0x270] sm:$0xf] %v1094
        %1106 = vst [vmem:[#allocation6 + $0x278] sm:$0xf] %v1095
        %1107 = vst [vmem:[#allocation6 + $0x280] sm:$0xf] %v1096
        %1108 = vst [vmem:[#allocation6 + $0x288] sm:$0xf] %v1097
        %1109 = vst [vmem:[#allocation6 + $0x290] sm:$0xf] %v1098
        %1110 = vst.msk [vmem:[#allocation6 + $0x298] sm:$0xf] %vm365, %v1093
        %v1111 = vld [vmem:[#allocation6] sm:$0xff]
        %v1112 = vld [vmem:[#allocation6 + $0x8] sm:$0xff]
        %v1113 = vld [vmem:[#allocation6 + $0x10] sm:$0xff]
        %v1114 = vld [vmem:[#allocation6 + $0x18] sm:$0xff]
        %v1115 = vld [vmem:[#allocation6 + $0x20] sm:$0xff]
        %v1116 = vld [vmem:[#allocation6 + $0x28] sm:$0xff]
        %v1117 = vld [vmem:[#allocation6 + $0x30] sm:$0xff]
        %v1118 = vld [vmem:[#allocation6 + $0x38] sm:$0xff]
        %v1119 = vld [vmem:[#allocation6 + $0x40] sm:$0xff]
        %v1120 = vld [vmem:[#allocation6 + $0x48] sm:$0xff]
        %v1121 = vld [vmem:[#allocation6 + $0x50] sm:$0xff]
        %v1122 = vld [vmem:[#allocation6 + $0x58] sm:$0xff]
        %v1123 = vld [vmem:[#allocation6 + $0x60] sm:$0xff]
        %v1124 = vld [vmem:[#allocation6 + $0x68] sm:$0xff]
        %v1125 = vld [vmem:[#allocation6 + $0x70] sm:$0xff]
        %v1126 = vld [vmem:[#allocation6 + $0x78] sm:$0xff]
        %v1127 = vld [vmem:[#allocation6 + $0x80] sm:$0xff]
        %v1128 = vld [vmem:[#allocation6 + $0x88] sm:$0xff]
        %v1129 = vld [vmem:[#allocation6 + $0x90] sm:$0xff]
        %v1130 = vld [vmem:[#allocation6 + $0x98] sm:$0xff]
        %v1131 = vld [vmem:[#allocation6 + $0xa0] sm:$0xff]
        %v1132 = vld [vmem:[#allocation6 + $0xa8] sm:$0xff]
        %v1133 = vld [vmem:[#allocation6 + $0xb0] sm:$0xff]
        %v1134 = vld [vmem:[#allocation6 + $0xb8] sm:$0xff]
        %v1135 = vld [vmem:[#allocation6 + $0xc0] sm:$0xff]
        %v1136 = vld [vmem:[#allocation6 + $0xc8] sm:$0xff]
        %v1137 = vld [vmem:[#allocation6 + $0xd0] sm:$0xff]
        %v1138 = vld [vmem:[#allocation6 + $0xd8] sm:$0xff]
        %v1139 = vld [vmem:[#allocation6 + $0xe0] sm:$0xff]
        %v1140 = vld [vmem:[#allocation6 + $0xe8] sm:$0xff]
        %v1141 = vld [vmem:[#allocation6 + $0xf0] sm:$0xff]
        %v1142 = vld [vmem:[#allocation6 + $0xf8] sm:$0xff]
        %v1143 = vld [vmem:[#allocation6 + $0x100] sm:$0xff]
        %v1144 = vld [vmem:[#allocation6 + $0x108] sm:$0xff]
        %v1145 = vld [vmem:[#allocation6 + $0x110] sm:$0xff]
        %v1146 = vld [vmem:[#allocation6 + $0x118] sm:$0xff]
        %v1147 = vld [vmem:[#allocation6 + $0x120] sm:$0xff]
        %v1148 = vld [vmem:[#allocation6 + $0x128] sm:$0xff]
        %v1149 = vld [vmem:[#allocation6 + $0x130] sm:$0xff]
        %v1150 = vld [vmem:[#allocation6 + $0x138] sm:$0xff]
        %v1151 = vld [vmem:[#allocation6 + $0x140] sm:$0xff]
        %v1152 = vld [vmem:[#allocation6 + $0x148] sm:$0xff]
        %v1153 = vld [vmem:[#allocation6 + $0x150] sm:$0xff]
        %v1154 = vld [vmem:[#allocation6 + $0x158] sm:$0xff]
        %v1155 = vld [vmem:[#allocation6 + $0x160] sm:$0xff]
        %v1156 = vld [vmem:[#allocation6 + $0x168] sm:$0xff]
        %v1157 = vld [vmem:[#allocation6 + $0x170] sm:$0xff]
        %v1158 = vld [vmem:[#allocation6 + $0x178] sm:$0xff]
        %v1159 = vld [vmem:[#allocation6 + $0x180] sm:$0xff]
        %v1160 = vld [vmem:[#allocation6 + $0x188] sm:$0xff]
        %v1161 = vld [vmem:[#allocation6 + $0x190] sm:$0xff]
        %v1162 = vld [vmem:[#allocation6 + $0x198] sm:$0xff]
        %v1163 = vld [vmem:[#allocation6 + $0x1a0] sm:$0xff]
        %v1164 = vld [vmem:[#allocation6 + $0x1a8] sm:$0xff]
        %v1165 = vld [vmem:[#allocation6 + $0x1b0] sm:$0xff]
        %v1166 = vld [vmem:[#allocation6 + $0x1b8] sm:$0xff]
        %v1167 = vld [vmem:[#allocation6 + $0x1c0] sm:$0xff]
        %v1168 = vld [vmem:[#allocation6 + $0x1c8] sm:$0xff]
        %v1169 = vld [vmem:[#allocation6 + $0x1d0] sm:$0xff]
        %v1170 = vld [vmem:[#allocation6 + $0x1d8] sm:$0xff]
        %v1171 = vld [vmem:[#allocation6 + $0x1e0] sm:$0xff]
        %v1172 = vld [vmem:[#allocation6 + $0x1e8] sm:$0xff]
        %v1173 = vld [vmem:[#allocation6 + $0x1f0] sm:$0xff]
        %v1174 = vld [vmem:[#allocation6 + $0x1f8] sm:$0xff]
        %v1175 = vld [vmem:[#allocation6 + $0x200] sm:$0xff]
        %v1176 = vld [vmem:[#allocation6 + $0x208] sm:$0xff]
        %v1177 = vld [vmem:[#allocation6 + $0x210] sm:$0xff]
        %v1178 = vld [vmem:[#allocation6 + $0x218] sm:$0xff]
        %v1179 = vld [vmem:[#allocation6 + $0x220] sm:$0xff]
        %v1180 = vld [vmem:[#allocation6 + $0x228] sm:$0xff]
        %v1181 = vld [vmem:[#allocation6 + $0x230] sm:$0xff]
        %v1182 = vld [vmem:[#allocation6 + $0x238] sm:$0xff]
        %v1183 = vld [vmem:[#allocation6 + $0x240] sm:$0xff]
        %v1184 = vld [vmem:[#allocation6 + $0x248] sm:$0xff]
        %v1185 = vld [vmem:[#allocation6 + $0x250] sm:$0xff]
        %v1186 = vld [vmem:[#allocation6 + $0x258] sm:$0xff]
        %v1187 = vld [vmem:[#allocation6 + $0x260] sm:$0xff]
        %v1188 = vld [vmem:[#allocation6 + $0x268] sm:$0xff]
        %v1189 = vld [vmem:[#allocation6 + $0x270] sm:$0xff]
        %v1190 = vld [vmem:[#allocation6 + $0x278] sm:$0xff]
        %v1191 = vld [vmem:[#allocation6 + $0x280] sm:$0xff]
        %v1192 = vld [vmem:[#allocation6 + $0x288] sm:$0xff]
        %v1193 = vld [vmem:[#allocation6 + $0x290] sm:$0xff]
        %v1194 = vld [vmem:[#allocation6 + $0x298] sm:$0xff]
        %v1195 = vld [vmem:[#allocation6 + $0x2a0] sm:$0xff]
        %v1196 = vld [vmem:[#allocation6 + $0x2a8] sm:$0xff]
        %v1197 = vld [vmem:[#allocation6 + $0x2b0] sm:$0xff]
        %v1198 = vld [vmem:[#allocation6 + $0x2b8] sm:$0xff]
        %v1199 = vld [vmem:[#allocation6 + $0x2c0] sm:$0xff]
        %v1200 = vld [vmem:[#allocation6 + $0x2c8] sm:$0xff]
        %v1201 = vld [vmem:[#allocation6 + $0x2d0] sm:$0xff]
        %v1202 = vld [vmem:[#allocation6 + $0x2d8] sm:$0xff]
        %v1203 = vld [vmem:[#allocation6 + $0x2e0] sm:$0xff]
        %v1204 = vld [vmem:[#allocation6 + $0x2e8] sm:$0xff]
        %v1205 = vld [vmem:[#allocation6 + $0x2f0] sm:$0xff]
        %v1206 = vld [vmem:[#allocation6 + $0x2f8] sm:$0xff]
        %1207 = vmatprep.subr.mxu0 %v1112
        %1208 = vmatpush1.msra.mxu0 %v1111
        %1209 = vmatprep.subr.mxu0 %v1118
        %1210 = vmatpush1.msra.mxu0 %v1117
        %1211 = vmatprep.subr.mxu0 %v1124
        %1212 = vmatpush1.msra.mxu0 %v1123
        %1213 = vmatprep.subr.mxu0 %v1130
        %1214 = vmatpush1.msra.mxu0 %v1129
        %1215 = vmatprep.subr.mxu0 %v1136
        %1216 = vmatpush1.msra.mxu0 %v1135
        %1217 = vmatprep.subr.mxu0 %v1142
        %1218 = vmatpush1.msra.mxu0 %v1141
        %1219 = vmatprep.subr.mxu0 %v1148
        %1220 = vmatpush1.msra.mxu0 %v1147
        %1221 = vmatprep.subr.mxu0 %v1154
        %1222 = vmatpush1.msra.mxu0 %v1153
        %1223 = vmatprep.subr.mxu0 %v1160
        %1224 = vmatpush1.msra.mxu0 %v1159
        %1225 = vmatprep.subr.mxu0 %v1166
        %1226 = vmatpush1.msra.mxu0 %v1165
        %1227 = vmatprep.subr.mxu0 %v1172
        %1228 = vmatpush1.msra.mxu0 %v1171
        %1229 = vmatprep.subr.mxu0 %v1178
        %1230 = vmatpush1.msra.mxu0 %v1177
        %1231 = vmatprep.subr.mxu0 %v1184
        %1232 = vmatpush1.msra.mxu0 %v1183
        %1233 = vmatprep.subr.mxu0 %v1190
        %1234 = vmatpush1.msra.mxu0 %v1189
        %1235 = vmatprep.subr.mxu0 %v1196
        %1236 = vmatpush1.msra.mxu0 %v1195
        %1237 = vmatprep.subr.mxu0 %v1202
        %1238 = vmatpush1.msra.mxu0 %v1201
        %1239 = vmatprep.subr.mxu0 0.0
        %1240 = vmatpush1.msra.mxu0 0.0
        %1241 = vmatprep.subr.mxu0 0.0
        %1242 = vmatpush1.msra.mxu0 0.0
        %1243 = vmatprep.subr.mxu0 0.0
        %1244 = vmatpush1.msra.mxu0 0.0
        %1245 = vmatprep.subr.mxu0 0.0
        %1246 = vmatpush1.msra.mxu0 0.0
        %1247 = vmatprep.subr.mxu0 0.0
        %1248 = vmatpush1.msra.mxu0 0.0
        %1249 = vmatprep.subr.mxu0 0.0
        %1250 = vmatpush1.msra.mxu0 0.0
        %1251 = vmatprep.subr.mxu0 0.0
        %1252 = vmatpush1.msra.mxu0 0.0
        %1253 = vmatprep.subr.mxu0 0.0
        %1254 = vmatpush1.msra.mxu0 0.0
        %1255 = vmatprep.subr.mxu0 0.0
        %1256 = vmatpush1.msra.mxu0 0.0
        %1257 = vmatprep.subr.mxu0 0.0
        %1258 = vmatpush1.msra.mxu0 0.0
        %1259 = vmatprep.subr.mxu0 0.0
        %1260 = vmatpush1.msra.mxu0 0.0
        %1261 = vmatprep.subr.mxu0 0.0
        %1262 = vmatpush1.msra.mxu0 0.0
        %1263 = vmatprep.subr.mxu0 0.0
        %1264 = vmatpush1.msra.mxu0 0.0
        %1265 = vmatprep.subr.mxu0 0.0
        %1266 = vmatpush1.msra.mxu0 0.0
        %1267 = vmatprep.subr.mxu0 0.0
        %1268 = vmatpush1.msra.mxu0 0.0
        %1269 = vmatprep.subr.mxu0 0.0
        %1270 = vmatpush1.msra.mxu0 0.0
        %1271 = vmatprep.mubr.f32.mxu0 0.0
        %1272 = vmatmul.mubr.f32.gmra.mrb[0].mxu0 %v336
        %v1273 = vpop.f32.mrb[0].mxu0
        %v1274 = vadd.f32 0.0, %v1273
        %v1275 = vpop.f32.mrb[0].mxu0
        %v1276 = vadd.f32 0.0, %v1275
        %1277 = vmatprep.mubr.f32.mxu0 0.0
        %1278 = vmatmul.mubr.f32.gmra.mrb[0].mxu0 %v337
        %v1279 = vpop.f32.mrb[0].mxu0
        %v1280 = vadd.f32 0.0, %v1279
        %v1281 = vpop.f32.mrb[0].mxu0
        %v1282 = vadd.f32 0.0, %v1281
        %1283 = vmatprep.mubr.f32.mxu0 0.0
        %1284 = vmatmul.mubr.f32.gmra.mrb[0].mxu0 %v338
        %v1285 = vpop.f32.mrb[0].mxu0
        %v1286 = vadd.f32 0.0, %v1285
        %v1287 = vpop.f32.mrb[0].mxu0
        %v1288 = vadd.f32 0.0, %v1287
        %1289 = vmatprep.mubr.f32.mxu0 0.0
        %1290 = vmatmul.mubr.f32.gmra.mrb[0].mxu0 %v339
        %v1291 = vpop.f32.mrb[0].mxu0
        %v1292 = vadd.f32 0.0, %v1291
        %v1293 = vpop.f32.mrb[0].mxu0
        %v1294 = vadd.f32 0.0, %v1293
        %1295 = vdwg.mxu0
        %1296 = vmatprep.subr.mxu0 %v1114
        %1297 = vmatpush1.msra.mxu0 %v1113
        %1298 = vmatprep.subr.mxu0 %v1120
        %1299 = vmatpush1.msra.mxu0 %v1119
        %1300 = vmatprep.subr.mxu0 %v1126
        %1301 = vmatpush1.msra.mxu0 %v1125
        %1302 = vmatprep.subr.mxu0 %v1132
        %1303 = vmatpush1.msra.mxu0 %v1131
        %1304 = vmatprep.subr.mxu0 %v1138
        %1305 = vmatpush1.msra.mxu0 %v1137
        %1306 = vmatprep.subr.mxu0 %v1144
        %1307 = vmatpush1.msra.mxu0 %v1143
        %1308 = vmatprep.subr.mxu0 %v1150
        %1309 = vmatpush1.msra.mxu0 %v1149
        %1310 = vmatprep.subr.mxu0 %v1156
        %1311 = vmatpush1.msra.mxu0 %v1155
        %1312 = vmatprep.subr.mxu0 %v1162
        %1313 = vmatpush1.msra.mxu0 %v1161
        %1314 = vmatprep.subr.mxu0 %v1168
        %1315 = vmatpush1.msra.mxu0 %v1167
        %1316 = vmatprep.subr.mxu0 %v1174
        %1317 = vmatpush1.msra.mxu0 %v1173
        %1318 = vmatprep.subr.mxu0 %v1180
        %1319 = vmatpush1.msra.mxu0 %v1179
        %1320 = vmatprep.subr.mxu0 %v1186
        %1321 = vmatpush1.msra.mxu0 %v1185
        %1322 = vmatprep.subr.mxu0 %v1192
        %1323 = vmatpush1.msra.mxu0 %v1191
        %1324 = vmatprep.subr.mxu0 %v1198
        %1325 = vmatpush1.msra.mxu0 %v1197
        %1326 = vmatprep.subr.mxu0 %v1204
        %1327 = vmatpush1.msra.mxu0 %v1203
        %1328 = vmatprep.subr.mxu0 0.0
        %1329 = vmatpush1.msra.mxu0 0.0
        %1330 = vmatprep.subr.mxu0 0.0
        %1331 = vmatpush1.msra.mxu0 0.0
        %1332 = vmatprep.subr.mxu0 0.0
        %1333 = vmatpush1.msra.mxu0 0.0
        %1334 = vmatprep.subr.mxu0 0.0
        %1335 = vmatpush1.msra.mxu0 0.0
        %1336 = vmatprep.subr.mxu0 0.0
        %1337 = vmatpush1.msra.mxu0 0.0
        %1338 = vmatprep.subr.mxu0 0.0
        %1339 = vmatpush1.msra.mxu0 0.0
        %1340 = vmatprep.subr.mxu0 0.0
        %1341 = vmatpush1.msra.mxu0 0.0
        %1342 = vmatprep.subr.mxu0 0.0
        %1343 = vmatpush1.msra.mxu0 0.0
        %1344 = vmatprep.subr.mxu0 0.0
        %1345 = vmatpush1.msra.mxu0 0.0
        %1346 = vmatprep.subr.mxu0 0.0
        %1347 = vmatpush1.msra.mxu0 0.0
        %1348 = vmatprep.subr.mxu0 0.0
        %1349 = vmatpush1.msra.mxu0 0.0
        %1350 = vmatprep.subr.mxu0 0.0
        %1351 = vmatpush1.msra.mxu0 0.0
        %1352 = vmatprep.subr.mxu0 0.0
        %1353 = vmatpush1.msra.mxu0 0.0
        %1354 = vmatprep.subr.mxu0 0.0
        %1355 = vmatpush1.msra.mxu0 0.0
        %1356 = vmatprep.subr.mxu0 0.0
        %1357 = vmatpush1.msra.mxu0 0.0
        %1358 = vmatprep.subr.mxu0 0.0
        %1359 = vmatpush1.msra.mxu0 0.0
        %1360 = vmatprep.mubr.f32.mxu0 0.0
        %1361 = vmatmul.mubr.f32.gmra.mrb[0].mxu0 %v336
        %v1362 = vpop.f32.mrb[0].mxu0
        %v1363 = vadd.f32 0.0, %v1362
        %v1364 = vpop.f32.mrb[0].mxu0
        %v1365 = vadd.f32 0.0, %v1364
        %1366 = vmatprep.mubr.f32.mxu0 0.0
        %1367 = vmatmul.mubr.f32.gmra.mrb[0].mxu0 %v337
        %v1368 = vpop.f32.mrb[0].mxu0
        %v1369 = vadd.f32 0.0, %v1368
        %v1370 = vpop.f32.mrb[0].mxu0
        %v1371 = vadd.f32 0.0, %v1370
        %1372 = vmatprep.mubr.f32.mxu0 0.0
        %1373 = vmatmul.mubr.f32.gmra.mrb[0].mxu0 %v338
        %v1374 = vpop.f32.mrb[0].mxu0
        %v1375 = vadd.f32 0.0, %v1374
        %v1376 = vpop.f32.mrb[0].mxu0
        %v1377 = vadd.f32 0.0, %v1376
        %1378 = vmatprep.mubr.f32.mxu0 0.0
        %1379 = vmatmul.mubr.f32.gmra.mrb[0].mxu0 %v339
        %v1380 = vpop.f32.mrb[0].mxu0
        %v1381 = vadd.f32 0.0, %v1380
        %v1382 = vpop.f32.mrb[0].mxu0
        %v1383 = vadd.f32 0.0, %v1382
        %1384 = vdwg.mxu0
        %1385 = vmatprep.subr.mxu0 %v1116
        %1386 = vmatpush1.msra.mxu0 %v1115
        %1387 = vmatprep.subr.mxu0 %v1122
        %1388 = vmatpush1.msra.mxu0 %v1121
        %1389 = vmatprep.subr.mxu0 %v1128
        %1390 = vmatpush1.msra.mxu0 %v1127
        %1391 = vmatprep.subr.mxu0 %v1134
        %1392 = vmatpush1.msra.mxu0 %v1133
        %1393 = vmatprep.subr.mxu0 %v1140
        %1394 = vmatpush1.msra.mxu0 %v1139
        %1395 = vmatprep.subr.mxu0 %v1146
        %1396 = vmatpush1.msra.mxu0 %v1145
        %1397 = vmatprep.subr.mxu0 %v1152
        %1398 = vmatpush1.msra.mxu0 %v1151
        %1399 = vmatprep.subr.mxu0 %v1158
        %1400 = vmatpush1.msra.mxu0 %v1157
        %1401 = vmatprep.subr.mxu0 %v1164
        %1402 = vmatpush1.msra.mxu0 %v1163
        %1403 = vmatprep.subr.mxu0 %v1170
        %1404 = vmatpush1.msra.mxu0 %v1169
        %1405 = vmatprep.subr.mxu0 %v1176
        %1406 = vmatpush1.msra.mxu0 %v1175
        %1407 = vmatprep.subr.mxu0 %v1182
        %1408 = vmatpush1.msra.mxu0 %v1181
        %1409 = vmatprep.subr.mxu0 %v1188
        %1410 = vmatpush1.msra.mxu0 %v1187
        %1411 = vmatprep.subr.mxu0 %v1194
        %1412 = vmatpush1.msra.mxu0 %v1193
        %1413 = vmatprep.subr.mxu0 %v1200
        %1414 = vmatpush1.msra.mxu0 %v1199
        %1415 = vmatprep.subr.mxu0 %v1206
        %1416 = vmatpush1.msra.mxu0 %v1205
        %1417 = vmatprep.subr.mxu0 0.0
        %1418 = vmatpush1.msra.mxu0 0.0
        %1419 = vmatprep.subr.mxu0 0.0
        %1420 = vmatpush1.msra.mxu0 0.0
        %1421 = vmatprep.subr.mxu0 0.0
        %1422 = vmatpush1.msra.mxu0 0.0
        %1423 = vmatprep.subr.mxu0 0.0
        %1424 = vmatpush1.msra.mxu0 0.0
        %1425 = vmatprep.subr.mxu0 0.0
        %1426 = vmatpush1.msra.mxu0 0.0
        %1427 = vmatprep.subr.mxu0 0.0
        %1428 = vmatpush1.msra.mxu0 0.0
        %1429 = vmatprep.subr.mxu0 0.0
        %1430 = vmatpush1.msra.mxu0 0.0
        %1431 = vmatprep.subr.mxu0 0.0
        %1432 = vmatpush1.msra.mxu0 0.0
        %1433 = vmatprep.subr.mxu0 0.0
        %1434 = vmatpush1.msra.mxu0 0.0
        %1435 = vmatprep.subr.mxu0 0.0
        %1436 = vmatpush1.msra.mxu0 0.0
        %1437 = vmatprep.subr.mxu0 0.0
        %1438 = vmatpush1.msra.mxu0 0.0
        %1439 = vmatprep.subr.mxu0 0.0
        %1440 = vmatpush1.msra.mxu0 0.0
        %1441 = vmatprep.subr.mxu0 0.0
        %1442 = vmatpush1.msra.mxu0 0.0
        %1443 = vmatprep.subr.mxu0 0.0
        %1444 = vmatpush1.msra.mxu0 0.0
        %1445 = vmatprep.subr.mxu0 0.0
        %1446 = vmatpush1.msra.mxu0 0.0
        %1447 = vmatprep.subr.mxu0 0.0
        %1448 = vmatpush1.msra.mxu0 0.0
        %1449 = vmatprep.mubr.f32.mxu0 0.0
        %1450 = vmatmul.mubr.f32.gmra.mrb[0].mxu0 %v336
        %v1451 = vpop.f32.mrb[0].mxu0
        %v1452 = vadd.f32 0.0, %v1451
        %v1453 = vpop.f32.mrb[0].mxu0
        %v1454 = vadd.f32 0.0, %v1453
        %1455 = vmatprep.mubr.f32.mxu0 0.0
        %1456 = vmatmul.mubr.f32.gmra.mrb[0].mxu0 %v337
        %v1457 = vpop.f32.mrb[0].mxu0
        %v1458 = vadd.f32 0.0, %v1457
        %v1459 = vpop.f32.mrb[0].mxu0
        %v1460 = vadd.f32 0.0, %v1459
        %1461 = vmatprep.mubr.f32.mxu0 0.0
        %1462 = vmatmul.mubr.f32.gmra.mrb[0].mxu0 %v338
        %v1463 = vpop.f32.mrb[0].mxu0
        %v1464 = vadd.f32 0.0, %v1463
        %v1465 = vpop.f32.mrb[0].mxu0
        %v1466 = vadd.f32 0.0, %v1465
        %1467 = vmatprep.mubr.f32.mxu0 0.0
        %1468 = vmatmul.mubr.f32.gmra.mrb[0].mxu0 %v339
        %v1469 = vpop.f32.mrb[0].mxu0
        %v1470 = vadd.f32 0.0, %v1469
        %v1471 = vpop.f32.mrb[0].mxu0
        %v1472 = vadd.f32 0.0, %v1471
        %1473 = vdwg.mxu0
        %s1474 = smul.u32 %s24, 8
        %s1475 = sld [smem:[#allocation8 + %s1474]]
        %s1476 = scvt.s32.f32 %s1475
        %v1477 = vstv %s1476
        %v1478 = vmul.f32 %v340, %v1477
        %v1479 = vmul.f32 %v341, %v1477
        %v1480 = vadd.f32 %v1478, 0.0
        %v1481 = vadd.f32 %v1479, 0.0
        %s1482 = sadd.s32 %s1474, 1
        %s1483 = sld [smem:[#allocation8 + %s1482]]
        %s1484 = scvt.s32.f32 %s1483
        %v1485 = vstv %s1484
        %v1486 = vmul.f32 %v340, %v1485
        %v1487 = vmul.f32 %v341, %v1485
        %v1490 = vrot.slane %v1486, 7
        %v1491 = vrot.slane %v1490, 2
        %v1492 = vrot.slane %v1487, 7
        %v1493 = vrot.slane %v1492, 2
        %v1496 = vadd.f32 %v1480, %v1491
        %v1497 = vadd.f32 %v1481, %v1493
        %v1498 = vxor.u32 %v1274, 2147483648
        %v1499 = vxor.u32 %v1276, 2147483648
        %v1500 = vxor.u32 %v1363, 2147483648
        %v1501 = vxor.u32 %v1365, 2147483648
        %v1502 = vxor.u32 %v1452, 2147483648
        %v1503 = vxor.u32 %v1454, 2147483648
        %v1504 = vxor.u32 %v1280, 2147483648
        %v1505 = vxor.u32 %v1282, 2147483648
        %v1506 = vxor.u32 %v1369, 2147483648
        %v1507 = vxor.u32 %v1371, 2147483648
        %v1508 = vxor.u32 %v1458, 2147483648
        %v1509 = vxor.u32 %v1460, 2147483648
        %v1510 = vmul.f32 %v1498, 1.442695
        %v1511 = vpow.pop %v1510
        %v1512 = vmul.f32 %v1499, 1.442695
        %v1513 = vpow.pop %v1512
        %v1514 = vmul.f32 %v1500, 1.442695
        %v1515 = vpow.pop %v1514
        %v1516 = vmul.f32 %v1501, 1.442695
        %v1517 = vpow.pop %v1516
        %v1518 = vmul.f32 %v1502, 1.442695
        %v1519 = vpow.pop %v1518
        %v1520 = vmul.f32 %v1503, 1.442695
        %v1521 = vpow.pop %v1520
        %v1522 = vmul.f32 %v1504, 1.442695
        %v1523 = vpow.pop %v1522
        %v1524 = vmul.f32 %v1505, 1.442695
        %v1525 = vpow.pop %v1524
        %v1526 = vmul.f32 %v1506, 1.442695
        %v1527 = vpow.pop %v1526
        %v1528 = vmul.f32 %v1507, 1.442695
        %v1529 = vpow.pop %v1528
        %v1530 = vmul.f32 %v1508, 1.442695
        %v1531 = vpow.pop %v1530
        %v1532 = vmul.f32 %v1509, 1.442695
        %v1533 = vpow.pop %v1532
        %v1534 = vadd.f32 %v1511, 1.0
        %v1535 = vadd.f32 %v1513, 1.0
        %v1536 = vadd.f32 %v1515, 1.0
        %v1537 = vadd.f32 %v1517, 1.0
        %v1538 = vadd.f32 %v1519, 1.0
        %v1539 = vadd.f32 %v1521, 1.0
        %v1540 = vadd.f32 %v1523, 1.0
        %v1541 = vadd.f32 %v1525, 1.0
        %v1542 = vadd.f32 %v1527, 1.0
        %v1543 = vadd.f32 %v1529, 1.0
        %v1544 = vadd.f32 %v1531, 1.0
        %v1545 = vadd.f32 %v1533, 1.0
        %v1546 = vrcp.pop %v1534
        %v1547 = vmul.f32 1.0, %v1546
        %v1548 = vrcp.pop %v1535
        %v1549 = vmul.f32 1.0, %v1548
        %v1550 = vrcp.pop %v1536
        %v1551 = vmul.f32 1.0, %v1550
        %v1552 = vrcp.pop %v1537
        %v1553 = vmul.f32 1.0, %v1552
        %v1554 = vrcp.pop %v1538
        %v1555 = vmul.f32 1.0, %v1554
        %v1556 = vrcp.pop %v1539
        %v1557 = vmul.f32 1.0, %v1556
        %v1558 = vrcp.pop %v1540
        %v1559 = vmul.f32 1.0, %v1558
        %v1560 = vrcp.pop %v1541
        %v1561 = vmul.f32 1.0, %v1560
        %v1562 = vrcp.pop %v1542
        %v1563 = vmul.f32 1.0, %v1562
        %v1564 = vrcp.pop %v1543
        %v1565 = vmul.f32 1.0, %v1564
        %v1566 = vrcp.pop %v1544
        %v1567 = vmul.f32 1.0, %v1566
        %v1568 = vrcp.pop %v1545
        %v1569 = vmul.f32 1.0, %v1568
        %v1570 = vtanh.pop %v1280
        %v1571 = vtanh.pop %v1282
        %v1572 = vtanh.pop %v1369
        %v1573 = vtanh.pop %v1371
        %v1574 = vtanh.pop %v1458
        %v1575 = vtanh.pop %v1460
        %v1576 = vld [vmem:[#allocation3] sm:$0xff]
        %v1577 = vld [vmem:[#allocation3 + $0x8] sm:$0xff]
        %v1578 = vld [vmem:[#allocation3 + $0x10] sm:$0xff]
        %v1582 = vcombine.low %v1576, %v1576
        %v1583 = vcombine.low %v1577, %v1577
        %v1584 = vcombine.low %v1578, %v1578
        %v1588 = vmul.f32 %v1547, %v1582
        %v1589 = vmul.f32 %v1549, %v1576
        %v1590 = vmul.f32 %v1551, %v1583
        %v1591 = vmul.f32 %v1553, %v1577
        %v1592 = vmul.f32 %v1555, %v1584
        %v1593 = vmul.f32 %v1557, %v1578
        %v1600 = vrot.slane %v1570, 4
        %v1601 = vrot.slane %v1571, 4
        %v1602 = vrot.slane %v1572, 4
        %v1603 = vrot.slane %v1573, 4
        %v1604 = vrot.slane %v1574, 4
        %v1605 = vrot.slane %v1575, 4
        %v1612 = vmul.f32 %v1547, %v1600
        %v1613 = vmul.f32 %v1549, %v1601
        %v1614 = vmul.f32 %v1551, %v1602
        %v1615 = vmul.f32 %v1553, %v1603
        %v1616 = vmul.f32 %v1555, %v1604
        %v1617 = vmul.f32 %v1557, %v1605
        %v1624 = vrot.slane %v1612, 4
        %v1625 = vrot.slane %v1613, 4
        %v1626 = vrot.slane %v1614, 4
        %v1627 = vrot.slane %v1615, 4
        %v1628 = vrot.slane %v1616, 4
        %v1629 = vrot.slane %v1617, 4
        %v1636 = vadd.f32 %v1588, %v1624
        %v1637 = vadd.f32 %v1589, %v1625
        %v1638 = vadd.f32 %v1590, %v1626
        %v1639 = vadd.f32 %v1591, %v1627
        %v1640 = vadd.f32 %v1592, %v1628
        %v1641 = vadd.f32 %v1593, %v1629
        %v1642 = vtanh.pop %v1636
        %v1643 = vtanh.pop %v1637
        %v1644 = vtanh.pop %v1638
        %v1645 = vtanh.pop %v1639
        %v1646 = vtanh.pop %v1640
        %v1647 = vtanh.pop %v1641
        %v1654 = vrot.slane %v1642, 4
        %v1655 = vrot.slane %v1643, 4
        %v1656 = vrot.slane %v1644, 4
        %v1657 = vrot.slane %v1645, 4
        %v1658 = vrot.slane %v1646, 4
        %v1659 = vrot.slane %v1647, 4
        %v1666 = vmul.f32 %v1559, %v1654
        %v1667 = vmul.f32 %v1561, %v1655
        %v1668 = vmul.f32 %v1563, %v1656
        %v1669 = vmul.f32 %v1565, %v1657
        %v1670 = vmul.f32 %v1567, %v1658
        %v1671 = vmul.f32 %v1569, %v1659
        %v1674 = vlaneseq
        %v1675 = vshrl.u32 %v1674, 7
        %v1676 = vsub.s32 0, %v1675
        %v1677 = vrot.slane %v1496, %v1676
        %v1678 = vlaneseq
        %v1679 = vshrl.u32 %v1678, 7
        %v1680 = vsub.s32 2, %v1679
        %v1681 = vrot.slane %v1496, %v1680
        %v1682 = vlaneseq
        %v1683 = vshrl.u32 %v1682, 7
        %v1684 = vsub.s32 4, %v1683
        %v1685 = vrot.slane %v1496, %v1684
        %v1686 = vlaneseq
        %v1687 = vshrl.u32 %v1686, 7
        %v1688 = vsub.s32 6, %v1687
        %v1689 = vrot.slane %v1496, %v1688
        %v1690 = vlaneseq
        %v1691 = vshrl.u32 %v1690, 7
        %v1692 = vsub.s32 0, %v1691
        %v1693 = vrot.slane %v1497, %v1692
        %v1694 = vlaneseq
        %v1695 = vshrl.u32 %v1694, 7
        %v1696 = vsub.s32 2, %v1695
        %v1697 = vrot.slane %v1497, %v1696
        %v1704 = vlaneseq
        %v1705 = vshrl.u32 %v1704, 7
        %v1706 = vsub.s32 0, %v1705
        %v1707 = vrot.slane %v1677, %v1706
        %v1708 = vlaneseq
        %v1709 = vshrl.u32 %v1708, 7
        %v1710 = vsub.s32 0, %v1709
        %v1711 = vrot.slane %v1681, %v1710
        %v1712 = vlaneseq
        %v1713 = vshrl.u32 %v1712, 7
        %v1714 = vsub.s32 0, %v1713
        %v1715 = vrot.slane %v1685, %v1714
        %v1716 = vlaneseq
        %v1717 = vshrl.u32 %v1716, 7
        %v1718 = vsub.s32 0, %v1717
        %v1719 = vrot.slane %v1689, %v1718
        %v1720 = vlaneseq
        %v1721 = vshrl.u32 %v1720, 7
        %v1722 = vsub.s32 0, %v1721
        %v1723 = vrot.slane %v1693, %v1722
        %v1724 = vlaneseq
        %v1725 = vshrl.u32 %v1724, 7
        %v1726 = vsub.s32 0, %v1725
        %v1727 = vrot.slane %v1697, %v1726
        %v1728 = vmul.f32 %v1707, %v1636
        %v1729 = vmul.f32 %v1711, %v1637
        %v1730 = vmul.f32 %v1715, %v1638
        %v1731 = vmul.f32 %v1719, %v1639
        %v1732 = vmul.f32 %v1723, %v1640
        %v1733 = vmul.f32 %v1727, %v1641
        %v1734 = vsub.f32 1.0, %v1496
        %v1735 = vsub.f32 1.0, %v1497
        %v1738 = vlaneseq
        %v1739 = vshrl.u32 %v1738, 7
        %v1740 = vsub.s32 0, %v1739
        %v1741 = vrot.slane %v1734, %v1740
        %v1742 = vlaneseq
        %v1743 = vshrl.u32 %v1742, 7
        %v1744 = vsub.s32 2, %v1743
        %v1745 = vrot.slane %v1734, %v1744
        %v1746 = vlaneseq
        %v1747 = vshrl.u32 %v1746, 7
        %v1748 = vsub.s32 4, %v1747
        %v1749 = vrot.slane %v1734, %v1748
        %v1750 = vlaneseq
        %v1751 = vshrl.u32 %v1750, 7
        %v1752 = vsub.s32 6, %v1751
        %v1753 = vrot.slane %v1734, %v1752
        %v1754 = vlaneseq
        %v1755 = vshrl.u32 %v1754, 7
        %v1756 = vsub.s32 0, %v1755
        %v1757 = vrot.slane %v1735, %v1756
        %v1758 = vlaneseq
        %v1759 = vshrl.u32 %v1758, 7
        %v1760 = vsub.s32 2, %v1759
        %v1761 = vrot.slane %v1735, %v1760
        %v1768 = vlaneseq
        %v1769 = vshrl.u32 %v1768, 7
        %v1770 = vsub.s32 0, %v1769
        %v1771 = vrot.slane %v1741, %v1770
        %v1772 = vlaneseq
        %v1773 = vshrl.u32 %v1772, 7
        %v1774 = vsub.s32 0, %v1773
        %v1775 = vrot.slane %v1745, %v1774
        %v1776 = vlaneseq
        %v1777 = vshrl.u32 %v1776, 7
        %v1778 = vsub.s32 0, %v1777
        %v1779 = vrot.slane %v1749, %v1778
        %v1780 = vlaneseq
        %v1781 = vshrl.u32 %v1780, 7
        %v1782 = vsub.s32 0, %v1781
        %v1783 = vrot.slane %v1753, %v1782
        %v1784 = vlaneseq
        %v1785 = vshrl.u32 %v1784, 7
        %v1786 = vsub.s32 0, %v1785
        %v1787 = vrot.slane %v1757, %v1786
        %v1788 = vlaneseq
        %v1789 = vshrl.u32 %v1788, 7
        %v1790 = vsub.s32 0, %v1789
        %v1791 = vrot.slane %v1761, %v1790
        %v1792 = vcombine.high %v1576, %v1576
        %v1793 = vcombine.high %v1577, %v1577
        %v1794 = vcombine.high %v1578, %v1578
        %v1798 = vmul.f32 %v1771, %v1576
        %v1799 = vmul.f32 %v1775, %v1792
        %v1800 = vmul.f32 %v1779, %v1577
        %v1801 = vmul.f32 %v1783, %v1793
        %v1802 = vmul.f32 %v1787, %v1578
        %v1803 = vmul.f32 %v1791, %v1794
        %v1810 = vrot.slane %v1798, 4
        %v1811 = vrot.slane %v1799, 4
        %v1812 = vrot.slane %v1800, 4
        %v1813 = vrot.slane %v1801, 4
        %v1814 = vrot.slane %v1802, 4
        %v1815 = vrot.slane %v1803, 4
        %v1822 = vadd.f32 %v1728, %v1810
        %v1823 = vadd.f32 %v1729, %v1811
        %v1824 = vadd.f32 %v1730, %v1812
        %v1825 = vadd.f32 %v1731, %v1813
        %v1826 = vadd.f32 %v1732, %v1814
        %v1827 = vadd.f32 %v1733, %v1815
        %v1834 = vcombine.high %v1822, %v1823
        %v1835 = vcombine.high %v1824, %v1825
        %v1836 = vcombine.high %v1826, %v1827
        %1840 = vst [vmem:[#allocation3] sm:$0xff] %v1834
        %1841 = vst [vmem:[#allocation3 + $0x8] sm:$0xff] %v1835
        %vm1842 = vcmask 1043456
        %vm1843 = vmor %vm399, %vm1842
        %1844 = vst.msk [vmem:[#allocation3 + $0x10] sm:$0xff] %vm1843, %v1836
        %v1845 = vmul.f32 %v1707, %v1666
        %v1846 = vmul.f32 %v1711, %v1667
        %v1847 = vmul.f32 %v1715, %v1668
        %v1848 = vmul.f32 %v1719, %v1669
        %v1849 = vmul.f32 %v1723, %v1670
        %v1850 = vmul.f32 %v1727, %v1671
        %1851 = vrot.lane.b32.xlu0 %v626, 109
        %v1852 = vpop.permute.xlu0 %1851
        %1853 = vrot.lane.b32.xlu0 %v627, 109
        %v1854 = vpop.permute.xlu0 %1853
        %1855 = vrot.lane.b32.xlu0 %v628, 109
        %v1856 = vpop.permute.xlu0 %1855
        %v1857 = vsel %vm473, %v719, %v1852
        %v1858 = vsel %vm473, %v1852, %v723
        %v1859 = vsel %vm473, %v723, %v1854
        %v1860 = vsel %vm473, %v1854, %v727
        %v1861 = vsel %vm473, %v727, %v1856
        %v1868 = vmul.f32 %v1771, %v1857
        %v1869 = vmul.f32 %v1775, %v1858
        %v1870 = vmul.f32 %v1779, %v1859
        %v1871 = vmul.f32 %v1783, %v1860
        %v1872 = vmul.f32 %v1787, %v1861
        %v1873 = vmul.f32 %v1791, %v1856
        %v1874 = vadd.f32 %v1845, %v1868
        %v1875 = vadd.f32 %v1846, %v1869
        %v1876 = vadd.f32 %v1847, %v1870
        %v1877 = vadd.f32 %v1848, %v1871
        %v1878 = vadd.f32 %v1849, %v1872
        %v1879 = vadd.f32 %v1850, %v1873
        %v1886 = vcombine.low %v1874, %v1875
        %v1887 = vcombine.low %v1876, %v1877
        %v1888 = vcombine.low %v1878, %v1879
        %1889 = vrot.lane.b32.xlu0 %v1886, 19
        %v1890 = vpop.permute.xlu0 %1889
        %1891 = vrot.lane.b32.xlu0 %v1887, 19
        %v1892 = vpop.permute.xlu0 %1891
        %1893 = vrot.lane.b32.xlu0 %v1888, 19
        %v1894 = vpop.permute.xlu0 %1893
        %v1895 = vrot.slane %v1890, 4
        %v1896 = vrot.slane %v1892, 4
        %v1897 = vrot.slane %v1894, 4
        %vm1898 = vcmask 154624
        %v1899 = vsel %vm1898, %v1895, %v1890
        %v1900 = vsel %vm1842, %v1895, %v1896
        %v1901 = vsel %vm1898, %v1900, %v1892
        %v1902 = vsel %vm1842, %v1896, %v1897
        %v1903 = vsel %vm1898, %v1902, %v1894
        %vm1907 = vcmask 1043608
        %vm1908 = vcmask 1047556
        %vm1909 = vmor %vm1908, %vm1907
        %1910 = vst.msk [vmem:[#allocation2] sm:$0xff] %vm1909, %v1899
        %1911 = vst [vmem:[#allocation2 + $0x8] sm:$0xff] %v1901
        %vm1912 = vcmask 220164
        %vm1913 = vmor %vm1912, %vm1842
        %1914 = vst.msk [vmem:[#allocation2 + $0x10] sm:$0xff] %vm1913, %v1903
        %v1915 = vxor.u32 %v1286, 2147483648
        %v1916 = vxor.u32 %v1288, 2147483648
        %v1917 = vxor.u32 %v1375, 2147483648
        %v1918 = vxor.u32 %v1377, 2147483648
        %v1919 = vxor.u32 %v1464, 2147483648
        %v1920 = vxor.u32 %v1466, 2147483648
        %v1921 = vxor.u32 %v1292, 2147483648
        %v1922 = vxor.u32 %v1294, 2147483648
        %v1923 = vxor.u32 %v1381, 2147483648
        %v1924 = vxor.u32 %v1383, 2147483648
        %v1925 = vxor.u32 %v1470, 2147483648
        %v1926 = vxor.u32 %v1472, 2147483648
        %v1927 = vmul.f32 %v1915, 1.442695
        %v1928 = vpow.pop %v1927
        %v1929 = vmul.f32 %v1916, 1.442695
        %v1930 = vpow.pop %v1929
        %v1931 = vmul.f32 %v1917, 1.442695
        %v1932 = vpow.pop %v1931
        %v1933 = vmul.f32 %v1918, 1.442695
        %v1934 = vpow.pop %v1933
        %v1935 = vmul.f32 %v1919, 1.442695
        %v1936 = vpow.pop %v1935
        %v1937 = vmul.f32 %v1920, 1.442695
        %v1938 = vpow.pop %v1937
        %v1939 = vmul.f32 %v1921, 1.442695
        %v1940 = vpow.pop %v1939
        %v1941 = vmul.f32 %v1922, 1.442695
        %v1942 = vpow.pop %v1941
        %v1943 = vmul.f32 %v1923, 1.442695
        %v1944 = vpow.pop %v1943
        %v1945 = vmul.f32 %v1924, 1.442695
        %v1946 = vpow.pop %v1945
        %v1947 = vmul.f32 %v1925, 1.442695
        %v1948 = vpow.pop %v1947
        %v1949 = vmul.f32 %v1926, 1.442695
        %v1950 = vpow.pop %v1949
        %v1951 = vadd.f32 %v1928, 1.0
        %v1952 = vadd.f32 %v1930, 1.0
        %v1953 = vadd.f32 %v1932, 1.0
        %v1954 = vadd.f32 %v1934, 1.0
        %v1955 = vadd.f32 %v1936, 1.0
        %v1956 = vadd.f32 %v1938, 1.0
        %v1957 = vadd.f32 %v1940, 1.0
        %v1958 = vadd.f32 %v1942, 1.0
        %v1959 = vadd.f32 %v1944, 1.0
        %v1960 = vadd.f32 %v1946, 1.0
        %v1961 = vadd.f32 %v1948, 1.0
        %v1962 = vadd.f32 %v1950, 1.0
        %v1963 = vrcp.pop %v1951
        %v1964 = vmul.f32 1.0, %v1963
        %v1965 = vrcp.pop %v1952
        %v1966 = vmul.f32 1.0, %v1965
        %v1967 = vrcp.pop %v1953
        %v1968 = vmul.f32 1.0, %v1967
        %v1969 = vrcp.pop %v1954
        %v1970 = vmul.f32 1.0, %v1969
        %v1971 = vrcp.pop %v1955
        %v1972 = vmul.f32 1.0, %v1971
        %v1973 = vrcp.pop %v1956
        %v1974 = vmul.f32 1.0, %v1973
        %v1975 = vrcp.pop %v1957
        %v1976 = vmul.f32 1.0, %v1975
        %v1977 = vrcp.pop %v1958
        %v1978 = vmul.f32 1.0, %v1977
        %v1979 = vrcp.pop %v1959
        %v1980 = vmul.f32 1.0, %v1979
        %v1981 = vrcp.pop %v1960
        %v1982 = vmul.f32 1.0, %v1981
        %v1983 = vrcp.pop %v1961
        %v1984 = vmul.f32 1.0, %v1983
        %v1985 = vrcp.pop %v1962
        %v1986 = vmul.f32 1.0, %v1985
        %v1987 = vtanh.pop %v1292
        %v1988 = vtanh.pop %v1294
        %v1989 = vtanh.pop %v1381
        %v1990 = vtanh.pop %v1383
        %v1991 = vtanh.pop %v1470
        %v1992 = vtanh.pop %v1472
        %v1993 = vld [vmem:[#allocation5] sm:$0xff]
        %v1994 = vld [vmem:[#allocation5 + $0x8] sm:$0xff]
        %v1995 = vld [vmem:[#allocation5 + $0x10] sm:$0xff]
        %v1999 = vcombine.low %v1993, %v1993
        %v2000 = vcombine.low %v1994, %v1994
        %v2001 = vcombine.low %v1995, %v1995
        %v2005 = vmul.f32 %v1964, %v1999
        %v2006 = vmul.f32 %v1966, %v1993
        %v2007 = vmul.f32 %v1968, %v2000
        %v2008 = vmul.f32 %v1970, %v1994
        %v2009 = vmul.f32 %v1972, %v2001
        %v2010 = vmul.f32 %v1974, %v1995
        %v2017 = vrot.slane %v1987, 4
        %v2018 = vrot.slane %v1988, 4
        %v2019 = vrot.slane %v1989, 4
        %v2020 = vrot.slane %v1990, 4
        %v2021 = vrot.slane %v1991, 4
        %v2022 = vrot.slane %v1992, 4
        %v2029 = vmul.f32 %v1964, %v2017
        %v2030 = vmul.f32 %v1966, %v2018
        %v2031 = vmul.f32 %v1968, %v2019
        %v2032 = vmul.f32 %v1970, %v2020
        %v2033 = vmul.f32 %v1972, %v2021
        %v2034 = vmul.f32 %v1974, %v2022
        %v2041 = vrot.slane %v2029, 4
        %v2042 = vrot.slane %v2030, 4
        %v2043 = vrot.slane %v2031, 4
        %v2044 = vrot.slane %v2032, 4
        %v2045 = vrot.slane %v2033, 4
        %v2046 = vrot.slane %v2034, 4
        %v2053 = vadd.f32 %v2005, %v2041
        %v2054 = vadd.f32 %v2006, %v2042
        %v2055 = vadd.f32 %v2007, %v2043
        %v2056 = vadd.f32 %v2008, %v2044
        %v2057 = vadd.f32 %v2009, %v2045
        %v2058 = vadd.f32 %v2010, %v2046
        %v2059 = vtanh.pop %v2053
        %v2060 = vtanh.pop %v2054
        %v2061 = vtanh.pop %v2055
        %v2062 = vtanh.pop %v2056
        %v2063 = vtanh.pop %v2057
        %v2064 = vtanh.pop %v2058
        %v2071 = vrot.slane %v2059, 4
        %v2072 = vrot.slane %v2060, 4
        %v2073 = vrot.slane %v2061, 4
        %v2074 = vrot.slane %v2062, 4
        %v2075 = vrot.slane %v2063, 4
        %v2076 = vrot.slane %v2064, 4
        %v2083 = vmul.f32 %v1976, %v2071
        %v2084 = vmul.f32 %v1978, %v2072
        %v2085 = vmul.f32 %v1980, %v2073
        %v2086 = vmul.f32 %v1982, %v2074
        %v2087 = vmul.f32 %v1984, %v2075
        %v2088 = vmul.f32 %v1986, %v2076
        %v2089 = vmul.f32 %v1707, %v2053
        %v2090 = vmul.f32 %v1711, %v2054
        %v2091 = vmul.f32 %v1715, %v2055
        %v2092 = vmul.f32 %v1719, %v2056
        %v2093 = vmul.f32 %v1723, %v2057
        %v2094 = vmul.f32 %v1727, %v2058
        %v2095 = vcombine.high %v1993, %v1993
        %v2096 = vcombine.high %v1994, %v1994
        %v2097 = vcombine.high %v1995, %v1995
        %v2101 = vmul.f32 %v1771, %v1993
        %v2102 = vmul.f32 %v1775, %v2095
        %v2103 = vmul.f32 %v1779, %v1994
        %v2104 = vmul.f32 %v1783, %v2096
        %v2105 = vmul.f32 %v1787, %v1995
        %v2106 = vmul.f32 %v1791, %v2097
        %v2113 = vrot.slane %v2101, 4
        %v2114 = vrot.slane %v2102, 4
        %v2115 = vrot.slane %v2103, 4
        %v2116 = vrot.slane %v2104, 4
        %v2117 = vrot.slane %v2105, 4
        %v2118 = vrot.slane %v2106, 4
        %v2125 = vadd.f32 %v2089, %v2113
        %v2126 = vadd.f32 %v2090, %v2114
        %v2127 = vadd.f32 %v2091, %v2115
        %v2128 = vadd.f32 %v2092, %v2116
        %v2129 = vadd.f32 %v2093, %v2117
        %v2130 = vadd.f32 %v2094, %v2118
        %v2137 = vcombine.high %v2125, %v2126
        %v2138 = vcombine.high %v2127, %v2128
        %v2139 = vcombine.high %v2129, %v2130
        %2143 = vst [vmem:[#allocation5] sm:$0xff] %v2137
        %2144 = vst [vmem:[#allocation5 + $0x8] sm:$0xff] %v2138
        %2145 = vst.msk [vmem:[#allocation5 + $0x10] sm:$0xff] %vm1843, %v2139
        %v2146 = vmul.f32 %v1707, %v2083
        %v2147 = vmul.f32 %v1711, %v2084
        %v2148 = vmul.f32 %v1715, %v2085
        %v2149 = vmul.f32 %v1719, %v2086
        %v2150 = vmul.f32 %v1723, %v2087
        %v2151 = vmul.f32 %v1727, %v2088
        %v2152 = vmul.f32 %v1771, %v978
        %v2153 = vmul.f32 %v1775, %v979
        %v2154 = vmul.f32 %v1779, %v980
        %v2155 = vmul.f32 %v1783, %v981
        %v2156 = vmul.f32 %v1787, %v982
        %v2157 = vmul.f32 %v1791, %v977
        %v2158 = vadd.f32 %v2146, %v2152
        %v2159 = vadd.f32 %v2147, %v2153
        %v2160 = vadd.f32 %v2148, %v2154
        %v2161 = vadd.f32 %v2149, %v2155
        %v2162 = vadd.f32 %v2150, %v2156
        %v2163 = vadd.f32 %v2151, %v2157
        %v2170 = vcombine.low %v2158, %v2159
        %v2171 = vcombine.low %v2160, %v2161
        %v2172 = vcombine.low %v2162, %v2163
        %2173 = vrot.lane.b32.xlu0 %v2170, 19
        %v2174 = vpop.permute.xlu0 %2173
        %2175 = vrot.lane.b32.xlu0 %v2171, 19
        %v2176 = vpop.permute.xlu0 %2175
        %2177 = vrot.lane.b32.xlu0 %v2172, 19
        %v2178 = vpop.permute.xlu0 %2177
        %v2179 = vrot.slane %v2174, 4
        %v2180 = vrot.slane %v2176, 4
        %v2181 = vrot.slane %v2178, 4
        %v2182 = vsel %vm1898, %v2179, %v2174
        %v2183 = vsel %vm1842, %v2179, %v2180
        %v2184 = vsel %vm1898, %v2183, %v2176
        %v2185 = vsel %vm1842, %v2180, %v2181
        %v2186 = vsel %vm1898, %v2185, %v2178
        %2190 = vst.msk [vmem:[#allocation4] sm:$0xff] %vm1909, %v2182
        %2191 = vst [vmem:[#allocation4 + $0x8] sm:$0xff] %v2184
        %2192 = vst.msk [vmem:[#allocation4 + $0x10] sm:$0xff] %vm1913, %v2186
        %s2193 = smul.u32 %s24, 4
        %s2194 = sadd.s32 %s2193, 1
        %v2195 = vld [vmem:[#allocation2] sm:$0xff]
        %v2196 = vld [vmem:[#allocation2 + $0x8] sm:$0xff]
        %v2197 = vld [vmem:[#allocation2 + $0x10] sm:$0xff]
        %v2198 = vld [vmem:[#allocation4] sm:$0xff]
        %v2199 = vld [vmem:[#allocation4 + $0x8] sm:$0xff]
        %v2200 = vld [vmem:[#allocation4 + $0x10] sm:$0xff]
        %s2201 = scalar_lea.vmem %s184, 24 [#allocation9]
        %v2202 = vld [vmem:[%s2201] sm:$0xff]
        %v2203 = vld [vmem:[%s2201 + $0x8] sm:$0xff]
        %v2204 = vld [vmem:[%s2201 + $0x10] sm:$0xff]
        %v2208 = vcombine.high %v2202, %v2202
        %v2209 = vcombine.high %v2203, %v2203
        %v2210 = vcombine.high %v2204, %v2204
        %2214 = vst [vmem:[#allocation6] sm:$0xf] %v2202
        %2215 = vst [vmem:[#allocation6 + $0x8] sm:$0xf] %v2208
        %2216 = vst [vmem:[#allocation6 + $0x10] sm:$0xf] %v2203
        %2217 = vst [vmem:[#allocation6 + $0x18] sm:$0xf] %v2209
        %2218 = vst [vmem:[#allocation6 + $0x20] sm:$0xf] %v2204
        %2219 = vst.msk [vmem:[#allocation6 + $0x28] sm:$0xf] %vm365, %v2210
        %v2220 = vcombine.low %v2202, %v2202
        %v2221 = vcombine.low %v2203, %v2203
        %v2222 = vcombine.low %v2204, %v2204
        %2223 = vrot.lane.b32.xlu0 %v2220, 127
        %v2224 = vpop.permute.xlu0 %2223
        %2225 = vrot.lane.b32.xlu0 %v2202, 127
        %v2226 = vpop.permute.xlu0 %2225
        %2227 = vrot.lane.b32.xlu0 %v2221, 127
        %v2228 = vpop.permute.xlu0 %2227
        %2229 = vrot.lane.b32.xlu0 %v2203, 127
        %v2230 = vpop.permute.xlu0 %2229
        %2231 = vrot.lane.b32.xlu0 %v2222, 127
        %v2232 = vpop.permute.xlu0 %2231
        %2233 = vrot.lane.b32.xlu0 %v2204, 127
        %v2234 = vpop.permute.xlu0 %2233
        %v2235 = vsel %vm382, %v2224, %v2226
        %v2236 = vsel %vm382, %v2226, %v2228
        %v2237 = vsel %vm382, %v2228, %v2230
        %v2238 = vsel %vm382, %v2230, %v2232
        %v2239 = vsel %vm382, %v2232, %v2234
        %2246 = vst [vmem:[#allocation6] sm:$0xf0] %v2235
        %2247 = vst [vmem:[#allocation6 + $0x8] sm:$0xf0] %v2236
        %2248 = vst [vmem:[#allocation6 + $0x10] sm:$0xf0] %v2237
        %2249 = vst [vmem:[#allocation6 + $0x18] sm:$0xf0] %v2238
        %2250 = vst [vmem:[#allocation6 + $0x20] sm:$0xf0] %v2239
        %2251 = vst.msk [vmem:[#allocation6 + $0x28] sm:$0xf0] %vm399, %v2234
        %2252 = vrot.lane.b32.xlu0 %v2202, 126
        %v2253 = vpop.permute.xlu0 %2252
        %2254 = vrot.lane.b32.xlu0 %v2208, 126
        %v2255 = vpop.permute.xlu0 %2254
        %2256 = vrot.lane.b32.xlu0 %v2203, 126
        %v2257 = vpop.permute.xlu0 %2256
        %2258 = vrot.lane.b32.xlu0 %v2209, 126
        %v2259 = vpop.permute.xlu0 %2258
        %2260 = vrot.lane.b32.xlu0 %v2204, 126
        %v2261 = vpop.permute.xlu0 %2260
        %2262 = vrot.lane.b32.xlu0 %v2210, 126
        %v2263 = vpop.permute.xlu0 %2262
        %v2264 = vsel %vm413, %v2253, %v2255
        %v2265 = vsel %vm413, %v2255, %v2257
        %v2266 = vsel %vm413, %v2257, %v2259
        %v2267 = vsel %vm413, %v2259, %v2261
        %v2268 = vsel %vm413, %v2261, %v2263
        %2275 = vst [vmem:[#allocation6 + $0x30] sm:$0xf] %v2264
        %2276 = vst [vmem:[#allocation6 + $0x38] sm:$0xf] %v2265
        %2277 = vst [vmem:[#allocation6 + $0x40] sm:$0xf] %v2266
        %2278 = vst [vmem:[#allocation6 + $0x48] sm:$0xf] %v2267
        %2279 = vst [vmem:[#allocation6 + $0x50] sm:$0xf] %v2268
        %2280 = vst.msk [vmem:[#allocation6 + $0x58] sm:$0xf] %vm365, %v2263
        %2281 = vrot.lane.b32.xlu0 %v2220, 110
        %v2282 = vpop.permute.xlu0 %2281
        %2283 = vrot.lane.b32.xlu0 %v2202, 110
        %v2284 = vpop.permute.xlu0 %2283
        %2285 = vrot.lane.b32.xlu0 %v2221, 110
        %v2286 = vpop.permute.xlu0 %2285
        %2287 = vrot.lane.b32.xlu0 %v2203, 110
        %v2288 = vpop.permute.xlu0 %2287
        %2289 = vrot.lane.b32.xlu0 %v2222, 110
        %v2290 = vpop.permute.xlu0 %2289
        %2291 = vrot.lane.b32.xlu0 %v2204, 110
        %v2292 = vpop.permute.xlu0 %2291
        %v2293 = vsel %vm443, %v2282, %v2284
        %v2294 = vsel %vm443, %v2284, %v2286
        %v2295 = vsel %vm443, %v2286, %v2288
        %v2296 = vsel %vm443, %v2288, %v2290
        %v2297 = vsel %vm443, %v2290, %v2292
        %2304 = vst [vmem:[#allocation6 + $0x30] sm:$0xf0] %v2293
        %2305 = vst [vmem:[#allocation6 + $0x38] sm:$0xf0] %v2294
        %2306 = vst [vmem:[#allocation6 + $0x40] sm:$0xf0] %v2295
        %2307 = vst [vmem:[#allocation6 + $0x48] sm:$0xf0] %v2296
        %2308 = vst [vmem:[#allocation6 + $0x50] sm:$0xf0] %v2297
        %2309 = vst.msk [vmem:[#allocation6 + $0x58] sm:$0xf0] %vm399, %v2292
        %2310 = vrot.lane.b32.xlu0 %v2202, 109
        %v2311 = vpop.permute.xlu0 %2310
        %2312 = vrot.lane.b32.xlu0 %v2208, 109
        %v2313 = vpop.permute.xlu0 %2312
        %2314 = vrot.lane.b32.xlu0 %v2203, 109
        %v2315 = vpop.permute.xlu0 %2314
        %2316 = vrot.lane.b32.xlu0 %v2209, 109
        %v2317 = vpop.permute.xlu0 %2316
        %2318 = vrot.lane.b32.xlu0 %v2204, 109
        %v2319 = vpop.permute.xlu0 %2318
        %2320 = vrot.lane.b32.xlu0 %v2210, 109
        %v2321 = vpop.permute.xlu0 %2320
        %v2322 = vsel %vm473, %v2311, %v2313
        %v2323 = vsel %vm473, %v2313, %v2315
        %v2324 = vsel %vm473, %v2315, %v2317
        %v2325 = vsel %vm473, %v2317, %v2319
        %v2326 = vsel %vm473, %v2319, %v2321
        %2333 = vst [vmem:[#allocation6 + $0x60] sm:$0xf] %v2322
        %2334 = vst [vmem:[#allocation6 + $0x68] sm:$0xf] %v2323
        %2335 = vst [vmem:[#allocation6 + $0x70] sm:$0xf] %v2324
        %2336 = vst [vmem:[#allocation6 + $0x78] sm:$0xf] %v2325
        %2337 = vst [vmem:[#allocation6 + $0x80] sm:$0xf] %v2326
        %2338 = vst.msk [vmem:[#allocation6 + $0x88] sm:$0xf] %vm365, %v2321
        %2339 = vrot.lane.b32.xlu0 %v2220, 108
        %v2340 = vpop.permute.xlu0 %2339
        %2341 = vrot.lane.b32.xlu0 %v2202, 108
        %v2342 = vpop.permute.xlu0 %2341
        %2343 = vrot.lane.b32.xlu0 %v2221, 108
        %v2344 = vpop.permute.xlu0 %2343
        %2345 = vrot.lane.b32.xlu0 %v2203, 108
        %v2346 = vpop.permute.xlu0 %2345
        %2347 = vrot.lane.b32.xlu0 %v2222, 108
        %v2348 = vpop.permute.xlu0 %2347
        %2349 = vrot.lane.b32.xlu0 %v2204, 108
        %v2350 = vpop.permute.xlu0 %2349
        %v2351 = vsel %vm503, %v2340, %v2342
        %v2352 = vsel %vm503, %v2342, %v2344
        %v2353 = vsel %vm503, %v2344, %v2346
        %v2354 = vsel %vm503, %v2346, %v2348
        %v2355 = vsel %vm503, %v2348, %v2350
        %2362 = vst [vmem:[#allocation6 + $0x60] sm:$0xf0] %v2351
        %2363 = vst [vmem:[#allocation6 + $0x68] sm:$0xf0] %v2352
        %2364 = vst [vmem:[#allocation6 + $0x70] sm:$0xf0] %v2353
        %2365 = vst [vmem:[#allocation6 + $0x78] sm:$0xf0] %v2354
        %2366 = vst [vmem:[#allocation6 + $0x80] sm:$0xf0] %v2355
        %2367 = vst.msk [vmem:[#allocation6 + $0x88] sm:$0xf0] %vm399, %v2350
        %2368 = vrot.lane.b32.xlu0 %v2202, 92
        %v2369 = vpop.permute.xlu0 %2368
        %2370 = vrot.lane.b32.xlu0 %v2208, 92
        %v2371 = vpop.permute.xlu0 %2370
        %2372 = vrot.lane.b32.xlu0 %v2203, 92
        %v2373 = vpop.permute.xlu0 %2372
        %2374 = vrot.lane.b32.xlu0 %v2209, 92
        %v2375 = vpop.permute.xlu0 %2374
        %2376 = vrot.lane.b32.xlu0 %v2204, 92
        %v2377 = vpop.permute.xlu0 %2376
        %2378 = vrot.lane.b32.xlu0 %v2210, 92
        %v2379 = vpop.permute.xlu0 %2378
        %v2380 = vsel %vm533, %v2369, %v2371
        %v2381 = vsel %vm533, %v2371, %v2373
        %v2382 = vsel %vm533, %v2373, %v2375
        %v2383 = vsel %vm533, %v2375, %v2377
        %v2384 = vsel %vm533, %v2377, %v2379
        %2391 = vst [vmem:[#allocation6 + $0x90] sm:$0xf] %v2380
        %2392 = vst [vmem:[#allocation6 + $0x98] sm:$0xf] %v2381
        %2393 = vst [vmem:[#allocation6 + $0xa0] sm:$0xf] %v2382
        %2394 = vst [vmem:[#allocation6 + $0xa8] sm:$0xf] %v2383
        %2395 = vst [vmem:[#allocation6 + $0xb0] sm:$0xf] %v2384
        %2396 = vst.msk [vmem:[#allocation6 + $0xb8] sm:$0xf] %vm365, %v2379
        %2397 = vrot.lane.b32.xlu0 %v2220, 91
        %v2398 = vpop.permute.xlu0 %2397
        %2399 = vrot.lane.b32.xlu0 %v2202, 91
        %v2400 = vpop.permute.xlu0 %2399
        %2401 = vrot.lane.b32.xlu0 %v2221, 91
        %v2402 = vpop.permute.xlu0 %2401
        %2403 = vrot.lane.b32.xlu0 %v2203, 91
        %v2404 = vpop.permute.xlu0 %2403
        %2405 = vrot.lane.b32.xlu0 %v2222, 91
        %v2406 = vpop.permute.xlu0 %2405
        %2407 = vrot.lane.b32.xlu0 %v2204, 91
        %v2408 = vpop.permute.xlu0 %2407
        %v2409 = vsel %vm563, %v2398, %v2400
        %v2410 = vsel %vm563, %v2400, %v2402
        %v2411 = vsel %vm563, %v2402, %v2404
        %v2412 = vsel %vm563, %v2404, %v2406
        %v2413 = vsel %vm563, %v2406, %v2408
        %2420 = vst [vmem:[#allocation6 + $0x90] sm:$0xf0] %v2409
        %2421 = vst [vmem:[#allocation6 + $0x98] sm:$0xf0] %v2410
        %2422 = vst [vmem:[#allocation6 + $0xa0] sm:$0xf0] %v2411
        %2423 = vst [vmem:[#allocation6 + $0xa8] sm:$0xf0] %v2412
        %2424 = vst [vmem:[#allocation6 + $0xb0] sm:$0xf0] %v2413
        %2425 = vst.msk [vmem:[#allocation6 + $0xb8] sm:$0xf0] %vm399, %v2408
        %2426 = vrot.lane.b32.xlu0 %v2202, 90
        %v2427 = vpop.permute.xlu0 %2426
        %2428 = vrot.lane.b32.xlu0 %v2208, 90
        %v2429 = vpop.permute.xlu0 %2428
        %2430 = vrot.lane.b32.xlu0 %v2203, 90
        %v2431 = vpop.permute.xlu0 %2430
        %2432 = vrot.lane.b32.xlu0 %v2209, 90
        %v2433 = vpop.permute.xlu0 %2432
        %2434 = vrot.lane.b32.xlu0 %v2204, 90
        %v2435 = vpop.permute.xlu0 %2434
        %2436 = vrot.lane.b32.xlu0 %v2210, 90
        %v2437 = vpop.permute.xlu0 %2436
        %v2438 = vsel %vm593, %v2427, %v2429
        %v2439 = vsel %vm593, %v2429, %v2431
        %v2440 = vsel %vm593, %v2431, %v2433
        %v2441 = vsel %vm593, %v2433, %v2435
        %v2442 = vsel %vm593, %v2435, %v2437
        %2449 = vst [vmem:[#allocation6 + $0xc0] sm:$0xf] %v2438
        %2450 = vst [vmem:[#allocation6 + $0xc8] sm:$0xf] %v2439
        %2451 = vst [vmem:[#allocation6 + $0xd0] sm:$0xf] %v2440
        %2452 = vst [vmem:[#allocation6 + $0xd8] sm:$0xf] %v2441
        %2453 = vst [vmem:[#allocation6 + $0xe0] sm:$0xf] %v2442
        %2454 = vst.msk [vmem:[#allocation6 + $0xe8] sm:$0xf] %vm365, %v2437
        %v2458 = vcombine.low %v2195, %v2195
        %v2459 = vcombine.low %v2196, %v2196
        %v2460 = vcombine.low %v2197, %v2197
        %2464 = vst [vmem:[#allocation6 + $0xc0] sm:$0xf0] %v2458
        %2465 = vst [vmem:[#allocation6 + $0xc8] sm:$0xf0] %v2195
        %2466 = vst [vmem:[#allocation6 + $0xd0] sm:$0xf0] %v2459
        %2467 = vst [vmem:[#allocation6 + $0xd8] sm:$0xf0] %v2196
        %2468 = vst [vmem:[#allocation6 + $0xe0] sm:$0xf0] %v2460
        %2469 = vst.msk [vmem:[#allocation6 + $0xe8] sm:$0xf0] %vm399, %v2197
        %v2470 = vcombine.high %v2195, %v2195
        %v2471 = vcombine.high %v2196, %v2196
        %v2472 = vcombine.high %v2197, %v2197
        %2473 = vrot.lane.b32.xlu0 %v2195, 127
        %v2474 = vpop.permute.xlu0 %2473
        %2475 = vrot.lane.b32.xlu0 %v2470, 127
        %v2476 = vpop.permute.xlu0 %2475
        %2477 = vrot.lane.b32.xlu0 %v2196, 127
        %v2478 = vpop.permute.xlu0 %2477
        %2479 = vrot.lane.b32.xlu0 %v2471, 127
        %v2480 = vpop.permute.xlu0 %2479
        %2481 = vrot.lane.b32.xlu0 %v2197, 127
        %v2482 = vpop.permute.xlu0 %2481
        %2483 = vrot.lane.b32.xlu0 %v2472, 127
        %v2484 = vpop.permute.xlu0 %2483
        %v2485 = vsel %vm382, %v2474, %v2476
        %v2486 = vsel %vm382, %v2476, %v2478
        %v2487 = vsel %vm382, %v2478, %v2480
        %v2488 = vsel %vm382, %v2480, %v2482
        %v2489 = vsel %vm382, %v2482, %v2484
        %2496 = vst [vmem:[#allocation6 + $0xf0] sm:$0xf] %v2485
        %2497 = vst [vmem:[#allocation6 + $0xf8] sm:$0xf] %v2486
        %2498 = vst [vmem:[#allocation6 + $0x100] sm:$0xf] %v2487
        %2499 = vst [vmem:[#allocation6 + $0x108] sm:$0xf] %v2488
        %2500 = vst [vmem:[#allocation6 + $0x110] sm:$0xf] %v2489
        %2501 = vst.msk [vmem:[#allocation6 + $0x118] sm:$0xf] %vm365, %v2484
        %2502 = vrot.lane.b32.xlu0 %v2458, 126
        %v2503 = vpop.permute.xlu0 %2502
        %2504 = vrot.lane.b32.xlu0 %v2195, 126
        %v2505 = vpop.permute.xlu0 %2504
        %2506 = vrot.lane.b32.xlu0 %v2459, 126
        %v2507 = vpop.permute.xlu0 %2506
        %2508 = vrot.lane.b32.xlu0 %v2196, 126
        %v2509 = vpop.permute.xlu0 %2508
        %2510 = vrot.lane.b32.xlu0 %v2460, 126
        %v2511 = vpop.permute.xlu0 %2510
        %2512 = vrot.lane.b32.xlu0 %v2197, 126
        %v2513 = vpop.permute.xlu0 %2512
        %v2514 = vsel %vm413, %v2503, %v2505
        %v2515 = vsel %vm413, %v2505, %v2507
        %v2516 = vsel %vm413, %v2507, %v2509
        %v2517 = vsel %vm413, %v2509, %v2511
        %v2518 = vsel %vm413, %v2511, %v2513
        %2525 = vst [vmem:[#allocation6 + $0xf0] sm:$0xf0] %v2514
        %2526 = vst [vmem:[#allocation6 + $0xf8] sm:$0xf0] %v2515
        %2527 = vst [vmem:[#allocation6 + $0x100] sm:$0xf0] %v2516
        %2528 = vst [vmem:[#allocation6 + $0x108] sm:$0xf0] %v2517
        %2529 = vst [vmem:[#allocation6 + $0x110] sm:$0xf0] %v2518
        %2530 = vst.msk [vmem:[#allocation6 + $0x118] sm:$0xf0] %vm399, %v2513
        %2531 = vrot.lane.b32.xlu0 %v2195, 110
        %v2532 = vpop.permute.xlu0 %2531
        %2533 = vrot.lane.b32.xlu0 %v2470, 110
        %v2534 = vpop.permute.xlu0 %2533
        %2535 = vrot.lane.b32.xlu0 %v2196, 110
        %v2536 = vpop.permute.xlu0 %2535
        %2537 = vrot.lane.b32.xlu0 %v2471, 110
        %v2538 = vpop.permute.xlu0 %2537
        %2539 = vrot.lane.b32.xlu0 %v2197, 110
        %v2540 = vpop.permute.xlu0 %2539
        %2541 = vrot.lane.b32.xlu0 %v2472, 110
        %v2542 = vpop.permute.xlu0 %2541
        %v2543 = vsel %vm443, %v2532, %v2534
        %v2544 = vsel %vm443, %v2534, %v2536
        %v2545 = vsel %vm443, %v2536, %v2538
        %v2546 = vsel %vm443, %v2538, %v2540
        %v2547 = vsel %vm443, %v2540, %v2542
        %2554 = vst [vmem:[#allocation6 + $0x120] sm:$0xf] %v2543
        %2555 = vst [vmem:[#allocation6 + $0x128] sm:$0xf] %v2544
        %2556 = vst [vmem:[#allocation6 + $0x130] sm:$0xf] %v2545
        %2557 = vst [vmem:[#allocation6 + $0x138] sm:$0xf] %v2546
        %2558 = vst [vmem:[#allocation6 + $0x140] sm:$0xf] %v2547
        %2559 = vst.msk [vmem:[#allocation6 + $0x148] sm:$0xf] %vm365, %v2542
        %2560 = vrot.lane.b32.xlu0 %v2458, 109
        %v2561 = vpop.permute.xlu0 %2560
        %2562 = vrot.lane.b32.xlu0 %v2195, 109
        %v2563 = vpop.permute.xlu0 %2562
        %2564 = vrot.lane.b32.xlu0 %v2459, 109
        %v2565 = vpop.permute.xlu0 %2564
        %2566 = vrot.lane.b32.xlu0 %v2196, 109
        %v2567 = vpop.permute.xlu0 %2566
        %2568 = vrot.lane.b32.xlu0 %v2460, 109
        %v2569 = vpop.permute.xlu0 %2568
        %2570 = vrot.lane.b32.xlu0 %v2197, 109
        %v2571 = vpop.permute.xlu0 %2570
        %v2572 = vsel %vm473, %v2561, %v2563
        %v2573 = vsel %vm473, %v2563, %v2565
        %v2574 = vsel %vm473, %v2565, %v2567
        %v2575 = vsel %vm473, %v2567, %v2569
        %v2576 = vsel %vm473, %v2569, %v2571
        %2583 = vst [vmem:[#allocation6 + $0x120] sm:$0xf0] %v2572
        %2584 = vst [vmem:[#allocation6 + $0x128] sm:$0xf0] %v2573
        %2585 = vst [vmem:[#allocation6 + $0x130] sm:$0xf0] %v2574
        %2586 = vst [vmem:[#allocation6 + $0x138] sm:$0xf0] %v2575
        %2587 = vst [vmem:[#allocation6 + $0x140] sm:$0xf0] %v2576
        %2588 = vst.msk [vmem:[#allocation6 + $0x148] sm:$0xf0] %vm399, %v2571
        %2589 = vrot.lane.b32.xlu0 %v2195, 108
        %v2590 = vpop.permute.xlu0 %2589
        %2591 = vrot.lane.b32.xlu0 %v2470, 108
        %v2592 = vpop.permute.xlu0 %2591
        %2593 = vrot.lane.b32.xlu0 %v2196, 108
        %v2594 = vpop.permute.xlu0 %2593
        %2595 = vrot.lane.b32.xlu0 %v2471, 108
        %v2596 = vpop.permute.xlu0 %2595
        %2597 = vrot.lane.b32.xlu0 %v2197, 108
        %v2598 = vpop.permute.xlu0 %2597
        %2599 = vrot.lane.b32.xlu0 %v2472, 108
        %v2600 = vpop.permute.xlu0 %2599
        %v2601 = vsel %vm503, %v2590, %v2592
        %v2602 = vsel %vm503, %v2592, %v2594
        %v2603 = vsel %vm503, %v2594, %v2596
        %v2604 = vsel %vm503, %v2596, %v2598
        %v2605 = vsel %vm503, %v2598, %v2600
        %2612 = vst [vmem:[#allocation6 + $0x150] sm:$0xf] %v2601
        %2613 = vst [vmem:[#allocation6 + $0x158] sm:$0xf] %v2602
        %2614 = vst [vmem:[#allocation6 + $0x160] sm:$0xf] %v2603
        %2615 = vst [vmem:[#allocation6 + $0x168] sm:$0xf] %v2604
        %2616 = vst [vmem:[#allocation6 + $0x170] sm:$0xf] %v2605
        %2617 = vst.msk [vmem:[#allocation6 + $0x178] sm:$0xf] %vm365, %v2600
        %2618 = vrot.lane.b32.xlu0 %v2458, 92
        %v2619 = vpop.permute.xlu0 %2618
        %2620 = vrot.lane.b32.xlu0 %v2195, 92
        %v2621 = vpop.permute.xlu0 %2620
        %2622 = vrot.lane.b32.xlu0 %v2459, 92
        %v2623 = vpop.permute.xlu0 %2622
        %2624 = vrot.lane.b32.xlu0 %v2196, 92
        %v2625 = vpop.permute.xlu0 %2624
        %2626 = vrot.lane.b32.xlu0 %v2460, 92
        %v2627 = vpop.permute.xlu0 %2626
        %2628 = vrot.lane.b32.xlu0 %v2197, 92
        %v2629 = vpop.permute.xlu0 %2628
        %v2630 = vsel %vm533, %v2619, %v2621
        %v2631 = vsel %vm533, %v2621, %v2623
        %v2632 = vsel %vm533, %v2623, %v2625
        %v2633 = vsel %vm533, %v2625, %v2627
        %v2634 = vsel %vm533, %v2627, %v2629
        %2641 = vst [vmem:[#allocation6 + $0x150] sm:$0xf0] %v2630
        %2642 = vst [vmem:[#allocation6 + $0x158] sm:$0xf0] %v2631
        %2643 = vst [vmem:[#allocation6 + $0x160] sm:$0xf0] %v2632
        %2644 = vst [vmem:[#allocation6 + $0x168] sm:$0xf0] %v2633
        %2645 = vst [vmem:[#allocation6 + $0x170] sm:$0xf0] %v2634
        %2646 = vst.msk [vmem:[#allocation6 + $0x178] sm:$0xf0] %vm399, %v2629
        %2647 = vrot.lane.b32.xlu0 %v2195, 91
        %v2648 = vpop.permute.xlu0 %2647
        %2649 = vrot.lane.b32.xlu0 %v2470, 91
        %v2650 = vpop.permute.xlu0 %2649
        %2651 = vrot.lane.b32.xlu0 %v2196, 91
        %v2652 = vpop.permute.xlu0 %2651
        %2653 = vrot.lane.b32.xlu0 %v2471, 91
        %v2654 = vpop.permute.xlu0 %2653
        %2655 = vrot.lane.b32.xlu0 %v2197, 91
        %v2656 = vpop.permute.xlu0 %2655
        %2657 = vrot.lane.b32.xlu0 %v2472, 91
        %v2658 = vpop.permute.xlu0 %2657
        %v2659 = vsel %vm563, %v2648, %v2650
        %v2660 = vsel %vm563, %v2650, %v2652
        %v2661 = vsel %vm563, %v2652, %v2654
        %v2662 = vsel %vm563, %v2654, %v2656
        %v2663 = vsel %vm563, %v2656, %v2658
        %2670 = vst [vmem:[#allocation6 + $0x180] sm:$0xf] %v2659
        %2671 = vst [vmem:[#allocation6 + $0x188] sm:$0xf] %v2660
        %2672 = vst [vmem:[#allocation6 + $0x190] sm:$0xf] %v2661
        %2673 = vst [vmem:[#allocation6 + $0x198] sm:$0xf] %v2662
        %2674 = vst [vmem:[#allocation6 + $0x1a0] sm:$0xf] %v2663
        %2675 = vst.msk [vmem:[#allocation6 + $0x1a8] sm:$0xf] %vm365, %v2658
        %2676 = vrot.lane.b32.xlu0 %v2458, 90
        %v2677 = vpop.permute.xlu0 %2676
        %2678 = vrot.lane.b32.xlu0 %v2195, 90
        %v2679 = vpop.permute.xlu0 %2678
        %2680 = vrot.lane.b32.xlu0 %v2459, 90
        %v2681 = vpop.permute.xlu0 %2680
        %2682 = vrot.lane.b32.xlu0 %v2196, 90
        %v2683 = vpop.permute.xlu0 %2682
        %2684 = vrot.lane.b32.xlu0 %v2460, 90
        %v2685 = vpop.permute.xlu0 %2684
        %2686 = vrot.lane.b32.xlu0 %v2197, 90
        %v2687 = vpop.permute.xlu0 %2686
        %v2688 = vsel %vm593, %v2677, %v2679
        %v2689 = vsel %vm593, %v2679, %v2681
        %v2690 = vsel %vm593, %v2681, %v2683
        %v2691 = vsel %vm593, %v2683, %v2685
        %v2692 = vsel %vm593, %v2685, %v2687
        %2699 = vst [vmem:[#allocation6 + $0x180] sm:$0xf0] %v2688
        %2700 = vst [vmem:[#allocation6 + $0x188] sm:$0xf0] %v2689
        %2701 = vst [vmem:[#allocation6 + $0x190] sm:$0xf0] %v2690
        %2702 = vst [vmem:[#allocation6 + $0x198] sm:$0xf0] %v2691
        %2703 = vst [vmem:[#allocation6 + $0x1a0] sm:$0xf0] %v2692
        %2704 = vst.msk [vmem:[#allocation6 + $0x1a8] sm:$0xf0] %vm399, %v2687
        %v2708 = vcombine.high %v2198, %v2198
        %v2709 = vcombine.high %v2199, %v2199
        %v2710 = vcombine.high %v2200, %v2200
        %2714 = vst [vmem:[#allocation6 + $0x1b0] sm:$0xf] %v2198
        %2715 = vst [vmem:[#allocation6 + $0x1b8] sm:$0xf] %v2708
        %2716 = vst [vmem:[#allocation6 + $0x1c0] sm:$0xf] %v2199
        %2717 = vst [vmem:[#allocation6 + $0x1c8] sm:$0xf] %v2709
        %2718 = vst [vmem:[#allocation6 + $0x1d0] sm:$0xf] %v2200
        %2719 = vst.msk [vmem:[#allocation6 + $0x1d8] sm:$0xf] %vm365, %v2710
        %v2720 = vcombine.low %v2198, %v2198
        %v2721 = vcombine.low %v2199, %v2199
        %v2722 = vcombine.low %v2200, %v2200
        %2723 = vrot.lane.b32.xlu0 %v2720, 127
        %v2724 = vpop.permute.xlu0 %2723
        %2725 = vrot.lane.b32.xlu0 %v2198, 127
        %v2726 = vpop.permute.xlu0 %2725
        %2727 = vrot.lane.b32.xlu0 %v2721, 127
        %v2728 = vpop.permute.xlu0 %2727
        %2729 = vrot.lane.b32.xlu0 %v2199, 127
        %v2730 = vpop.permute.xlu0 %2729
        %2731 = vrot.lane.b32.xlu0 %v2722, 127
        %v2732 = vpop.permute.xlu0 %2731
        %2733 = vrot.lane.b32.xlu0 %v2200, 127
        %v2734 = vpop.permute.xlu0 %2733
        %v2735 = vsel %vm382, %v2724, %v2726
        %v2736 = vsel %vm382, %v2726, %v2728
        %v2737 = vsel %vm382, %v2728, %v2730
        %v2738 = vsel %vm382, %v2730, %v2732
        %v2739 = vsel %vm382, %v2732, %v2734
        %2746 = vst [vmem:[#allocation6 + $0x1b0] sm:$0xf0] %v2735
        %2747 = vst [vmem:[#allocation6 + $0x1b8] sm:$0xf0] %v2736
        %2748 = vst [vmem:[#allocation6 + $0x1c0] sm:$0xf0] %v2737
        %2749 = vst [vmem:[#allocation6 + $0x1c8] sm:$0xf0] %v2738
        %2750 = vst [vmem:[#allocation6 + $0x1d0] sm:$0xf0] %v2739
        %2751 = vst.msk [vmem:[#allocation6 + $0x1d8] sm:$0xf0] %vm399, %v2734
        %2752 = vrot.lane.b32.xlu0 %v2198, 126
        %v2753 = vpop.permute.xlu0 %2752
        %2754 = vrot.lane.b32.xlu0 %v2708, 126
        %v2755 = vpop.permute.xlu0 %2754
        %2756 = vrot.lane.b32.xlu0 %v2199, 126
        %v2757 = vpop.permute.xlu0 %2756
        %2758 = vrot.lane.b32.xlu0 %v2709, 126
        %v2759 = vpop.permute.xlu0 %2758
        %2760 = vrot.lane.b32.xlu0 %v2200, 126
        %v2761 = vpop.permute.xlu0 %2760
        %2762 = vrot.lane.b32.xlu0 %v2710, 126
        %v2763 = vpop.permute.xlu0 %2762
        %v2764 = vsel %vm413, %v2753, %v2755
        %v2765 = vsel %vm413, %v2755, %v2757
        %v2766 = vsel %vm413, %v2757, %v2759
        %v2767 = vsel %vm413, %v2759, %v2761
        %v2768 = vsel %vm413, %v2761, %v2763
        %2775 = vst [vmem:[#allocation6 + $0x1e0] sm:$0xf] %v2764
        %2776 = vst [vmem:[#allocation6 + $0x1e8] sm:$0xf] %v2765
        %2777 = vst [vmem:[#allocation6 + $0x1f0] sm:$0xf] %v2766
        %2778 = vst [vmem:[#allocation6 + $0x1f8] sm:$0xf] %v2767
        %2779 = vst [vmem:[#allocation6 + $0x200] sm:$0xf] %v2768
        %2780 = vst.msk [vmem:[#allocation6 + $0x208] sm:$0xf] %vm365, %v2763
        %2781 = vrot.lane.b32.xlu0 %v2720, 110
        %v2782 = vpop.permute.xlu0 %2781
        %2783 = vrot.lane.b32.xlu0 %v2198, 110
        %v2784 = vpop.permute.xlu0 %2783
        %2785 = vrot.lane.b32.xlu0 %v2721, 110
        %v2786 = vpop.permute.xlu0 %2785
        %2787 = vrot.lane.b32.xlu0 %v2199, 110
        %v2788 = vpop.permute.xlu0 %2787
        %2789 = vrot.lane.b32.xlu0 %v2722, 110
        %v2790 = vpop.permute.xlu0 %2789
        %2791 = vrot.lane.b32.xlu0 %v2200, 110
        %v2792 = vpop.permute.xlu0 %2791
        %v2793 = vsel %vm443, %v2782, %v2784
        %v2794 = vsel %vm443, %v2784, %v2786
        %v2795 = vsel %vm443, %v2786, %v2788
        %v2796 = vsel %vm443, %v2788, %v2790
        %v2797 = vsel %vm443, %v2790, %v2792
        %2804 = vst [vmem:[#allocation6 + $0x1e0] sm:$0xf0] %v2793
        %2805 = vst [vmem:[#allocation6 + $0x1e8] sm:$0xf0] %v2794
        %2806 = vst [vmem:[#allocation6 + $0x1f0] sm:$0xf0] %v2795
        %2807 = vst [vmem:[#allocation6 + $0x1f8] sm:$0xf0] %v2796
        %2808 = vst [vmem:[#allocation6 + $0x200] sm:$0xf0] %v2797
        %2809 = vst.msk [vmem:[#allocation6 + $0x208] sm:$0xf0] %vm399, %v2792
        %2810 = vrot.lane.b32.xlu0 %v2198, 109
        %v2811 = vpop.permute.xlu0 %2810
        %2812 = vrot.lane.b32.xlu0 %v2708, 109
        %v2813 = vpop.permute.xlu0 %2812
        %2814 = vrot.lane.b32.xlu0 %v2199, 109
        %v2815 = vpop.permute.xlu0 %2814
        %2816 = vrot.lane.b32.xlu0 %v2709, 109
        %v2817 = vpop.permute.xlu0 %2816
        %2818 = vrot.lane.b32.xlu0 %v2200, 109
        %v2819 = vpop.permute.xlu0 %2818
        %2820 = vrot.lane.b32.xlu0 %v2710, 109
        %v2821 = vpop.permute.xlu0 %2820
        %v2822 = vsel %vm473, %v2811, %v2813
        %v2823 = vsel %vm473, %v2813, %v2815
        %v2824 = vsel %vm473, %v2815, %v2817
        %v2825 = vsel %vm473, %v2817, %v2819
        %v2826 = vsel %vm473, %v2819, %v2821
        %2833 = vst [vmem:[#allocation6 + $0x210] sm:$0xf] %v2822
        %2834 = vst [vmem:[#allocation6 + $0x218] sm:$0xf] %v2823
        %2835 = vst [vmem:[#allocation6 + $0x220] sm:$0xf] %v2824
        %2836 = vst [vmem:[#allocation6 + $0x228] sm:$0xf] %v2825
        %2837 = vst [vmem:[#allocation6 + $0x230] sm:$0xf] %v2826
        %2838 = vst.msk [vmem:[#allocation6 + $0x238] sm:$0xf] %vm365, %v2821
        %2839 = vrot.lane.b32.xlu0 %v2720, 108
        %v2840 = vpop.permute.xlu0 %2839
        %2841 = vrot.lane.b32.xlu0 %v2198, 108
        %v2842 = vpop.permute.xlu0 %2841
        %2843 = vrot.lane.b32.xlu0 %v2721, 108
        %v2844 = vpop.permute.xlu0 %2843
        %2845 = vrot.lane.b32.xlu0 %v2199, 108
        %v2846 = vpop.permute.xlu0 %2845
        %2847 = vrot.lane.b32.xlu0 %v2722, 108
        %v2848 = vpop.permute.xlu0 %2847
        %2849 = vrot.lane.b32.xlu0 %v2200, 108
        %v2850 = vpop.permute.xlu0 %2849
        %v2851 = vsel %vm503, %v2840, %v2842
        %v2852 = vsel %vm503, %v2842, %v2844
        %v2853 = vsel %vm503, %v2844, %v2846
        %v2854 = vsel %vm503, %v2846, %v2848
        %v2855 = vsel %vm503, %v2848, %v2850
        %2862 = vst [vmem:[#allocation6 + $0x210] sm:$0xf0] %v2851
        %2863 = vst [vmem:[#allocation6 + $0x218] sm:$0xf0] %v2852
        %2864 = vst [vmem:[#allocation6 + $0x220] sm:$0xf0] %v2853
        %2865 = vst [vmem:[#allocation6 + $0x228] sm:$0xf0] %v2854
        %2866 = vst [vmem:[#allocation6 + $0x230] sm:$0xf0] %v2855
        %2867 = vst.msk [vmem:[#allocation6 + $0x238] sm:$0xf0] %vm399, %v2850
        %2868 = vrot.lane.b32.xlu0 %v2198, 92
        %v2869 = vpop.permute.xlu0 %2868
        %2870 = vrot.lane.b32.xlu0 %v2708, 92
        %v2871 = vpop.permute.xlu0 %2870
        %2872 = vrot.lane.b32.xlu0 %v2199, 92
        %v2873 = vpop.permute.xlu0 %2872
        %2874 = vrot.lane.b32.xlu0 %v2709, 92
        %v2875 = vpop.permute.xlu0 %2874
        %2876 = vrot.lane.b32.xlu0 %v2200, 92
        %v2877 = vpop.permute.xlu0 %2876
        %2878 = vrot.lane.b32.xlu0 %v2710, 92
        %v2879 = vpop.permute.xlu0 %2878
        %v2880 = vsel %vm533, %v2869, %v2871
        %v2881 = vsel %vm533, %v2871, %v2873
        %v2882 = vsel %vm533, %v2873, %v2875
        %v2883 = vsel %vm533, %v2875, %v2877
        %v2884 = vsel %vm533, %v2877, %v2879
        %2891 = vst [vmem:[#allocation6 + $0x240] sm:$0xf] %v2880
        %2892 = vst [vmem:[#allocation6 + $0x248] sm:$0xf] %v2881
        %2893 = vst [vmem:[#allocation6 + $0x250] sm:$0xf] %v2882
        %2894 = vst [vmem:[#allocation6 + $0x258] sm:$0xf] %v2883
        %2895 = vst [vmem:[#allocation6 + $0x260] sm:$0xf] %v2884
        %2896 = vst.msk [vmem:[#allocation6 + $0x268] sm:$0xf] %vm365, %v2879
        %2897 = vrot.lane.b32.xlu0 %v2720, 91
        %v2898 = vpop.permute.xlu0 %2897
        %2899 = vrot.lane.b32.xlu0 %v2198, 91
        %v2900 = vpop.permute.xlu0 %2899
        %2901 = vrot.lane.b32.xlu0 %v2721, 91
        %v2902 = vpop.permute.xlu0 %2901
        %2903 = vrot.lane.b32.xlu0 %v2199, 91
        %v2904 = vpop.permute.xlu0 %2903
        %2905 = vrot.lane.b32.xlu0 %v2722, 91
        %v2906 = vpop.permute.xlu0 %2905
        %2907 = vrot.lane.b32.xlu0 %v2200, 91
        %v2908 = vpop.permute.xlu0 %2907
        %v2909 = vsel %vm563, %v2898, %v2900
        %v2910 = vsel %vm563, %v2900, %v2902
        %v2911 = vsel %vm563, %v2902, %v2904
        %v2912 = vsel %vm563, %v2904, %v2906
        %v2913 = vsel %vm563, %v2906, %v2908
        %2920 = vst [vmem:[#allocation6 + $0x240] sm:$0xf0] %v2909
        %2921 = vst [vmem:[#allocation6 + $0x248] sm:$0xf0] %v2910
        %2922 = vst [vmem:[#allocation6 + $0x250] sm:$0xf0] %v2911
        %2923 = vst [vmem:[#allocation6 + $0x258] sm:$0xf0] %v2912
        %2924 = vst [vmem:[#allocation6 + $0x260] sm:$0xf0] %v2913
        %2925 = vst.msk [vmem:[#allocation6 + $0x268] sm:$0xf0] %vm399, %v2908
        %2926 = vrot.lane.b32.xlu0 %v2198, 90
        %v2927 = vpop.permute.xlu0 %2926
        %2928 = vrot.lane.b32.xlu0 %v2708, 90
        %v2929 = vpop.permute.xlu0 %2928
        %2930 = vrot.lane.b32.xlu0 %v2199, 90
        %v2931 = vpop.permute.xlu0 %2930
        %2932 = vrot.lane.b32.xlu0 %v2709, 90
        %v2933 = vpop.permute.xlu0 %2932
        %2934 = vrot.lane.b32.xlu0 %v2200, 90
        %v2935 = vpop.permute.xlu0 %2934
        %2936 = vrot.lane.b32.xlu0 %v2710, 90
        %v2937 = vpop.permute.xlu0 %2936
        %v2938 = vsel %vm593, %v2927, %v2929
        %v2939 = vsel %vm593, %v2929, %v2931
        %v2940 = vsel %vm593, %v2931, %v2933
        %v2941 = vsel %vm593, %v2933, %v2935
        %v2942 = vsel %vm593, %v2935, %v2937
        %2949 = vst [vmem:[#allocation6 + $0x270] sm:$0xf] %v2938
        %2950 = vst [vmem:[#allocation6 + $0x278] sm:$0xf] %v2939
        %2951 = vst [vmem:[#allocation6 + $0x280] sm:$0xf] %v2940
        %2952 = vst [vmem:[#allocation6 + $0x288] sm:$0xf] %v2941
        %2953 = vst [vmem:[#allocation6 + $0x290] sm:$0xf] %v2942
        %2954 = vst.msk [vmem:[#allocation6 + $0x298] sm:$0xf] %vm365, %v2937
        %v2955 = vld [vmem:[#allocation6] sm:$0xff]
        %v2956 = vld [vmem:[#allocation6 + $0x8] sm:$0xff]
        %v2957 = vld [vmem:[#allocation6 + $0x10] sm:$0xff]
        %v2958 = vld [vmem:[#allocation6 + $0x18] sm:$0xff]
        %v2959 = vld [vmem:[#allocation6 + $0x20] sm:$0xff]
        %v2960 = vld [vmem:[#allocation6 + $0x28] sm:$0xff]
        %v2961 = vld [vmem:[#allocation6 + $0x30] sm:$0xff]
        %v2962 = vld [vmem:[#allocation6 + $0x38] sm:$0xff]
        %v2963 = vld [vmem:[#allocation6 + $0x40] sm:$0xff]
        %v2964 = vld [vmem:[#allocation6 + $0x48] sm:$0xff]
        %v2965 = vld [vmem:[#allocation6 + $0x50] sm:$0xff]
        %v2966 = vld [vmem:[#allocation6 + $0x58] sm:$0xff]
        %v2967 = vld [vmem:[#allocation6 + $0x60] sm:$0xff]
        %v2968 = vld [vmem:[#allocation6 + $0x68] sm:$0xff]
        %v2969 = vld [vmem:[#allocation6 + $0x70] sm:$0xff]
        %v2970 = vld [vmem:[#allocation6 + $0x78] sm:$0xff]
        %v2971 = vld [vmem:[#allocation6 + $0x80] sm:$0xff]
        %v2972 = vld [vmem:[#allocation6 + $0x88] sm:$0xff]
        %v2973 = vld [vmem:[#allocation6 + $0x90] sm:$0xff]
        %v2974 = vld [vmem:[#allocation6 + $0x98] sm:$0xff]
        %v2975 = vld [vmem:[#allocation6 + $0xa0] sm:$0xff]
        %v2976 = vld [vmem:[#allocation6 + $0xa8] sm:$0xff]
        %v2977 = vld [vmem:[#allocation6 + $0xb0] sm:$0xff]
        %v2978 = vld [vmem:[#allocation6 + $0xb8] sm:$0xff]
        %v2979 = vld [vmem:[#allocation6 + $0xc0] sm:$0xff]
        %v2980 = vld [vmem:[#allocation6 + $0xc8] sm:$0xff]
        %v2981 = vld [vmem:[#allocation6 + $0xd0] sm:$0xff]
        %v2982 = vld [vmem:[#allocation6 + $0xd8] sm:$0xff]
        %v2983 = vld [vmem:[#allocation6 + $0xe0] sm:$0xff]
        %v2984 = vld [vmem:[#allocation6 + $0xe8] sm:$0xff]
        %v2985 = vld [vmem:[#allocation6 + $0xf0] sm:$0xff]
        %v2986 = vld [vmem:[#allocation6 + $0xf8] sm:$0xff]
        %v2987 = vld [vmem:[#allocation6 + $0x100] sm:$0xff]
        %v2988 = vld [vmem:[#allocation6 + $0x108] sm:$0xff]
        %v2989 = vld [vmem:[#allocation6 + $0x110] sm:$0xff]
        %v2990 = vld [vmem:[#allocation6 + $0x118] sm:$0xff]
        %v2991 = vld [vmem:[#allocation6 + $0x120] sm:$0xff]
        %v2992 = vld [vmem:[#allocation6 + $0x128] sm:$0xff]
        %v2993 = vld [vmem:[#allocation6 + $0x130] sm:$0xff]
        %v2994 = vld [vmem:[#allocation6 + $0x138] sm:$0xff]
        %v2995 = vld [vmem:[#allocation6 + $0x140] sm:$0xff]
        %v2996 = vld [vmem:[#allocation6 + $0x148] sm:$0xff]
        %v2997 = vld [vmem:[#allocation6 + $0x150] sm:$0xff]
        %v2998 = vld [vmem:[#allocation6 + $0x158] sm:$0xff]
        %v2999 = vld [vmem:[#allocation6 + $0x160] sm:$0xff]
        %v3000 = vld [vmem:[#allocation6 + $0x168] sm:$0xff]
        %v3001 = vld [vmem:[#allocation6 + $0x170] sm:$0xff]
        %v3002 = vld [vmem:[#allocation6 + $0x178] sm:$0xff]
        %v3003 = vld [vmem:[#allocation6 + $0x180] sm:$0xff]
        %v3004 = vld [vmem:[#allocation6 + $0x188] sm:$0xff]
        %v3005 = vld [vmem:[#allocation6 + $0x190] sm:$0xff]
        %v3006 = vld [vmem:[#allocation6 + $0x198] sm:$0xff]
        %v3007 = vld [vmem:[#allocation6 + $0x1a0] sm:$0xff]
        %v3008 = vld [vmem:[#allocation6 + $0x1a8] sm:$0xff]
        %v3009 = vld [vmem:[#allocation6 + $0x1b0] sm:$0xff]
        %v3010 = vld [vmem:[#allocation6 + $0x1b8] sm:$0xff]
        %v3011 = vld [vmem:[#allocation6 + $0x1c0] sm:$0xff]
        %v3012 = vld [vmem:[#allocation6 + $0x1c8] sm:$0xff]
        %v3013 = vld [vmem:[#allocation6 + $0x1d0] sm:$0xff]
        %v3014 = vld [vmem:[#allocation6 + $0x1d8] sm:$0xff]
        %v3015 = vld [vmem:[#allocation6 + $0x1e0] sm:$0xff]
        %v3016 = vld [vmem:[#allocation6 + $0x1e8] sm:$0xff]
        %v3017 = vld [vmem:[#allocation6 + $0x1f0] sm:$0xff]
        %v3018 = vld [vmem:[#allocation6 + $0x1f8] sm:$0xff]
        %v3019 = vld [vmem:[#allocation6 + $0x200] sm:$0xff]
        %v3020 = vld [vmem:[#allocation6 + $0x208] sm:$0xff]
        %v3021 = vld [vmem:[#allocation6 + $0x210] sm:$0xff]
        %v3022 = vld [vmem:[#allocation6 + $0x218] sm:$0xff]
        %v3023 = vld [vmem:[#allocation6 + $0x220] sm:$0xff]
        %v3024 = vld [vmem:[#allocation6 + $0x228] sm:$0xff]
        %v3025 = vld [vmem:[#allocation6 + $0x230] sm:$0xff]
        %v3026 = vld [vmem:[#allocation6 + $0x238] sm:$0xff]
        %v3027 = vld [vmem:[#allocation6 + $0x240] sm:$0xff]
        %v3028 = vld [vmem:[#allocation6 + $0x248] sm:$0xff]
        %v3029 = vld [vmem:[#allocation6 + $0x250] sm:$0xff]
        %v3030 = vld [vmem:[#allocation6 + $0x258] sm:$0xff]
        %v3031 = vld [vmem:[#allocation6 + $0x260] sm:$0xff]
        %v3032 = vld [vmem:[#allocation6 + $0x268] sm:$0xff]
        %v3033 = vld [vmem:[#allocation6 + $0x270] sm:$0xff]
        %v3034 = vld [vmem:[#allocation6 + $0x278] sm:$0xff]
        %v3035 = vld [vmem:[#allocation6 + $0x280] sm:$0xff]
        %v3036 = vld [vmem:[#allocation6 + $0x288] sm:$0xff]
        %v3037 = vld [vmem:[#allocation6 + $0x290] sm:$0xff]
        %v3038 = vld [vmem:[#allocation6 + $0x298] sm:$0xff]
        %v3039 = vld [vmem:[#allocation6 + $0x2a0] sm:$0xff]
        %v3040 = vld [vmem:[#allocation6 + $0x2a8] sm:$0xff]
        %v3041 = vld [vmem:[#allocation6 + $0x2b0] sm:$0xff]
        %v3042 = vld [vmem:[#allocation6 + $0x2b8] sm:$0xff]
        %v3043 = vld [vmem:[#allocation6 + $0x2c0] sm:$0xff]
        %v3044 = vld [vmem:[#allocation6 + $0x2c8] sm:$0xff]
        %v3045 = vld [vmem:[#allocation6 + $0x2d0] sm:$0xff]
        %v3046 = vld [vmem:[#allocation6 + $0x2d8] sm:$0xff]
        %v3047 = vld [vmem:[#allocation6 + $0x2e0] sm:$0xff]
        %v3048 = vld [vmem:[#allocation6 + $0x2e8] sm:$0xff]
        %v3049 = vld [vmem:[#allocation6 + $0x2f0] sm:$0xff]
        %v3050 = vld [vmem:[#allocation6 + $0x2f8] sm:$0xff]
        %3051 = vmatprep.subr.mxu0 %v2956
        %3052 = vmatpush1.msra.mxu0 %v2955
        %3053 = vmatprep.subr.mxu0 %v2962
        %3054 = vmatpush1.msra.mxu0 %v2961
        %3055 = vmatprep.subr.mxu0 %v2968
        %3056 = vmatpush1.msra.mxu0 %v2967
        %3057 = vmatprep.subr.mxu0 %v2974
        %3058 = vmatpush1.msra.mxu0 %v2973
        %3059 = vmatprep.subr.mxu0 %v2980
        %3060 = vmatpush1.msra.mxu0 %v2979
        %3061 = vmatprep.subr.mxu0 %v2986
        %3062 = vmatpush1.msra.mxu0 %v2985
        %3063 = vmatprep.subr.mxu0 %v2992
        %3064 = vmatpush1.msra.mxu0 %v2991
        %3065 = vmatprep.subr.mxu0 %v2998
        %3066 = vmatpush1.msra.mxu0 %v2997
        %3067 = vmatprep.subr.mxu0 %v3004
        %3068 = vmatpush1.msra.mxu0 %v3003
        %3069 = vmatprep.subr.mxu0 %v3010
        %3070 = vmatpush1.msra.mxu0 %v3009
        %3071 = vmatprep.subr.mxu0 %v3016
        %3072 = vmatpush1.msra.mxu0 %v3015
        %3073 = vmatprep.subr.mxu0 %v3022
        %3074 = vmatpush1.msra.mxu0 %v3021
        %3075 = vmatprep.subr.mxu0 %v3028
        %3076 = vmatpush1.msra.mxu0 %v3027
        %3077 = vmatprep.subr.mxu0 %v3034
        %3078 = vmatpush1.msra.mxu0 %v3033
        %3079 = vmatprep.subr.mxu0 %v3040
        %3080 = vmatpush1.msra.mxu0 %v3039
        %3081 = vmatprep.subr.mxu0 %v3046
        %3082 = vmatpush1.msra.mxu0 %v3045
        %3083 = vmatprep.subr.mxu0 0.0
        %3084 = vmatpush1.msra.mxu0 0.0
        %3085 = vmatprep.subr.mxu0 0.0
        %3086 = vmatpush1.msra.mxu0 0.0
        %3087 = vmatprep.subr.mxu0 0.0
        %3088 = vmatpush1.msra.mxu0 0.0
        %3089 = vmatprep.subr.mxu0 0.0
        %3090 = vmatpush1.msra.mxu0 0.0
        %3091 = vmatprep.subr.mxu0 0.0
        %3092 = vmatpush1.msra.mxu0 0.0
        %3093 = vmatprep.subr.mxu0 0.0
        %3094 = vmatpush1.msra.mxu0 0.0
        %3095 = vmatprep.subr.mxu0 0.0
        %3096 = vmatpush1.msra.mxu0 0.0
        %3097 = vmatprep.subr.mxu0 0.0
        %3098 = vmatpush1.msra.mxu0 0.0
        %3099 = vmatprep.subr.mxu0 0.0
        %3100 = vmatpush1.msra.mxu0 0.0
        %3101 = vmatprep.subr.mxu0 0.0
        %3102 = vmatpush1.msra.mxu0 0.0
        %3103 = vmatprep.subr.mxu0 0.0
        %3104 = vmatpush1.msra.mxu0 0.0
        %3105 = vmatprep.subr.mxu0 0.0
        %3106 = vmatpush1.msra.mxu0 0.0
        %3107 = vmatprep.subr.mxu0 0.0
        %3108 = vmatpush1.msra.mxu0 0.0
        %3109 = vmatprep.subr.mxu0 0.0
        %3110 = vmatpush1.msra.mxu0 0.0
        %3111 = vmatprep.subr.mxu0 0.0
        %3112 = vmatpush1.msra.mxu0 0.0
        %3113 = vmatprep.subr.mxu0 0.0
        %3114 = vmatpush1.msra.mxu0 0.0
        %3115 = vmatprep.mubr.f32.mxu0 0.0
        %3116 = vmatmul.mubr.f32.gmra.mrb[0].mxu0 %v336
        %v3117 = vpop.f32.mrb[0].mxu0
        %v3118 = vadd.f32 0.0, %v3117
        %v3119 = vpop.f32.mrb[0].mxu0
        %v3120 = vadd.f32 0.0, %v3119
        %3121 = vmatprep.mubr.f32.mxu0 0.0
        %3122 = vmatmul.mubr.f32.gmra.mrb[0].mxu0 %v337
        %v3123 = vpop.f32.mrb[0].mxu0
        %v3124 = vadd.f32 0.0, %v3123
        %v3125 = vpop.f32.mrb[0].mxu0
        %v3126 = vadd.f32 0.0, %v3125
        %3127 = vmatprep.mubr.f32.mxu0 0.0
        %3128 = vmatmul.mubr.f32.gmra.mrb[0].mxu0 %v338
        %v3129 = vpop.f32.mrb[0].mxu0
        %v3130 = vadd.f32 0.0, %v3129
        %v3131 = vpop.f32.mrb[0].mxu0
        %v3132 = vadd.f32 0.0, %v3131
        %3133 = vmatprep.mubr.f32.mxu0 0.0
        %3134 = vmatmul.mubr.f32.gmra.mrb[0].mxu0 %v339
        %v3135 = vpop.f32.mrb[0].mxu0
        %v3136 = vadd.f32 0.0, %v3135
        %v3137 = vpop.f32.mrb[0].mxu0
        %v3138 = vadd.f32 0.0, %v3137
        %3139 = vdwg.mxu0
        %3140 = vmatprep.subr.mxu0 %v2958
        %3141 = vmatpush1.msra.mxu0 %v2957
        %3142 = vmatprep.subr.mxu0 %v2964
        %3143 = vmatpush1.msra.mxu0 %v2963
        %3144 = vmatprep.subr.mxu0 %v2970
        %3145 = vmatpush1.msra.mxu0 %v2969
        %3146 = vmatprep.subr.mxu0 %v2976
        %3147 = vmatpush1.msra.mxu0 %v2975
        %3148 = vmatprep.subr.mxu0 %v2982
        %3149 = vmatpush1.msra.mxu0 %v2981
        %3150 = vmatprep.subr.mxu0 %v2988
        %3151 = vmatpush1.msra.mxu0 %v2987
        %3152 = vmatprep.subr.mxu0 %v2994
        %3153 = vmatpush1.msra.mxu0 %v2993
        %3154 = vmatprep.subr.mxu0 %v3000
        %3155 = vmatpush1.msra.mxu0 %v2999
        %3156 = vmatprep.subr.mxu0 %v3006
        %3157 = vmatpush1.msra.mxu0 %v3005
        %3158 = vmatprep.subr.mxu0 %v3012
        %3159 = vmatpush1.msra.mxu0 %v3011
        %3160 = vmatprep.subr.mxu0 %v3018
        %3161 = vmatpush1.msra.mxu0 %v3017
        %3162 = vmatprep.subr.mxu0 %v3024
        %3163 = vmatpush1.msra.mxu0 %v3023
        %3164 = vmatprep.subr.mxu0 %v3030
        %3165 = vmatpush1.msra.mxu0 %v3029
        %3166 = vmatprep.subr.mxu0 %v3036
        %3167 = vmatpush1.msra.mxu0 %v3035
        %3168 = vmatprep.subr.mxu0 %v3042
        %3169 = vmatpush1.msra.mxu0 %v3041
        %3170 = vmatprep.subr.mxu0 %v3048
        %3171 = vmatpush1.msra.mxu0 %v3047
        %3172 = vmatprep.subr.mxu0 0.0
        %3173 = vmatpush1.msra.mxu0 0.0
        %3174 = vmatprep.subr.mxu0 0.0
        %3175 = vmatpush1.msra.mxu0 0.0
        %3176 = vmatprep.subr.mxu0 0.0
        %3177 = vmatpush1.msra.mxu0 0.0
        %3178 = vmatprep.subr.mxu0 0.0
        %3179 = vmatpush1.msra.mxu0 0.0
        %3180 = vmatprep.subr.mxu0 0.0
        %3181 = vmatpush1.msra.mxu0 0.0
        %3182 = vmatprep.subr.mxu0 0.0
        %3183 = vmatpush1.msra.mxu0 0.0
        %3184 = vmatprep.subr.mxu0 0.0
        %3185 = vmatpush1.msra.mxu0 0.0
        %3186 = vmatprep.subr.mxu0 0.0
        %3187 = vmatpush1.msra.mxu0 0.0
        %3188 = vmatprep.subr.mxu0 0.0
        %3189 = vmatpush1.msra.mxu0 0.0
        %3190 = vmatprep.subr.mxu0 0.0
        %3191 = vmatpush1.msra.mxu0 0.0
        %3192 = vmatprep.subr.mxu0 0.0
        %3193 = vmatpush1.msra.mxu0 0.0
        %3194 = vmatprep.subr.mxu0 0.0
        %3195 = vmatpush1.msra.mxu0 0.0
        %3196 = vmatprep.subr.mxu0 0.0
        %3197 = vmatpush1.msra.mxu0 0.0
        %3198 = vmatprep.subr.mxu0 0.0
        %3199 = vmatpush1.msra.mxu0 0.0
        %3200 = vmatprep.subr.mxu0 0.0
        %3201 = vmatpush1.msra.mxu0 0.0
        %3202 = vmatprep.subr.mxu0 0.0
        %3203 = vmatpush1.msra.mxu0 0.0
        %3204 = vmatprep.mubr.f32.mxu0 0.0
        %3205 = vmatmul.mubr.f32.gmra.mrb[0].mxu0 %v336
        %v3206 = vpop.f32.mrb[0].mxu0
        %v3207 = vadd.f32 0.0, %v3206
        %v3208 = vpop.f32.mrb[0].mxu0
        %v3209 = vadd.f32 0.0, %v3208
        %3210 = vmatprep.mubr.f32.mxu0 0.0
        %3211 = vmatmul.mubr.f32.gmra.mrb[0].mxu0 %v337
        %v3212 = vpop.f32.mrb[0].mxu0
        %v3213 = vadd.f32 0.0, %v3212
        %v3214 = vpop.f32.mrb[0].mxu0
        %v3215 = vadd.f32 0.0, %v3214
        %3216 = vmatprep.mubr.f32.mxu0 0.0
        %3217 = vmatmul.mubr.f32.gmra.mrb[0].mxu0 %v338
        %v3218 = vpop.f32.mrb[0].mxu0
        %v3219 = vadd.f32 0.0, %v3218
        %v3220 = vpop.f32.mrb[0].mxu0
        %v3221 = vadd.f32 0.0, %v3220
        %3222 = vmatprep.mubr.f32.mxu0 0.0
        %3223 = vmatmul.mubr.f32.gmra.mrb[0].mxu0 %v339
        %v3224 = vpop.f32.mrb[0].mxu0
        %v3225 = vadd.f32 0.0, %v3224
        %v3226 = vpop.f32.mrb[0].mxu0
        %v3227 = vadd.f32 0.0, %v3226
        %3228 = vdwg.mxu0
        %3229 = vmatprep.subr.mxu0 %v2960
        %3230 = vmatpush1.msra.mxu0 %v2959
        %3231 = vmatprep.subr.mxu0 %v2966
        %3232 = vmatpush1.msra.mxu0 %v2965
        %3233 = vmatprep.subr.mxu0 %v2972
        %3234 = vmatpush1.msra.mxu0 %v2971
        %3235 = vmatprep.subr.mxu0 %v2978
        %3236 = vmatpush1.msra.mxu0 %v2977
        %3237 = vmatprep.subr.mxu0 %v2984
        %3238 = vmatpush1.msra.mxu0 %v2983
        %3239 = vmatprep.subr.mxu0 %v2990
        %3240 = vmatpush1.msra.mxu0 %v2989
        %3241 = vmatprep.subr.mxu0 %v2996
        %3242 = vmatpush1.msra.mxu0 %v2995
        %3243 = vmatprep.subr.mxu0 %v3002
        %3244 = vmatpush1.msra.mxu0 %v3001
        %3245 = vmatprep.subr.mxu0 %v3008
        %3246 = vmatpush1.msra.mxu0 %v3007
        %3247 = vmatprep.subr.mxu0 %v3014
        %3248 = vmatpush1.msra.mxu0 %v3013
        %3249 = vmatprep.subr.mxu0 %v3020
        %3250 = vmatpush1.msra.mxu0 %v3019
        %3251 = vmatprep.subr.mxu0 %v3026
        %3252 = vmatpush1.msra.mxu0 %v3025
        %3253 = vmatprep.subr.mxu0 %v3032
        %3254 = vmatpush1.msra.mxu0 %v3031
        %3255 = vmatprep.subr.mxu0 %v3038
        %3256 = vmatpush1.msra.mxu0 %v3037
        %3257 = vmatprep.subr.mxu0 %v3044
        %3258 = vmatpush1.msra.mxu0 %v3043
        %3259 = vmatprep.subr.mxu0 %v3050
        %3260 = vmatpush1.msra.mxu0 %v3049
        %3261 = vmatprep.subr.mxu0 0.0
        %3262 = vmatpush1.msra.mxu0 0.0
        %3263 = vmatprep.subr.mxu0 0.0
        %3264 = vmatpush1.msra.mxu0 0.0
        %3265 = vmatprep.subr.mxu0 0.0
        %3266 = vmatpush1.msra.mxu0 0.0
        %3267 = vmatprep.subr.mxu0 0.0
        %3268 = vmatpush1.msra.mxu0 0.0
        %3269 = vmatprep.subr.mxu0 0.0
        %3270 = vmatpush1.msra.mxu0 0.0
        %3271 = vmatprep.subr.mxu0 0.0
        %3272 = vmatpush1.msra.mxu0 0.0
        %3273 = vmatprep.subr.mxu0 0.0
        %3274 = vmatpush1.msra.mxu0 0.0
        %3275 = vmatprep.subr.mxu0 0.0
        %3276 = vmatpush1.msra.mxu0 0.0
        %3277 = vmatprep.subr.mxu0 0.0
        %3278 = vmatpush1.msra.mxu0 0.0
        %3279 = vmatprep.subr.mxu0 0.0
        %3280 = vmatpush1.msra.mxu0 0.0
        %3281 = vmatprep.subr.mxu0 0.0
        %3282 = vmatpush1.msra.mxu0 0.0
        %3283 = vmatprep.subr.mxu0 0.0
        %3284 = vmatpush1.msra.mxu0 0.0
        %3285 = vmatprep.subr.mxu0 0.0
        %3286 = vmatpush1.msra.mxu0 0.0
        %3287 = vmatprep.subr.mxu0 0.0
        %3288 = vmatpush1.msra.mxu0 0.0
        %3289 = vmatprep.subr.mxu0 0.0
        %3290 = vmatpush1.msra.mxu0 0.0
        %3291 = vmatprep.subr.mxu0 0.0
        %3292 = vmatpush1.msra.mxu0 0.0
        %3293 = vmatprep.mubr.f32.mxu0 0.0
        %3294 = vmatmul.mubr.f32.gmra.mrb[0].mxu0 %v336
        %v3295 = vpop.f32.mrb[0].mxu0
        %v3296 = vadd.f32 0.0, %v3295
        %v3297 = vpop.f32.mrb[0].mxu0
        %v3298 = vadd.f32 0.0, %v3297
        %3299 = vmatprep.mubr.f32.mxu0 0.0
        %3300 = vmatmul.mubr.f32.gmra.mrb[0].mxu0 %v337
        %v3301 = vpop.f32.mrb[0].mxu0
        %v3302 = vadd.f32 0.0, %v3301
        %v3303 = vpop.f32.mrb[0].mxu0
        %v3304 = vadd.f32 0.0, %v3303
        %3305 = vmatprep.mubr.f32.mxu0 0.0
        %3306 = vmatmul.mubr.f32.gmra.mrb[0].mxu0 %v338
        %v3307 = vpop.f32.mrb[0].mxu0
        %v3308 = vadd.f32 0.0, %v3307
        %v3309 = vpop.f32.mrb[0].mxu0
        %v3310 = vadd.f32 0.0, %v3309
        %3311 = vmatprep.mubr.f32.mxu0 0.0
        %3312 = vmatmul.mubr.f32.gmra.mrb[0].mxu0 %v339
        %v3313 = vpop.f32.mrb[0].mxu0
        %v3314 = vadd.f32 0.0, %v3313
        %v3315 = vpop.f32.mrb[0].mxu0
        %v3316 = vadd.f32 0.0, %v3315
        %3317 = vdwg.mxu0
        %s3318 = smul.u32 %s2194, 2
        %s3319 = sld [smem:[#allocation8 + %s3318]]
        %s3320 = scvt.s32.f32 %s3319
        %v3321 = vstv %s3320
        %v3322 = vmul.f32 %v340, %v3321
        %v3323 = vmul.f32 %v341, %v3321
        %v3324 = vadd.f32 %v3322, 0.0
        %v3325 = vadd.f32 %v3323, 0.0
        %s3326 = sadd.s32 %s3318, 1
        %s3327 = sld [smem:[#allocation8 + %s3326]]
        %s3328 = scvt.s32.f32 %s3327
        %v3329 = vstv %s3328
        %v3330 = vmul.f32 %v340, %v3329
        %v3331 = vmul.f32 %v341, %v3329
        %v3334 = vrot.slane %v3330, 7
        %v3335 = vrot.slane %v3334, 2
        %v3336 = vrot.slane %v3331, 7
        %v3337 = vrot.slane %v3336, 2
        %v3340 = vadd.f32 %v3324, %v3335
        %v3341 = vadd.f32 %v3325, %v3337
        %v3342 = vxor.u32 %v3118, 2147483648
        %v3343 = vxor.u32 %v3120, 2147483648
        %v3344 = vxor.u32 %v3207, 2147483648
        %v3345 = vxor.u32 %v3209, 2147483648
        %v3346 = vxor.u32 %v3296, 2147483648
        %v3347 = vxor.u32 %v3298, 2147483648
        %v3348 = vxor.u32 %v3124, 2147483648
        %v3349 = vxor.u32 %v3126, 2147483648
        %v3350 = vxor.u32 %v3213, 2147483648
        %v3351 = vxor.u32 %v3215, 2147483648
        %v3352 = vxor.u32 %v3302, 2147483648
        %v3353 = vxor.u32 %v3304, 2147483648
        %v3354 = vmul.f32 %v3342, 1.442695
        %v3355 = vpow.pop %v3354
        %v3356 = vmul.f32 %v3343, 1.442695
        %v3357 = vpow.pop %v3356
        %v3358 = vmul.f32 %v3344, 1.442695
        %v3359 = vpow.pop %v3358
        %v3360 = vmul.f32 %v3345, 1.442695
        %v3361 = vpow.pop %v3360
        %v3362 = vmul.f32 %v3346, 1.442695
        %v3363 = vpow.pop %v3362
        %v3364 = vmul.f32 %v3347, 1.442695
        %v3365 = vpow.pop %v3364
        %v3366 = vmul.f32 %v3348, 1.442695
        %v3367 = vpow.pop %v3366
        %v3368 = vmul.f32 %v3349, 1.442695
        %v3369 = vpow.pop %v3368
        %v3370 = vmul.f32 %v3350, 1.442695
        %v3371 = vpow.pop %v3370
        %v3372 = vmul.f32 %v3351, 1.442695
        %v3373 = vpow.pop %v3372
        %v3374 = vmul.f32 %v3352, 1.442695
        %v3375 = vpow.pop %v3374
        %v3376 = vmul.f32 %v3353, 1.442695
        %v3377 = vpow.pop %v3376
        %v3378 = vadd.f32 %v3355, 1.0
        %v3379 = vadd.f32 %v3357, 1.0
        %v3380 = vadd.f32 %v3359, 1.0
        %v3381 = vadd.f32 %v3361, 1.0
        %v3382 = vadd.f32 %v3363, 1.0
        %v3383 = vadd.f32 %v3365, 1.0
        %v3384 = vadd.f32 %v3367, 1.0
        %v3385 = vadd.f32 %v3369, 1.0
        %v3386 = vadd.f32 %v3371, 1.0
        %v3387 = vadd.f32 %v3373, 1.0
        %v3388 = vadd.f32 %v3375, 1.0
        %v3389 = vadd.f32 %v3377, 1.0
        %v3390 = vrcp.pop %v3378
        %v3391 = vmul.f32 1.0, %v3390
        %v3392 = vrcp.pop %v3379
        %v3393 = vmul.f32 1.0, %v3392
        %v3394 = vrcp.pop %v3380
        %v3395 = vmul.f32 1.0, %v3394
        %v3396 = vrcp.pop %v3381
        %v3397 = vmul.f32 1.0, %v3396
        %v3398 = vrcp.pop %v3382
        %v3399 = vmul.f32 1.0, %v3398
        %v3400 = vrcp.pop %v3383
        %v3401 = vmul.f32 1.0, %v3400
        %v3402 = vrcp.pop %v3384
        %v3403 = vmul.f32 1.0, %v3402
        %v3404 = vrcp.pop %v3385
        %v3405 = vmul.f32 1.0, %v3404
        %v3406 = vrcp.pop %v3386
        %v3407 = vmul.f32 1.0, %v3406
        %v3408 = vrcp.pop %v3387
        %v3409 = vmul.f32 1.0, %v3408
        %v3410 = vrcp.pop %v3388
        %v3411 = vmul.f32 1.0, %v3410
        %v3412 = vrcp.pop %v3389
        %v3413 = vmul.f32 1.0, %v3412
        %v3414 = vtanh.pop %v3124
        %v3415 = vtanh.pop %v3126
        %v3416 = vtanh.pop %v3213
        %v3417 = vtanh.pop %v3215
        %v3418 = vtanh.pop %v3302
        %v3419 = vtanh.pop %v3304
        %v3420 = vld [vmem:[#allocation3] sm:$0xff]
        %v3421 = vld [vmem:[#allocation3 + $0x8] sm:$0xff]
        %v3422 = vld [vmem:[#allocation3 + $0x10] sm:$0xff]
        %v3426 = vcombine.low %v3420, %v3420
        %v3427 = vcombine.low %v3421, %v3421
        %v3428 = vcombine.low %v3422, %v3422
        %v3432 = vmul.f32 %v3391, %v3426
        %v3433 = vmul.f32 %v3393, %v3420
        %v3434 = vmul.f32 %v3395, %v3427
        %v3435 = vmul.f32 %v3397, %v3421
        %v3436 = vmul.f32 %v3399, %v3428
        %v3437 = vmul.f32 %v3401, %v3422
        %v3444 = vrot.slane %v3414, 4
        %v3445 = vrot.slane %v3415, 4
        %v3446 = vrot.slane %v3416, 4
        %v3447 = vrot.slane %v3417, 4
        %v3448 = vrot.slane %v3418, 4
        %v3449 = vrot.slane %v3419, 4
        %v3456 = vmul.f32 %v3391, %v3444
        %v3457 = vmul.f32 %v3393, %v3445
        %v3458 = vmul.f32 %v3395, %v3446
        %v3459 = vmul.f32 %v3397, %v3447
        %v3460 = vmul.f32 %v3399, %v3448
        %v3461 = vmul.f32 %v3401, %v3449
        %v3468 = vrot.slane %v3456, 4
        %v3469 = vrot.slane %v3457, 4
        %v3470 = vrot.slane %v3458, 4
        %v3471 = vrot.slane %v3459, 4
        %v3472 = vrot.slane %v3460, 4
        %v3473 = vrot.slane %v3461, 4
        %v3480 = vadd.f32 %v3432, %v3468
        %v3481 = vadd.f32 %v3433, %v3469
        %v3482 = vadd.f32 %v3434, %v3470
        %v3483 = vadd.f32 %v3435, %v3471
        %v3484 = vadd.f32 %v3436, %v3472
        %v3485 = vadd.f32 %v3437, %v3473
        %v3486 = vtanh.pop %v3480
        %v3487 = vtanh.pop %v3481
        %v3488 = vtanh.pop %v3482
        %v3489 = vtanh.pop %v3483
        %v3490 = vtanh.pop %v3484
        %v3491 = vtanh.pop %v3485
        %v3498 = vrot.slane %v3486, 4
        %v3499 = vrot.slane %v3487, 4
        %v3500 = vrot.slane %v3488, 4
        %v3501 = vrot.slane %v3489, 4
        %v3502 = vrot.slane %v3490, 4
        %v3503 = vrot.slane %v3491, 4
        %v3510 = vmul.f32 %v3403, %v3498
        %v3511 = vmul.f32 %v3405, %v3499
        %v3512 = vmul.f32 %v3407, %v3500
        %v3513 = vmul.f32 %v3409, %v3501
        %v3514 = vmul.f32 %v3411, %v3502
        %v3515 = vmul.f32 %v3413, %v3503
        %v3518 = vlaneseq
        %v3519 = vshrl.u32 %v3518, 7
        %v3520 = vsub.s32 0, %v3519
        %v3521 = vrot.slane %v3340, %v3520
        %v3522 = vlaneseq
        %v3523 = vshrl.u32 %v3522, 7
        %v3524 = vsub.s32 2, %v3523
        %v3525 = vrot.slane %v3340, %v3524
        %v3526 = vlaneseq
        %v3527 = vshrl.u32 %v3526, 7
        %v3528 = vsub.s32 4, %v3527
        %v3529 = vrot.slane %v3340, %v3528
        %v3530 = vlaneseq
        %v3531 = vshrl.u32 %v3530, 7
        %v3532 = vsub.s32 6, %v3531
        %v3533 = vrot.slane %v3340, %v3532
        %v3534 = vlaneseq
        %v3535 = vshrl.u32 %v3534, 7
        %v3536 = vsub.s32 0, %v3535
        %v3537 = vrot.slane %v3341, %v3536
        %v3538 = vlaneseq
        %v3539 = vshrl.u32 %v3538, 7
        %v3540 = vsub.s32 2, %v3539
        %v3541 = vrot.slane %v3341, %v3540
        %v3548 = vlaneseq
        %v3549 = vshrl.u32 %v3548, 7
        %v3550 = vsub.s32 0, %v3549
        %v3551 = vrot.slane %v3521, %v3550
        %v3552 = vlaneseq
        %v3553 = vshrl.u32 %v3552, 7
        %v3554 = vsub.s32 0, %v3553
        %v3555 = vrot.slane %v3525, %v3554
        %v3556 = vlaneseq
        %v3557 = vshrl.u32 %v3556, 7
        %v3558 = vsub.s32 0, %v3557
        %v3559 = vrot.slane %v3529, %v3558
        %v3560 = vlaneseq
        %v3561 = vshrl.u32 %v3560, 7
        %v3562 = vsub.s32 0, %v3561
        %v3563 = vrot.slane %v3533, %v3562
        %v3564 = vlaneseq
        %v3565 = vshrl.u32 %v3564, 7
        %v3566 = vsub.s32 0, %v3565
        %v3567 = vrot.slane %v3537, %v3566
        %v3568 = vlaneseq
        %v3569 = vshrl.u32 %v3568, 7
        %v3570 = vsub.s32 0, %v3569
        %v3571 = vrot.slane %v3541, %v3570
        %v3572 = vmul.f32 %v3551, %v3480
        %v3573 = vmul.f32 %v3555, %v3481
        %v3574 = vmul.f32 %v3559, %v3482
        %v3575 = vmul.f32 %v3563, %v3483
        %v3576 = vmul.f32 %v3567, %v3484
        %v3577 = vmul.f32 %v3571, %v3485
        %v3578 = vsub.f32 1.0, %v3340
        %v3579 = vsub.f32 1.0, %v3341
        %v3582 = vlaneseq
        %v3583 = vshrl.u32 %v3582, 7
        %v3584 = vsub.s32 0, %v3583
        %v3585 = vrot.slane %v3578, %v3584
        %v3586 = vlaneseq
        %v3587 = vshrl.u32 %v3586, 7
        %v3588 = vsub.s32 2, %v3587
        %v3589 = vrot.slane %v3578, %v3588
        %v3590 = vlaneseq
        %v3591 = vshrl.u32 %v3590, 7
        %v3592 = vsub.s32 4, %v3591
        %v3593 = vrot.slane %v3578, %v3592
        %v3594 = vlaneseq
        %v3595 = vshrl.u32 %v3594, 7
        %v3596 = vsub.s32 6, %v3595
        %v3597 = vrot.slane %v3578, %v3596
        %v3598 = vlaneseq
        %v3599 = vshrl.u32 %v3598, 7
        %v3600 = vsub.s32 0, %v3599
        %v3601 = vrot.slane %v3579, %v3600
        %v3602 = vlaneseq
        %v3603 = vshrl.u32 %v3602, 7
        %v3604 = vsub.s32 2, %v3603
        %v3605 = vrot.slane %v3579, %v3604
        %v3612 = vlaneseq
        %v3613 = vshrl.u32 %v3612, 7
        %v3614 = vsub.s32 0, %v3613
        %v3615 = vrot.slane %v3585, %v3614
        %v3616 = vlaneseq
        %v3617 = vshrl.u32 %v3616, 7
        %v3618 = vsub.s32 0, %v3617
        %v3619 = vrot.slane %v3589, %v3618
        %v3620 = vlaneseq
        %v3621 = vshrl.u32 %v3620, 7
        %v3622 = vsub.s32 0, %v3621
        %v3623 = vrot.slane %v3593, %v3622
        %v3624 = vlaneseq
        %v3625 = vshrl.u32 %v3624, 7
        %v3626 = vsub.s32 0, %v3625
        %v3627 = vrot.slane %v3597, %v3626
        %v3628 = vlaneseq
        %v3629 = vshrl.u32 %v3628, 7
        %v3630 = vsub.s32 0, %v3629
        %v3631 = vrot.slane %v3601, %v3630
        %v3632 = vlaneseq
        %v3633 = vshrl.u32 %v3632, 7
        %v3634 = vsub.s32 0, %v3633
        %v3635 = vrot.slane %v3605, %v3634
        %v3636 = vcombine.high %v3420, %v3420
        %v3637 = vcombine.high %v3421, %v3421
        %v3638 = vcombine.high %v3422, %v3422
        %v3642 = vmul.f32 %v3615, %v3420
        %v3643 = vmul.f32 %v3619, %v3636
        %v3644 = vmul.f32 %v3623, %v3421
        %v3645 = vmul.f32 %v3627, %v3637
        %v3646 = vmul.f32 %v3631, %v3422
        %v3647 = vmul.f32 %v3635, %v3638
        %v3654 = vrot.slane %v3642, 4
        %v3655 = vrot.slane %v3643, 4
        %v3656 = vrot.slane %v3644, 4
        %v3657 = vrot.slane %v3645, 4
        %v3658 = vrot.slane %v3646, 4
        %v3659 = vrot.slane %v3647, 4
        %v3666 = vadd.f32 %v3572, %v3654
        %v3667 = vadd.f32 %v3573, %v3655
        %v3668 = vadd.f32 %v3574, %v3656
        %v3669 = vadd.f32 %v3575, %v3657
        %v3670 = vadd.f32 %v3576, %v3658
        %v3671 = vadd.f32 %v3577, %v3659
        %v3678 = vcombine.high %v3666, %v3667
        %v3679 = vcombine.high %v3668, %v3669
        %v3680 = vcombine.high %v3670, %v3671
        %3684 = vst [vmem:[#allocation3] sm:$0xff] %v3678
        %3685 = vst [vmem:[#allocation3 + $0x8] sm:$0xff] %v3679
        %3686 = vst.msk [vmem:[#allocation3 + $0x10] sm:$0xff] %vm1843, %v3680
        %v3687 = vmul.f32 %v3551, %v3510
        %v3688 = vmul.f32 %v3555, %v3511
        %v3689 = vmul.f32 %v3559, %v3512
        %v3690 = vmul.f32 %v3563, %v3513
        %v3691 = vmul.f32 %v3567, %v3514
        %v3692 = vmul.f32 %v3571, %v3515
        %3693 = vrot.lane.b32.xlu0 %v2470, 109
        %v3694 = vpop.permute.xlu0 %3693
        %3695 = vrot.lane.b32.xlu0 %v2471, 109
        %v3696 = vpop.permute.xlu0 %3695
        %3697 = vrot.lane.b32.xlu0 %v2472, 109
        %v3698 = vpop.permute.xlu0 %3697
        %v3699 = vsel %vm473, %v2563, %v3694
        %v3700 = vsel %vm473, %v3694, %v2567
        %v3701 = vsel %vm473, %v2567, %v3696
        %v3702 = vsel %vm473, %v3696, %v2571
        %v3703 = vsel %vm473, %v2571, %v3698
        %v3710 = vmul.f32 %v3615, %v3699
        %v3711 = vmul.f32 %v3619, %v3700
        %v3712 = vmul.f32 %v3623, %v3701
        %v3713 = vmul.f32 %v3627, %v3702
        %v3714 = vmul.f32 %v3631, %v3703
        %v3715 = vmul.f32 %v3635, %v3698
        %v3716 = vadd.f32 %v3687, %v3710
        %v3717 = vadd.f32 %v3688, %v3711
        %v3718 = vadd.f32 %v3689, %v3712
        %v3719 = vadd.f32 %v3690, %v3713
        %v3720 = vadd.f32 %v3691, %v3714
        %v3721 = vadd.f32 %v3692, %v3715
        %v3728 = vcombine.low %v3716, %v3717
        %v3729 = vcombine.low %v3718, %v3719
        %v3730 = vcombine.low %v3720, %v3721
        %3731 = vrot.lane.b32.xlu0 %v3728, 19
        %v3732 = vpop.permute.xlu0 %3731
        %3733 = vrot.lane.b32.xlu0 %v3729, 19
        %v3734 = vpop.permute.xlu0 %3733
        %3735 = vrot.lane.b32.xlu0 %v3730, 19
        %v3736 = vpop.permute.xlu0 %3735
        %v3737 = vrot.slane %v3732, 4
        %v3738 = vrot.slane %v3734, 4
        %v3739 = vrot.slane %v3736, 4
        %v3740 = vsel %vm1898, %v3737, %v3732
        %v3741 = vsel %vm1842, %v3737, %v3738
        %v3742 = vsel %vm1898, %v3741, %v3734
        %v3743 = vsel %vm1842, %v3738, %v3739
        %v3744 = vsel %vm1898, %v3743, %v3736
        %3748 = vst.msk [vmem:[#allocation2] sm:$0xff] %vm1909, %v3740
        %3749 = vst [vmem:[#allocation2 + $0x8] sm:$0xff] %v3742
        %3750 = vst.msk [vmem:[#allocation2 + $0x10] sm:$0xff] %vm1913, %v3744
        %v3751 = vxor.u32 %v3130, 2147483648
        %v3752 = vxor.u32 %v3132, 2147483648
        %v3753 = vxor.u32 %v3219, 2147483648
        %v3754 = vxor.u32 %v3221, 2147483648
        %v3755 = vxor.u32 %v3308, 2147483648
        %v3756 = vxor.u32 %v3310, 2147483648
        %v3757 = vxor.u32 %v3136, 2147483648
        %v3758 = vxor.u32 %v3138, 2147483648
        %v3759 = vxor.u32 %v3225, 2147483648
        %v3760 = vxor.u32 %v3227, 2147483648
        %v3761 = vxor.u32 %v3314, 2147483648
        %v3762 = vxor.u32 %v3316, 2147483648
        %v3763 = vmul.f32 %v3751, 1.442695
        %v3764 = vpow.pop %v3763
        %v3765 = vmul.f32 %v3752, 1.442695
        %v3766 = vpow.pop %v3765
        %v3767 = vmul.f32 %v3753, 1.442695
        %v3768 = vpow.pop %v3767
        %v3769 = vmul.f32 %v3754, 1.442695
        %v3770 = vpow.pop %v3769
        %v3771 = vmul.f32 %v3755, 1.442695
        %v3772 = vpow.pop %v3771
        %v3773 = vmul.f32 %v3756, 1.442695
        %v3774 = vpow.pop %v3773
        %v3775 = vmul.f32 %v3757, 1.442695
        %v3776 = vpow.pop %v3775
        %v3777 = vmul.f32 %v3758, 1.442695
        %v3778 = vpow.pop %v3777
        %v3779 = vmul.f32 %v3759, 1.442695
        %v3780 = vpow.pop %v3779
        %v3781 = vmul.f32 %v3760, 1.442695
        %v3782 = vpow.pop %v3781
        %v3783 = vmul.f32 %v3761, 1.442695
        %v3784 = vpow.pop %v3783
        %v3785 = vmul.f32 %v3762, 1.442695
        %v3786 = vpow.pop %v3785
        %v3787 = vadd.f32 %v3764, 1.0
        %v3788 = vadd.f32 %v3766, 1.0
        %v3789 = vadd.f32 %v3768, 1.0
        %v3790 = vadd.f32 %v3770, 1.0
        %v3791 = vadd.f32 %v3772, 1.0
        %v3792 = vadd.f32 %v3774, 1.0
        %v3793 = vadd.f32 %v3776, 1.0
        %v3794 = vadd.f32 %v3778, 1.0
        %v3795 = vadd.f32 %v3780, 1.0
        %v3796 = vadd.f32 %v3782, 1.0
        %v3797 = vadd.f32 %v3784, 1.0
        %v3798 = vadd.f32 %v3786, 1.0
        %v3799 = vrcp.pop %v3787
        %v3800 = vmul.f32 1.0, %v3799
        %v3801 = vrcp.pop %v3788
        %v3802 = vmul.f32 1.0, %v3801
        %v3803 = vrcp.pop %v3789
        %v3804 = vmul.f32 1.0, %v3803
        %v3805 = vrcp.pop %v3790
        %v3806 = vmul.f32 1.0, %v3805
        %v3807 = vrcp.pop %v3791
        %v3808 = vmul.f32 1.0, %v3807
        %v3809 = vrcp.pop %v3792
        %v3810 = vmul.f32 1.0, %v3809
        %v3811 = vrcp.pop %v3793
        %v3812 = vmul.f32 1.0, %v3811
        %v3813 = vrcp.pop %v3794
        %v3814 = vmul.f32 1.0, %v3813
        %v3815 = vrcp.pop %v3795
        %v3816 = vmul.f32 1.0, %v3815
        %v3817 = vrcp.pop %v3796
        %v3818 = vmul.f32 1.0, %v3817
        %v3819 = vrcp.pop %v3797
        %v3820 = vmul.f32 1.0, %v3819
        %v3821 = vrcp.pop %v3798
        %v3822 = vmul.f32 1.0, %v3821
        %v3823 = vtanh.pop %v3136
        %v3824 = vtanh.pop %v3138
        %v3825 = vtanh.pop %v3225
        %v3826 = vtanh.pop %v3227
        %v3827 = vtanh.pop %v3314
        %v3828 = vtanh.pop %v3316
        %v3829 = vld [vmem:[#allocation5] sm:$0xff]
        %v3830 = vld [vmem:[#allocation5 + $0x8] sm:$0xff]
        %v3831 = vld [vmem:[#allocation5 + $0x10] sm:$0xff]
        %v3835 = vcombine.low %v3829, %v3829
        %v3836 = vcombine.low %v3830, %v3830
        %v3837 = vcombine.low %v3831, %v3831
        %v3841 = vmul.f32 %v3800, %v3835
        %v3842 = vmul.f32 %v3802, %v3829
        %v3843 = vmul.f32 %v3804, %v3836
        %v3844 = vmul.f32 %v3806, %v3830
        %v3845 = vmul.f32 %v3808, %v3837
        %v3846 = vmul.f32 %v3810, %v3831
        %v3853 = vrot.slane %v3823, 4
        %v3854 = vrot.slane %v3824, 4
        %v3855 = vrot.slane %v3825, 4
        %v3856 = vrot.slane %v3826, 4
        %v3857 = vrot.slane %v3827, 4
        %v3858 = vrot.slane %v3828, 4
        %v3865 = vmul.f32 %v3800, %v3853
        %v3866 = vmul.f32 %v3802, %v3854
        %v3867 = vmul.f32 %v3804, %v3855
        %v3868 = vmul.f32 %v3806, %v3856
        %v3869 = vmul.f32 %v3808, %v3857
        %v3870 = vmul.f32 %v3810, %v3858
        %v3877 = vrot.slane %v3865, 4
        %v3878 = vrot.slane %v3866, 4
        %v3879 = vrot.slane %v3867, 4
        %v3880 = vrot.slane %v3868, 4
        %v3881 = vrot.slane %v3869, 4
        %v3882 = vrot.slane %v3870, 4
        %v3889 = vadd.f32 %v3841, %v3877
        %v3890 = vadd.f32 %v3842, %v3878
        %v3891 = vadd.f32 %v3843, %v3879
        %v3892 = vadd.f32 %v3844, %v3880
        %v3893 = vadd.f32 %v3845, %v3881
        %v3894 = vadd.f32 %v3846, %v3882
        %v3895 = vtanh.pop %v3889
        %v3896 = vtanh.pop %v3890
        %v3897 = vtanh.pop %v3891
        %v3898 = vtanh.pop %v3892
        %v3899 = vtanh.pop %v3893
        %v3900 = vtanh.pop %v3894
        %v3907 = vrot.slane %v3895, 4
        %v3908 = vrot.slane %v3896, 4
        %v3909 = vrot.slane %v3897, 4
        %v3910 = vrot.slane %v3898, 4
        %v3911 = vrot.slane %v3899, 4
        %v3912 = vrot.slane %v3900, 4
        %v3919 = vmul.f32 %v3812, %v3907
        %v3920 = vmul.f32 %v3814, %v3908
        %v3921 = vmul.f32 %v3816, %v3909
        %v3922 = vmul.f32 %v3818, %v3910
        %v3923 = vmul.f32 %v3820, %v3911
        %v3924 = vmul.f32 %v3822, %v3912
        %v3925 = vmul.f32 %v3551, %v3889
        %v3926 = vmul.f32 %v3555, %v3890
        %v3927 = vmul.f32 %v3559, %v3891
        %v3928 = vmul.f32 %v3563, %v3892
        %v3929 = vmul.f32 %v3567, %v3893
        %v3930 = vmul.f32 %v3571, %v3894
        %v3931 = vcombine.high %v3829, %v3829
        %v3932 = vcombine.high %v3830, %v3830
        %v3933 = vcombine.high %v3831, %v3831
        %v3937 = vmul.f32 %v3615, %v3829
        %v3938 = vmul.f32 %v3619, %v3931
        %v3939 = vmul.f32 %v3623, %v3830
        %v3940 = vmul.f32 %v3627, %v3932
        %v3941 = vmul.f32 %v3631, %v3831
        %v3942 = vmul.f32 %v3635, %v3933
        %v3949 = vrot.slane %v3937, 4
        %v3950 = vrot.slane %v3938, 4
        %v3951 = vrot.slane %v3939, 4
        %v3952 = vrot.slane %v3940, 4
        %v3953 = vrot.slane %v3941, 4
        %v3954 = vrot.slane %v3942, 4
        %v3961 = vadd.f32 %v3925, %v3949
        %v3962 = vadd.f32 %v3926, %v3950
        %v3963 = vadd.f32 %v3927, %v3951
        %v3964 = vadd.f32 %v3928, %v3952
        %v3965 = vadd.f32 %v3929, %v3953
        %v3966 = vadd.f32 %v3930, %v3954
        %v3973 = vcombine.high %v3961, %v3962
        %v3974 = vcombine.high %v3963, %v3964
        %v3975 = vcombine.high %v3965, %v3966
        %3979 = vst [vmem:[#allocation5] sm:$0xff] %v3973
        %3980 = vst [vmem:[#allocation5 + $0x8] sm:$0xff] %v3974
        %3981 = vst.msk [vmem:[#allocation5 + $0x10] sm:$0xff] %vm1843, %v3975
        %v3982 = vmul.f32 %v3551, %v3919
        %v3983 = vmul.f32 %v3555, %v3920
        %v3984 = vmul.f32 %v3559, %v3921
        %v3985 = vmul.f32 %v3563, %v3922
        %v3986 = vmul.f32 %v3567, %v3923
        %v3987 = vmul.f32 %v3571, %v3924
        %v3988 = vmul.f32 %v3615, %v2822
        %v3989 = vmul.f32 %v3619, %v2823
        %v3990 = vmul.f32 %v3623, %v2824
        %v3991 = vmul.f32 %v3627, %v2825
        %v3992 = vmul.f32 %v3631, %v2826
        %v3993 = vmul.f32 %v3635, %v2821
        %v3994 = vadd.f32 %v3982, %v3988
        %v3995 = vadd.f32 %v3983, %v3989
        %v3996 = vadd.f32 %v3984, %v3990
        %v3997 = vadd.f32 %v3985, %v3991
        %v3998 = vadd.f32 %v3986, %v3992
        %v3999 = vadd.f32 %v3987, %v3993
        %v4006 = vcombine.low %v3994, %v3995
        %v4007 = vcombine.low %v3996, %v3997
        %v4008 = vcombine.low %v3998, %v3999
        %4009 = vrot.lane.b32.xlu0 %v4006, 19
        %v4010 = vpop.permute.xlu0 %4009
        %4011 = vrot.lane.b32.xlu0 %v4007, 19
        %v4012 = vpop.permute.xlu0 %4011
        %4013 = vrot.lane.b32.xlu0 %v4008, 19
        %v4014 = vpop.permute.xlu0 %4013
        %v4015 = vrot.slane %v4010, 4
        %v4016 = vrot.slane %v4012, 4
        %v4017 = vrot.slane %v4014, 4
        %v4018 = vsel %vm1898, %v4015, %v4010
        %v4019 = vsel %vm1842, %v4015, %v4016
        %v4020 = vsel %vm1898, %v4019, %v4012
        %v4021 = vsel %vm1842, %v4016, %v4017
        %v4022 = vsel %vm1898, %v4021, %v4014
        %4026 = vst.msk [vmem:[#allocation4] sm:$0xff] %vm1909, %v4018
        %4027 = vst [vmem:[#allocation4 + $0x8] sm:$0xff] %v4020
        %4028 = vst.msk [vmem:[#allocation4 + $0x10] sm:$0xff] %vm1913, %v4022
        %s4029 = sadd.s32 %s2193, 2
        %v4030 = vld [vmem:[#allocation2] sm:$0xff]
        %v4031 = vld [vmem:[#allocation2 + $0x8] sm:$0xff]
        %v4032 = vld [vmem:[#allocation2 + $0x10] sm:$0xff]
        %v4033 = vld [vmem:[#allocation4] sm:$0xff]
        %v4034 = vld [vmem:[#allocation4 + $0x8] sm:$0xff]
        %v4035 = vld [vmem:[#allocation4 + $0x10] sm:$0xff]
        %s4036 = scalar_lea.vmem %s184, 48 [#allocation9]
        %v4037 = vld [vmem:[%s4036] sm:$0xff]
        %v4038 = vld [vmem:[%s4036 + $0x8] sm:$0xff]
        %v4039 = vld [vmem:[%s4036 + $0x10] sm:$0xff]
        %v4043 = vcombine.high %v4037, %v4037
        %v4044 = vcombine.high %v4038, %v4038
        %v4045 = vcombine.high %v4039, %v4039
        %4049 = vst [vmem:[#allocation6] sm:$0xf] %v4037
        %4050 = vst [vmem:[#allocation6 + $0x8] sm:$0xf] %v4043
        %4051 = vst [vmem:[#allocation6 + $0x10] sm:$0xf] %v4038
        %4052 = vst [vmem:[#allocation6 + $0x18] sm:$0xf] %v4044
        %4053 = vst [vmem:[#allocation6 + $0x20] sm:$0xf] %v4039
        %4054 = vst.msk [vmem:[#allocation6 + $0x28] sm:$0xf] %vm365, %v4045
        %v4055 = vcombine.low %v4037, %v4037
        %v4056 = vcombine.low %v4038, %v4038
        %v4057 = vcombine.low %v4039, %v4039
        %4058 = vrot.lane.b32.xlu0 %v4055, 127
        %v4059 = vpop.permute.xlu0 %4058
        %4060 = vrot.lane.b32.xlu0 %v4037, 127
        %v4061 = vpop.permute.xlu0 %4060
        %4062 = vrot.lane.b32.xlu0 %v4056, 127
        %v4063 = vpop.permute.xlu0 %4062
        %4064 = vrot.lane.b32.xlu0 %v4038, 127
        %v4065 = vpop.permute.xlu0 %4064
        %4066 = vrot.lane.b32.xlu0 %v4057, 127
        %v4067 = vpop.permute.xlu0 %4066
        %4068 = vrot.lane.b32.xlu0 %v4039, 127
        %v4069 = vpop.permute.xlu0 %4068
        %v4070 = vsel %vm382, %v4059, %v4061
        %v4071 = vsel %vm382, %v4061, %v4063
        %v4072 = vsel %vm382, %v4063, %v4065
        %v4073 = vsel %vm382, %v4065, %v4067
        %v4074 = vsel %vm382, %v4067, %v4069
        %4081 = vst [vmem:[#allocation6] sm:$0xf0] %v4070
        %4082 = vst [vmem:[#allocation6 + $0x8] sm:$0xf0] %v4071
        %4083 = vst [vmem:[#allocation6 + $0x10] sm:$0xf0] %v4072
        %4084 = vst [vmem:[#allocation6 + $0x18] sm:$0xf0] %v4073
        %4085 = vst [vmem:[#allocation6 + $0x20] sm:$0xf0] %v4074
        %4086 = vst.msk [vmem:[#allocation6 + $0x28] sm:$0xf0] %vm399, %v4069
        %4087 = vrot.lane.b32.xlu0 %v4037, 126
        %v4088 = vpop.permute.xlu0 %4087
        %4089 = vrot.lane.b32.xlu0 %v4043, 126
        %v4090 = vpop.permute.xlu0 %4089
        %4091 = vrot.lane.b32.xlu0 %v4038, 126
        %v4092 = vpop.permute.xlu0 %4091
        %4093 = vrot.lane.b32.xlu0 %v4044, 126
        %v4094 = vpop.permute.xlu0 %4093
        %4095 = vrot.lane.b32.xlu0 %v4039, 126
        %v4096 = vpop.permute.xlu0 %4095
        %4097 = vrot.lane.b32.xlu0 %v4045, 126
        %v4098 = vpop.permute.xlu0 %4097
        %v4099 = vsel %vm413, %v4088, %v4090
        %v4100 = vsel %vm413, %v4090, %v4092
        %v4101 = vsel %vm413, %v4092, %v4094
        %v4102 = vsel %vm413, %v4094, %v4096
        %v4103 = vsel %vm413, %v4096, %v4098
        %4110 = vst [vmem:[#allocation6 + $0x30] sm:$0xf] %v4099
        %4111 = vst [vmem:[#allocation6 + $0x38] sm:$0xf] %v4100
        %4112 = vst [vmem:[#allocation6 + $0x40] sm:$0xf] %v4101
        %4113 = vst [vmem:[#allocation6 + $0x48] sm:$0xf] %v4102
        %4114 = vst [vmem:[#allocation6 + $0x50] sm:$0xf] %v4103
        %4115 = vst.msk [vmem:[#allocation6 + $0x58] sm:$0xf] %vm365, %v4098
        %4116 = vrot.lane.b32.xlu0 %v4055, 110
        %v4117 = vpop.permute.xlu0 %4116
        %4118 = vrot.lane.b32.xlu0 %v4037, 110
        %v4119 = vpop.permute.xlu0 %4118
        %4120 = vrot.lane.b32.xlu0 %v4056, 110
        %v4121 = vpop.permute.xlu0 %4120
        %4122 = vrot.lane.b32.xlu0 %v4038, 110
        %v4123 = vpop.permute.xlu0 %4122
        %4124 = vrot.lane.b32.xlu0 %v4057, 110
        %v4125 = vpop.permute.xlu0 %4124
        %4126 = vrot.lane.b32.xlu0 %v4039, 110
        %v4127 = vpop.permute.xlu0 %4126
        %v4128 = vsel %vm443, %v4117, %v4119
        %v4129 = vsel %vm443, %v4119, %v4121
        %v4130 = vsel %vm443, %v4121, %v4123
        %v4131 = vsel %vm443, %v4123, %v4125
        %v4132 = vsel %vm443, %v4125, %v4127
        %4139 = vst [vmem:[#allocation6 + $0x30] sm:$0xf0] %v4128
        %4140 = vst [vmem:[#allocation6 + $0x38] sm:$0xf0] %v4129
        %4141 = vst [vmem:[#allocation6 + $0x40] sm:$0xf0] %v4130
        %4142 = vst [vmem:[#allocation6 + $0x48] sm:$0xf0] %v4131
        %4143 = vst [vmem:[#allocation6 + $0x50] sm:$0xf0] %v4132
        %4144 = vst.msk [vmem:[#allocation6 + $0x58] sm:$0xf0] %vm399, %v4127
        %4145 = vrot.lane.b32.xlu0 %v4037, 109
        %v4146 = vpop.permute.xlu0 %4145
        %4147 = vrot.lane.b32.xlu0 %v4043, 109
        %v4148 = vpop.permute.xlu0 %4147
        %4149 = vrot.lane.b32.xlu0 %v4038, 109
        %v4150 = vpop.permute.xlu0 %4149
        %4151 = vrot.lane.b32.xlu0 %v4044, 109
        %v4152 = vpop.permute.xlu0 %4151
        %4153 = vrot.lane.b32.xlu0 %v4039, 109
        %v4154 = vpop.permute.xlu0 %4153
        %4155 = vrot.lane.b32.xlu0 %v4045, 109
        %v4156 = vpop.permute.xlu0 %4155
        %v4157 = vsel %vm473, %v4146, %v4148
        %v4158 = vsel %vm473, %v4148, %v4150
        %v4159 = vsel %vm473, %v4150, %v4152
        %v4160 = vsel %vm473, %v4152, %v4154
        %v4161 = vsel %vm473, %v4154, %v4156
        %4168 = vst [vmem:[#allocation6 + $0x60] sm:$0xf] %v4157
        %4169 = vst [vmem:[#allocation6 + $0x68] sm:$0xf] %v4158
        %4170 = vst [vmem:[#allocation6 + $0x70] sm:$0xf] %v4159
        %4171 = vst [vmem:[#allocation6 + $0x78] sm:$0xf] %v4160
        %4172 = vst [vmem:[#allocation6 + $0x80] sm:$0xf] %v4161
        %4173 = vst.msk [vmem:[#allocation6 + $0x88] sm:$0xf] %vm365, %v4156
        %4174 = vrot.lane.b32.xlu0 %v4055, 108
        %v4175 = vpop.permute.xlu0 %4174
        %4176 = vrot.lane.b32.xlu0 %v4037, 108
        %v4177 = vpop.permute.xlu0 %4176
        %4178 = vrot.lane.b32.xlu0 %v4056, 108
        %v4179 = vpop.permute.xlu0 %4178
        %4180 = vrot.lane.b32.xlu0 %v4038, 108
        %v4181 = vpop.permute.xlu0 %4180
        %4182 = vrot.lane.b32.xlu0 %v4057, 108
        %v4183 = vpop.permute.xlu0 %4182
        %4184 = vrot.lane.b32.xlu0 %v4039, 108
        %v4185 = vpop.permute.xlu0 %4184
        %v4186 = vsel %vm503, %v4175, %v4177
        %v4187 = vsel %vm503, %v4177, %v4179
        %v4188 = vsel %vm503, %v4179, %v4181
        %v4189 = vsel %vm503, %v4181, %v4183
        %v4190 = vsel %vm503, %v4183, %v4185
        %4197 = vst [vmem:[#allocation6 + $0x60] sm:$0xf0] %v4186
        %4198 = vst [vmem:[#allocation6 + $0x68] sm:$0xf0] %v4187
        %4199 = vst [vmem:[#allocation6 + $0x70] sm:$0xf0] %v4188
        %4200 = vst [vmem:[#allocation6 + $0x78] sm:$0xf0] %v4189
        %4201 = vst [vmem:[#allocation6 + $0x80] sm:$0xf0] %v4190
        %4202 = vst.msk [vmem:[#allocation6 + $0x88] sm:$0xf0] %vm399, %v4185
        %4203 = vrot.lane.b32.xlu0 %v4037, 92
        %v4204 = vpop.permute.xlu0 %4203
        %4205 = vrot.lane.b32.xlu0 %v4043, 92
        %v4206 = vpop.permute.xlu0 %4205
        %4207 = vrot.lane.b32.xlu0 %v4038, 92
        %v4208 = vpop.permute.xlu0 %4207
        %4209 = vrot.lane.b32.xlu0 %v4044, 92
        %v4210 = vpop.permute.xlu0 %4209
        %4211 = vrot.lane.b32.xlu0 %v4039, 92
        %v4212 = vpop.permute.xlu0 %4211
        %4213 = vrot.lane.b32.xlu0 %v4045, 92
        %v4214 = vpop.permute.xlu0 %4213
        %v4215 = vsel %vm533, %v4204, %v4206
        %v4216 = vsel %vm533, %v4206, %v4208
        %v4217 = vsel %vm533, %v4208, %v4210
        %v4218 = vsel %vm533, %v4210, %v4212
        %v4219 = vsel %vm533, %v4212, %v4214
        %4226 = vst [vmem:[#allocation6 + $0x90] sm:$0xf] %v4215
        %4227 = vst [vmem:[#allocation6 + $0x98] sm:$0xf] %v4216
        %4228 = vst [vmem:[#allocation6 + $0xa0] sm:$0xf] %v4217
        %4229 = vst [vmem:[#allocation6 + $0xa8] sm:$0xf] %v4218
        %4230 = vst [vmem:[#allocation6 + $0xb0] sm:$0xf] %v4219
        %4231 = vst.msk [vmem:[#allocation6 + $0xb8] sm:$0xf] %vm365, %v4214
        %4232 = vrot.lane.b32.xlu0 %v4055, 91
        %v4233 = vpop.permute.xlu0 %4232
        %4234 = vrot.lane.b32.xlu0 %v4037, 91
        %v4235 = vpop.permute.xlu0 %4234
        %4236 = vrot.lane.b32.xlu0 %v4056, 91
        %v4237 = vpop.permute.xlu0 %4236
        %4238 = vrot.lane.b32.xlu0 %v4038, 91
        %v4239 = vpop.permute.xlu0 %4238
        %4240 = vrot.lane.b32.xlu0 %v4057, 91
        %v4241 = vpop.permute.xlu0 %4240
        %4242 = vrot.lane.b32.xlu0 %v4039, 91
        %v4243 = vpop.permute.xlu0 %4242
        %v4244 = vsel %vm563, %v4233, %v4235
        %v4245 = vsel %vm563, %v4235, %v4237
        %v4246 = vsel %vm563, %v4237, %v4239
        %v4247 = vsel %vm563, %v4239, %v4241
        %v4248 = vsel %vm563, %v4241, %v4243
        %4255 = vst [vmem:[#allocation6 + $0x90] sm:$0xf0] %v4244
        %4256 = vst [vmem:[#allocation6 + $0x98] sm:$0xf0] %v4245
        %4257 = vst [vmem:[#allocation6 + $0xa0] sm:$0xf0] %v4246
        %4258 = vst [vmem:[#allocation6 + $0xa8] sm:$0xf0] %v4247
        %4259 = vst [vmem:[#allocation6 + $0xb0] sm:$0xf0] %v4248
        %4260 = vst.msk [vmem:[#allocation6 + $0xb8] sm:$0xf0] %vm399, %v4243
        %4261 = vrot.lane.b32.xlu0 %v4037, 90
        %v4262 = vpop.permute.xlu0 %4261
        %4263 = vrot.lane.b32.xlu0 %v4043, 90
        %v4264 = vpop.permute.xlu0 %4263
        %4265 = vrot.lane.b32.xlu0 %v4038, 90
        %v4266 = vpop.permute.xlu0 %4265
        %4267 = vrot.lane.b32.xlu0 %v4044, 90
        %v4268 = vpop.permute.xlu0 %4267
        %4269 = vrot.lane.b32.xlu0 %v4039, 90
        %v4270 = vpop.permute.xlu0 %4269
        %4271 = vrot.lane.b32.xlu0 %v4045, 90
        %v4272 = vpop.permute.xlu0 %4271
        %v4273 = vsel %vm593, %v4262, %v4264
        %v4274 = vsel %vm593, %v4264, %v4266
        %v4275 = vsel %vm593, %v4266, %v4268
        %v4276 = vsel %vm593, %v4268, %v4270
        %v4277 = vsel %vm593, %v4270, %v4272
        %4284 = vst [vmem:[#allocation6 + $0xc0] sm:$0xf] %v4273
        %4285 = vst [vmem:[#allocation6 + $0xc8] sm:$0xf] %v4274
        %4286 = vst [vmem:[#allocation6 + $0xd0] sm:$0xf] %v4275
        %4287 = vst [vmem:[#allocation6 + $0xd8] sm:$0xf] %v4276
        %4288 = vst [vmem:[#allocation6 + $0xe0] sm:$0xf] %v4277
        %4289 = vst.msk [vmem:[#allocation6 + $0xe8] sm:$0xf] %vm365, %v4272
        %v4293 = vcombine.low %v4030, %v4030
        %v4294 = vcombine.low %v4031, %v4031
        %v4295 = vcombine.low %v4032, %v4032
        %4299 = vst [vmem:[#allocation6 + $0xc0] sm:$0xf0] %v4293
        %4300 = vst [vmem:[#allocation6 + $0xc8] sm:$0xf0] %v4030
        %4301 = vst [vmem:[#allocation6 + $0xd0] sm:$0xf0] %v4294
        %4302 = vst [vmem:[#allocation6 + $0xd8] sm:$0xf0] %v4031
        %4303 = vst [vmem:[#allocation6 + $0xe0] sm:$0xf0] %v4295
        %4304 = vst.msk [vmem:[#allocation6 + $0xe8] sm:$0xf0] %vm399, %v4032
        %v4305 = vcombine.high %v4030, %v4030
        %v4306 = vcombine.high %v4031, %v4031
        %v4307 = vcombine.high %v4032, %v4032
        %4308 = vrot.lane.b32.xlu0 %v4030, 127
        %v4309 = vpop.permute.xlu0 %4308
        %4310 = vrot.lane.b32.xlu0 %v4305, 127
        %v4311 = vpop.permute.xlu0 %4310
        %4312 = vrot.lane.b32.xlu0 %v4031, 127
        %v4313 = vpop.permute.xlu0 %4312
        %4314 = vrot.lane.b32.xlu0 %v4306, 127
        %v4315 = vpop.permute.xlu0 %4314
        %4316 = vrot.lane.b32.xlu0 %v4032, 127
        %v4317 = vpop.permute.xlu0 %4316
        %4318 = vrot.lane.b32.xlu0 %v4307, 127
        %v4319 = vpop.permute.xlu0 %4318
        %v4320 = vsel %vm382, %v4309, %v4311
        %v4321 = vsel %vm382, %v4311, %v4313
        %v4322 = vsel %vm382, %v4313, %v4315
        %v4323 = vsel %vm382, %v4315, %v4317
        %v4324 = vsel %vm382, %v4317, %v4319
        %4331 = vst [vmem:[#allocation6 + $0xf0] sm:$0xf] %v4320
        %4332 = vst [vmem:[#allocation6 + $0xf8] sm:$0xf] %v4321
        %4333 = vst [vmem:[#allocation6 + $0x100] sm:$0xf] %v4322
        %4334 = vst [vmem:[#allocation6 + $0x108] sm:$0xf] %v4323
        %4335 = vst [vmem:[#allocation6 + $0x110] sm:$0xf] %v4324
        %4336 = vst.msk [vmem:[#allocation6 + $0x118] sm:$0xf] %vm365, %v4319
        %4337 = vrot.lane.b32.xlu0 %v4293, 126
        %v4338 = vpop.permute.xlu0 %4337
        %4339 = vrot.lane.b32.xlu0 %v4030, 126
        %v4340 = vpop.permute.xlu0 %4339
        %4341 = vrot.lane.b32.xlu0 %v4294, 126
        %v4342 = vpop.permute.xlu0 %4341
        %4343 = vrot.lane.b32.xlu0 %v4031, 126
        %v4344 = vpop.permute.xlu0 %4343
        %4345 = vrot.lane.b32.xlu0 %v4295, 126
        %v4346 = vpop.permute.xlu0 %4345
        %4347 = vrot.lane.b32.xlu0 %v4032, 126
        %v4348 = vpop.permute.xlu0 %4347
        %v4349 = vsel %vm413, %v4338, %v4340
        %v4350 = vsel %vm413, %v4340, %v4342
        %v4351 = vsel %vm413, %v4342, %v4344
        %v4352 = vsel %vm413, %v4344, %v4346
        %v4353 = vsel %vm413, %v4346, %v4348
        %4360 = vst [vmem:[#allocation6 + $0xf0] sm:$0xf0] %v4349
        %4361 = vst [vmem:[#allocation6 + $0xf8] sm:$0xf0] %v4350
        %4362 = vst [vmem:[#allocation6 + $0x100] sm:$0xf0] %v4351
        %4363 = vst [vmem:[#allocation6 + $0x108] sm:$0xf0] %v4352
        %4364 = vst [vmem:[#allocation6 + $0x110] sm:$0xf0] %v4353
        %4365 = vst.msk [vmem:[#allocation6 + $0x118] sm:$0xf0] %vm399, %v4348
        %4366 = vrot.lane.b32.xlu0 %v4030, 110
        %v4367 = vpop.permute.xlu0 %4366
        %4368 = vrot.lane.b32.xlu0 %v4305, 110
        %v4369 = vpop.permute.xlu0 %4368
        %4370 = vrot.lane.b32.xlu0 %v4031, 110
        %v4371 = vpop.permute.xlu0 %4370
        %4372 = vrot.lane.b32.xlu0 %v4306, 110
        %v4373 = vpop.permute.xlu0 %4372
        %4374 = vrot.lane.b32.xlu0 %v4032, 110
        %v4375 = vpop.permute.xlu0 %4374
        %4376 = vrot.lane.b32.xlu0 %v4307, 110
        %v4377 = vpop.permute.xlu0 %4376
        %v4378 = vsel %vm443, %v4367, %v4369
        %v4379 = vsel %vm443, %v4369, %v4371
        %v4380 = vsel %vm443, %v4371, %v4373
        %v4381 = vsel %vm443, %v4373, %v4375
        %v4382 = vsel %vm443, %v4375, %v4377
        %4389 = vst [vmem:[#allocation6 + $0x120] sm:$0xf] %v4378
        %4390 = vst [vmem:[#allocation6 + $0x128] sm:$0xf] %v4379
        %4391 = vst [vmem:[#allocation6 + $0x130] sm:$0xf] %v4380
        %4392 = vst [vmem:[#allocation6 + $0x138] sm:$0xf] %v4381
        %4393 = vst [vmem:[#allocation6 + $0x140] sm:$0xf] %v4382
        %4394 = vst.msk [vmem:[#allocation6 + $0x148] sm:$0xf] %vm365, %v4377
        %4395 = vrot.lane.b32.xlu0 %v4293, 109
        %v4396 = vpop.permute.xlu0 %4395
        %4397 = vrot.lane.b32.xlu0 %v4030, 109
        %v4398 = vpop.permute.xlu0 %4397
        %4399 = vrot.lane.b32.xlu0 %v4294, 109
        %v4400 = vpop.permute.xlu0 %4399
        %4401 = vrot.lane.b32.xlu0 %v4031, 109
        %v4402 = vpop.permute.xlu0 %4401
        %4403 = vrot.lane.b32.xlu0 %v4295, 109
        %v4404 = vpop.permute.xlu0 %4403
        %4405 = vrot.lane.b32.xlu0 %v4032, 109
        %v4406 = vpop.permute.xlu0 %4405
        %v4407 = vsel %vm473, %v4396, %v4398
        %v4408 = vsel %vm473, %v4398, %v4400
        %v4409 = vsel %vm473, %v4400, %v4402
        %v4410 = vsel %vm473, %v4402, %v4404
        %v4411 = vsel %vm473, %v4404, %v4406
        %4418 = vst [vmem:[#allocation6 + $0x120] sm:$0xf0] %v4407
        %4419 = vst [vmem:[#allocation6 + $0x128] sm:$0xf0] %v4408
        %4420 = vst [vmem:[#allocation6 + $0x130] sm:$0xf0] %v4409
        %4421 = vst [vmem:[#allocation6 + $0x138] sm:$0xf0] %v4410
        %4422 = vst [vmem:[#allocation6 + $0x140] sm:$0xf0] %v4411
        %4423 = vst.msk [vmem:[#allocation6 + $0x148] sm:$0xf0] %vm399, %v4406
        %4424 = vrot.lane.b32.xlu0 %v4030, 108
        %v4425 = vpop.permute.xlu0 %4424
        %4426 = vrot.lane.b32.xlu0 %v4305, 108
        %v4427 = vpop.permute.xlu0 %4426
        %4428 = vrot.lane.b32.xlu0 %v4031, 108
        %v4429 = vpop.permute.xlu0 %4428
        %4430 = vrot.lane.b32.xlu0 %v4306, 108
        %v4431 = vpop.permute.xlu0 %4430
        %4432 = vrot.lane.b32.xlu0 %v4032, 108
        %v4433 = vpop.permute.xlu0 %4432
        %4434 = vrot.lane.b32.xlu0 %v4307, 108
        %v4435 = vpop.permute.xlu0 %4434
        %v4436 = vsel %vm503, %v4425, %v4427
        %v4437 = vsel %vm503, %v4427, %v4429
        %v4438 = vsel %vm503, %v4429, %v4431
        %v4439 = vsel %vm503, %v4431, %v4433
        %v4440 = vsel %vm503, %v4433, %v4435
        %4447 = vst [vmem:[#allocation6 + $0x150] sm:$0xf] %v4436
        %4448 = vst [vmem:[#allocation6 + $0x158] sm:$0xf] %v4437
        %4449 = vst [vmem:[#allocation6 + $0x160] sm:$0xf] %v4438
        %4450 = vst [vmem:[#allocation6 + $0x168] sm:$0xf] %v4439
        %4451 = vst [vmem:[#allocation6 + $0x170] sm:$0xf] %v4440
        %4452 = vst.msk [vmem:[#allocation6 + $0x178] sm:$0xf] %vm365, %v4435
        %4453 = vrot.lane.b32.xlu0 %v4293, 92
        %v4454 = vpop.permute.xlu0 %4453
        %4455 = vrot.lane.b32.xlu0 %v4030, 92
        %v4456 = vpop.permute.xlu0 %4455
        %4457 = vrot.lane.b32.xlu0 %v4294, 92
        %v4458 = vpop.permute.xlu0 %4457
        %4459 = vrot.lane.b32.xlu0 %v4031, 92
        %v4460 = vpop.permute.xlu0 %4459
        %4461 = vrot.lane.b32.xlu0 %v4295, 92
        %v4462 = vpop.permute.xlu0 %4461
        %4463 = vrot.lane.b32.xlu0 %v4032, 92
        %v4464 = vpop.permute.xlu0 %4463
        %v4465 = vsel %vm533, %v4454, %v4456
        %v4466 = vsel %vm533, %v4456, %v4458
        %v4467 = vsel %vm533, %v4458, %v4460
        %v4468 = vsel %vm533, %v4460, %v4462
        %v4469 = vsel %vm533, %v4462, %v4464
        %4476 = vst [vmem:[#allocation6 + $0x150] sm:$0xf0] %v4465
        %4477 = vst [vmem:[#allocation6 + $0x158] sm:$0xf0] %v4466
        %4478 = vst [vmem:[#allocation6 + $0x160] sm:$0xf0] %v4467
        %4479 = vst [vmem:[#allocation6 + $0x168] sm:$0xf0] %v4468
        %4480 = vst [vmem:[#allocation6 + $0x170] sm:$0xf0] %v4469
        %4481 = vst.msk [vmem:[#allocation6 + $0x178] sm:$0xf0] %vm399, %v4464
        %4482 = vrot.lane.b32.xlu0 %v4030, 91
        %v4483 = vpop.permute.xlu0 %4482
        %4484 = vrot.lane.b32.xlu0 %v4305, 91
        %v4485 = vpop.permute.xlu0 %4484
        %4486 = vrot.lane.b32.xlu0 %v4031, 91
        %v4487 = vpop.permute.xlu0 %4486
        %4488 = vrot.lane.b32.xlu0 %v4306, 91
        %v4489 = vpop.permute.xlu0 %4488
        %4490 = vrot.lane.b32.xlu0 %v4032, 91
        %v4491 = vpop.permute.xlu0 %4490
        %4492 = vrot.lane.b32.xlu0 %v4307, 91
        %v4493 = vpop.permute.xlu0 %4492
        %v4494 = vsel %vm563, %v4483, %v4485
        %v4495 = vsel %vm563, %v4485, %v4487
        %v4496 = vsel %vm563, %v4487, %v4489
        %v4497 = vsel %vm563, %v4489, %v4491
        %v4498 = vsel %vm563, %v4491, %v4493
        %4505 = vst [vmem:[#allocation6 + $0x180] sm:$0xf] %v4494
        %4506 = vst [vmem:[#allocation6 + $0x188] sm:$0xf] %v4495
        %4507 = vst [vmem:[#allocation6 + $0x190] sm:$0xf] %v4496
        %4508 = vst [vmem:[#allocation6 + $0x198] sm:$0xf] %v4497
        %4509 = vst [vmem:[#allocation6 + $0x1a0] sm:$0xf] %v4498
        %4510 = vst.msk [vmem:[#allocation6 + $0x1a8] sm:$0xf] %vm365, %v4493
        %4511 = vrot.lane.b32.xlu0 %v4293, 90
        %v4512 = vpop.permute.xlu0 %4511
        %4513 = vrot.lane.b32.xlu0 %v4030, 90
        %v4514 = vpop.permute.xlu0 %4513
        %4515 = vrot.lane.b32.xlu0 %v4294, 90
        %v4516 = vpop.permute.xlu0 %4515
        %4517 = vrot.lane.b32.xlu0 %v4031, 90
        %v4518 = vpop.permute.xlu0 %4517
        %4519 = vrot.lane.b32.xlu0 %v4295, 90
        %v4520 = vpop.permute.xlu0 %4519
        %4521 = vrot.lane.b32.xlu0 %v4032, 90
        %v4522 = vpop.permute.xlu0 %4521
        %v4523 = vsel %vm593, %v4512, %v4514
        %v4524 = vsel %vm593, %v4514, %v4516
        %v4525 = vsel %vm593, %v4516, %v4518
        %v4526 = vsel %vm593, %v4518, %v4520
        %v4527 = vsel %vm593, %v4520, %v4522
        %4534 = vst [vmem:[#allocation6 + $0x180] sm:$0xf0] %v4523
        %4535 = vst [vmem:[#allocation6 + $0x188] sm:$0xf0] %v4524
        %4536 = vst [vmem:[#allocation6 + $0x190] sm:$0xf0] %v4525
        %4537 = vst [vmem:[#allocation6 + $0x198] sm:$0xf0] %v4526
        %4538 = vst [vmem:[#allocation6 + $0x1a0] sm:$0xf0] %v4527
        %4539 = vst.msk [vmem:[#allocation6 + $0x1a8] sm:$0xf0] %vm399, %v4522
        %v4543 = vcombine.high %v4033, %v4033
        %v4544 = vcombine.high %v4034, %v4034
        %v4545 = vcombine.high %v4035, %v4035
        %4549 = vst [vmem:[#allocation6 + $0x1b0] sm:$0xf] %v4033
        %4550 = vst [vmem:[#allocation6 + $0x1b8] sm:$0xf] %v4543
        %4551 = vst [vmem:[#allocation6 + $0x1c0] sm:$0xf] %v4034
        %4552 = vst [vmem:[#allocation6 + $0x1c8] sm:$0xf] %v4544
        %4553 = vst [vmem:[#allocation6 + $0x1d0] sm:$0xf] %v4035
        %4554 = vst.msk [vmem:[#allocation6 + $0x1d8] sm:$0xf] %vm365, %v4545
        %v4555 = vcombine.low %v4033, %v4033
        %v4556 = vcombine.low %v4034, %v4034
        %v4557 = vcombine.low %v4035, %v4035
        %4558 = vrot.lane.b32.xlu0 %v4555, 127
        %v4559 = vpop.permute.xlu0 %4558
        %4560 = vrot.lane.b32.xlu0 %v4033, 127
        %v4561 = vpop.permute.xlu0 %4560
        %4562 = vrot.lane.b32.xlu0 %v4556, 127
        %v4563 = vpop.permute.xlu0 %4562
        %4564 = vrot.lane.b32.xlu0 %v4034, 127
        %v4565 = vpop.permute.xlu0 %4564
        %4566 = vrot.lane.b32.xlu0 %v4557, 127
        %v4567 = vpop.permute.xlu0 %4566
        %4568 = vrot.lane.b32.xlu0 %v4035, 127
        %v4569 = vpop.permute.xlu0 %4568
        %v4570 = vsel %vm382, %v4559, %v4561
        %v4571 = vsel %vm382, %v4561, %v4563
        %v4572 = vsel %vm382, %v4563, %v4565
        %v4573 = vsel %vm382, %v4565, %v4567
        %v4574 = vsel %vm382, %v4567, %v4569
        %4581 = vst [vmem:[#allocation6 + $0x1b0] sm:$0xf0] %v4570
        %4582 = vst [vmem:[#allocation6 + $0x1b8] sm:$0xf0] %v4571
        %4583 = vst [vmem:[#allocation6 + $0x1c0] sm:$0xf0] %v4572
        %4584 = vst [vmem:[#allocation6 + $0x1c8] sm:$0xf0] %v4573
        %4585 = vst [vmem:[#allocation6 + $0x1d0] sm:$0xf0] %v4574
        %4586 = vst.msk [vmem:[#allocation6 + $0x1d8] sm:$0xf0] %vm399, %v4569
        %4587 = vrot.lane.b32.xlu0 %v4033, 126
        %v4588 = vpop.permute.xlu0 %4587
        %4589 = vrot.lane.b32.xlu0 %v4543, 126
        %v4590 = vpop.permute.xlu0 %4589
        %4591 = vrot.lane.b32.xlu0 %v4034, 126
        %v4592 = vpop.permute.xlu0 %4591
        %4593 = vrot.lane.b32.xlu0 %v4544, 126
        %v4594 = vpop.permute.xlu0 %4593
        %4595 = vrot.lane.b32.xlu0 %v4035, 126
        %v4596 = vpop.permute.xlu0 %4595
        %4597 = vrot.lane.b32.xlu0 %v4545, 126
        %v4598 = vpop.permute.xlu0 %4597
        %v4599 = vsel %vm413, %v4588, %v4590
        %v4600 = vsel %vm413, %v4590, %v4592
        %v4601 = vsel %vm413, %v4592, %v4594
        %v4602 = vsel %vm413, %v4594, %v4596
        %v4603 = vsel %vm413, %v4596, %v4598
        %4610 = vst [vmem:[#allocation6 + $0x1e0] sm:$0xf] %v4599
        %4611 = vst [vmem:[#allocation6 + $0x1e8] sm:$0xf] %v4600
        %4612 = vst [vmem:[#allocation6 + $0x1f0] sm:$0xf] %v4601
        %4613 = vst [vmem:[#allocation6 + $0x1f8] sm:$0xf] %v4602
        %4614 = vst [vmem:[#allocation6 + $0x200] sm:$0xf] %v4603
        %4615 = vst.msk [vmem:[#allocation6 + $0x208] sm:$0xf] %vm365, %v4598
        %4616 = vrot.lane.b32.xlu0 %v4555, 110
        %v4617 = vpop.permute.xlu0 %4616
        %4618 = vrot.lane.b32.xlu0 %v4033, 110
        %v4619 = vpop.permute.xlu0 %4618
        %4620 = vrot.lane.b32.xlu0 %v4556, 110
        %v4621 = vpop.permute.xlu0 %4620
        %4622 = vrot.lane.b32.xlu0 %v4034, 110
        %v4623 = vpop.permute.xlu0 %4622
        %4624 = vrot.lane.b32.xlu0 %v4557, 110
        %v4625 = vpop.permute.xlu0 %4624
        %4626 = vrot.lane.b32.xlu0 %v4035, 110
        %v4627 = vpop.permute.xlu0 %4626
        %v4628 = vsel %vm443, %v4617, %v4619
        %v4629 = vsel %vm443, %v4619, %v4621
        %v4630 = vsel %vm443, %v4621, %v4623
        %v4631 = vsel %vm443, %v4623, %v4625
        %v4632 = vsel %vm443, %v4625, %v4627
        %4639 = vst [vmem:[#allocation6 + $0x1e0] sm:$0xf0] %v4628
        %4640 = vst [vmem:[#allocation6 + $0x1e8] sm:$0xf0] %v4629
        %4641 = vst [vmem:[#allocation6 + $0x1f0] sm:$0xf0] %v4630
        %4642 = vst [vmem:[#allocation6 + $0x1f8] sm:$0xf0] %v4631
        %4643 = vst [vmem:[#allocation6 + $0x200] sm:$0xf0] %v4632
        %4644 = vst.msk [vmem:[#allocation6 + $0x208] sm:$0xf0] %vm399, %v4627
        %4645 = vrot.lane.b32.xlu0 %v4033, 109
        %v4646 = vpop.permute.xlu0 %4645
        %4647 = vrot.lane.b32.xlu0 %v4543, 109
        %v4648 = vpop.permute.xlu0 %4647
        %4649 = vrot.lane.b32.xlu0 %v4034, 109
        %v4650 = vpop.permute.xlu0 %4649
        %4651 = vrot.lane.b32.xlu0 %v4544, 109
        %v4652 = vpop.permute.xlu0 %4651
        %4653 = vrot.lane.b32.xlu0 %v4035, 109
        %v4654 = vpop.permute.xlu0 %4653
        %4655 = vrot.lane.b32.xlu0 %v4545, 109
        %v4656 = vpop.permute.xlu0 %4655
        %v4657 = vsel %vm473, %v4646, %v4648
        %v4658 = vsel %vm473, %v4648, %v4650
        %v4659 = vsel %vm473, %v4650, %v4652
        %v4660 = vsel %vm473, %v4652, %v4654
        %v4661 = vsel %vm473, %v4654, %v4656
        %4668 = vst [vmem:[#allocation6 + $0x210] sm:$0xf] %v4657
        %4669 = vst [vmem:[#allocation6 + $0x218] sm:$0xf] %v4658
        %4670 = vst [vmem:[#allocation6 + $0x220] sm:$0xf] %v4659
        %4671 = vst [vmem:[#allocation6 + $0x228] sm:$0xf] %v4660
        %4672 = vst [vmem:[#allocation6 + $0x230] sm:$0xf] %v4661
        %4673 = vst.msk [vmem:[#allocation6 + $0x238] sm:$0xf] %vm365, %v4656
        %4674 = vrot.lane.b32.xlu0 %v4555, 108
        %v4675 = vpop.permute.xlu0 %4674
        %4676 = vrot.lane.b32.xlu0 %v4033, 108
        %v4677 = vpop.permute.xlu0 %4676
        %4678 = vrot.lane.b32.xlu0 %v4556, 108
        %v4679 = vpop.permute.xlu0 %4678
        %4680 = vrot.lane.b32.xlu0 %v4034, 108
        %v4681 = vpop.permute.xlu0 %4680
        %4682 = vrot.lane.b32.xlu0 %v4557, 108
        %v4683 = vpop.permute.xlu0 %4682
        %4684 = vrot.lane.b32.xlu0 %v4035, 108
        %v4685 = vpop.permute.xlu0 %4684
        %v4686 = vsel %vm503, %v4675, %v4677
        %v4687 = vsel %vm503, %v4677, %v4679
        %v4688 = vsel %vm503, %v4679, %v4681
        %v4689 = vsel %vm503, %v4681, %v4683
        %v4690 = vsel %vm503, %v4683, %v4685
        %4697 = vst [vmem:[#allocation6 + $0x210] sm:$0xf0] %v4686
        %4698 = vst [vmem:[#allocation6 + $0x218] sm:$0xf0] %v4687
        %4699 = vst [vmem:[#allocation6 + $0x220] sm:$0xf0] %v4688
        %4700 = vst [vmem:[#allocation6 + $0x228] sm:$0xf0] %v4689
        %4701 = vst [vmem:[#allocation6 + $0x230] sm:$0xf0] %v4690
        %4702 = vst.msk [vmem:[#allocation6 + $0x238] sm:$0xf0] %vm399, %v4685
        %4703 = vrot.lane.b32.xlu0 %v4033, 92
        %v4704 = vpop.permute.xlu0 %4703
        %4705 = vrot.lane.b32.xlu0 %v4543, 92
        %v4706 = vpop.permute.xlu0 %4705
        %4707 = vrot.lane.b32.xlu0 %v4034, 92
        %v4708 = vpop.permute.xlu0 %4707
        %4709 = vrot.lane.b32.xlu0 %v4544, 92
        %v4710 = vpop.permute.xlu0 %4709
        %4711 = vrot.lane.b32.xlu0 %v4035, 92
        %v4712 = vpop.permute.xlu0 %4711
        %4713 = vrot.lane.b32.xlu0 %v4545, 92
        %v4714 = vpop.permute.xlu0 %4713
        %v4715 = vsel %vm533, %v4704, %v4706
        %v4716 = vsel %vm533, %v4706, %v4708
        %v4717 = vsel %vm533, %v4708, %v4710
        %v4718 = vsel %vm533, %v4710, %v4712
        %v4719 = vsel %vm533, %v4712, %v4714
        %4726 = vst [vmem:[#allocation6 + $0x240] sm:$0xf] %v4715
        %4727 = vst [vmem:[#allocation6 + $0x248] sm:$0xf] %v4716
        %4728 = vst [vmem:[#allocation6 + $0x250] sm:$0xf] %v4717
        %4729 = vst [vmem:[#allocation6 + $0x258] sm:$0xf] %v4718
        %4730 = vst [vmem:[#allocation6 + $0x260] sm:$0xf] %v4719
        %4731 = vst.msk [vmem:[#allocation6 + $0x268] sm:$0xf] %vm365, %v4714
        %4732 = vrot.lane.b32.xlu0 %v4555, 91
        %v4733 = vpop.permute.xlu0 %4732
        %4734 = vrot.lane.b32.xlu0 %v4033, 91
        %v4735 = vpop.permute.xlu0 %4734
        %4736 = vrot.lane.b32.xlu0 %v4556, 91
        %v4737 = vpop.permute.xlu0 %4736
        %4738 = vrot.lane.b32.xlu0 %v4034, 91
        %v4739 = vpop.permute.xlu0 %4738
        %4740 = vrot.lane.b32.xlu0 %v4557, 91
        %v4741 = vpop.permute.xlu0 %4740
        %4742 = vrot.lane.b32.xlu0 %v4035, 91
        %v4743 = vpop.permute.xlu0 %4742
        %v4744 = vsel %vm563, %v4733, %v4735
        %v4745 = vsel %vm563, %v4735, %v4737
        %v4746 = vsel %vm563, %v4737, %v4739
        %v4747 = vsel %vm563, %v4739, %v4741
        %v4748 = vsel %vm563, %v4741, %v4743
        %4755 = vst [vmem:[#allocation6 + $0x240] sm:$0xf0] %v4744
        %4756 = vst [vmem:[#allocation6 + $0x248] sm:$0xf0] %v4745
        %4757 = vst [vmem:[#allocation6 + $0x250] sm:$0xf0] %v4746
        %4758 = vst [vmem:[#allocation6 + $0x258] sm:$0xf0] %v4747
        %4759 = vst [vmem:[#allocation6 + $0x260] sm:$0xf0] %v4748
        %4760 = vst.msk [vmem:[#allocation6 + $0x268] sm:$0xf0] %vm399, %v4743
        %4761 = vrot.lane.b32.xlu0 %v4033, 90
        %v4762 = vpop.permute.xlu0 %4761
        %4763 = vrot.lane.b32.xlu0 %v4543, 90
        %v4764 = vpop.permute.xlu0 %4763
        %4765 = vrot.lane.b32.xlu0 %v4034, 90
        %v4766 = vpop.permute.xlu0 %4765
        %4767 = vrot.lane.b32.xlu0 %v4544, 90
        %v4768 = vpop.permute.xlu0 %4767
        %4769 = vrot.lane.b32.xlu0 %v4035, 90
        %v4770 = vpop.permute.xlu0 %4769
        %4771 = vrot.lane.b32.xlu0 %v4545, 90
        %v4772 = vpop.permute.xlu0 %4771
        %v4773 = vsel %vm593, %v4762, %v4764
        %v4774 = vsel %vm593, %v4764, %v4766
        %v4775 = vsel %vm593, %v4766, %v4768
        %v4776 = vsel %vm593, %v4768, %v4770
        %v4777 = vsel %vm593, %v4770, %v4772
        %4784 = vst [vmem:[#allocation6 + $0x270] sm:$0xf] %v4773
        %4785 = vst [vmem:[#allocation6 + $0x278] sm:$0xf] %v4774
        %4786 = vst [vmem:[#allocation6 + $0x280] sm:$0xf] %v4775
        %4787 = vst [vmem:[#allocation6 + $0x288] sm:$0xf] %v4776
        %4788 = vst [vmem:[#allocation6 + $0x290] sm:$0xf] %v4777
        %4789 = vst.msk [vmem:[#allocation6 + $0x298] sm:$0xf] %vm365, %v4772
        %v4790 = vld [vmem:[#allocation6] sm:$0xff]
        %v4791 = vld [vmem:[#allocation6 + $0x8] sm:$0xff]
        %v4792 = vld [vmem:[#allocation6 + $0x10] sm:$0xff]
        %v4793 = vld [vmem:[#allocation6 + $0x18] sm:$0xff]
        %v4794 = vld [vmem:[#allocation6 + $0x20] sm:$0xff]
        %v4795 = vld [vmem:[#allocation6 + $0x28] sm:$0xff]
        %v4796 = vld [vmem:[#allocation6 + $0x30] sm:$0xff]
        %v4797 = vld [vmem:[#allocation6 + $0x38] sm:$0xff]
        %v4798 = vld [vmem:[#allocation6 + $0x40] sm:$0xff]
        %v4799 = vld [vmem:[#allocation6 + $0x48] sm:$0xff]
        %v4800 = vld [vmem:[#allocation6 + $0x50] sm:$0xff]
        %v4801 = vld [vmem:[#allocation6 + $0x58] sm:$0xff]
        %v4802 = vld [vmem:[#allocation6 + $0x60] sm:$0xff]
        %v4803 = vld [vmem:[#allocation6 + $0x68] sm:$0xff]
        %v4804 = vld [vmem:[#allocation6 + $0x70] sm:$0xff]
        %v4805 = vld [vmem:[#allocation6 + $0x78] sm:$0xff]
        %v4806 = vld [vmem:[#allocation6 + $0x80] sm:$0xff]
        %v4807 = vld [vmem:[#allocation6 + $0x88] sm:$0xff]
        %v4808 = vld [vmem:[#allocation6 + $0x90] sm:$0xff]
        %v4809 = vld [vmem:[#allocation6 + $0x98] sm:$0xff]
        %v4810 = vld [vmem:[#allocation6 + $0xa0] sm:$0xff]
        %v4811 = vld [vmem:[#allocation6 + $0xa8] sm:$0xff]
        %v4812 = vld [vmem:[#allocation6 + $0xb0] sm:$0xff]
        %v4813 = vld [vmem:[#allocation6 + $0xb8] sm:$0xff]
        %v4814 = vld [vmem:[#allocation6 + $0xc0] sm:$0xff]
        %v4815 = vld [vmem:[#allocation6 + $0xc8] sm:$0xff]
        %v4816 = vld [vmem:[#allocation6 + $0xd0] sm:$0xff]
        %v4817 = vld [vmem:[#allocation6 + $0xd8] sm:$0xff]
        %v4818 = vld [vmem:[#allocation6 + $0xe0] sm:$0xff]
        %v4819 = vld [vmem:[#allocation6 + $0xe8] sm:$0xff]
        %v4820 = vld [vmem:[#allocation6 + $0xf0] sm:$0xff]
        %v4821 = vld [vmem:[#allocation6 + $0xf8] sm:$0xff]
        %v4822 = vld [vmem:[#allocation6 + $0x100] sm:$0xff]
        %v4823 = vld [vmem:[#allocation6 + $0x108] sm:$0xff]
        %v4824 = vld [vmem:[#allocation6 + $0x110] sm:$0xff]
        %v4825 = vld [vmem:[#allocation6 + $0x118] sm:$0xff]
        %v4826 = vld [vmem:[#allocation6 + $0x120] sm:$0xff]
        %v4827 = vld [vmem:[#allocation6 + $0x128] sm:$0xff]
        %v4828 = vld [vmem:[#allocation6 + $0x130] sm:$0xff]
        %v4829 = vld [vmem:[#allocation6 + $0x138] sm:$0xff]
        %v4830 = vld [vmem:[#allocation6 + $0x140] sm:$0xff]
        %v4831 = vld [vmem:[#allocation6 + $0x148] sm:$0xff]
        %v4832 = vld [vmem:[#allocation6 + $0x150] sm:$0xff]
        %v4833 = vld [vmem:[#allocation6 + $0x158] sm:$0xff]
        %v4834 = vld [vmem:[#allocation6 + $0x160] sm:$0xff]
        %v4835 = vld [vmem:[#allocation6 + $0x168] sm:$0xff]
        %v4836 = vld [vmem:[#allocation6 + $0x170] sm:$0xff]
        %v4837 = vld [vmem:[#allocation6 + $0x178] sm:$0xff]
        %v4838 = vld [vmem:[#allocation6 + $0x180] sm:$0xff]
        %v4839 = vld [vmem:[#allocation6 + $0x188] sm:$0xff]
        %v4840 = vld [vmem:[#allocation6 + $0x190] sm:$0xff]
        %v4841 = vld [vmem:[#allocation6 + $0x198] sm:$0xff]
        %v4842 = vld [vmem:[#allocation6 + $0x1a0] sm:$0xff]
        %v4843 = vld [vmem:[#allocation6 + $0x1a8] sm:$0xff]
        %v4844 = vld [vmem:[#allocation6 + $0x1b0] sm:$0xff]
        %v4845 = vld [vmem:[#allocation6 + $0x1b8] sm:$0xff]
        %v4846 = vld [vmem:[#allocation6 + $0x1c0] sm:$0xff]
        %v4847 = vld [vmem:[#allocation6 + $0x1c8] sm:$0xff]
        %v4848 = vld [vmem:[#allocation6 + $0x1d0] sm:$0xff]
        %v4849 = vld [vmem:[#allocation6 + $0x1d8] sm:$0xff]
        %v4850 = vld [vmem:[#allocation6 + $0x1e0] sm:$0xff]
        %v4851 = vld [vmem:[#allocation6 + $0x1e8] sm:$0xff]
        %v4852 = vld [vmem:[#allocation6 + $0x1f0] sm:$0xff]
        %v4853 = vld [vmem:[#allocation6 + $0x1f8] sm:$0xff]
        %v4854 = vld [vmem:[#allocation6 + $0x200] sm:$0xff]
        %v4855 = vld [vmem:[#allocation6 + $0x208] sm:$0xff]
        %v4856 = vld [vmem:[#allocation6 + $0x210] sm:$0xff]
        %v4857 = vld [vmem:[#allocation6 + $0x218] sm:$0xff]
        %v4858 = vld [vmem:[#allocation6 + $0x220] sm:$0xff]
        %v4859 = vld [vmem:[#allocation6 + $0x228] sm:$0xff]
        %v4860 = vld [vmem:[#allocation6 + $0x230] sm:$0xff]
        %v4861 = vld [vmem:[#allocation6 + $0x238] sm:$0xff]
        %v4862 = vld [vmem:[#allocation6 + $0x240] sm:$0xff]
        %v4863 = vld [vmem:[#allocation6 + $0x248] sm:$0xff]
        %v4864 = vld [vmem:[#allocation6 + $0x250] sm:$0xff]
        %v4865 = vld [vmem:[#allocation6 + $0x258] sm:$0xff]
        %v4866 = vld [vmem:[#allocation6 + $0x260] sm:$0xff]
        %v4867 = vld [vmem:[#allocation6 + $0x268] sm:$0xff]
        %v4868 = vld [vmem:[#allocation6 + $0x270] sm:$0xff]
        %v4869 = vld [vmem:[#allocation6 + $0x278] sm:$0xff]
        %v4870 = vld [vmem:[#allocation6 + $0x280] sm:$0xff]
        %v4871 = vld [vmem:[#allocation6 + $0x288] sm:$0xff]
        %v4872 = vld [vmem:[#allocation6 + $0x290] sm:$0xff]
        %v4873 = vld [vmem:[#allocation6 + $0x298] sm:$0xff]
        %v4874 = vld [vmem:[#allocation6 + $0x2a0] sm:$0xff]
        %v4875 = vld [vmem:[#allocation6 + $0x2a8] sm:$0xff]
        %v4876 = vld [vmem:[#allocation6 + $0x2b0] sm:$0xff]
        %v4877 = vld [vmem:[#allocation6 + $0x2b8] sm:$0xff]
        %v4878 = vld [vmem:[#allocation6 + $0x2c0] sm:$0xff]
        %v4879 = vld [vmem:[#allocation6 + $0x2c8] sm:$0xff]
        %v4880 = vld [vmem:[#allocation6 + $0x2d0] sm:$0xff]
        %v4881 = vld [vmem:[#allocation6 + $0x2d8] sm:$0xff]
        %v4882 = vld [vmem:[#allocation6 + $0x2e0] sm:$0xff]
        %v4883 = vld [vmem:[#allocation6 + $0x2e8] sm:$0xff]
        %v4884 = vld [vmem:[#allocation6 + $0x2f0] sm:$0xff]
        %v4885 = vld [vmem:[#allocation6 + $0x2f8] sm:$0xff]
        %4886 = vmatprep.subr.mxu0 %v4791
        %4887 = vmatpush1.msra.mxu0 %v4790
        %4888 = vmatprep.subr.mxu0 %v4797
        %4889 = vmatpush1.msra.mxu0 %v4796
        %4890 = vmatprep.subr.mxu0 %v4803
        %4891 = vmatpush1.msra.mxu0 %v4802
        %4892 = vmatprep.subr.mxu0 %v4809
        %4893 = vmatpush1.msra.mxu0 %v4808
        %4894 = vmatprep.subr.mxu0 %v4815
        %4895 = vmatpush1.msra.mxu0 %v4814
        %4896 = vmatprep.subr.mxu0 %v4821
        %4897 = vmatpush1.msra.mxu0 %v4820
        %4898 = vmatprep.subr.mxu0 %v4827
        %4899 = vmatpush1.msra.mxu0 %v4826
        %4900 = vmatprep.subr.mxu0 %v4833
        %4901 = vmatpush1.msra.mxu0 %v4832
        %4902 = vmatprep.subr.mxu0 %v4839
        %4903 = vmatpush1.msra.mxu0 %v4838
        %4904 = vmatprep.subr.mxu0 %v4845
        %4905 = vmatpush1.msra.mxu0 %v4844
        %4906 = vmatprep.subr.mxu0 %v4851
        %4907 = vmatpush1.msra.mxu0 %v4850
        %4908 = vmatprep.subr.mxu0 %v4857
        %4909 = vmatpush1.msra.mxu0 %v4856
        %4910 = vmatprep.subr.mxu0 %v4863
        %4911 = vmatpush1.msra.mxu0 %v4862
        %4912 = vmatprep.subr.mxu0 %v4869
        %4913 = vmatpush1.msra.mxu0 %v4868
        %4914 = vmatprep.subr.mxu0 %v4875
        %4915 = vmatpush1.msra.mxu0 %v4874
        %4916 = vmatprep.subr.mxu0 %v4881
        %4917 = vmatpush1.msra.mxu0 %v4880
        %4918 = vmatprep.subr.mxu0 0.0
        %4919 = vmatpush1.msra.mxu0 0.0
        %4920 = vmatprep.subr.mxu0 0.0
        %4921 = vmatpush1.msra.mxu0 0.0
        %4922 = vmatprep.subr.mxu0 0.0
        %4923 = vmatpush1.msra.mxu0 0.0
        %4924 = vmatprep.subr.mxu0 0.0
        %4925 = vmatpush1.msra.mxu0 0.0
        %4926 = vmatprep.subr.mxu0 0.0
        %4927 = vmatpush1.msra.mxu0 0.0
        %4928 = vmatprep.subr.mxu0 0.0
        %4929 = vmatpush1.msra.mxu0 0.0
        %4930 = vmatprep.subr.mxu0 0.0
        %4931 = vmatpush1.msra.mxu0 0.0
        %4932 = vmatprep.subr.mxu0 0.0
        %4933 = vmatpush1.msra.mxu0 0.0
        %4934 = vmatprep.subr.mxu0 0.0
        %4935 = vmatpush1.msra.mxu0 0.0
        %4936 = vmatprep.subr.mxu0 0.0
        %4937 = vmatpush1.msra.mxu0 0.0
        %4938 = vmatprep.subr.mxu0 0.0
        %4939 = vmatpush1.msra.mxu0 0.0
        %4940 = vmatprep.subr.mxu0 0.0
        %4941 = vmatpush1.msra.mxu0 0.0
        %4942 = vmatprep.subr.mxu0 0.0
        %4943 = vmatpush1.msra.mxu0 0.0
        %4944 = vmatprep.subr.mxu0 0.0
        %4945 = vmatpush1.msra.mxu0 0.0
        %4946 = vmatprep.subr.mxu0 0.0
        %4947 = vmatpush1.msra.mxu0 0.0
        %4948 = vmatprep.subr.mxu0 0.0
        %4949 = vmatpush1.msra.mxu0 0.0
        %4950 = vmatprep.mubr.f32.mxu0 0.0
        %4951 = vmatmul.mubr.f32.gmra.mrb[0].mxu0 %v336
        %v4952 = vpop.f32.mrb[0].mxu0
        %v4953 = vadd.f32 0.0, %v4952
        %v4954 = vpop.f32.mrb[0].mxu0
        %v4955 = vadd.f32 0.0, %v4954
        %4956 = vmatprep.mubr.f32.mxu0 0.0
        %4957 = vmatmul.mubr.f32.gmra.mrb[0].mxu0 %v337
        %v4958 = vpop.f32.mrb[0].mxu0
        %v4959 = vadd.f32 0.0, %v4958
        %v4960 = vpop.f32.mrb[0].mxu0
        %v4961 = vadd.f32 0.0, %v4960
        %4962 = vmatprep.mubr.f32.mxu0 0.0
        %4963 = vmatmul.mubr.f32.gmra.mrb[0].mxu0 %v338
        %v4964 = vpop.f32.mrb[0].mxu0
        %v4965 = vadd.f32 0.0, %v4964
        %v4966 = vpop.f32.mrb[0].mxu0
        %v4967 = vadd.f32 0.0, %v4966
        %4968 = vmatprep.mubr.f32.mxu0 0.0
        %4969 = vmatmul.mubr.f32.gmra.mrb[0].mxu0 %v339
        %v4970 = vpop.f32.mrb[0].mxu0
        %v4971 = vadd.f32 0.0, %v4970
        %v4972 = vpop.f32.mrb[0].mxu0
        %v4973 = vadd.f32 0.0, %v4972
        %4974 = vdwg.mxu0
        %4975 = vmatprep.subr.mxu0 %v4793
        %4976 = vmatpush1.msra.mxu0 %v4792
        %4977 = vmatprep.subr.mxu0 %v4799
        %4978 = vmatpush1.msra.mxu0 %v4798
        %4979 = vmatprep.subr.mxu0 %v4805
        %4980 = vmatpush1.msra.mxu0 %v4804
        %4981 = vmatprep.subr.mxu0 %v4811
        %4982 = vmatpush1.msra.mxu0 %v4810
        %4983 = vmatprep.subr.mxu0 %v4817
        %4984 = vmatpush1.msra.mxu0 %v4816
        %4985 = vmatprep.subr.mxu0 %v4823
        %4986 = vmatpush1.msra.mxu0 %v4822
        %4987 = vmatprep.subr.mxu0 %v4829
        %4988 = vmatpush1.msra.mxu0 %v4828
        %4989 = vmatprep.subr.mxu0 %v4835
        %4990 = vmatpush1.msra.mxu0 %v4834
        %4991 = vmatprep.subr.mxu0 %v4841
        %4992 = vmatpush1.msra.mxu0 %v4840
        %4993 = vmatprep.subr.mxu0 %v4847
        %4994 = vmatpush1.msra.mxu0 %v4846
        %4995 = vmatprep.subr.mxu0 %v4853
        %4996 = vmatpush1.msra.mxu0 %v4852
        %4997 = vmatprep.subr.mxu0 %v4859
        %4998 = vmatpush1.msra.mxu0 %v4858
        %4999 = vmatprep.subr.mxu0 %v4865
        %5000 = vmatpush1.msra.mxu0 %v4864
        %5001 = vmatprep.subr.mxu0 %v4871
        %5002 = vmatpush1.msra.mxu0 %v4870
        %5003 = vmatprep.subr.mxu0 %v4877
        %5004 = vmatpush1.msra.mxu0 %v4876
        %5005 = vmatprep.subr.mxu0 %v4883
        %5006 = vmatpush1.msra.mxu0 %v4882
        %5007 = vmatprep.subr.mxu0 0.0
        %5008 = vmatpush1.msra.mxu0 0.0
        %5009 = vmatprep.subr.mxu0 0.0
        %5010 = vmatpush1.msra.mxu0 0.0
        %5011 = vmatprep.subr.mxu0 0.0
        %5012 = vmatpush1.msra.mxu0 0.0
        %5013 = vmatprep.subr.mxu0 0.0
        %5014 = vmatpush1.msra.mxu0 0.0
        %5015 = vmatprep.subr.mxu0 0.0
        %5016 = vmatpush1.msra.mxu0 0.0
        %5017 = vmatprep.subr.mxu0 0.0
        %5018 = vmatpush1.msra.mxu0 0.0
        %5019 = vmatprep.subr.mxu0 0.0
        %5020 = vmatpush1.msra.mxu0 0.0
        %5021 = vmatprep.subr.mxu0 0.0
        %5022 = vmatpush1.msra.mxu0 0.0
        %5023 = vmatprep.subr.mxu0 0.0
        %5024 = vmatpush1.msra.mxu0 0.0
        %5025 = vmatprep.subr.mxu0 0.0
        %5026 = vmatpush1.msra.mxu0 0.0
        %5027 = vmatprep.subr.mxu0 0.0
        %5028 = vmatpush1.msra.mxu0 0.0
        %5029 = vmatprep.subr.mxu0 0.0
        %5030 = vmatpush1.msra.mxu0 0.0
        %5031 = vmatprep.subr.mxu0 0.0
        %5032 = vmatpush1.msra.mxu0 0.0
        %5033 = vmatprep.subr.mxu0 0.0
        %5034 = vmatpush1.msra.mxu0 0.0
        %5035 = vmatprep.subr.mxu0 0.0
        %5036 = vmatpush1.msra.mxu0 0.0
        %5037 = vmatprep.subr.mxu0 0.0
        %5038 = vmatpush1.msra.mxu0 0.0
        %5039 = vmatprep.mubr.f32.mxu0 0.0
        %5040 = vmatmul.mubr.f32.gmra.mrb[0].mxu0 %v336
        %v5041 = vpop.f32.mrb[0].mxu0
        %v5042 = vadd.f32 0.0, %v5041
        %v5043 = vpop.f32.mrb[0].mxu0
        %v5044 = vadd.f32 0.0, %v5043
        %5045 = vmatprep.mubr.f32.mxu0 0.0
        %5046 = vmatmul.mubr.f32.gmra.mrb[0].mxu0 %v337
        %v5047 = vpop.f32.mrb[0].mxu0
        %v5048 = vadd.f32 0.0, %v5047
        %v5049 = vpop.f32.mrb[0].mxu0
        %v5050 = vadd.f32 0.0, %v5049
        %5051 = vmatprep.mubr.f32.mxu0 0.0
        %5052 = vmatmul.mubr.f32.gmra.mrb[0].mxu0 %v338
        %v5053 = vpop.f32.mrb[0].mxu0
        %v5054 = vadd.f32 0.0, %v5053
        %v5055 = vpop.f32.mrb[0].mxu0
        %v5056 = vadd.f32 0.0, %v5055
        %5057 = vmatprep.mubr.f32.mxu0 0.0
        %5058 = vmatmul.mubr.f32.gmra.mrb[0].mxu0 %v339
        %v5059 = vpop.f32.mrb[0].mxu0
        %v5060 = vadd.f32 0.0, %v5059
        %v5061 = vpop.f32.mrb[0].mxu0
        %v5062 = vadd.f32 0.0, %v5061
        %5063 = vdwg.mxu0
        %5064 = vmatprep.subr.mxu0 %v4795
        %5065 = vmatpush1.msra.mxu0 %v4794
        %5066 = vmatprep.subr.mxu0 %v4801
        %5067 = vmatpush1.msra.mxu0 %v4800
        %5068 = vmatprep.subr.mxu0 %v4807
        %5069 = vmatpush1.msra.mxu0 %v4806
        %5070 = vmatprep.subr.mxu0 %v4813
        %5071 = vmatpush1.msra.mxu0 %v4812
        %5072 = vmatprep.subr.mxu0 %v4819
        %5073 = vmatpush1.msra.mxu0 %v4818
        %5074 = vmatprep.subr.mxu0 %v4825
        %5075 = vmatpush1.msra.mxu0 %v4824
        %5076 = vmatprep.subr.mxu0 %v4831
        %5077 = vmatpush1.msra.mxu0 %v4830
        %5078 = vmatprep.subr.mxu0 %v4837
        %5079 = vmatpush1.msra.mxu0 %v4836
        %5080 = vmatprep.subr.mxu0 %v4843
        %5081 = vmatpush1.msra.mxu0 %v4842
        %5082 = vmatprep.subr.mxu0 %v4849
        %5083 = vmatpush1.msra.mxu0 %v4848
        %5084 = vmatprep.subr.mxu0 %v4855
        %5085 = vmatpush1.msra.mxu0 %v4854
        %5086 = vmatprep.subr.mxu0 %v4861
        %5087 = vmatpush1.msra.mxu0 %v4860
        %5088 = vmatprep.subr.mxu0 %v4867
        %5089 = vmatpush1.msra.mxu0 %v4866
        %5090 = vmatprep.subr.mxu0 %v4873
        %5091 = vmatpush1.msra.mxu0 %v4872
        %5092 = vmatprep.subr.mxu0 %v4879
        %5093 = vmatpush1.msra.mxu0 %v4878
        %5094 = vmatprep.subr.mxu0 %v4885
        %5095 = vmatpush1.msra.mxu0 %v4884
        %5096 = vmatprep.subr.mxu0 0.0
        %5097 = vmatpush1.msra.mxu0 0.0
        %5098 = vmatprep.subr.mxu0 0.0
        %5099 = vmatpush1.msra.mxu0 0.0
        %5100 = vmatprep.subr.mxu0 0.0
        %5101 = vmatpush1.msra.mxu0 0.0
        %5102 = vmatprep.subr.mxu0 0.0
        %5103 = vmatpush1.msra.mxu0 0.0
        %5104 = vmatprep.subr.mxu0 0.0
        %5105 = vmatpush1.msra.mxu0 0.0
        %5106 = vmatprep.subr.mxu0 0.0
        %5107 = vmatpush1.msra.mxu0 0.0
        %5108 = vmatprep.subr.mxu0 0.0
        %5109 = vmatpush1.msra.mxu0 0.0
        %5110 = vmatprep.subr.mxu0 0.0
        %5111 = vmatpush1.msra.mxu0 0.0
        %5112 = vmatprep.subr.mxu0 0.0
        %5113 = vmatpush1.msra.mxu0 0.0
        %5114 = vmatprep.subr.mxu0 0.0
        %5115 = vmatpush1.msra.mxu0 0.0
        %5116 = vmatprep.subr.mxu0 0.0
        %5117 = vmatpush1.msra.mxu0 0.0
        %5118 = vmatprep.subr.mxu0 0.0
        %5119 = vmatpush1.msra.mxu0 0.0
        %5120 = vmatprep.subr.mxu0 0.0
        %5121 = vmatpush1.msra.mxu0 0.0
        %5122 = vmatprep.subr.mxu0 0.0
        %5123 = vmatpush1.msra.mxu0 0.0
        %5124 = vmatprep.subr.mxu0 0.0
        %5125 = vmatpush1.msra.mxu0 0.0
        %5126 = vmatprep.subr.mxu0 0.0
        %5127 = vmatpush1.msra.mxu0 0.0
        %5128 = vmatprep.mubr.f32.mxu0 0.0
        %5129 = vmatmul.mubr.f32.gmra.mrb[0].mxu0 %v336
        %v5130 = vpop.f32.mrb[0].mxu0
        %v5131 = vadd.f32 0.0, %v5130
        %v5132 = vpop.f32.mrb[0].mxu0
        %v5133 = vadd.f32 0.0, %v5132
        %5134 = vmatprep.mubr.f32.mxu0 0.0
        %5135 = vmatmul.mubr.f32.gmra.mrb[0].mxu0 %v337
        %v5136 = vpop.f32.mrb[0].mxu0
        %v5137 = vadd.f32 0.0, %v5136
        %v5138 = vpop.f32.mrb[0].mxu0
        %v5139 = vadd.f32 0.0, %v5138
        %5140 = vmatprep.mubr.f32.mxu0 0.0
        %5141 = vmatmul.mubr.f32.gmra.mrb[0].mxu0 %v338
        %v5142 = vpop.f32.mrb[0].mxu0
        %v5143 = vadd.f32 0.0, %v5142
        %v5144 = vpop.f32.mrb[0].mxu0
        %v5145 = vadd.f32 0.0, %v5144
        %5146 = vmatprep.mubr.f32.mxu0 0.0
        %5147 = vmatmul.mubr.f32.gmra.mrb[0].mxu0 %v339
        %v5148 = vpop.f32.mrb[0].mxu0
        %v5149 = vadd.f32 0.0, %v5148
        %v5150 = vpop.f32.mrb[0].mxu0
        %v5151 = vadd.f32 0.0, %v5150
        %5152 = vdwg.mxu0
        %s5153 = smul.u32 %s4029, 2
        %s5154 = sld [smem:[#allocation8 + %s5153]]
        %s5155 = scvt.s32.f32 %s5154
        %v5156 = vstv %s5155
        %v5157 = vmul.f32 %v340, %v5156
        %v5158 = vmul.f32 %v341, %v5156
        %v5159 = vadd.f32 %v5157, 0.0
        %v5160 = vadd.f32 %v5158, 0.0
        %s5161 = sadd.s32 %s5153, 1
        %s5162 = sld [smem:[#allocation8 + %s5161]]
        %s5163 = scvt.s32.f32 %s5162
        %v5164 = vstv %s5163
        %v5165 = vmul.f32 %v340, %v5164
        %v5166 = vmul.f32 %v341, %v5164
        %v5169 = vrot.slane %v5165, 7
        %v5170 = vrot.slane %v5169, 2
        %v5171 = vrot.slane %v5166, 7
        %v5172 = vrot.slane %v5171, 2
        %v5175 = vadd.f32 %v5159, %v5170
        %v5176 = vadd.f32 %v5160, %v5172
        %v5177 = vxor.u32 %v4953, 2147483648
        %v5178 = vxor.u32 %v4955, 2147483648
        %v5179 = vxor.u32 %v5042, 2147483648
        %v5180 = vxor.u32 %v5044, 2147483648
        %v5181 = vxor.u32 %v5131, 2147483648
        %v5182 = vxor.u32 %v5133, 2147483648
        %v5183 = vxor.u32 %v4959, 2147483648
        %v5184 = vxor.u32 %v4961, 2147483648
        %v5185 = vxor.u32 %v5048, 2147483648
        %v5186 = vxor.u32 %v5050, 2147483648
        %v5187 = vxor.u32 %v5137, 2147483648
        %v5188 = vxor.u32 %v5139, 2147483648
        %v5189 = vmul.f32 %v5177, 1.442695
        %v5190 = vpow.pop %v5189
        %v5191 = vmul.f32 %v5178, 1.442695
        %v5192 = vpow.pop %v5191
        %v5193 = vmul.f32 %v5179, 1.442695
        %v5194 = vpow.pop %v5193
        %v5195 = vmul.f32 %v5180, 1.442695
        %v5196 = vpow.pop %v5195
        %v5197 = vmul.f32 %v5181, 1.442695
        %v5198 = vpow.pop %v5197
        %v5199 = vmul.f32 %v5182, 1.442695
        %v5200 = vpow.pop %v5199
        %v5201 = vmul.f32 %v5183, 1.442695
        %v5202 = vpow.pop %v5201
        %v5203 = vmul.f32 %v5184, 1.442695
        %v5204 = vpow.pop %v5203
        %v5205 = vmul.f32 %v5185, 1.442695
        %v5206 = vpow.pop %v5205
        %v5207 = vmul.f32 %v5186, 1.442695
        %v5208 = vpow.pop %v5207
        %v5209 = vmul.f32 %v5187, 1.442695
        %v5210 = vpow.pop %v5209
        %v5211 = vmul.f32 %v5188, 1.442695
        %v5212 = vpow.pop %v5211
        %v5213 = vadd.f32 %v5190, 1.0
        %v5214 = vadd.f32 %v5192, 1.0
        %v5215 = vadd.f32 %v5194, 1.0
        %v5216 = vadd.f32 %v5196, 1.0
        %v5217 = vadd.f32 %v5198, 1.0
        %v5218 = vadd.f32 %v5200, 1.0
        %v5219 = vadd.f32 %v5202, 1.0
        %v5220 = vadd.f32 %v5204, 1.0
        %v5221 = vadd.f32 %v5206, 1.0
        %v5222 = vadd.f32 %v5208, 1.0
        %v5223 = vadd.f32 %v5210, 1.0
        %v5224 = vadd.f32 %v5212, 1.0
        %v5225 = vrcp.pop %v5213
        %v5226 = vmul.f32 1.0, %v5225
        %v5227 = vrcp.pop %v5214
        %v5228 = vmul.f32 1.0, %v5227
        %v5229 = vrcp.pop %v5215
        %v5230 = vmul.f32 1.0, %v5229
        %v5231 = vrcp.pop %v5216
        %v5232 = vmul.f32 1.0, %v5231
        %v5233 = vrcp.pop %v5217
        %v5234 = vmul.f32 1.0, %v5233
        %v5235 = vrcp.pop %v5218
        %v5236 = vmul.f32 1.0, %v5235
        %v5237 = vrcp.pop %v5219
        %v5238 = vmul.f32 1.0, %v5237
        %v5239 = vrcp.pop %v5220
        %v5240 = vmul.f32 1.0, %v5239
        %v5241 = vrcp.pop %v5221
        %v5242 = vmul.f32 1.0, %v5241
        %v5243 = vrcp.pop %v5222
        %v5244 = vmul.f32 1.0, %v5243
        %v5245 = vrcp.pop %v5223
        %v5246 = vmul.f32 1.0, %v5245
        %v5247 = vrcp.pop %v5224
        %v5248 = vmul.f32 1.0, %v5247
        %v5249 = vtanh.pop %v4959
        %v5250 = vtanh.pop %v4961
        %v5251 = vtanh.pop %v5048
        %v5252 = vtanh.pop %v5050
        %v5253 = vtanh.pop %v5137
        %v5254 = vtanh.pop %v5139
        %v5255 = vld [vmem:[#allocation3] sm:$0xff]
        %v5256 = vld [vmem:[#allocation3 + $0x8] sm:$0xff]
        %v5257 = vld [vmem:[#allocation3 + $0x10] sm:$0xff]
        %v5261 = vcombine.low %v5255, %v5255
        %v5262 = vcombine.low %v5256, %v5256
        %v5263 = vcombine.low %v5257, %v5257
        %v5267 = vmul.f32 %v5226, %v5261
        %v5268 = vmul.f32 %v5228, %v5255
        %v5269 = vmul.f32 %v5230, %v5262
        %v5270 = vmul.f32 %v5232, %v5256
        %v5271 = vmul.f32 %v5234, %v5263
        %v5272 = vmul.f32 %v5236, %v5257
        %v5279 = vrot.slane %v5249, 4
        %v5280 = vrot.slane %v5250, 4
        %v5281 = vrot.slane %v5251, 4
        %v5282 = vrot.slane %v5252, 4
        %v5283 = vrot.slane %v5253, 4
        %v5284 = vrot.slane %v5254, 4
        %v5291 = vmul.f32 %v5226, %v5279
        %v5292 = vmul.f32 %v5228, %v5280
        %v5293 = vmul.f32 %v5230, %v5281
        %v5294 = vmul.f32 %v5232, %v5282
        %v5295 = vmul.f32 %v5234, %v5283
        %v5296 = vmul.f32 %v5236, %v5284
        %v5303 = vrot.slane %v5291, 4
        %v5304 = vrot.slane %v5292, 4
        %v5305 = vrot.slane %v5293, 4
        %v5306 = vrot.slane %v5294, 4
        %v5307 = vrot.slane %v5295, 4
        %v5308 = vrot.slane %v5296, 4
        %v5315 = vadd.f32 %v5267, %v5303
        %v5316 = vadd.f32 %v5268, %v5304
        %v5317 = vadd.f32 %v5269, %v5305
        %v5318 = vadd.f32 %v5270, %v5306
        %v5319 = vadd.f32 %v5271, %v5307
        %v5320 = vadd.f32 %v5272, %v5308
        %v5321 = vtanh.pop %v5315
        %v5322 = vtanh.pop %v5316
        %v5323 = vtanh.pop %v5317
        %v5324 = vtanh.pop %v5318
        %v5325 = vtanh.pop %v5319
        %v5326 = vtanh.pop %v5320
        %v5333 = vrot.slane %v5321, 4
        %v5334 = vrot.slane %v5322, 4
        %v5335 = vrot.slane %v5323, 4
        %v5336 = vrot.slane %v5324, 4
        %v5337 = vrot.slane %v5325, 4
        %v5338 = vrot.slane %v5326, 4
        %v5345 = vmul.f32 %v5238, %v5333
        %v5346 = vmul.f32 %v5240, %v5334
        %v5347 = vmul.f32 %v5242, %v5335
        %v5348 = vmul.f32 %v5244, %v5336
        %v5349 = vmul.f32 %v5246, %v5337
        %v5350 = vmul.f32 %v5248, %v5338
        %v5353 = vlaneseq
        %v5354 = vshrl.u32 %v5353, 7
        %v5355 = vsub.s32 0, %v5354
        %v5356 = vrot.slane %v5175, %v5355
        %v5357 = vlaneseq
        %v5358 = vshrl.u32 %v5357, 7
        %v5359 = vsub.s32 2, %v5358
        %v5360 = vrot.slane %v5175, %v5359
        %v5361 = vlaneseq
        %v5362 = vshrl.u32 %v5361, 7
        %v5363 = vsub.s32 4, %v5362
        %v5364 = vrot.slane %v5175, %v5363
        %v5365 = vlaneseq
        %v5366 = vshrl.u32 %v5365, 7
        %v5367 = vsub.s32 6, %v5366
        %v5368 = vrot.slane %v5175, %v5367
        %v5369 = vlaneseq
        %v5370 = vshrl.u32 %v5369, 7
        %v5371 = vsub.s32 0, %v5370
        %v5372 = vrot.slane %v5176, %v5371
        %v5373 = vlaneseq
        %v5374 = vshrl.u32 %v5373, 7
        %v5375 = vsub.s32 2, %v5374
        %v5376 = vrot.slane %v5176, %v5375
        %v5383 = vlaneseq
        %v5384 = vshrl.u32 %v5383, 7
        %v5385 = vsub.s32 0, %v5384
        %v5386 = vrot.slane %v5356, %v5385
        %v5387 = vlaneseq
        %v5388 = vshrl.u32 %v5387, 7
        %v5389 = vsub.s32 0, %v5388
        %v5390 = vrot.slane %v5360, %v5389
        %v5391 = vlaneseq
        %v5392 = vshrl.u32 %v5391, 7
        %v5393 = vsub.s32 0, %v5392
        %v5394 = vrot.slane %v5364, %v5393
        %v5395 = vlaneseq
        %v5396 = vshrl.u32 %v5395, 7
        %v5397 = vsub.s32 0, %v5396
        %v5398 = vrot.slane %v5368, %v5397
        %v5399 = vlaneseq
        %v5400 = vshrl.u32 %v5399, 7
        %v5401 = vsub.s32 0, %v5400
        %v5402 = vrot.slane %v5372, %v5401
        %v5403 = vlaneseq
        %v5404 = vshrl.u32 %v5403, 7
        %v5405 = vsub.s32 0, %v5404
        %v5406 = vrot.slane %v5376, %v5405
        %v5407 = vmul.f32 %v5386, %v5315
        %v5408 = vmul.f32 %v5390, %v5316
        %v5409 = vmul.f32 %v5394, %v5317
        %v5410 = vmul.f32 %v5398, %v5318
        %v5411 = vmul.f32 %v5402, %v5319
        %v5412 = vmul.f32 %v5406, %v5320
        %v5413 = vsub.f32 1.0, %v5175
        %v5414 = vsub.f32 1.0, %v5176
        %v5417 = vlaneseq
        %v5418 = vshrl.u32 %v5417, 7
        %v5419 = vsub.s32 0, %v5418
        %v5420 = vrot.slane %v5413, %v5419
        %v5421 = vlaneseq
        %v5422 = vshrl.u32 %v5421, 7
        %v5423 = vsub.s32 2, %v5422
        %v5424 = vrot.slane %v5413, %v5423
        %v5425 = vlaneseq
        %v5426 = vshrl.u32 %v5425, 7
        %v5427 = vsub.s32 4, %v5426
        %v5428 = vrot.slane %v5413, %v5427
        %v5429 = vlaneseq
        %v5430 = vshrl.u32 %v5429, 7
        %v5431 = vsub.s32 6, %v5430
        %v5432 = vrot.slane %v5413, %v5431
        %v5433 = vlaneseq
        %v5434 = vshrl.u32 %v5433, 7
        %v5435 = vsub.s32 0, %v5434
        %v5436 = vrot.slane %v5414, %v5435
        %v5437 = vlaneseq
        %v5438 = vshrl.u32 %v5437, 7
        %v5439 = vsub.s32 2, %v5438
        %v5440 = vrot.slane %v5414, %v5439
        %v5447 = vlaneseq
        %v5448 = vshrl.u32 %v5447, 7
        %v5449 = vsub.s32 0, %v5448
        %v5450 = vrot.slane %v5420, %v5449
        %v5451 = vlaneseq
        %v5452 = vshrl.u32 %v5451, 7
        %v5453 = vsub.s32 0, %v5452
        %v5454 = vrot.slane %v5424, %v5453
        %v5455 = vlaneseq
        %v5456 = vshrl.u32 %v5455, 7
        %v5457 = vsub.s32 0, %v5456
        %v5458 = vrot.slane %v5428, %v5457
        %v5459 = vlaneseq
        %v5460 = vshrl.u32 %v5459, 7
        %v5461 = vsub.s32 0, %v5460
        %v5462 = vrot.slane %v5432, %v5461
        %v5463 = vlaneseq
        %v5464 = vshrl.u32 %v5463, 7
        %v5465 = vsub.s32 0, %v5464
        %v5466 = vrot.slane %v5436, %v5465
        %v5467 = vlaneseq
        %v5468 = vshrl.u32 %v5467, 7
        %v5469 = vsub.s32 0, %v5468
        %v5470 = vrot.slane %v5440, %v5469
        %v5471 = vcombine.high %v5255, %v5255
        %v5472 = vcombine.high %v5256, %v5256
        %v5473 = vcombine.high %v5257, %v5257
        %v5477 = vmul.f32 %v5450, %v5255
        %v5478 = vmul.f32 %v5454, %v5471
        %v5479 = vmul.f32 %v5458, %v5256
        %v5480 = vmul.f32 %v5462, %v5472
        %v5481 = vmul.f32 %v5466, %v5257
        %v5482 = vmul.f32 %v5470, %v5473
        %v5489 = vrot.slane %v5477, 4
        %v5490 = vrot.slane %v5478, 4
        %v5491 = vrot.slane %v5479, 4
        %v5492 = vrot.slane %v5480, 4
        %v5493 = vrot.slane %v5481, 4
        %v5494 = vrot.slane %v5482, 4
        %v5501 = vadd.f32 %v5407, %v5489
        %v5502 = vadd.f32 %v5408, %v5490
        %v5503 = vadd.f32 %v5409, %v5491
        %v5504 = vadd.f32 %v5410, %v5492
        %v5505 = vadd.f32 %v5411, %v5493
        %v5506 = vadd.f32 %v5412, %v5494
        %v5513 = vcombine.high %v5501, %v5502
        %v5514 = vcombine.high %v5503, %v5504
        %v5515 = vcombine.high %v5505, %v5506
        %5519 = vst [vmem:[#allocation3] sm:$0xff] %v5513
        %5520 = vst [vmem:[#allocation3 + $0x8] sm:$0xff] %v5514
        %5521 = vst.msk [vmem:[#allocation3 + $0x10] sm:$0xff] %vm1843, %v5515
        %v5522 = vmul.f32 %v5386, %v5345
        %v5523 = vmul.f32 %v5390, %v5346
        %v5524 = vmul.f32 %v5394, %v5347
        %v5525 = vmul.f32 %v5398, %v5348
        %v5526 = vmul.f32 %v5402, %v5349
        %v5527 = vmul.f32 %v5406, %v5350
        %5528 = vrot.lane.b32.xlu0 %v4305, 109
        %v5529 = vpop.permute.xlu0 %5528
        %5530 = vrot.lane.b32.xlu0 %v4306, 109
        %v5531 = vpop.permute.xlu0 %5530
        %5532 = vrot.lane.b32.xlu0 %v4307, 109
        %v5533 = vpop.permute.xlu0 %5532
        %v5534 = vsel %vm473, %v4398, %v5529
        %v5535 = vsel %vm473, %v5529, %v4402
        %v5536 = vsel %vm473, %v4402, %v5531
        %v5537 = vsel %vm473, %v5531, %v4406
        %v5538 = vsel %vm473, %v4406, %v5533
        %v5545 = vmul.f32 %v5450, %v5534
        %v5546 = vmul.f32 %v5454, %v5535
        %v5547 = vmul.f32 %v5458, %v5536
        %v5548 = vmul.f32 %v5462, %v5537
        %v5549 = vmul.f32 %v5466, %v5538
        %v5550 = vmul.f32 %v5470, %v5533
        %v5551 = vadd.f32 %v5522, %v5545
        %v5552 = vadd.f32 %v5523, %v5546
        %v5553 = vadd.f32 %v5524, %v5547
        %v5554 = vadd.f32 %v5525, %v5548
        %v5555 = vadd.f32 %v5526, %v5549
        %v5556 = vadd.f32 %v5527, %v5550
        %v5563 = vcombine.low %v5551, %v5552
        %v5564 = vcombine.low %v5553, %v5554
        %v5565 = vcombine.low %v5555, %v5556
        %5566 = vrot.lane.b32.xlu0 %v5563, 19
        %v5567 = vpop.permute.xlu0 %5566
        %5568 = vrot.lane.b32.xlu0 %v5564, 19
        %v5569 = vpop.permute.xlu0 %5568
        %5570 = vrot.lane.b32.xlu0 %v5565, 19
        %v5571 = vpop.permute.xlu0 %5570
        %v5572 = vrot.slane %v5567, 4
        %v5573 = vrot.slane %v5569, 4
        %v5574 = vrot.slane %v5571, 4
        %v5575 = vsel %vm1898, %v5572, %v5567
        %v5576 = vsel %vm1842, %v5572, %v5573
        %v5577 = vsel %vm1898, %v5576, %v5569
        %v5578 = vsel %vm1842, %v5573, %v5574
        %v5579 = vsel %vm1898, %v5578, %v5571
        %5583 = vst.msk [vmem:[#allocation2] sm:$0xff] %vm1909, %v5575
        %5584 = vst [vmem:[#allocation2 + $0x8] sm:$0xff] %v5577
        %5585 = vst.msk [vmem:[#allocation2 + $0x10] sm:$0xff] %vm1913, %v5579
        %v5586 = vxor.u32 %v4965, 2147483648
        %v5587 = vxor.u32 %v4967, 2147483648
        %v5588 = vxor.u32 %v5054, 2147483648
        %v5589 = vxor.u32 %v5056, 2147483648
        %v5590 = vxor.u32 %v5143, 2147483648
        %v5591 = vxor.u32 %v5145, 2147483648
        %v5592 = vxor.u32 %v4971, 2147483648
        %v5593 = vxor.u32 %v4973, 2147483648
        %v5594 = vxor.u32 %v5060, 2147483648
        %v5595 = vxor.u32 %v5062, 2147483648
        %v5596 = vxor.u32 %v5149, 2147483648
        %v5597 = vxor.u32 %v5151, 2147483648
        %v5598 = vmul.f32 %v5586, 1.442695
        %v5599 = vpow.pop %v5598
        %v5600 = vmul.f32 %v5587, 1.442695
        %v5601 = vpow.pop %v5600
        %v5602 = vmul.f32 %v5588, 1.442695
        %v5603 = vpow.pop %v5602
        %v5604 = vmul.f32 %v5589, 1.442695
        %v5605 = vpow.pop %v5604
        %v5606 = vmul.f32 %v5590, 1.442695
        %v5607 = vpow.pop %v5606
        %v5608 = vmul.f32 %v5591, 1.442695
        %v5609 = vpow.pop %v5608
        %v5610 = vmul.f32 %v5592, 1.442695
        %v5611 = vpow.pop %v5610
        %v5612 = vmul.f32 %v5593, 1.442695
        %v5613 = vpow.pop %v5612
        %v5614 = vmul.f32 %v5594, 1.442695
        %v5615 = vpow.pop %v5614
        %v5616 = vmul.f32 %v5595, 1.442695
        %v5617 = vpow.pop %v5616
        %v5618 = vmul.f32 %v5596, 1.442695
        %v5619 = vpow.pop %v5618
        %v5620 = vmul.f32 %v5597, 1.442695
        %v5621 = vpow.pop %v5620
        %v5622 = vadd.f32 %v5599, 1.0
        %v5623 = vadd.f32 %v5601, 1.0
        %v5624 = vadd.f32 %v5603, 1.0
        %v5625 = vadd.f32 %v5605, 1.0
        %v5626 = vadd.f32 %v5607, 1.0
        %v5627 = vadd.f32 %v5609, 1.0
        %v5628 = vadd.f32 %v5611, 1.0
        %v5629 = vadd.f32 %v5613, 1.0
        %v5630 = vadd.f32 %v5615, 1.0
        %v5631 = vadd.f32 %v5617, 1.0
        %v5632 = vadd.f32 %v5619, 1.0
        %v5633 = vadd.f32 %v5621, 1.0
        %v5634 = vrcp.pop %v5622
        %v5635 = vmul.f32 1.0, %v5634
        %v5636 = vrcp.pop %v5623
        %v5637 = vmul.f32 1.0, %v5636
        %v5638 = vrcp.pop %v5624
        %v5639 = vmul.f32 1.0, %v5638
        %v5640 = vrcp.pop %v5625
        %v5641 = vmul.f32 1.0, %v5640
        %v5642 = vrcp.pop %v5626
        %v5643 = vmul.f32 1.0, %v5642
        %v5644 = vrcp.pop %v5627
        %v5645 = vmul.f32 1.0, %v5644
        %v5646 = vrcp.pop %v5628
        %v5647 = vmul.f32 1.0, %v5646
        %v5648 = vrcp.pop %v5629
        %v5649 = vmul.f32 1.0, %v5648
        %v5650 = vrcp.pop %v5630
        %v5651 = vmul.f32 1.0, %v5650
        %v5652 = vrcp.pop %v5631
        %v5653 = vmul.f32 1.0, %v5652
        %v5654 = vrcp.pop %v5632
        %v5655 = vmul.f32 1.0, %v5654
        %v5656 = vrcp.pop %v5633
        %v5657 = vmul.f32 1.0, %v5656
        %v5658 = vtanh.pop %v4971
        %v5659 = vtanh.pop %v4973
        %v5660 = vtanh.pop %v5060
        %v5661 = vtanh.pop %v5062
        %v5662 = vtanh.pop %v5149
        %v5663 = vtanh.pop %v5151
        %v5664 = vld [vmem:[#allocation5] sm:$0xff]
        %v5665 = vld [vmem:[#allocation5 + $0x8] sm:$0xff]
        %v5666 = vld [vmem:[#allocation5 + $0x10] sm:$0xff]
        %v5670 = vcombine.low %v5664, %v5664
        %v5671 = vcombine.low %v5665, %v5665
        %v5672 = vcombine.low %v5666, %v5666
        %v5676 = vmul.f32 %v5635, %v5670
        %v5677 = vmul.f32 %v5637, %v5664
        %v5678 = vmul.f32 %v5639, %v5671
        %v5679 = vmul.f32 %v5641, %v5665
        %v5680 = vmul.f32 %v5643, %v5672
        %v5681 = vmul.f32 %v5645, %v5666
        %v5688 = vrot.slane %v5658, 4
        %v5689 = vrot.slane %v5659, 4
        %v5690 = vrot.slane %v5660, 4
        %v5691 = vrot.slane %v5661, 4
        %v5692 = vrot.slane %v5662, 4
        %v5693 = vrot.slane %v5663, 4
        %v5700 = vmul.f32 %v5635, %v5688
        %v5701 = vmul.f32 %v5637, %v5689
        %v5702 = vmul.f32 %v5639, %v5690
        %v5703 = vmul.f32 %v5641, %v5691
        %v5704 = vmul.f32 %v5643, %v5692
        %v5705 = vmul.f32 %v5645, %v5693
        %v5712 = vrot.slane %v5700, 4
        %v5713 = vrot.slane %v5701, 4
        %v5714 = vrot.slane %v5702, 4
        %v5715 = vrot.slane %v5703, 4
        %v5716 = vrot.slane %v5704, 4
        %v5717 = vrot.slane %v5705, 4
        %v5724 = vadd.f32 %v5676, %v5712
        %v5725 = vadd.f32 %v5677, %v5713
        %v5726 = vadd.f32 %v5678, %v5714
        %v5727 = vadd.f32 %v5679, %v5715
        %v5728 = vadd.f32 %v5680, %v5716
        %v5729 = vadd.f32 %v5681, %v5717
        %v5730 = vtanh.pop %v5724
        %v5731 = vtanh.pop %v5725
        %v5732 = vtanh.pop %v5726
        %v5733 = vtanh.pop %v5727
        %v5734 = vtanh.pop %v5728
        %v5735 = vtanh.pop %v5729
        %v5742 = vrot.slane %v5730, 4
        %v5743 = vrot.slane %v5731, 4
        %v5744 = vrot.slane %v5732, 4
        %v5745 = vrot.slane %v5733, 4
        %v5746 = vrot.slane %v5734, 4
        %v5747 = vrot.slane %v5735, 4
        %v5754 = vmul.f32 %v5647, %v5742
        %v5755 = vmul.f32 %v5649, %v5743
        %v5756 = vmul.f32 %v5651, %v5744
        %v5757 = vmul.f32 %v5653, %v5745
        %v5758 = vmul.f32 %v5655, %v5746
        %v5759 = vmul.f32 %v5657, %v5747
        %v5760 = vmul.f32 %v5386, %v5724
        %v5761 = vmul.f32 %v5390, %v5725
        %v5762 = vmul.f32 %v5394, %v5726
        %v5763 = vmul.f32 %v5398, %v5727
        %v5764 = vmul.f32 %v5402, %v5728
        %v5765 = vmul.f32 %v5406, %v5729
        %v5766 = vcombine.high %v5664, %v5664
        %v5767 = vcombine.high %v5665, %v5665
        %v5768 = vcombine.high %v5666, %v5666
        %v5772 = vmul.f32 %v5450, %v5664
        %v5773 = vmul.f32 %v5454, %v5766
        %v5774 = vmul.f32 %v5458, %v5665
        %v5775 = vmul.f32 %v5462, %v5767
        %v5776 = vmul.f32 %v5466, %v5666
        %v5777 = vmul.f32 %v5470, %v5768
        %v5784 = vrot.slane %v5772, 4
        %v5785 = vrot.slane %v5773, 4
        %v5786 = vrot.slane %v5774, 4
        %v5787 = vrot.slane %v5775, 4
        %v5788 = vrot.slane %v5776, 4
        %v5789 = vrot.slane %v5777, 4
        %v5796 = vadd.f32 %v5760, %v5784
        %v5797 = vadd.f32 %v5761, %v5785
        %v5798 = vadd.f32 %v5762, %v5786
        %v5799 = vadd.f32 %v5763, %v5787
        %v5800 = vadd.f32 %v5764, %v5788
        %v5801 = vadd.f32 %v5765, %v5789
        %v5808 = vcombine.high %v5796, %v5797
        %v5809 = vcombine.high %v5798, %v5799
        %v5810 = vcombine.high %v5800, %v5801
        %5814 = vst [vmem:[#allocation5] sm:$0xff] %v5808
        %5815 = vst [vmem:[#allocation5 + $0x8] sm:$0xff] %v5809
        %5816 = vst.msk [vmem:[#allocation5 + $0x10] sm:$0xff] %vm1843, %v5810
        %v5817 = vmul.f32 %v5386, %v5754
        %v5818 = vmul.f32 %v5390, %v5755
        %v5819 = vmul.f32 %v5394, %v5756
        %v5820 = vmul.f32 %v5398, %v5757
        %v5821 = vmul.f32 %v5402, %v5758
        %v5822 = vmul.f32 %v5406, %v5759
        %v5823 = vmul.f32 %v5450, %v4657
        %v5824 = vmul.f32 %v5454, %v4658
        %v5825 = vmul.f32 %v5458, %v4659
        %v5826 = vmul.f32 %v5462, %v4660
        %v5827 = vmul.f32 %v5466, %v4661
        %v5828 = vmul.f32 %v5470, %v4656
        %v5829 = vadd.f32 %v5817, %v5823
        %v5830 = vadd.f32 %v5818, %v5824
        %v5831 = vadd.f32 %v5819, %v5825
        %v5832 = vadd.f32 %v5820, %v5826
        %v5833 = vadd.f32 %v5821, %v5827
        %v5834 = vadd.f32 %v5822, %v5828
        %v5841 = vcombine.low %v5829, %v5830
        %v5842 = vcombine.low %v5831, %v5832
        %v5843 = vcombine.low %v5833, %v5834
        %5844 = vrot.lane.b32.xlu0 %v5841, 19
        %v5845 = vpop.permute.xlu0 %5844
        %5846 = vrot.lane.b32.xlu0 %v5842, 19
        %v5847 = vpop.permute.xlu0 %5846
        %5848 = vrot.lane.b32.xlu0 %v5843, 19
        %v5849 = vpop.permute.xlu0 %5848
        %v5850 = vrot.slane %v5845, 4
        %v5851 = vrot.slane %v5847, 4
        %v5852 = vrot.slane %v5849, 4
        %v5853 = vsel %vm1898, %v5850, %v5845
        %v5854 = vsel %vm1842, %v5850, %v5851
        %v5855 = vsel %vm1898, %v5854, %v5847
        %v5856 = vsel %vm1842, %v5851, %v5852
        %v5857 = vsel %vm1898, %v5856, %v5849
        %5861 = vst.msk [vmem:[#allocation4] sm:$0xff] %vm1909, %v5853
        %5862 = vst [vmem:[#allocation4 + $0x8] sm:$0xff] %v5855
        %5863 = vst.msk [vmem:[#allocation4 + $0x10] sm:$0xff] %vm1913, %v5857
        %s5864 = sadd.s32 %s2193, 3
        %v5865 = vld [vmem:[#allocation2] sm:$0xff]
        %v5866 = vld [vmem:[#allocation2 + $0x8] sm:$0xff]
        %v5867 = vld [vmem:[#allocation2 + $0x10] sm:$0xff]
        %v5868 = vld [vmem:[#allocation4] sm:$0xff]
        %v5869 = vld [vmem:[#allocation4 + $0x8] sm:$0xff]
        %v5870 = vld [vmem:[#allocation4 + $0x10] sm:$0xff]
        %s5871 = scalar_lea.vmem %s184, 72 [#allocation9]
        %v5872 = vld [vmem:[%s5871] sm:$0xff]
        %v5873 = vld [vmem:[%s5871 + $0x8] sm:$0xff]
        %v5874 = vld [vmem:[%s5871 + $0x10] sm:$0xff]
        %v5878 = vcombine.high %v5872, %v5872
        %v5879 = vcombine.high %v5873, %v5873
        %v5880 = vcombine.high %v5874, %v5874
        %5884 = vst [vmem:[#allocation6] sm:$0xf] %v5872
        %5885 = vst [vmem:[#allocation6 + $0x8] sm:$0xf] %v5878
        %5886 = vst [vmem:[#allocation6 + $0x10] sm:$0xf] %v5873
        %5887 = vst [vmem:[#allocation6 + $0x18] sm:$0xf] %v5879
        %5888 = vst [vmem:[#allocation6 + $0x20] sm:$0xf] %v5874
        %5889 = vst.msk [vmem:[#allocation6 + $0x28] sm:$0xf] %vm365, %v5880
        %v5890 = vcombine.low %v5872, %v5872
        %v5891 = vcombine.low %v5873, %v5873
        %v5892 = vcombine.low %v5874, %v5874
        %5893 = vrot.lane.b32.xlu0 %v5890, 127
        %v5894 = vpop.permute.xlu0 %5893
        %5895 = vrot.lane.b32.xlu0 %v5872, 127
        %v5896 = vpop.permute.xlu0 %5895
        %5897 = vrot.lane.b32.xlu0 %v5891, 127
        %v5898 = vpop.permute.xlu0 %5897
        %5899 = vrot.lane.b32.xlu0 %v5873, 127
        %v5900 = vpop.permute.xlu0 %5899
        %5901 = vrot.lane.b32.xlu0 %v5892, 127
        %v5902 = vpop.permute.xlu0 %5901
        %5903 = vrot.lane.b32.xlu0 %v5874, 127
        %v5904 = vpop.permute.xlu0 %5903
        %v5905 = vsel %vm382, %v5894, %v5896
        %v5906 = vsel %vm382, %v5896, %v5898
        %v5907 = vsel %vm382, %v5898, %v5900
        %v5908 = vsel %vm382, %v5900, %v5902
        %v5909 = vsel %vm382, %v5902, %v5904
        %5916 = vst [vmem:[#allocation6] sm:$0xf0] %v5905
        %5917 = vst [vmem:[#allocation6 + $0x8] sm:$0xf0] %v5906
        %5918 = vst [vmem:[#allocation6 + $0x10] sm:$0xf0] %v5907
        %5919 = vst [vmem:[#allocation6 + $0x18] sm:$0xf0] %v5908
        %5920 = vst [vmem:[#allocation6 + $0x20] sm:$0xf0] %v5909
        %5921 = vst.msk [vmem:[#allocation6 + $0x28] sm:$0xf0] %vm399, %v5904
        %5922 = vrot.lane.b32.xlu0 %v5872, 126
        %v5923 = vpop.permute.xlu0 %5922
        %5924 = vrot.lane.b32.xlu0 %v5878, 126
        %v5925 = vpop.permute.xlu0 %5924
        %5926 = vrot.lane.b32.xlu0 %v5873, 126
        %v5927 = vpop.permute.xlu0 %5926
        %5928 = vrot.lane.b32.xlu0 %v5879, 126
        %v5929 = vpop.permute.xlu0 %5928
        %5930 = vrot.lane.b32.xlu0 %v5874, 126
        %v5931 = vpop.permute.xlu0 %5930
        %5932 = vrot.lane.b32.xlu0 %v5880, 126
        %v5933 = vpop.permute.xlu0 %5932
        %v5934 = vsel %vm413, %v5923, %v5925
        %v5935 = vsel %vm413, %v5925, %v5927
        %v5936 = vsel %vm413, %v5927, %v5929
        %v5937 = vsel %vm413, %v5929, %v5931
        %v5938 = vsel %vm413, %v5931, %v5933
        %5945 = vst [vmem:[#allocation6 + $0x30] sm:$0xf] %v5934
        %5946 = vst [vmem:[#allocation6 + $0x38] sm:$0xf] %v5935
        %5947 = vst [vmem:[#allocation6 + $0x40] sm:$0xf] %v5936
        %5948 = vst [vmem:[#allocation6 + $0x48] sm:$0xf] %v5937
        %5949 = vst [vmem:[#allocation6 + $0x50] sm:$0xf] %v5938
        %5950 = vst.msk [vmem:[#allocation6 + $0x58] sm:$0xf] %vm365, %v5933
        %5951 = vrot.lane.b32.xlu0 %v5890, 110
        %v5952 = vpop.permute.xlu0 %5951
        %5953 = vrot.lane.b32.xlu0 %v5872, 110
        %v5954 = vpop.permute.xlu0 %5953
        %5955 = vrot.lane.b32.xlu0 %v5891, 110
        %v5956 = vpop.permute.xlu0 %5955
        %5957 = vrot.lane.b32.xlu0 %v5873, 110
        %v5958 = vpop.permute.xlu0 %5957
        %5959 = vrot.lane.b32.xlu0 %v5892, 110
        %v5960 = vpop.permute.xlu0 %5959
        %5961 = vrot.lane.b32.xlu0 %v5874, 110
        %v5962 = vpop.permute.xlu0 %5961
        %v5963 = vsel %vm443, %v5952, %v5954
        %v5964 = vsel %vm443, %v5954, %v5956
        %v5965 = vsel %vm443, %v5956, %v5958
        %v5966 = vsel %vm443, %v5958, %v5960
        %v5967 = vsel %vm443, %v5960, %v5962
        %5974 = vst [vmem:[#allocation6 + $0x30] sm:$0xf0] %v5963
        %5975 = vst [vmem:[#allocation6 + $0x38] sm:$0xf0] %v5964
        %5976 = vst [vmem:[#allocation6 + $0x40] sm:$0xf0] %v5965
        %5977 = vst [vmem:[#allocation6 + $0x48] sm:$0xf0] %v5966
        %5978 = vst [vmem:[#allocation6 + $0x50] sm:$0xf0] %v5967
        %5979 = vst.msk [vmem:[#allocation6 + $0x58] sm:$0xf0] %vm399, %v5962
        %5980 = vrot.lane.b32.xlu0 %v5872, 109
        %v5981 = vpop.permute.xlu0 %5980
        %5982 = vrot.lane.b32.xlu0 %v5878, 109
        %v5983 = vpop.permute.xlu0 %5982
        %5984 = vrot.lane.b32.xlu0 %v5873, 109
        %v5985 = vpop.permute.xlu0 %5984
        %5986 = vrot.lane.b32.xlu0 %v5879, 109
        %v5987 = vpop.permute.xlu0 %5986
        %5988 = vrot.lane.b32.xlu0 %v5874, 109
        %v5989 = vpop.permute.xlu0 %5988
        %5990 = vrot.lane.b32.xlu0 %v5880, 109
        %v5991 = vpop.permute.xlu0 %5990
        %v5992 = vsel %vm473, %v5981, %v5983
        %v5993 = vsel %vm473, %v5983, %v5985
        %v5994 = vsel %vm473, %v5985, %v5987
        %v5995 = vsel %vm473, %v5987, %v5989
        %v5996 = vsel %vm473, %v5989, %v5991
        %6003 = vst [vmem:[#allocation6 + $0x60] sm:$0xf] %v5992
        %6004 = vst [vmem:[#allocation6 + $0x68] sm:$0xf] %v5993
        %6005 = vst [vmem:[#allocation6 + $0x70] sm:$0xf] %v5994
        %6006 = vst [vmem:[#allocation6 + $0x78] sm:$0xf] %v5995
        %6007 = vst [vmem:[#allocation6 + $0x80] sm:$0xf] %v5996
        %6008 = vst.msk [vmem:[#allocation6 + $0x88] sm:$0xf] %vm365, %v5991
        %6009 = vrot.lane.b32.xlu0 %v5890, 108
        %v6010 = vpop.permute.xlu0 %6009
        %6011 = vrot.lane.b32.xlu0 %v5872, 108
        %v6012 = vpop.permute.xlu0 %6011
        %6013 = vrot.lane.b32.xlu0 %v5891, 108
        %v6014 = vpop.permute.xlu0 %6013
        %6015 = vrot.lane.b32.xlu0 %v5873, 108
        %v6016 = vpop.permute.xlu0 %6015
        %6017 = vrot.lane.b32.xlu0 %v5892, 108
        %v6018 = vpop.permute.xlu0 %6017
        %6019 = vrot.lane.b32.xlu0 %v5874, 108
        %v6020 = vpop.permute.xlu0 %6019
        %v6021 = vsel %vm503, %v6010, %v6012
        %v6022 = vsel %vm503, %v6012, %v6014
        %v6023 = vsel %vm503, %v6014, %v6016
        %v6024 = vsel %vm503, %v6016, %v6018
        %v6025 = vsel %vm503, %v6018, %v6020
        %6032 = vst [vmem:[#allocation6 + $0x60] sm:$0xf0] %v6021
        %6033 = vst [vmem:[#allocation6 + $0x68] sm:$0xf0] %v6022
        %6034 = vst [vmem:[#allocation6 + $0x70] sm:$0xf0] %v6023
        %6035 = vst [vmem:[#allocation6 + $0x78] sm:$0xf0] %v6024
        %6036 = vst [vmem:[#allocation6 + $0x80] sm:$0xf0] %v6025
        %6037 = vst.msk [vmem:[#allocation6 + $0x88] sm:$0xf0] %vm399, %v6020
        %6038 = vrot.lane.b32.xlu0 %v5872, 92
        %v6039 = vpop.permute.xlu0 %6038
        %6040 = vrot.lane.b32.xlu0 %v5878, 92
        %v6041 = vpop.permute.xlu0 %6040
        %6042 = vrot.lane.b32.xlu0 %v5873, 92
        %v6043 = vpop.permute.xlu0 %6042
        %6044 = vrot.lane.b32.xlu0 %v5879, 92
        %v6045 = vpop.permute.xlu0 %6044
        %6046 = vrot.lane.b32.xlu0 %v5874, 92
        %v6047 = vpop.permute.xlu0 %6046
        %6048 = vrot.lane.b32.xlu0 %v5880, 92
        %v6049 = vpop.permute.xlu0 %6048
        %v6050 = vsel %vm533, %v6039, %v6041
        %v6051 = vsel %vm533, %v6041, %v6043
        %v6052 = vsel %vm533, %v6043, %v6045
        %v6053 = vsel %vm533, %v6045, %v6047
        %v6054 = vsel %vm533, %v6047, %v6049
        %6061 = vst [vmem:[#allocation6 + $0x90] sm:$0xf] %v6050
        %6062 = vst [vmem:[#allocation6 + $0x98] sm:$0xf] %v6051
        %6063 = vst [vmem:[#allocation6 + $0xa0] sm:$0xf] %v6052
        %6064 = vst [vmem:[#allocation6 + $0xa8] sm:$0xf] %v6053
        %6065 = vst [vmem:[#allocation6 + $0xb0] sm:$0xf] %v6054
        %6066 = vst.msk [vmem:[#allocation6 + $0xb8] sm:$0xf] %vm365, %v6049
        %6067 = vrot.lane.b32.xlu0 %v5890, 91
        %v6068 = vpop.permute.xlu0 %6067
        %6069 = vrot.lane.b32.xlu0 %v5872, 91
        %v6070 = vpop.permute.xlu0 %6069
        %6071 = vrot.lane.b32.xlu0 %v5891, 91
        %v6072 = vpop.permute.xlu0 %6071
        %6073 = vrot.lane.b32.xlu0 %v5873, 91
        %v6074 = vpop.permute.xlu0 %6073
        %6075 = vrot.lane.b32.xlu0 %v5892, 91
        %v6076 = vpop.permute.xlu0 %6075
        %6077 = vrot.lane.b32.xlu0 %v5874, 91
        %v6078 = vpop.permute.xlu0 %6077
        %v6079 = vsel %vm563, %v6068, %v6070
        %v6080 = vsel %vm563, %v6070, %v6072
        %v6081 = vsel %vm563, %v6072, %v6074
        %v6082 = vsel %vm563, %v6074, %v6076
        %v6083 = vsel %vm563, %v6076, %v6078
        %6090 = vst [vmem:[#allocation6 + $0x90] sm:$0xf0] %v6079
        %6091 = vst [vmem:[#allocation6 + $0x98] sm:$0xf0] %v6080
        %6092 = vst [vmem:[#allocation6 + $0xa0] sm:$0xf0] %v6081
        %6093 = vst [vmem:[#allocation6 + $0xa8] sm:$0xf0] %v6082
        %6094 = vst [vmem:[#allocation6 + $0xb0] sm:$0xf0] %v6083
        %6095 = vst.msk [vmem:[#allocation6 + $0xb8] sm:$0xf0] %vm399, %v6078
        %6096 = vrot.lane.b32.xlu0 %v5872, 90
        %v6097 = vpop.permute.xlu0 %6096
        %6098 = vrot.lane.b32.xlu0 %v5878, 90
        %v6099 = vpop.permute.xlu0 %6098
        %6100 = vrot.lane.b32.xlu0 %v5873, 90
        %v6101 = vpop.permute.xlu0 %6100
        %6102 = vrot.lane.b32.xlu0 %v5879, 90
        %v6103 = vpop.permute.xlu0 %6102
        %6104 = vrot.lane.b32.xlu0 %v5874, 90
        %v6105 = vpop.permute.xlu0 %6104
        %6106 = vrot.lane.b32.xlu0 %v5880, 90
        %v6107 = vpop.permute.xlu0 %6106
        %v6108 = vsel %vm593, %v6097, %v6099
        %v6109 = vsel %vm593, %v6099, %v6101
        %v6110 = vsel %vm593, %v6101, %v6103
        %v6111 = vsel %vm593, %v6103, %v6105
        %v6112 = vsel %vm593, %v6105, %v6107
        %6119 = vst [vmem:[#allocation6 + $0xc0] sm:$0xf] %v6108
        %6120 = vst [vmem:[#allocation6 + $0xc8] sm:$0xf] %v6109
        %6121 = vst [vmem:[#allocation6 + $0xd0] sm:$0xf] %v6110
        %6122 = vst [vmem:[#allocation6 + $0xd8] sm:$0xf] %v6111
        %6123 = vst [vmem:[#allocation6 + $0xe0] sm:$0xf] %v6112
        %6124 = vst.msk [vmem:[#allocation6 + $0xe8] sm:$0xf] %vm365, %v6107
        %v6128 = vcombine.low %v5865, %v5865
        %v6129 = vcombine.low %v5866, %v5866
        %v6130 = vcombine.low %v5867, %v5867
        %6134 = vst [vmem:[#allocation6 + $0xc0] sm:$0xf0] %v6128
        %6135 = vst [vmem:[#allocation6 + $0xc8] sm:$0xf0] %v5865
        %6136 = vst [vmem:[#allocation6 + $0xd0] sm:$0xf0] %v6129
        %6137 = vst [vmem:[#allocation6 + $0xd8] sm:$0xf0] %v5866
        %6138 = vst [vmem:[#allocation6 + $0xe0] sm:$0xf0] %v6130
        %6139 = vst.msk [vmem:[#allocation6 + $0xe8] sm:$0xf0] %vm399, %v5867
        %v6140 = vcombine.high %v5865, %v5865
        %v6141 = vcombine.high %v5866, %v5866
        %v6142 = vcombine.high %v5867, %v5867
        %6143 = vrot.lane.b32.xlu0 %v5865, 127
        %v6144 = vpop.permute.xlu0 %6143
        %6145 = vrot.lane.b32.xlu0 %v6140, 127
        %v6146 = vpop.permute.xlu0 %6145
        %6147 = vrot.lane.b32.xlu0 %v5866, 127
        %v6148 = vpop.permute.xlu0 %6147
        %6149 = vrot.lane.b32.xlu0 %v6141, 127
        %v6150 = vpop.permute.xlu0 %6149
        %6151 = vrot.lane.b32.xlu0 %v5867, 127
        %v6152 = vpop.permute.xlu0 %6151
        %6153 = vrot.lane.b32.xlu0 %v6142, 127
        %v6154 = vpop.permute.xlu0 %6153
        %v6155 = vsel %vm382, %v6144, %v6146
        %v6156 = vsel %vm382, %v6146, %v6148
        %v6157 = vsel %vm382, %v6148, %v6150
        %v6158 = vsel %vm382, %v6150, %v6152
        %v6159 = vsel %vm382, %v6152, %v6154
        %6166 = vst [vmem:[#allocation6 + $0xf0] sm:$0xf] %v6155
        %6167 = vst [vmem:[#allocation6 + $0xf8] sm:$0xf] %v6156
        %6168 = vst [vmem:[#allocation6 + $0x100] sm:$0xf] %v6157
        %6169 = vst [vmem:[#allocation6 + $0x108] sm:$0xf] %v6158
        %6170 = vst [vmem:[#allocation6 + $0x110] sm:$0xf] %v6159
        %6171 = vst.msk [vmem:[#allocation6 + $0x118] sm:$0xf] %vm365, %v6154
        %6172 = vrot.lane.b32.xlu0 %v6128, 126
        %v6173 = vpop.permute.xlu0 %6172
        %6174 = vrot.lane.b32.xlu0 %v5865, 126
        %v6175 = vpop.permute.xlu0 %6174
        %6176 = vrot.lane.b32.xlu0 %v6129, 126
        %v6177 = vpop.permute.xlu0 %6176
        %6178 = vrot.lane.b32.xlu0 %v5866, 126
        %v6179 = vpop.permute.xlu0 %6178
        %6180 = vrot.lane.b32.xlu0 %v6130, 126
        %v6181 = vpop.permute.xlu0 %6180
        %6182 = vrot.lane.b32.xlu0 %v5867, 126
        %v6183 = vpop.permute.xlu0 %6182
        %v6184 = vsel %vm413, %v6173, %v6175
        %v6185 = vsel %vm413, %v6175, %v6177
        %v6186 = vsel %vm413, %v6177, %v6179
        %v6187 = vsel %vm413, %v6179, %v6181
        %v6188 = vsel %vm413, %v6181, %v6183
        %6195 = vst [vmem:[#allocation6 + $0xf0] sm:$0xf0] %v6184
        %6196 = vst [vmem:[#allocation6 + $0xf8] sm:$0xf0] %v6185
        %6197 = vst [vmem:[#allocation6 + $0x100] sm:$0xf0] %v6186
        %6198 = vst [vmem:[#allocation6 + $0x108] sm:$0xf0] %v6187
        %6199 = vst [vmem:[#allocation6 + $0x110] sm:$0xf0] %v6188
        %6200 = vst.msk [vmem:[#allocation6 + $0x118] sm:$0xf0] %vm399, %v6183
        %6201 = vrot.lane.b32.xlu0 %v5865, 110
        %v6202 = vpop.permute.xlu0 %6201
        %6203 = vrot.lane.b32.xlu0 %v6140, 110
        %v6204 = vpop.permute.xlu0 %6203
        %6205 = vrot.lane.b32.xlu0 %v5866, 110
        %v6206 = vpop.permute.xlu0 %6205
        %6207 = vrot.lane.b32.xlu0 %v6141, 110
        %v6208 = vpop.permute.xlu0 %6207
        %6209 = vrot.lane.b32.xlu0 %v5867, 110
        %v6210 = vpop.permute.xlu0 %6209
        %6211 = vrot.lane.b32.xlu0 %v6142, 110
        %v6212 = vpop.permute.xlu0 %6211
        %v6213 = vsel %vm443, %v6202, %v6204
        %v6214 = vsel %vm443, %v6204, %v6206
        %v6215 = vsel %vm443, %v6206, %v6208
        %v6216 = vsel %vm443, %v6208, %v6210
        %v6217 = vsel %vm443, %v6210, %v6212
        %6224 = vst [vmem:[#allocation6 + $0x120] sm:$0xf] %v6213
        %6225 = vst [vmem:[#allocation6 + $0x128] sm:$0xf] %v6214
        %6226 = vst [vmem:[#allocation6 + $0x130] sm:$0xf] %v6215
        %6227 = vst [vmem:[#allocation6 + $0x138] sm:$0xf] %v6216
        %6228 = vst [vmem:[#allocation6 + $0x140] sm:$0xf] %v6217
        %6229 = vst.msk [vmem:[#allocation6 + $0x148] sm:$0xf] %vm365, %v6212
        %6230 = vrot.lane.b32.xlu0 %v6128, 109
        %v6231 = vpop.permute.xlu0 %6230
        %6232 = vrot.lane.b32.xlu0 %v5865, 109
        %v6233 = vpop.permute.xlu0 %6232
        %6234 = vrot.lane.b32.xlu0 %v6129, 109
        %v6235 = vpop.permute.xlu0 %6234
        %6236 = vrot.lane.b32.xlu0 %v5866, 109
        %v6237 = vpop.permute.xlu0 %6236
        %6238 = vrot.lane.b32.xlu0 %v6130, 109
        %v6239 = vpop.permute.xlu0 %6238
        %6240 = vrot.lane.b32.xlu0 %v5867, 109
        %v6241 = vpop.permute.xlu0 %6240
        %v6242 = vsel %vm473, %v6231, %v6233
        %v6243 = vsel %vm473, %v6233, %v6235
        %v6244 = vsel %vm473, %v6235, %v6237
        %v6245 = vsel %vm473, %v6237, %v6239
        %v6246 = vsel %vm473, %v6239, %v6241
        %6253 = vst [vmem:[#allocation6 + $0x120] sm:$0xf0] %v6242
        %6254 = vst [vmem:[#allocation6 + $0x128] sm:$0xf0] %v6243
        %6255 = vst [vmem:[#allocation6 + $0x130] sm:$0xf0] %v6244
        %6256 = vst [vmem:[#allocation6 + $0x138] sm:$0xf0] %v6245
        %6257 = vst [vmem:[#allocation6 + $0x140] sm:$0xf0] %v6246
        %6258 = vst.msk [vmem:[#allocation6 + $0x148] sm:$0xf0] %vm399, %v6241
        %6259 = vrot.lane.b32.xlu0 %v5865, 108
        %v6260 = vpop.permute.xlu0 %6259
        %6261 = vrot.lane.b32.xlu0 %v6140, 108
        %v6262 = vpop.permute.xlu0 %6261
        %6263 = vrot.lane.b32.xlu0 %v5866, 108
        %v6264 = vpop.permute.xlu0 %6263
        %6265 = vrot.lane.b32.xlu0 %v6141, 108
        %v6266 = vpop.permute.xlu0 %6265
        %6267 = vrot.lane.b32.xlu0 %v5867, 108
        %v6268 = vpop.permute.xlu0 %6267
        %6269 = vrot.lane.b32.xlu0 %v6142, 108
        %v6270 = vpop.permute.xlu0 %6269
        %v6271 = vsel %vm503, %v6260, %v6262
        %v6272 = vsel %vm503, %v6262, %v6264
        %v6273 = vsel %vm503, %v6264, %v6266
        %v6274 = vsel %vm503, %v6266, %v6268
        %v6275 = vsel %vm503, %v6268, %v6270
        %6282 = vst [vmem:[#allocation6 + $0x150] sm:$0xf] %v6271
        %6283 = vst [vmem:[#allocation6 + $0x158] sm:$0xf] %v6272
        %6284 = vst [vmem:[#allocation6 + $0x160] sm:$0xf] %v6273
        %6285 = vst [vmem:[#allocation6 + $0x168] sm:$0xf] %v6274
        %6286 = vst [vmem:[#allocation6 + $0x170] sm:$0xf] %v6275
        %6287 = vst.msk [vmem:[#allocation6 + $0x178] sm:$0xf] %vm365, %v6270
        %6288 = vrot.lane.b32.xlu0 %v6128, 92
        %v6289 = vpop.permute.xlu0 %6288
        %6290 = vrot.lane.b32.xlu0 %v5865, 92
        %v6291 = vpop.permute.xlu0 %6290
        %6292 = vrot.lane.b32.xlu0 %v6129, 92
        %v6293 = vpop.permute.xlu0 %6292
        %6294 = vrot.lane.b32.xlu0 %v5866, 92
        %v6295 = vpop.permute.xlu0 %6294
        %6296 = vrot.lane.b32.xlu0 %v6130, 92
        %v6297 = vpop.permute.xlu0 %6296
        %6298 = vrot.lane.b32.xlu0 %v5867, 92
        %v6299 = vpop.permute.xlu0 %6298
        %v6300 = vsel %vm533, %v6289, %v6291
        %v6301 = vsel %vm533, %v6291, %v6293
        %v6302 = vsel %vm533, %v6293, %v6295
        %v6303 = vsel %vm533, %v6295, %v6297
        %v6304 = vsel %vm533, %v6297, %v6299
        %6311 = vst [vmem:[#allocation6 + $0x150] sm:$0xf0] %v6300
        %6312 = vst [vmem:[#allocation6 + $0x158] sm:$0xf0] %v6301
        %6313 = vst [vmem:[#allocation6 + $0x160] sm:$0xf0] %v6302
        %6314 = vst [vmem:[#allocation6 + $0x168] sm:$0xf0] %v6303
        %6315 = vst [vmem:[#allocation6 + $0x170] sm:$0xf0] %v6304
        %6316 = vst.msk [vmem:[#allocation6 + $0x178] sm:$0xf0] %vm399, %v6299
        %6317 = vrot.lane.b32.xlu0 %v5865, 91
        %v6318 = vpop.permute.xlu0 %6317
        %6319 = vrot.lane.b32.xlu0 %v6140, 91
        %v6320 = vpop.permute.xlu0 %6319
        %6321 = vrot.lane.b32.xlu0 %v5866, 91
        %v6322 = vpop.permute.xlu0 %6321
        %6323 = vrot.lane.b32.xlu0 %v6141, 91
        %v6324 = vpop.permute.xlu0 %6323
        %6325 = vrot.lane.b32.xlu0 %v5867, 91
        %v6326 = vpop.permute.xlu0 %6325
        %6327 = vrot.lane.b32.xlu0 %v6142, 91
        %v6328 = vpop.permute.xlu0 %6327
        %v6329 = vsel %vm563, %v6318, %v6320
        %v6330 = vsel %vm563, %v6320, %v6322
        %v6331 = vsel %vm563, %v6322, %v6324
        %v6332 = vsel %vm563, %v6324, %v6326
        %v6333 = vsel %vm563, %v6326, %v6328
        %6340 = vst [vmem:[#allocation6 + $0x180] sm:$0xf] %v6329
        %6341 = vst [vmem:[#allocation6 + $0x188] sm:$0xf] %v6330
        %6342 = vst [vmem:[#allocation6 + $0x190] sm:$0xf] %v6331
        %6343 = vst [vmem:[#allocation6 + $0x198] sm:$0xf] %v6332
        %6344 = vst [vmem:[#allocation6 + $0x1a0] sm:$0xf] %v6333
        %6345 = vst.msk [vmem:[#allocation6 + $0x1a8] sm:$0xf] %vm365, %v6328
        %6346 = vrot.lane.b32.xlu0 %v6128, 90
        %v6347 = vpop.permute.xlu0 %6346
        %6348 = vrot.lane.b32.xlu0 %v5865, 90
        %v6349 = vpop.permute.xlu0 %6348
        %6350 = vrot.lane.b32.xlu0 %v6129, 90
        %v6351 = vpop.permute.xlu0 %6350
        %6352 = vrot.lane.b32.xlu0 %v5866, 90
        %v6353 = vpop.permute.xlu0 %6352
        %6354 = vrot.lane.b32.xlu0 %v6130, 90
        %v6355 = vpop.permute.xlu0 %6354
        %6356 = vrot.lane.b32.xlu0 %v5867, 90
        %v6357 = vpop.permute.xlu0 %6356
        %v6358 = vsel %vm593, %v6347, %v6349
        %v6359 = vsel %vm593, %v6349, %v6351
        %v6360 = vsel %vm593, %v6351, %v6353
        %v6361 = vsel %vm593, %v6353, %v6355
        %v6362 = vsel %vm593, %v6355, %v6357
        %6369 = vst [vmem:[#allocation6 + $0x180] sm:$0xf0] %v6358
        %6370 = vst [vmem:[#allocation6 + $0x188] sm:$0xf0] %v6359
        %6371 = vst [vmem:[#allocation6 + $0x190] sm:$0xf0] %v6360
        %6372 = vst [vmem:[#allocation6 + $0x198] sm:$0xf0] %v6361
        %6373 = vst [vmem:[#allocation6 + $0x1a0] sm:$0xf0] %v6362
        %6374 = vst.msk [vmem:[#allocation6 + $0x1a8] sm:$0xf0] %vm399, %v6357
        %v6378 = vcombine.high %v5868, %v5868
        %v6379 = vcombine.high %v5869, %v5869
        %v6380 = vcombine.high %v5870, %v5870
        %6384 = vst [vmem:[#allocation6 + $0x1b0] sm:$0xf] %v5868
        %6385 = vst [vmem:[#allocation6 + $0x1b8] sm:$0xf] %v6378
        %6386 = vst [vmem:[#allocation6 + $0x1c0] sm:$0xf] %v5869
        %6387 = vst [vmem:[#allocation6 + $0x1c8] sm:$0xf] %v6379
        %6388 = vst [vmem:[#allocation6 + $0x1d0] sm:$0xf] %v5870
        %6389 = vst.msk [vmem:[#allocation6 + $0x1d8] sm:$0xf] %vm365, %v6380
        %v6390 = vcombine.low %v5868, %v5868
        %v6391 = vcombine.low %v5869, %v5869
        %v6392 = vcombine.low %v5870, %v5870
        %6393 = vrot.lane.b32.xlu0 %v6390, 127
        %v6394 = vpop.permute.xlu0 %6393
        %6395 = vrot.lane.b32.xlu0 %v5868, 127
        %v6396 = vpop.permute.xlu0 %6395
        %6397 = vrot.lane.b32.xlu0 %v6391, 127
        %v6398 = vpop.permute.xlu0 %6397
        %6399 = vrot.lane.b32.xlu0 %v5869, 127
        %v6400 = vpop.permute.xlu0 %6399
        %6401 = vrot.lane.b32.xlu0 %v6392, 127
        %v6402 = vpop.permute.xlu0 %6401
        %6403 = vrot.lane.b32.xlu0 %v5870, 127
        %v6404 = vpop.permute.xlu0 %6403
        %v6405 = vsel %vm382, %v6394, %v6396
        %v6406 = vsel %vm382, %v6396, %v6398
        %v6407 = vsel %vm382, %v6398, %v6400
        %v6408 = vsel %vm382, %v6400, %v6402
        %v6409 = vsel %vm382, %v6402, %v6404
        %6416 = vst [vmem:[#allocation6 + $0x1b0] sm:$0xf0] %v6405
        %6417 = vst [vmem:[#allocation6 + $0x1b8] sm:$0xf0] %v6406
        %6418 = vst [vmem:[#allocation6 + $0x1c0] sm:$0xf0] %v6407
        %6419 = vst [vmem:[#allocation6 + $0x1c8] sm:$0xf0] %v6408
        %6420 = vst [vmem:[#allocation6 + $0x1d0] sm:$0xf0] %v6409
        %6421 = vst.msk [vmem:[#allocation6 + $0x1d8] sm:$0xf0] %vm399, %v6404
        %6422 = vrot.lane.b32.xlu0 %v5868, 126
        %v6423 = vpop.permute.xlu0 %6422
        %6424 = vrot.lane.b32.xlu0 %v6378, 126
        %v6425 = vpop.permute.xlu0 %6424
        %6426 = vrot.lane.b32.xlu0 %v5869, 126
        %v6427 = vpop.permute.xlu0 %6426
        %6428 = vrot.lane.b32.xlu0 %v6379, 126
        %v6429 = vpop.permute.xlu0 %6428
        %6430 = vrot.lane.b32.xlu0 %v5870, 126
        %v6431 = vpop.permute.xlu0 %6430
        %6432 = vrot.lane.b32.xlu0 %v6380, 126
        %v6433 = vpop.permute.xlu0 %6432
        %v6434 = vsel %vm413, %v6423, %v6425
        %v6435 = vsel %vm413, %v6425, %v6427
        %v6436 = vsel %vm413, %v6427, %v6429
        %v6437 = vsel %vm413, %v6429, %v6431
        %v6438 = vsel %vm413, %v6431, %v6433
        %6445 = vst [vmem:[#allocation6 + $0x1e0] sm:$0xf] %v6434
        %6446 = vst [vmem:[#allocation6 + $0x1e8] sm:$0xf] %v6435
        %6447 = vst [vmem:[#allocation6 + $0x1f0] sm:$0xf] %v6436
        %6448 = vst [vmem:[#allocation6 + $0x1f8] sm:$0xf] %v6437
        %6449 = vst [vmem:[#allocation6 + $0x200] sm:$0xf] %v6438
        %6450 = vst.msk [vmem:[#allocation6 + $0x208] sm:$0xf] %vm365, %v6433
        %6451 = vrot.lane.b32.xlu0 %v6390, 110
        %v6452 = vpop.permute.xlu0 %6451
        %6453 = vrot.lane.b32.xlu0 %v5868, 110
        %v6454 = vpop.permute.xlu0 %6453
        %6455 = vrot.lane.b32.xlu0 %v6391, 110
        %v6456 = vpop.permute.xlu0 %6455
        %6457 = vrot.lane.b32.xlu0 %v5869, 110
        %v6458 = vpop.permute.xlu0 %6457
        %6459 = vrot.lane.b32.xlu0 %v6392, 110
        %v6460 = vpop.permute.xlu0 %6459
        %6461 = vrot.lane.b32.xlu0 %v5870, 110
        %v6462 = vpop.permute.xlu0 %6461
        %v6463 = vsel %vm443, %v6452, %v6454
        %v6464 = vsel %vm443, %v6454, %v6456
        %v6465 = vsel %vm443, %v6456, %v6458
        %v6466 = vsel %vm443, %v6458, %v6460
        %v6467 = vsel %vm443, %v6460, %v6462
        %6474 = vst [vmem:[#allocation6 + $0x1e0] sm:$0xf0] %v6463
        %6475 = vst [vmem:[#allocation6 + $0x1e8] sm:$0xf0] %v6464
        %6476 = vst [vmem:[#allocation6 + $0x1f0] sm:$0xf0] %v6465
        %6477 = vst [vmem:[#allocation6 + $0x1f8] sm:$0xf0] %v6466
        %6478 = vst [vmem:[#allocation6 + $0x200] sm:$0xf0] %v6467
        %6479 = vst.msk [vmem:[#allocation6 + $0x208] sm:$0xf0] %vm399, %v6462
        %6480 = vrot.lane.b32.xlu0 %v5868, 109
        %v6481 = vpop.permute.xlu0 %6480
        %6482 = vrot.lane.b32.xlu0 %v6378, 109
        %v6483 = vpop.permute.xlu0 %6482
        %6484 = vrot.lane.b32.xlu0 %v5869, 109
        %v6485 = vpop.permute.xlu0 %6484
        %6486 = vrot.lane.b32.xlu0 %v6379, 109
        %v6487 = vpop.permute.xlu0 %6486
        %6488 = vrot.lane.b32.xlu0 %v5870, 109
        %v6489 = vpop.permute.xlu0 %6488
        %6490 = vrot.lane.b32.xlu0 %v6380, 109
        %v6491 = vpop.permute.xlu0 %6490
        %v6492 = vsel %vm473, %v6481, %v6483
        %v6493 = vsel %vm473, %v6483, %v6485
        %v6494 = vsel %vm473, %v6485, %v6487
        %v6495 = vsel %vm473, %v6487, %v6489
        %v6496 = vsel %vm473, %v6489, %v6491
        %6503 = vst [vmem:[#allocation6 + $0x210] sm:$0xf] %v6492
        %6504 = vst [vmem:[#allocation6 + $0x218] sm:$0xf] %v6493
        %6505 = vst [vmem:[#allocation6 + $0x220] sm:$0xf] %v6494
        %6506 = vst [vmem:[#allocation6 + $0x228] sm:$0xf] %v6495
        %6507 = vst [vmem:[#allocation6 + $0x230] sm:$0xf] %v6496
        %6508 = vst.msk [vmem:[#allocation6 + $0x238] sm:$0xf] %vm365, %v6491
        %6509 = vrot.lane.b32.xlu0 %v6390, 108
        %v6510 = vpop.permute.xlu0 %6509
        %6511 = vrot.lane.b32.xlu0 %v5868, 108
        %v6512 = vpop.permute.xlu0 %6511
        %6513 = vrot.lane.b32.xlu0 %v6391, 108
        %v6514 = vpop.permute.xlu0 %6513
        %6515 = vrot.lane.b32.xlu0 %v5869, 108
        %v6516 = vpop.permute.xlu0 %6515
        %6517 = vrot.lane.b32.xlu0 %v6392, 108
        %v6518 = vpop.permute.xlu0 %6517
        %6519 = vrot.lane.b32.xlu0 %v5870, 108
        %v6520 = vpop.permute.xlu0 %6519
        %v6521 = vsel %vm503, %v6510, %v6512
        %v6522 = vsel %vm503, %v6512, %v6514
        %v6523 = vsel %vm503, %v6514, %v6516
        %v6524 = vsel %vm503, %v6516, %v6518
        %v6525 = vsel %vm503, %v6518, %v6520
        %6532 = vst [vmem:[#allocation6 + $0x210] sm:$0xf0] %v6521
        %6533 = vst [vmem:[#allocation6 + $0x218] sm:$0xf0] %v6522
        %6534 = vst [vmem:[#allocation6 + $0x220] sm:$0xf0] %v6523
        %6535 = vst [vmem:[#allocation6 + $0x228] sm:$0xf0] %v6524
        %6536 = vst [vmem:[#allocation6 + $0x230] sm:$0xf0] %v6525
        %6537 = vst.msk [vmem:[#allocation6 + $0x238] sm:$0xf0] %vm399, %v6520
        %6538 = vrot.lane.b32.xlu0 %v5868, 92
        %v6539 = vpop.permute.xlu0 %6538
        %6540 = vrot.lane.b32.xlu0 %v6378, 92
        %v6541 = vpop.permute.xlu0 %6540
        %6542 = vrot.lane.b32.xlu0 %v5869, 92
        %v6543 = vpop.permute.xlu0 %6542
        %6544 = vrot.lane.b32.xlu0 %v6379, 92
        %v6545 = vpop.permute.xlu0 %6544
        %6546 = vrot.lane.b32.xlu0 %v5870, 92
        %v6547 = vpop.permute.xlu0 %6546
        %6548 = vrot.lane.b32.xlu0 %v6380, 92
        %v6549 = vpop.permute.xlu0 %6548
        %v6550 = vsel %vm533, %v6539, %v6541
        %v6551 = vsel %vm533, %v6541, %v6543
        %v6552 = vsel %vm533, %v6543, %v6545
        %v6553 = vsel %vm533, %v6545, %v6547
        %v6554 = vsel %vm533, %v6547, %v6549
        %6561 = vst [vmem:[#allocation6 + $0x240] sm:$0xf] %v6550
        %6562 = vst [vmem:[#allocation6 + $0x248] sm:$0xf] %v6551
        %6563 = vst [vmem:[#allocation6 + $0x250] sm:$0xf] %v6552
        %6564 = vst [vmem:[#allocation6 + $0x258] sm:$0xf] %v6553
        %6565 = vst [vmem:[#allocation6 + $0x260] sm:$0xf] %v6554
        %6566 = vst.msk [vmem:[#allocation6 + $0x268] sm:$0xf] %vm365, %v6549
        %6567 = vrot.lane.b32.xlu0 %v6390, 91
        %v6568 = vpop.permute.xlu0 %6567
        %6569 = vrot.lane.b32.xlu0 %v5868, 91
        %v6570 = vpop.permute.xlu0 %6569
        %6571 = vrot.lane.b32.xlu0 %v6391, 91
        %v6572 = vpop.permute.xlu0 %6571
        %6573 = vrot.lane.b32.xlu0 %v5869, 91
        %v6574 = vpop.permute.xlu0 %6573
        %6575 = vrot.lane.b32.xlu0 %v6392, 91
        %v6576 = vpop.permute.xlu0 %6575
        %6577 = vrot.lane.b32.xlu0 %v5870, 91
        %v6578 = vpop.permute.xlu0 %6577
        %v6579 = vsel %vm563, %v6568, %v6570
        %v6580 = vsel %vm563, %v6570, %v6572
        %v6581 = vsel %vm563, %v6572, %v6574
        %v6582 = vsel %vm563, %v6574, %v6576
        %v6583 = vsel %vm563, %v6576, %v6578
        %6590 = vst [vmem:[#allocation6 + $0x240] sm:$0xf0] %v6579
        %6591 = vst [vmem:[#allocation6 + $0x248] sm:$0xf0] %v6580
        %6592 = vst [vmem:[#allocation6 + $0x250] sm:$0xf0] %v6581
        %6593 = vst [vmem:[#allocation6 + $0x258] sm:$0xf0] %v6582
        %6594 = vst [vmem:[#allocation6 + $0x260] sm:$0xf0] %v6583
        %6595 = vst.msk [vmem:[#allocation6 + $0x268] sm:$0xf0] %vm399, %v6578
        %6596 = vrot.lane.b32.xlu0 %v5868, 90
        %v6597 = vpop.permute.xlu0 %6596
        %6598 = vrot.lane.b32.xlu0 %v6378, 90
        %v6599 = vpop.permute.xlu0 %6598
        %6600 = vrot.lane.b32.xlu0 %v5869, 90
        %v6601 = vpop.permute.xlu0 %6600
        %6602 = vrot.lane.b32.xlu0 %v6379, 90
        %v6603 = vpop.permute.xlu0 %6602
        %6604 = vrot.lane.b32.xlu0 %v5870, 90
        %v6605 = vpop.permute.xlu0 %6604
        %6606 = vrot.lane.b32.xlu0 %v6380, 90
        %v6607 = vpop.permute.xlu0 %6606
        %v6608 = vsel %vm593, %v6597, %v6599
        %v6609 = vsel %vm593, %v6599, %v6601
        %v6610 = vsel %vm593, %v6601, %v6603
        %v6611 = vsel %vm593, %v6603, %v6605
        %v6612 = vsel %vm593, %v6605, %v6607
        %6619 = vst [vmem:[#allocation6 + $0x270] sm:$0xf] %v6608
        %6620 = vst [vmem:[#allocation6 + $0x278] sm:$0xf] %v6609
        %6621 = vst [vmem:[#allocation6 + $0x280] sm:$0xf] %v6610
        %6622 = vst [vmem:[#allocation6 + $0x288] sm:$0xf] %v6611
        %6623 = vst [vmem:[#allocation6 + $0x290] sm:$0xf] %v6612
        %6624 = vst.msk [vmem:[#allocation6 + $0x298] sm:$0xf] %vm365, %v6607
        %v6625 = vld [vmem:[#allocation6] sm:$0xff]
        %v6626 = vld [vmem:[#allocation6 + $0x8] sm:$0xff]
        %v6627 = vld [vmem:[#allocation6 + $0x10] sm:$0xff]
        %v6628 = vld [vmem:[#allocation6 + $0x18] sm:$0xff]
        %v6629 = vld [vmem:[#allocation6 + $0x20] sm:$0xff]
        %v6630 = vld [vmem:[#allocation6 + $0x28] sm:$0xff]
        %v6631 = vld [vmem:[#allocation6 + $0x30] sm:$0xff]
        %v6632 = vld [vmem:[#allocation6 + $0x38] sm:$0xff]
        %v6633 = vld [vmem:[#allocation6 + $0x40] sm:$0xff]
        %v6634 = vld [vmem:[#allocation6 + $0x48] sm:$0xff]
        %v6635 = vld [vmem:[#allocation6 + $0x50] sm:$0xff]
        %v6636 = vld [vmem:[#allocation6 + $0x58] sm:$0xff]
        %v6637 = vld [vmem:[#allocation6 + $0x60] sm:$0xff]
        %v6638 = vld [vmem:[#allocation6 + $0x68] sm:$0xff]
        %v6639 = vld [vmem:[#allocation6 + $0x70] sm:$0xff]
        %v6640 = vld [vmem:[#allocation6 + $0x78] sm:$0xff]
        %v6641 = vld [vmem:[#allocation6 + $0x80] sm:$0xff]
        %v6642 = vld [vmem:[#allocation6 + $0x88] sm:$0xff]
        %v6643 = vld [vmem:[#allocation6 + $0x90] sm:$0xff]
        %v6644 = vld [vmem:[#allocation6 + $0x98] sm:$0xff]
        %v6645 = vld [vmem:[#allocation6 + $0xa0] sm:$0xff]
        %v6646 = vld [vmem:[#allocation6 + $0xa8] sm:$0xff]
        %v6647 = vld [vmem:[#allocation6 + $0xb0] sm:$0xff]
        %v6648 = vld [vmem:[#allocation6 + $0xb8] sm:$0xff]
        %v6649 = vld [vmem:[#allocation6 + $0xc0] sm:$0xff]
        %v6650 = vld [vmem:[#allocation6 + $0xc8] sm:$0xff]
        %v6651 = vld [vmem:[#allocation6 + $0xd0] sm:$0xff]
        %v6652 = vld [vmem:[#allocation6 + $0xd8] sm:$0xff]
        %v6653 = vld [vmem:[#allocation6 + $0xe0] sm:$0xff]
        %v6654 = vld [vmem:[#allocation6 + $0xe8] sm:$0xff]
        %v6655 = vld [vmem:[#allocation6 + $0xf0] sm:$0xff]
        %v6656 = vld [vmem:[#allocation6 + $0xf8] sm:$0xff]
        %v6657 = vld [vmem:[#allocation6 + $0x100] sm:$0xff]
        %v6658 = vld [vmem:[#allocation6 + $0x108] sm:$0xff]
        %v6659 = vld [vmem:[#allocation6 + $0x110] sm:$0xff]
        %v6660 = vld [vmem:[#allocation6 + $0x118] sm:$0xff]
        %v6661 = vld [vmem:[#allocation6 + $0x120] sm:$0xff]
        %v6662 = vld [vmem:[#allocation6 + $0x128] sm:$0xff]
        %v6663 = vld [vmem:[#allocation6 + $0x130] sm:$0xff]
        %v6664 = vld [vmem:[#allocation6 + $0x138] sm:$0xff]
        %v6665 = vld [vmem:[#allocation6 + $0x140] sm:$0xff]
        %v6666 = vld [vmem:[#allocation6 + $0x148] sm:$0xff]
        %v6667 = vld [vmem:[#allocation6 + $0x150] sm:$0xff]
        %v6668 = vld [vmem:[#allocation6 + $0x158] sm:$0xff]
        %v6669 = vld [vmem:[#allocation6 + $0x160] sm:$0xff]
        %v6670 = vld [vmem:[#allocation6 + $0x168] sm:$0xff]
        %v6671 = vld [vmem:[#allocation6 + $0x170] sm:$0xff]
        %v6672 = vld [vmem:[#allocation6 + $0x178] sm:$0xff]
        %v6673 = vld [vmem:[#allocation6 + $0x180] sm:$0xff]
        %v6674 = vld [vmem:[#allocation6 + $0x188] sm:$0xff]
        %v6675 = vld [vmem:[#allocation6 + $0x190] sm:$0xff]
        %v6676 = vld [vmem:[#allocation6 + $0x198] sm:$0xff]
        %v6677 = vld [vmem:[#allocation6 + $0x1a0] sm:$0xff]
        %v6678 = vld [vmem:[#allocation6 + $0x1a8] sm:$0xff]
        %v6679 = vld [vmem:[#allocation6 + $0x1b0] sm:$0xff]
        %v6680 = vld [vmem:[#allocation6 + $0x1b8] sm:$0xff]
        %v6681 = vld [vmem:[#allocation6 + $0x1c0] sm:$0xff]
        %v6682 = vld [vmem:[#allocation6 + $0x1c8] sm:$0xff]
        %v6683 = vld [vmem:[#allocation6 + $0x1d0] sm:$0xff]
        %v6684 = vld [vmem:[#allocation6 + $0x1d8] sm:$0xff]
        %v6685 = vld [vmem:[#allocation6 + $0x1e0] sm:$0xff]
        %v6686 = vld [vmem:[#allocation6 + $0x1e8] sm:$0xff]
        %v6687 = vld [vmem:[#allocation6 + $0x1f0] sm:$0xff]
        %v6688 = vld [vmem:[#allocation6 + $0x1f8] sm:$0xff]
        %v6689 = vld [vmem:[#allocation6 + $0x200] sm:$0xff]
        %v6690 = vld [vmem:[#allocation6 + $0x208] sm:$0xff]
        %v6691 = vld [vmem:[#allocation6 + $0x210] sm:$0xff]
        %v6692 = vld [vmem:[#allocation6 + $0x218] sm:$0xff]
        %v6693 = vld [vmem:[#allocation6 + $0x220] sm:$0xff]
        %v6694 = vld [vmem:[#allocation6 + $0x228] sm:$0xff]
        %v6695 = vld [vmem:[#allocation6 + $0x230] sm:$0xff]
        %v6696 = vld [vmem:[#allocation6 + $0x238] sm:$0xff]
        %v6697 = vld [vmem:[#allocation6 + $0x240] sm:$0xff]
        %v6698 = vld [vmem:[#allocation6 + $0x248] sm:$0xff]
        %v6699 = vld [vmem:[#allocation6 + $0x250] sm:$0xff]
        %v6700 = vld [vmem:[#allocation6 + $0x258] sm:$0xff]
        %v6701 = vld [vmem:[#allocation6 + $0x260] sm:$0xff]
        %v6702 = vld [vmem:[#allocation6 + $0x268] sm:$0xff]
        %v6703 = vld [vmem:[#allocation6 + $0x270] sm:$0xff]
        %v6704 = vld [vmem:[#allocation6 + $0x278] sm:$0xff]
        %v6705 = vld [vmem:[#allocation6 + $0x280] sm:$0xff]
        %v6706 = vld [vmem:[#allocation6 + $0x288] sm:$0xff]
        %v6707 = vld [vmem:[#allocation6 + $0x290] sm:$0xff]
        %v6708 = vld [vmem:[#allocation6 + $0x298] sm:$0xff]
        %v6709 = vld [vmem:[#allocation6 + $0x2a0] sm:$0xff]
        %v6710 = vld [vmem:[#allocation6 + $0x2a8] sm:$0xff]
        %v6711 = vld [vmem:[#allocation6 + $0x2b0] sm:$0xff]
        %v6712 = vld [vmem:[#allocation6 + $0x2b8] sm:$0xff]
        %v6713 = vld [vmem:[#allocation6 + $0x2c0] sm:$0xff]
        %v6714 = vld [vmem:[#allocation6 + $0x2c8] sm:$0xff]
        %v6715 = vld [vmem:[#allocation6 + $0x2d0] sm:$0xff]
        %v6716 = vld [vmem:[#allocation6 + $0x2d8] sm:$0xff]
        %v6717 = vld [vmem:[#allocation6 + $0x2e0] sm:$0xff]
        %v6718 = vld [vmem:[#allocation6 + $0x2e8] sm:$0xff]
        %v6719 = vld [vmem:[#allocation6 + $0x2f0] sm:$0xff]
        %v6720 = vld [vmem:[#allocation6 + $0x2f8] sm:$0xff]
        %6721 = vmatprep.subr.mxu0 %v6626
        %6722 = vmatpush1.msra.mxu0 %v6625
        %6723 = vmatprep.subr.mxu0 %v6632
        %6724 = vmatpush1.msra.mxu0 %v6631
        %6725 = vmatprep.subr.mxu0 %v6638
        %6726 = vmatpush1.msra.mxu0 %v6637
        %6727 = vmatprep.subr.mxu0 %v6644
        %6728 = vmatpush1.msra.mxu0 %v6643
        %6729 = vmatprep.subr.mxu0 %v6650
        %6730 = vmatpush1.msra.mxu0 %v6649
        %6731 = vmatprep.subr.mxu0 %v6656
        %6732 = vmatpush1.msra.mxu0 %v6655
        %6733 = vmatprep.subr.mxu0 %v6662
        %6734 = vmatpush1.msra.mxu0 %v6661
        %6735 = vmatprep.subr.mxu0 %v6668
        %6736 = vmatpush1.msra.mxu0 %v6667
        %6737 = vmatprep.subr.mxu0 %v6674
        %6738 = vmatpush1.msra.mxu0 %v6673
        %6739 = vmatprep.subr.mxu0 %v6680
        %6740 = vmatpush1.msra.mxu0 %v6679
        %6741 = vmatprep.subr.mxu0 %v6686
        %6742 = vmatpush1.msra.mxu0 %v6685
        %6743 = vmatprep.subr.mxu0 %v6692
        %6744 = vmatpush1.msra.mxu0 %v6691
        %6745 = vmatprep.subr.mxu0 %v6698
        %6746 = vmatpush1.msra.mxu0 %v6697
        %6747 = vmatprep.subr.mxu0 %v6704
        %6748 = vmatpush1.msra.mxu0 %v6703
        %6749 = vmatprep.subr.mxu0 %v6710
        %6750 = vmatpush1.msra.mxu0 %v6709
        %6751 = vmatprep.subr.mxu0 %v6716
        %6752 = vmatpush1.msra.mxu0 %v6715
        %6753 = vmatprep.subr.mxu0 0.0
        %6754 = vmatpush1.msra.mxu0 0.0
        %6755 = vmatprep.subr.mxu0 0.0
        %6756 = vmatpush1.msra.mxu0 0.0
        %6757 = vmatprep.subr.mxu0 0.0
        %6758 = vmatpush1.msra.mxu0 0.0
        %6759 = vmatprep.subr.mxu0 0.0
        %6760 = vmatpush1.msra.mxu0 0.0
        %6761 = vmatprep.subr.mxu0 0.0
        %6762 = vmatpush1.msra.mxu0 0.0
        %6763 = vmatprep.subr.mxu0 0.0
        %6764 = vmatpush1.msra.mxu0 0.0
        %6765 = vmatprep.subr.mxu0 0.0
        %6766 = vmatpush1.msra.mxu0 0.0
        %6767 = vmatprep.subr.mxu0 0.0
        %6768 = vmatpush1.msra.mxu0 0.0
        %6769 = vmatprep.subr.mxu0 0.0
        %6770 = vmatpush1.msra.mxu0 0.0
        %6771 = vmatprep.subr.mxu0 0.0
        %6772 = vmatpush1.msra.mxu0 0.0
        %6773 = vmatprep.subr.mxu0 0.0
        %6774 = vmatpush1.msra.mxu0 0.0
        %6775 = vmatprep.subr.mxu0 0.0
        %6776 = vmatpush1.msra.mxu0 0.0
        %6777 = vmatprep.subr.mxu0 0.0
        %6778 = vmatpush1.msra.mxu0 0.0
        %6779 = vmatprep.subr.mxu0 0.0
        %6780 = vmatpush1.msra.mxu0 0.0
        %6781 = vmatprep.subr.mxu0 0.0
        %6782 = vmatpush1.msra.mxu0 0.0
        %6783 = vmatprep.subr.mxu0 0.0
        %6784 = vmatpush1.msra.mxu0 0.0
        %6785 = vmatprep.mubr.f32.mxu0 0.0
        %6786 = vmatmul.mubr.f32.gmra.mrb[0].mxu0 %v336
        %v6787 = vpop.f32.mrb[0].mxu0
        %v6788 = vadd.f32 0.0, %v6787
        %v6789 = vpop.f32.mrb[0].mxu0
        %v6790 = vadd.f32 0.0, %v6789
        %6791 = vmatprep.mubr.f32.mxu0 0.0
        %6792 = vmatmul.mubr.f32.gmra.mrb[0].mxu0 %v337
        %v6793 = vpop.f32.mrb[0].mxu0
        %v6794 = vadd.f32 0.0, %v6793
        %v6795 = vpop.f32.mrb[0].mxu0
        %v6796 = vadd.f32 0.0, %v6795
        %6797 = vmatprep.mubr.f32.mxu0 0.0
        %6798 = vmatmul.mubr.f32.gmra.mrb[0].mxu0 %v338
        %v6799 = vpop.f32.mrb[0].mxu0
        %v6800 = vadd.f32 0.0, %v6799
        %v6801 = vpop.f32.mrb[0].mxu0
        %v6802 = vadd.f32 0.0, %v6801
        %6803 = vmatprep.mubr.f32.mxu0 0.0
        %6804 = vmatmul.mubr.f32.gmra.mrb[0].mxu0 %v339
        %v6805 = vpop.f32.mrb[0].mxu0
        %v6806 = vadd.f32 0.0, %v6805
        %v6807 = vpop.f32.mrb[0].mxu0
        %v6808 = vadd.f32 0.0, %v6807
        %6809 = vdwg.mxu0
        %6810 = vmatprep.subr.mxu0 %v6628
        %6811 = vmatpush1.msra.mxu0 %v6627
        %6812 = vmatprep.subr.mxu0 %v6634
        %6813 = vmatpush1.msra.mxu0 %v6633
        %6814 = vmatprep.subr.mxu0 %v6640
        %6815 = vmatpush1.msra.mxu0 %v6639
        %6816 = vmatprep.subr.mxu0 %v6646
        %6817 = vmatpush1.msra.mxu0 %v6645
        %6818 = vmatprep.subr.mxu0 %v6652
        %6819 = vmatpush1.msra.mxu0 %v6651
        %6820 = vmatprep.subr.mxu0 %v6658
        %6821 = vmatpush1.msra.mxu0 %v6657
        %6822 = vmatprep.subr.mxu0 %v6664
        %6823 = vmatpush1.msra.mxu0 %v6663
        %6824 = vmatprep.subr.mxu0 %v6670
        %6825 = vmatpush1.msra.mxu0 %v6669
        %6826 = vmatprep.subr.mxu0 %v6676
        %6827 = vmatpush1.msra.mxu0 %v6675
        %6828 = vmatprep.subr.mxu0 %v6682
        %6829 = vmatpush1.msra.mxu0 %v6681
        %6830 = vmatprep.subr.mxu0 %v6688
        %6831 = vmatpush1.msra.mxu0 %v6687
        %6832 = vmatprep.subr.mxu0 %v6694
        %6833 = vmatpush1.msra.mxu0 %v6693
        %6834 = vmatprep.subr.mxu0 %v6700
        %6835 = vmatpush1.msra.mxu0 %v6699
        %6836 = vmatprep.subr.mxu0 %v6706
        %6837 = vmatpush1.msra.mxu0 %v6705
        %6838 = vmatprep.subr.mxu0 %v6712
        %6839 = vmatpush1.msra.mxu0 %v6711
        %6840 = vmatprep.subr.mxu0 %v6718
        %6841 = vmatpush1.msra.mxu0 %v6717
        %6842 = vmatprep.subr.mxu0 0.0
        %6843 = vmatpush1.msra.mxu0 0.0
        %6844 = vmatprep.subr.mxu0 0.0
        %6845 = vmatpush1.msra.mxu0 0.0
        %6846 = vmatprep.subr.mxu0 0.0
        %6847 = vmatpush1.msra.mxu0 0.0
        %6848 = vmatprep.subr.mxu0 0.0
        %6849 = vmatpush1.msra.mxu0 0.0
        %6850 = vmatprep.subr.mxu0 0.0
        %6851 = vmatpush1.msra.mxu0 0.0
        %6852 = vmatprep.subr.mxu0 0.0
        %6853 = vmatpush1.msra.mxu0 0.0
        %6854 = vmatprep.subr.mxu0 0.0
        %6855 = vmatpush1.msra.mxu0 0.0
        %6856 = vmatprep.subr.mxu0 0.0
        %6857 = vmatpush1.msra.mxu0 0.0
        %6858 = vmatprep.subr.mxu0 0.0
        %6859 = vmatpush1.msra.mxu0 0.0
        %6860 = vmatprep.subr.mxu0 0.0
        %6861 = vmatpush1.msra.mxu0 0.0
        %6862 = vmatprep.subr.mxu0 0.0
        %6863 = vmatpush1.msra.mxu0 0.0
        %6864 = vmatprep.subr.mxu0 0.0
        %6865 = vmatpush1.msra.mxu0 0.0
        %6866 = vmatprep.subr.mxu0 0.0
        %6867 = vmatpush1.msra.mxu0 0.0
        %6868 = vmatprep.subr.mxu0 0.0
        %6869 = vmatpush1.msra.mxu0 0.0
        %6870 = vmatprep.subr.mxu0 0.0
        %6871 = vmatpush1.msra.mxu0 0.0
        %6872 = vmatprep.subr.mxu0 0.0
        %6873 = vmatpush1.msra.mxu0 0.0
        %6874 = vmatprep.mubr.f32.mxu0 0.0
        %6875 = vmatmul.mubr.f32.gmra.mrb[0].mxu0 %v336
        %v6876 = vpop.f32.mrb[0].mxu0
        %v6877 = vadd.f32 0.0, %v6876
        %v6878 = vpop.f32.mrb[0].mxu0
        %v6879 = vadd.f32 0.0, %v6878
        %6880 = vmatprep.mubr.f32.mxu0 0.0
        %6881 = vmatmul.mubr.f32.gmra.mrb[0].mxu0 %v337
        %v6882 = vpop.f32.mrb[0].mxu0
        %v6883 = vadd.f32 0.0, %v6882
        %v6884 = vpop.f32.mrb[0].mxu0
        %v6885 = vadd.f32 0.0, %v6884
        %6886 = vmatprep.mubr.f32.mxu0 0.0
        %6887 = vmatmul.mubr.f32.gmra.mrb[0].mxu0 %v338
        %v6888 = vpop.f32.mrb[0].mxu0
        %v6889 = vadd.f32 0.0, %v6888
        %v6890 = vpop.f32.mrb[0].mxu0
        %v6891 = vadd.f32 0.0, %v6890
        %6892 = vmatprep.mubr.f32.mxu0 0.0
        %6893 = vmatmul.mubr.f32.gmra.mrb[0].mxu0 %v339
        %v6894 = vpop.f32.mrb[0].mxu0
        %v6895 = vadd.f32 0.0, %v6894
        %v6896 = vpop.f32.mrb[0].mxu0
        %v6897 = vadd.f32 0.0, %v6896
        %6898 = vdwg.mxu0
        %6899 = vmatprep.subr.mxu0 %v6630
        %6900 = vmatpush1.msra.mxu0 %v6629
        %6901 = vmatprep.subr.mxu0 %v6636
        %6902 = vmatpush1.msra.mxu0 %v6635
        %6903 = vmatprep.subr.mxu0 %v6642
        %6904 = vmatpush1.msra.mxu0 %v6641
        %6905 = vmatprep.subr.mxu0 %v6648
        %6906 = vmatpush1.msra.mxu0 %v6647
        %6907 = vmatprep.subr.mxu0 %v6654
        %6908 = vmatpush1.msra.mxu0 %v6653
        %6909 = vmatprep.subr.mxu0 %v6660
        %6910 = vmatpush1.msra.mxu0 %v6659
        %6911 = vmatprep.subr.mxu0 %v6666
        %6912 = vmatpush1.msra.mxu0 %v6665
        %6913 = vmatprep.subr.mxu0 %v6672
        %6914 = vmatpush1.msra.mxu0 %v6671
        %6915 = vmatprep.subr.mxu0 %v6678
        %6916 = vmatpush1.msra.mxu0 %v6677
        %6917 = vmatprep.subr.mxu0 %v6684
        %6918 = vmatpush1.msra.mxu0 %v6683
        %6919 = vmatprep.subr.mxu0 %v6690
        %6920 = vmatpush1.msra.mxu0 %v6689
        %6921 = vmatprep.subr.mxu0 %v6696
        %6922 = vmatpush1.msra.mxu0 %v6695
        %6923 = vmatprep.subr.mxu0 %v6702
        %6924 = vmatpush1.msra.mxu0 %v6701
        %6925 = vmatprep.subr.mxu0 %v6708
        %6926 = vmatpush1.msra.mxu0 %v6707
        %6927 = vmatprep.subr.mxu0 %v6714
        %6928 = vmatpush1.msra.mxu0 %v6713
        %6929 = vmatprep.subr.mxu0 %v6720
        %6930 = vmatpush1.msra.mxu0 %v6719
        %6931 = vmatprep.subr.mxu0 0.0
        %6932 = vmatpush1.msra.mxu0 0.0
        %6933 = vmatprep.subr.mxu0 0.0
        %6934 = vmatpush1.msra.mxu0 0.0
        %6935 = vmatprep.subr.mxu0 0.0
        %6936 = vmatpush1.msra.mxu0 0.0
        %6937 = vmatprep.subr.mxu0 0.0
        %6938 = vmatpush1.msra.mxu0 0.0
        %6939 = vmatprep.subr.mxu0 0.0
        %6940 = vmatpush1.msra.mxu0 0.0
        %6941 = vmatprep.subr.mxu0 0.0
        %6942 = vmatpush1.msra.mxu0 0.0
        %6943 = vmatprep.subr.mxu0 0.0
        %6944 = vmatpush1.msra.mxu0 0.0
        %6945 = vmatprep.subr.mxu0 0.0
        %6946 = vmatpush1.msra.mxu0 0.0
        %6947 = vmatprep.subr.mxu0 0.0
        %6948 = vmatpush1.msra.mxu0 0.0
        %6949 = vmatprep.subr.mxu0 0.0
        %6950 = vmatpush1.msra.mxu0 0.0
        %6951 = vmatprep.subr.mxu0 0.0
        %6952 = vmatpush1.msra.mxu0 0.0
        %6953 = vmatprep.subr.mxu0 0.0
        %6954 = vmatpush1.msra.mxu0 0.0
        %6955 = vmatprep.subr.mxu0 0.0
        %6956 = vmatpush1.msra.mxu0 0.0
        %6957 = vmatprep.subr.mxu0 0.0
        %6958 = vmatpush1.msra.mxu0 0.0
        %6959 = vmatprep.subr.mxu0 0.0
        %6960 = vmatpush1.msra.mxu0 0.0
        %6961 = vmatprep.subr.mxu0 0.0
        %6962 = vmatpush1.msra.mxu0 0.0
        %6963 = vmatprep.mubr.f32.mxu0 0.0
        %6964 = vmatmul.mubr.f32.gmra.mrb[0].mxu0 %v336
        %v6965 = vpop.f32.mrb[0].mxu0
        %v6966 = vadd.f32 0.0, %v6965
        %v6967 = vpop.f32.mrb[0].mxu0
        %v6968 = vadd.f32 0.0, %v6967
        %6969 = vmatprep.mubr.f32.mxu0 0.0
        %6970 = vmatmul.mubr.f32.gmra.mrb[0].mxu0 %v337
        %v6971 = vpop.f32.mrb[0].mxu0
        %v6972 = vadd.f32 0.0, %v6971
        %v6973 = vpop.f32.mrb[0].mxu0
        %v6974 = vadd.f32 0.0, %v6973
        %6975 = vmatprep.mubr.f32.mxu0 0.0
        %6976 = vmatmul.mubr.f32.gmra.mrb[0].mxu0 %v338
        %v6977 = vpop.f32.mrb[0].mxu0
        %v6978 = vadd.f32 0.0, %v6977
        %v6979 = vpop.f32.mrb[0].mxu0
        %v6980 = vadd.f32 0.0, %v6979
        %6981 = vmatprep.mubr.f32.mxu0 0.0
        %6982 = vmatmul.mubr.f32.gmra.mrb[0].mxu0 %v339
        %v6983 = vpop.f32.mrb[0].mxu0
        %v6984 = vadd.f32 0.0, %v6983
        %v6985 = vpop.f32.mrb[0].mxu0
        %v6986 = vadd.f32 0.0, %v6985
        %6987 = vdwg.mxu0
        %s6988 = smul.u32 %s5864, 2
        %s6989 = sld [smem:[#allocation8 + %s6988]]
        %s6990 = scvt.s32.f32 %s6989
        %v6991 = vstv %s6990
        %v6992 = vmul.f32 %v340, %v6991
        %v6993 = vmul.f32 %v341, %v6991
        %v6994 = vadd.f32 %v6992, 0.0
        %v6995 = vadd.f32 %v6993, 0.0
        %s6996 = sadd.s32 %s6988, 1
        %s6997 = sld [smem:[#allocation8 + %s6996]]
        %s6998 = scvt.s32.f32 %s6997
        %v6999 = vstv %s6998
        %v7000 = vmul.f32 %v340, %v6999
        %v7001 = vmul.f32 %v341, %v6999
        %v7004 = vrot.slane %v7000, 7
        %v7005 = vrot.slane %v7004, 2
        %v7006 = vrot.slane %v7001, 7
        %v7007 = vrot.slane %v7006, 2
        %v7010 = vadd.f32 %v6994, %v7005
        %v7011 = vadd.f32 %v6995, %v7007
        %v7012 = vxor.u32 %v6788, 2147483648
        %v7013 = vxor.u32 %v6790, 2147483648
        %v7014 = vxor.u32 %v6877, 2147483648
        %v7015 = vxor.u32 %v6879, 2147483648
        %v7016 = vxor.u32 %v6966, 2147483648
        %v7017 = vxor.u32 %v6968, 2147483648
        %v7018 = vxor.u32 %v6794, 2147483648
        %v7019 = vxor.u32 %v6796, 2147483648
        %v7020 = vxor.u32 %v6883, 2147483648
        %v7021 = vxor.u32 %v6885, 2147483648
        %v7022 = vxor.u32 %v6972, 2147483648
        %v7023 = vxor.u32 %v6974, 2147483648
        %v7024 = vmul.f32 %v7012, 1.442695
        %v7025 = vpow.pop %v7024
        %v7026 = vmul.f32 %v7013, 1.442695
        %v7027 = vpow.pop %v7026
        %v7028 = vmul.f32 %v7014, 1.442695
        %v7029 = vpow.pop %v7028
        %v7030 = vmul.f32 %v7015, 1.442695
        %v7031 = vpow.pop %v7030
        %v7032 = vmul.f32 %v7016, 1.442695
        %v7033 = vpow.pop %v7032
        %v7034 = vmul.f32 %v7017, 1.442695
        %v7035 = vpow.pop %v7034
        %v7036 = vmul.f32 %v7018, 1.442695
        %v7037 = vpow.pop %v7036
        %v7038 = vmul.f32 %v7019, 1.442695
        %v7039 = vpow.pop %v7038
        %v7040 = vmul.f32 %v7020, 1.442695
        %v7041 = vpow.pop %v7040
        %v7042 = vmul.f32 %v7021, 1.442695
        %v7043 = vpow.pop %v7042
        %v7044 = vmul.f32 %v7022, 1.442695
        %v7045 = vpow.pop %v7044
        %v7046 = vmul.f32 %v7023, 1.442695
        %v7047 = vpow.pop %v7046
        %v7048 = vadd.f32 %v7025, 1.0
        %v7049 = vadd.f32 %v7027, 1.0
        %v7050 = vadd.f32 %v7029, 1.0
        %v7051 = vadd.f32 %v7031, 1.0
        %v7052 = vadd.f32 %v7033, 1.0
        %v7053 = vadd.f32 %v7035, 1.0
        %v7054 = vadd.f32 %v7037, 1.0
        %v7055 = vadd.f32 %v7039, 1.0
        %v7056 = vadd.f32 %v7041, 1.0
        %v7057 = vadd.f32 %v7043, 1.0
        %v7058 = vadd.f32 %v7045, 1.0
        %v7059 = vadd.f32 %v7047, 1.0
        %v7060 = vrcp.pop %v7048
        %v7061 = vmul.f32 1.0, %v7060
        %v7062 = vrcp.pop %v7049
        %v7063 = vmul.f32 1.0, %v7062
        %v7064 = vrcp.pop %v7050
        %v7065 = vmul.f32 1.0, %v7064
        %v7066 = vrcp.pop %v7051
        %v7067 = vmul.f32 1.0, %v7066
        %v7068 = vrcp.pop %v7052
        %v7069 = vmul.f32 1.0, %v7068
        %v7070 = vrcp.pop %v7053
        %v7071 = vmul.f32 1.0, %v7070
        %v7072 = vrcp.pop %v7054
        %v7073 = vmul.f32 1.0, %v7072
        %v7074 = vrcp.pop %v7055
        %v7075 = vmul.f32 1.0, %v7074
        %v7076 = vrcp.pop %v7056
        %v7077 = vmul.f32 1.0, %v7076
        %v7078 = vrcp.pop %v7057
        %v7079 = vmul.f32 1.0, %v7078
        %v7080 = vrcp.pop %v7058
        %v7081 = vmul.f32 1.0, %v7080
        %v7082 = vrcp.pop %v7059
        %v7083 = vmul.f32 1.0, %v7082
        %v7084 = vtanh.pop %v6794
        %v7085 = vtanh.pop %v6796
        %v7086 = vtanh.pop %v6883
        %v7087 = vtanh.pop %v6885
        %v7088 = vtanh.pop %v6972
        %v7089 = vtanh.pop %v6974
        %v7090 = vld [vmem:[#allocation3] sm:$0xff]
        %v7091 = vld [vmem:[#allocation3 + $0x8] sm:$0xff]
        %v7092 = vld [vmem:[#allocation3 + $0x10] sm:$0xff]
        %v7096 = vcombine.low %v7090, %v7090
        %v7097 = vcombine.low %v7091, %v7091
        %v7098 = vcombine.low %v7092, %v7092
        %v7102 = vmul.f32 %v7061, %v7096
        %v7103 = vmul.f32 %v7063, %v7090
        %v7104 = vmul.f32 %v7065, %v7097
        %v7105 = vmul.f32 %v7067, %v7091
        %v7106 = vmul.f32 %v7069, %v7098
        %v7107 = vmul.f32 %v7071, %v7092
        %v7114 = vrot.slane %v7084, 4
        %v7115 = vrot.slane %v7085, 4
        %v7116 = vrot.slane %v7086, 4
        %v7117 = vrot.slane %v7087, 4
        %v7118 = vrot.slane %v7088, 4
        %v7119 = vrot.slane %v7089, 4
        %v7126 = vmul.f32 %v7061, %v7114
        %v7127 = vmul.f32 %v7063, %v7115
        %v7128 = vmul.f32 %v7065, %v7116
        %v7129 = vmul.f32 %v7067, %v7117
        %v7130 = vmul.f32 %v7069, %v7118
        %v7131 = vmul.f32 %v7071, %v7119
        %v7138 = vrot.slane %v7126, 4
        %v7139 = vrot.slane %v7127, 4
        %v7140 = vrot.slane %v7128, 4
        %v7141 = vrot.slane %v7129, 4
        %v7142 = vrot.slane %v7130, 4
        %v7143 = vrot.slane %v7131, 4
        %v7150 = vadd.f32 %v7102, %v7138
        %v7151 = vadd.f32 %v7103, %v7139
        %v7152 = vadd.f32 %v7104, %v7140
        %v7153 = vadd.f32 %v7105, %v7141
        %v7154 = vadd.f32 %v7106, %v7142
        %v7155 = vadd.f32 %v7107, %v7143
        %v7156 = vtanh.pop %v7150
        %v7157 = vtanh.pop %v7151
        %v7158 = vtanh.pop %v7152
        %v7159 = vtanh.pop %v7153
        %v7160 = vtanh.pop %v7154
        %v7161 = vtanh.pop %v7155
        %v7168 = vrot.slane %v7156, 4
        %v7169 = vrot.slane %v7157, 4
        %v7170 = vrot.slane %v7158, 4
        %v7171 = vrot.slane %v7159, 4
        %v7172 = vrot.slane %v7160, 4
        %v7173 = vrot.slane %v7161, 4
        %v7180 = vmul.f32 %v7073, %v7168
        %v7181 = vmul.f32 %v7075, %v7169
        %v7182 = vmul.f32 %v7077, %v7170
        %v7183 = vmul.f32 %v7079, %v7171
        %v7184 = vmul.f32 %v7081, %v7172
        %v7185 = vmul.f32 %v7083, %v7173
        %v7188 = vlaneseq
        %v7189 = vshrl.u32 %v7188, 7
        %v7190 = vsub.s32 0, %v7189
        %v7191 = vrot.slane %v7010, %v7190
        %v7192 = vlaneseq
        %v7193 = vshrl.u32 %v7192, 7
        %v7194 = vsub.s32 2, %v7193
        %v7195 = vrot.slane %v7010, %v7194
        %v7196 = vlaneseq
        %v7197 = vshrl.u32 %v7196, 7
        %v7198 = vsub.s32 4, %v7197
        %v7199 = vrot.slane %v7010, %v7198
        %v7200 = vlaneseq
        %v7201 = vshrl.u32 %v7200, 7
        %v7202 = vsub.s32 6, %v7201
        %v7203 = vrot.slane %v7010, %v7202
        %v7204 = vlaneseq
        %v7205 = vshrl.u32 %v7204, 7
        %v7206 = vsub.s32 0, %v7205
        %v7207 = vrot.slane %v7011, %v7206
        %v7208 = vlaneseq
        %v7209 = vshrl.u32 %v7208, 7
        %v7210 = vsub.s32 2, %v7209
        %v7211 = vrot.slane %v7011, %v7210
        %v7218 = vlaneseq
        %v7219 = vshrl.u32 %v7218, 7
        %v7220 = vsub.s32 0, %v7219
        %v7221 = vrot.slane %v7191, %v7220
        %v7222 = vlaneseq
        %v7223 = vshrl.u32 %v7222, 7
        %v7224 = vsub.s32 0, %v7223
        %v7225 = vrot.slane %v7195, %v7224
        %v7226 = vlaneseq
        %v7227 = vshrl.u32 %v7226, 7
        %v7228 = vsub.s32 0, %v7227
        %v7229 = vrot.slane %v7199, %v7228
        %v7230 = vlaneseq
        %v7231 = vshrl.u32 %v7230, 7
        %v7232 = vsub.s32 0, %v7231
        %v7233 = vrot.slane %v7203, %v7232
        %v7234 = vlaneseq
        %v7235 = vshrl.u32 %v7234, 7
        %v7236 = vsub.s32 0, %v7235
        %v7237 = vrot.slane %v7207, %v7236
        %v7238 = vlaneseq
        %v7239 = vshrl.u32 %v7238, 7
        %v7240 = vsub.s32 0, %v7239
        %v7241 = vrot.slane %v7211, %v7240
        %v7242 = vmul.f32 %v7221, %v7150
        %v7243 = vmul.f32 %v7225, %v7151
        %v7244 = vmul.f32 %v7229, %v7152
        %v7245 = vmul.f32 %v7233, %v7153
        %v7246 = vmul.f32 %v7237, %v7154
        %v7247 = vmul.f32 %v7241, %v7155
        %v7248 = vsub.f32 1.0, %v7010
        %v7249 = vsub.f32 1.0, %v7011
        %v7252 = vlaneseq
        %v7253 = vshrl.u32 %v7252, 7
        %v7254 = vsub.s32 0, %v7253
        %v7255 = vrot.slane %v7248, %v7254
        %v7256 = vlaneseq
        %v7257 = vshrl.u32 %v7256, 7
        %v7258 = vsub.s32 2, %v7257
        %v7259 = vrot.slane %v7248, %v7258
        %v7260 = vlaneseq
        %v7261 = vshrl.u32 %v7260, 7
        %v7262 = vsub.s32 4, %v7261
        %v7263 = vrot.slane %v7248, %v7262
        %v7264 = vlaneseq
        %v7265 = vshrl.u32 %v7264, 7
        %v7266 = vsub.s32 6, %v7265
        %v7267 = vrot.slane %v7248, %v7266
        %v7268 = vlaneseq
        %v7269 = vshrl.u32 %v7268, 7
        %v7270 = vsub.s32 0, %v7269
        %v7271 = vrot.slane %v7249, %v7270
        %v7272 = vlaneseq
        %v7273 = vshrl.u32 %v7272, 7
        %v7274 = vsub.s32 2, %v7273
        %v7275 = vrot.slane %v7249, %v7274
        %v7282 = vlaneseq
        %v7283 = vshrl.u32 %v7282, 7
        %v7284 = vsub.s32 0, %v7283
        %v7285 = vrot.slane %v7255, %v7284
        %v7286 = vlaneseq
        %v7287 = vshrl.u32 %v7286, 7
        %v7288 = vsub.s32 0, %v7287
        %v7289 = vrot.slane %v7259, %v7288
        %v7290 = vlaneseq
        %v7291 = vshrl.u32 %v7290, 7
        %v7292 = vsub.s32 0, %v7291
        %v7293 = vrot.slane %v7263, %v7292
        %v7294 = vlaneseq
        %v7295 = vshrl.u32 %v7294, 7
        %v7296 = vsub.s32 0, %v7295
        %v7297 = vrot.slane %v7267, %v7296
        %v7298 = vlaneseq
        %v7299 = vshrl.u32 %v7298, 7
        %v7300 = vsub.s32 0, %v7299
        %v7301 = vrot.slane %v7271, %v7300
        %v7302 = vlaneseq
        %v7303 = vshrl.u32 %v7302, 7
        %v7304 = vsub.s32 0, %v7303
        %v7305 = vrot.slane %v7275, %v7304
        %v7306 = vcombine.high %v7090, %v7090
        %v7307 = vcombine.high %v7091, %v7091
        %v7308 = vcombine.high %v7092, %v7092
        %v7312 = vmul.f32 %v7285, %v7090
        %v7313 = vmul.f32 %v7289, %v7306
        %v7314 = vmul.f32 %v7293, %v7091
        %v7315 = vmul.f32 %v7297, %v7307
        %v7316 = vmul.f32 %v7301, %v7092
        %v7317 = vmul.f32 %v7305, %v7308
        %v7324 = vrot.slane %v7312, 4
        %v7325 = vrot.slane %v7313, 4
        %v7326 = vrot.slane %v7314, 4
        %v7327 = vrot.slane %v7315, 4
        %v7328 = vrot.slane %v7316, 4
        %v7329 = vrot.slane %v7317, 4
        %v7336 = vadd.f32 %v7242, %v7324
        %v7337 = vadd.f32 %v7243, %v7325
        %v7338 = vadd.f32 %v7244, %v7326
        %v7339 = vadd.f32 %v7245, %v7327
        %v7340 = vadd.f32 %v7246, %v7328
        %v7341 = vadd.f32 %v7247, %v7329
        %v7348 = vcombine.high %v7336, %v7337
        %v7349 = vcombine.high %v7338, %v7339
        %v7350 = vcombine.high %v7340, %v7341
        %7354 = vst [vmem:[#allocation3] sm:$0xff] %v7348
        %7355 = vst [vmem:[#allocation3 + $0x8] sm:$0xff] %v7349
        %7356 = vst.msk [vmem:[#allocation3 + $0x10] sm:$0xff] %vm1843, %v7350
        %v7357 = vmul.f32 %v7221, %v7180
        %v7358 = vmul.f32 %v7225, %v7181
        %v7359 = vmul.f32 %v7229, %v7182
        %v7360 = vmul.f32 %v7233, %v7183
        %v7361 = vmul.f32 %v7237, %v7184
        %v7362 = vmul.f32 %v7241, %v7185
        %7363 = vrot.lane.b32.xlu0 %v6140, 109
        %v7364 = vpop.permute.xlu0 %7363
        %7365 = vrot.lane.b32.xlu0 %v6141, 109
        %v7366 = vpop.permute.xlu0 %7365
        %7367 = vrot.lane.b32.xlu0 %v6142, 109
        %v7368 = vpop.permute.xlu0 %7367
        %v7369 = vsel %vm473, %v6233, %v7364
        %v7370 = vsel %vm473, %v7364, %v6237
        %v7371 = vsel %vm473, %v6237, %v7366
        %v7372 = vsel %vm473, %v7366, %v6241
        %v7373 = vsel %vm473, %v6241, %v7368
        %v7380 = vmul.f32 %v7285, %v7369
        %v7381 = vmul.f32 %v7289, %v7370
        %v7382 = vmul.f32 %v7293, %v7371
        %v7383 = vmul.f32 %v7297, %v7372
        %v7384 = vmul.f32 %v7301, %v7373
        %v7385 = vmul.f32 %v7305, %v7368
        %v7386 = vadd.f32 %v7357, %v7380
        %v7387 = vadd.f32 %v7358, %v7381
        %v7388 = vadd.f32 %v7359, %v7382
        %v7389 = vadd.f32 %v7360, %v7383
        %v7390 = vadd.f32 %v7361, %v7384
        %v7391 = vadd.f32 %v7362, %v7385
        %v7398 = vcombine.low %v7386, %v7387
        %v7399 = vcombine.low %v7388, %v7389
        %v7400 = vcombine.low %v7390, %v7391
        %7401 = vrot.lane.b32.xlu0 %v7398, 19
        %v7402 = vpop.permute.xlu0 %7401
        %7403 = vrot.lane.b32.xlu0 %v7399, 19
        %v7404 = vpop.permute.xlu0 %7403
        %7405 = vrot.lane.b32.xlu0 %v7400, 19
        %v7406 = vpop.permute.xlu0 %7405
        %v7407 = vrot.slane %v7402, 4
        %v7408 = vrot.slane %v7404, 4
        %v7409 = vrot.slane %v7406, 4
        %v7410 = vsel %vm1898, %v7407, %v7402
        %v7411 = vsel %vm1842, %v7407, %v7408
        %v7412 = vsel %vm1898, %v7411, %v7404
        %v7413 = vsel %vm1842, %v7408, %v7409
        %v7414 = vsel %vm1898, %v7413, %v7406
        %7418 = vst.msk [vmem:[#allocation2] sm:$0xff] %vm1909, %v7410
        %7419 = vst [vmem:[#allocation2 + $0x8] sm:$0xff] %v7412
        %7420 = vst.msk [vmem:[#allocation2 + $0x10] sm:$0xff] %vm1913, %v7414
        %v7421 = vxor.u32 %v6800, 2147483648
        %v7422 = vxor.u32 %v6802, 2147483648
        %v7423 = vxor.u32 %v6889, 2147483648
        %v7424 = vxor.u32 %v6891, 2147483648
        %v7425 = vxor.u32 %v6978, 2147483648
        %v7426 = vxor.u32 %v6980, 2147483648
        %v7427 = vxor.u32 %v6806, 2147483648
        %v7428 = vxor.u32 %v6808, 2147483648
        %v7429 = vxor.u32 %v6895, 2147483648
        %v7430 = vxor.u32 %v6897, 2147483648
        %v7431 = vxor.u32 %v6984, 2147483648
        %v7432 = vxor.u32 %v6986, 2147483648
        %v7433 = vmul.f32 %v7421, 1.442695
        %v7434 = vpow.pop %v7433
        %v7435 = vmul.f32 %v7422, 1.442695
        %v7436 = vpow.pop %v7435
        %v7437 = vmul.f32 %v7423, 1.442695
        %v7438 = vpow.pop %v7437
        %v7439 = vmul.f32 %v7424, 1.442695
        %v7440 = vpow.pop %v7439
        %v7441 = vmul.f32 %v7425, 1.442695
        %v7442 = vpow.pop %v7441
        %v7443 = vmul.f32 %v7426, 1.442695
        %v7444 = vpow.pop %v7443
        %v7445 = vmul.f32 %v7427, 1.442695
        %v7446 = vpow.pop %v7445
        %v7447 = vmul.f32 %v7428, 1.442695
        %v7448 = vpow.pop %v7447
        %v7449 = vmul.f32 %v7429, 1.442695
        %v7450 = vpow.pop %v7449
        %v7451 = vmul.f32 %v7430, 1.442695
        %v7452 = vpow.pop %v7451
        %v7453 = vmul.f32 %v7431, 1.442695
        %v7454 = vpow.pop %v7453
        %v7455 = vmul.f32 %v7432, 1.442695
        %v7456 = vpow.pop %v7455
        %v7457 = vadd.f32 %v7434, 1.0
        %v7458 = vadd.f32 %v7436, 1.0
        %v7459 = vadd.f32 %v7438, 1.0
        %v7460 = vadd.f32 %v7440, 1.0
        %v7461 = vadd.f32 %v7442, 1.0
        %v7462 = vadd.f32 %v7444, 1.0
        %v7463 = vadd.f32 %v7446, 1.0
        %v7464 = vadd.f32 %v7448, 1.0
        %v7465 = vadd.f32 %v7450, 1.0
        %v7466 = vadd.f32 %v7452, 1.0
        %v7467 = vadd.f32 %v7454, 1.0
        %v7468 = vadd.f32 %v7456, 1.0
        %v7469 = vrcp.pop %v7457
        %v7470 = vmul.f32 1.0, %v7469
        %v7471 = vrcp.pop %v7458
        %v7472 = vmul.f32 1.0, %v7471
        %v7473 = vrcp.pop %v7459
        %v7474 = vmul.f32 1.0, %v7473
        %v7475 = vrcp.pop %v7460
        %v7476 = vmul.f32 1.0, %v7475
        %v7477 = vrcp.pop %v7461
        %v7478 = vmul.f32 1.0, %v7477
        %v7479 = vrcp.pop %v7462
        %v7480 = vmul.f32 1.0, %v7479
        %v7481 = vrcp.pop %v7463
        %v7482 = vmul.f32 1.0, %v7481
        %v7483 = vrcp.pop %v7464
        %v7484 = vmul.f32 1.0, %v7483
        %v7485 = vrcp.pop %v7465
        %v7486 = vmul.f32 1.0, %v7485
        %v7487 = vrcp.pop %v7466
        %v7488 = vmul.f32 1.0, %v7487
        %v7489 = vrcp.pop %v7467
        %v7490 = vmul.f32 1.0, %v7489
        %v7491 = vrcp.pop %v7468
        %v7492 = vmul.f32 1.0, %v7491
        %v7493 = vtanh.pop %v6806
        %v7494 = vtanh.pop %v6808
        %v7495 = vtanh.pop %v6895
        %v7496 = vtanh.pop %v6897
        %v7497 = vtanh.pop %v6984
        %v7498 = vtanh.pop %v6986
        %v7499 = vld [vmem:[#allocation5] sm:$0xff]
        %v7500 = vld [vmem:[#allocation5 + $0x8] sm:$0xff]
        %v7501 = vld [vmem:[#allocation5 + $0x10] sm:$0xff]
        %v7505 = vcombine.low %v7499, %v7499
        %v7506 = vcombine.low %v7500, %v7500
        %v7507 = vcombine.low %v7501, %v7501
        %v7511 = vmul.f32 %v7470, %v7505
        %v7512 = vmul.f32 %v7472, %v7499
        %v7513 = vmul.f32 %v7474, %v7506
        %v7514 = vmul.f32 %v7476, %v7500
        %v7515 = vmul.f32 %v7478, %v7507
        %v7516 = vmul.f32 %v7480, %v7501
        %v7523 = vrot.slane %v7493, 4
        %v7524 = vrot.slane %v7494, 4
        %v7525 = vrot.slane %v7495, 4
        %v7526 = vrot.slane %v7496, 4
        %v7527 = vrot.slane %v7497, 4
        %v7528 = vrot.slane %v7498, 4
        %v7535 = vmul.f32 %v7470, %v7523
        %v7536 = vmul.f32 %v7472, %v7524
        %v7537 = vmul.f32 %v7474, %v7525
        %v7538 = vmul.f32 %v7476, %v7526
        %v7539 = vmul.f32 %v7478, %v7527
        %v7540 = vmul.f32 %v7480, %v7528
        %v7547 = vrot.slane %v7535, 4
        %v7548 = vrot.slane %v7536, 4
        %v7549 = vrot.slane %v7537, 4
        %v7550 = vrot.slane %v7538, 4
        %v7551 = vrot.slane %v7539, 4
        %v7552 = vrot.slane %v7540, 4
        %v7559 = vadd.f32 %v7511, %v7547
        %v7560 = vadd.f32 %v7512, %v7548
        %v7561 = vadd.f32 %v7513, %v7549
        %v7562 = vadd.f32 %v7514, %v7550
        %v7563 = vadd.f32 %v7515, %v7551
        %v7564 = vadd.f32 %v7516, %v7552
        %v7565 = vtanh.pop %v7559
        %v7566 = vtanh.pop %v7560
        %v7567 = vtanh.pop %v7561
        %v7568 = vtanh.pop %v7562
        %v7569 = vtanh.pop %v7563
        %v7570 = vtanh.pop %v7564
        %v7577 = vrot.slane %v7565, 4
        %v7578 = vrot.slane %v7566, 4
        %v7579 = vrot.slane %v7567, 4
        %v7580 = vrot.slane %v7568, 4
        %v7581 = vrot.slane %v7569, 4
        %v7582 = vrot.slane %v7570, 4
        %v7589 = vmul.f32 %v7482, %v7577
        %v7590 = vmul.f32 %v7484, %v7578
        %v7591 = vmul.f32 %v7486, %v7579
        %v7592 = vmul.f32 %v7488, %v7580
        %v7593 = vmul.f32 %v7490, %v7581
        %v7594 = vmul.f32 %v7492, %v7582
        %v7595 = vmul.f32 %v7221, %v7559
        %v7596 = vmul.f32 %v7225, %v7560
        %v7597 = vmul.f32 %v7229, %v7561
        %v7598 = vmul.f32 %v7233, %v7562
        %v7599 = vmul.f32 %v7237, %v7563
        %v7600 = vmul.f32 %v7241, %v7564
        %v7601 = vcombine.high %v7499, %v7499
        %v7602 = vcombine.high %v7500, %v7500
        %v7603 = vcombine.high %v7501, %v7501
        %v7607 = vmul.f32 %v7285, %v7499
        %v7608 = vmul.f32 %v7289, %v7601
        %v7609 = vmul.f32 %v7293, %v7500
        %v7610 = vmul.f32 %v7297, %v7602
        %v7611 = vmul.f32 %v7301, %v7501
        %v7612 = vmul.f32 %v7305, %v7603
        %v7619 = vrot.slane %v7607, 4
        %v7620 = vrot.slane %v7608, 4
        %v7621 = vrot.slane %v7609, 4
        %v7622 = vrot.slane %v7610, 4
        %v7623 = vrot.slane %v7611, 4
        %v7624 = vrot.slane %v7612, 4
        %v7631 = vadd.f32 %v7595, %v7619
        %v7632 = vadd.f32 %v7596, %v7620
        %v7633 = vadd.f32 %v7597, %v7621
        %v7634 = vadd.f32 %v7598, %v7622
        %v7635 = vadd.f32 %v7599, %v7623
        %v7636 = vadd.f32 %v7600, %v7624
        %v7643 = vcombine.high %v7631, %v7632
        %v7644 = vcombine.high %v7633, %v7634
        %v7645 = vcombine.high %v7635, %v7636
        %7649 = vst [vmem:[#allocation5] sm:$0xff] %v7643
        %7650 = vst [vmem:[#allocation5 + $0x8] sm:$0xff] %v7644
        %7651 = vst.msk [vmem:[#allocation5 + $0x10] sm:$0xff] %vm1843, %v7645
        %v7652 = vmul.f32 %v7221, %v7589
        %v7653 = vmul.f32 %v7225, %v7590
        %v7654 = vmul.f32 %v7229, %v7591
        %v7655 = vmul.f32 %v7233, %v7592
        %v7656 = vmul.f32 %v7237, %v7593
        %v7657 = vmul.f32 %v7241, %v7594
        %v7658 = vmul.f32 %v7285, %v6492
        %v7659 = vmul.f32 %v7289, %v6493
        %v7660 = vmul.f32 %v7293, %v6494
        %v7661 = vmul.f32 %v7297, %v6495
        %v7662 = vmul.f32 %v7301, %v6496
        %v7663 = vmul.f32 %v7305, %v6491
        %v7664 = vadd.f32 %v7652, %v7658
        %v7665 = vadd.f32 %v7653, %v7659
        %v7666 = vadd.f32 %v7654, %v7660
        %v7667 = vadd.f32 %v7655, %v7661
        %v7668 = vadd.f32 %v7656, %v7662
        %v7669 = vadd.f32 %v7657, %v7663
        %v7676 = vcombine.low %v7664, %v7665
        %v7677 = vcombine.low %v7666, %v7667
        %v7678 = vcombine.low %v7668, %v7669
        %7679 = vrot.lane.b32.xlu0 %v7676, 19
        %v7680 = vpop.permute.xlu0 %7679
        %7681 = vrot.lane.b32.xlu0 %v7677, 19
        %v7682 = vpop.permute.xlu0 %7681
        %7683 = vrot.lane.b32.xlu0 %v7678, 19
        %v7684 = vpop.permute.xlu0 %7683
        %v7685 = vrot.slane %v7680, 4
        %v7686 = vrot.slane %v7682, 4
        %v7687 = vrot.slane %v7684, 4
        %v7688 = vsel %vm1898, %v7685, %v7680
        %v7689 = vsel %vm1842, %v7685, %v7686
        %v7690 = vsel %vm1898, %v7689, %v7682
        %v7691 = vsel %vm1842, %v7686, %v7687
        %v7692 = vsel %vm1898, %v7691, %v7684
        %7696 = vst.msk [vmem:[#allocation4] sm:$0xff] %vm1909, %v7688
        %7697 = vst [vmem:[#allocation4 + $0x8] sm:$0xff] %v7690
        %7698 = vst.msk [vmem:[#allocation4 + $0x10] sm:$0xff] %vm1913, %v7692
        %p7699 = scmp.eq.s32.totalorder %s24, 1
        // Predicated region
        $region49: #{tpu_custom_call.1} parent=31 // pred_check
          %p7700 = pneg %p7699
        $region50: #{tpu_custom_call.1} parent=31 // pred_check_branch
          %7702 = sbr.rel (%p7700) target = $region52
        $region51: #{tpu_custom_call.1} parent=31 // pred_region
          %v7703 = vld [vmem:[#allocation2] sm:$0xff]
          %v7704 = vld [vmem:[#allocation2 + $0x8] sm:$0xff]
          %v7705 = vld [vmem:[#allocation2 + $0x10] sm:$0xff]
          %v7706 = vld [vmem:[#allocation4] sm:$0xff]
          %v7707 = vld [vmem:[#allocation4 + $0x8] sm:$0xff]
          %v7708 = vld [vmem:[#allocation4 + $0x10] sm:$0xff]
          %v7709 = vadd.f32 %v7703, %v7706
          %v7710 = vadd.f32 %v7704, %v7707
          %v7711 = vadd.f32 %v7705, %v7708
          %v7712 = vmul.f32 %v7709, 0.5
          %v7713 = vmul.f32 %v7710, 0.5
          %v7714 = vmul.f32 %v7711, 0.5
          %7718 = vrot.lane.b32.xlu0 %v7712, 109
          %v7719 = vpop.permute.xlu0 %7718
          %7720 = vrot.lane.b32.xlu0 %v7713, 109
          %v7721 = vpop.permute.xlu0 %7720
          %7722 = vrot.lane.b32.xlu0 %v7714, 109
          %v7723 = vpop.permute.xlu0 %7722
          %v7724 = vrot.slane %v7719, 4
          %v7725 = vrot.slane %v7721, 4
          %v7726 = vrot.slane %v7723, 4
          %v7727 = vsel %vm1842, %v7724, %v7725
          %v7728 = vsel %vm473, %v7719, %v7727
          %v7729 = vsel %vm1842, %v7725, %v7726
          %v7730 = vsel %vm473, %v7721, %v7729
          %v7731 = vsel %vm473, %v7723, %v7726
          %7735 = vst [vmem:[#allocation15] sm:$0xff] %v7728
          %7736 = vst [vmem:[#allocation15 + $0x8] sm:$0xff] %v7730
          %7737 = vst.msk [vmem:[#allocation15 + $0x10] sm:$0xff] %vm1843, %v7731
        $region52: #{tpu_custom_call.1} parent=31 // pred_fallthru
          _
        // Predicated region
        $region53: #{tpu_custom_call.1} parent=31 // pred_check
          %p7738 = pneg %p105
        $region54: #{tpu_custom_call.1} parent=31 // pred_check_branch
          %7740 = sbr.rel (%p7738) target = $region56
        $region55: #{tpu_custom_call.1} parent=31 // pred_region
          %s7742 = ssub.s32 384, 384
          %7743 = vsyncadd [#allocation11], %s7742
          %s7745 = sshll.u32 [#allocation15], 4
          %s7746 = int_to_ptr.vmem [resolvable:$true] %s7745
          %7748 = dma.vmem_to_hbm [thread:$0]  %s7746, 384, %s4, [#allocation11]
        $region56: #{tpu_custom_call.1} parent=31 // pred_fallthru
          _
        // Predicated region
        $region57: #{tpu_custom_call.1} parent=31 // pred_check
          %p7749 = pneg %p105
        $region58: #{tpu_custom_call.1} parent=31 // pred_check_branch
          %7751 = sbr.rel (%p7749) target = $region60
        $region59: #{tpu_custom_call.1} parent=31 // pred_region
          %7752 = dma.done [#allocation11], 384
        $region60: #{tpu_custom_call.1} parent=31 // pred_fallthru
          _
      $region32: #{tpu_custom_call.1} parent=5 // pred_fallthru
        _
      %p7753 = scmp.le.s32.totalorder 2, %s19
      // Predicated region
      $region61: #{tpu_custom_call.1} parent=5 // pred_check
        %p7754 = pneg %p7753
      $region62: #{tpu_custom_call.1} parent=5 // pred_check_branch
        %7756 = sbr.rel (%p7754) target = $region64
      $region63: #{tpu_custom_call.1} parent=5 // pred_region
        %s7757 = ssub.s32 %s19, 2
      $region64: #{tpu_custom_call.1} parent=5 // pred_fallthru
        _
    $region6: #{tpu_custom_call.1} parent=1 // loop_footer
      %s23 = sadd.s32 1, %s19
    $region7: #{tpu_custom_call.1} parent=1 // loop_footer_branch
      %18 = sbr.rel target = $region3
    $region8: #{tpu_custom_call.1} parent=1 // loop_exit
      _
    %7758 = vsyncpa [#allocation10], 1
    %s7759 = scalar_lea.sflag [#allocation10], 1
    %7760 = vsyncpa %s7759, 1
    %7761 = vsyncpa [#allocation13], 1
    %7762 = vsyncpa [#allocation11], 1
    %s7763 = scalar_lea.sflag [#allocation11], 1
    %7764 = vsyncpa %s7763, 1

</llo_original>
